<compile_context>
chip_gen: v5e
topology: v5e:2x2
jax: 0.10.0
libtpu: 0.0.40
codegen_flags: <defaults>
</compile_context>

<pallas_src>
import functools

import jax
import jax.numpy as jnp
import numpy as np
from jax.experimental import pallas as pl
from jax.experimental.pallas import tpu as pltpu

GN_GROUPS = 4
GN_EPS = 1e-5


# ---------------------------------------------------------------------------
# In-kernel helpers
# ---------------------------------------------------------------------------
def _act(x):
    # torch.where((x>=-3)&(x<=3), hardswish(x), clamp(x,0,6) + 0.01*clamp(x,max=0))
    hs = x * jnp.clip(x + 3.0, 0.0, 6.0) * (1.0 / 6.0)
    other = jnp.clip(x, 0.0, 6.0) + 0.01 * jnp.minimum(x, 0.0)
    return jnp.where((x >= -3.0) & (x <= 3.0), hs, other)


def _gn_act(z, gamma, beta, mix, inv_cnt):
    # One-pass GroupNorm (var = E[x^2] - mean^2), gamma*rsqrt folded into one
    # per-channel scale, fused with the module's activation.
    # z: (C, N); mix: (C, C) group-membership matrix (block diagonal when the
    # channels of several branches are stacked).
    s1 = jnp.sum(z, axis=1, keepdims=True)
    s2 = jnp.sum(z * z, axis=1, keepdims=True)
    mean = jnp.dot(mix, s1, preferred_element_type=jnp.float32) * inv_cnt     # (C,1)
    msq = jnp.dot(mix, s2, preferred_element_type=jnp.float32) * inv_cnt      # (C,1)
    scale = gamma * jax.lax.rsqrt(msq - mean * mean + GN_EPS)
    return _act(z * scale + (beta - mean * scale))


def _scse(z2, wsse_exp, wfc1, wfc2, inv_n):
    # scSE epilogue: z2 * (cSE_gate + sSE_gate), single fused multiply.
    # wsse_exp has the sSE 1x1-conv row replicated per channel (block diagonal
    # when branches are stacked), so the spatial gate is one matmul.
    gap = jnp.sum(z2, axis=1, keepdims=True) * inv_n                          # (C,1)
    h = jnp.maximum(jnp.dot(wfc1, gap, preferred_element_type=jnp.float32), 0.0)
    s = jnp.clip(jnp.dot(wfc2, h, preferred_element_type=jnp.float32)
                 * (1.0 / 6.0) + 0.5, 0.0, 1.0)                               # hardsigmoid (C,1)
    q = jax.nn.sigmoid(jnp.dot(wsse_exp, z2, preferred_element_type=jnp.float32))
    return z2 * (s + q)


def _dw_convt(z, pad_sc, wdw, bdw, dst_ref, c0, *, K, dil, H, W, L, Ho, Wo, Hp, Wp):
    """Depthwise ConvTranspose2d (stride 1) for one branch.

    z: (C, H*W) activations.  pad_sc: (Hp, C, Wp) VMEM zero-pad slab (row index
    leading so every row access is a plain leading-dim index).  Results are
    accumulated per output row and stored directly at lane pitch Wo into
    dst_ref[c0:c0+C, :Ho*Wo].
    """
    del Hp, Wp  # only used by the wrapper to size pad_sc
    Cb = z.shape[0]
    # TODO(synk): at production sizes, zero only the L-wide border (interior is
    # fully overwritten below); at these sizes a full memset is negligible and
    # stays correct under any megacore grid split.
    pad_sc[...] = jnp.zeros(pad_sc.shape, jnp.float32)
    for i in range(H):
        pad_sc[L + i, :, L:L + W] = z[:, i * W:(i + 1) * W]
    for i in range(Ho):
        acc = jnp.zeros((Cb, Wo), jnp.float32)
        for kh in range(K):
            prow = pad_sc[i + kh * dil]                                       # (C, Wp)
            for kw in range(K):
                tap = wdw[:, kh * K + kw:kh * K + kw + 1]                     # (C,1) flipped tap
                acc = acc + tap * prow[:, kw * dil:kw * dil + Wo]
        dst_ref[c0:c0 + Cb, i * Wo:(i + 1) * Wo] = acc + bdw


# ---------------------------------------------------------------------------
# ONE fused kernel: the whole BasicBlock_upsample_down per batch element
# ---------------------------------------------------------------------------
def _basic_block_kernel(
        x_ref,
        w1T_all_ref, b1_all_ref, g1_all_ref, be1_all_ref, mixA_ref,
        wdw1_ref, bdw1_ref, wdw2_ref, bdw2_ref, wdwr_ref, bdwr_ref,
        wdw3_ref, bdw3_ref,
        w2T_d2_ref, b2_d2_ref, g2_d2_ref, be2_d2_ref, mix2_d2_ref,
        wsse_d2_ref, wfc1_d2_ref, wfc2_d2_ref,
        w1T_rz_ref, b1_rz_ref, g_rz_ref, be_rz_ref, mix_rz_ref,
        w2T_all_ref, b2_all_ref, g2_all_ref, be2_all_ref, mix2_all_ref,
        wsse_all_ref, wfc1_all_ref, wfc2_all_ref,
        o_ref,
        pad1_sc, pad2_sc, padr_sc, pad3_sc, yall_sc, y2_sc,
        *, C, geo1, geo2, geor, geo3):
    H, W = geo1["H"], geo1["W"]
    n_in = H * W
    n2 = geo2["Ho"] * geo2["Wo"]
    n_out = geo1["Ho"] * geo1["Wo"]
    gsz = C // GN_GROUPS

    x = x_ref[0]                                                              # (C_in, H*W)

    # ---- stacked layer1 of d1|d2|d3 (one matmul) + GroupNorm + act -----------
    zA = jnp.dot(w1T_all_ref[...], x, preferred_element_type=jnp.float32) + b1_all_ref[...]
    zA = _gn_act(zA, g1_all_ref[...], be1_all_ref[...], mixA_ref[...],
                 1.0 / float(gsz * n_in))                                     # (3C, H*W)

    # ---- d2 runs to completion first (resize consumes its scSE output) -------
    _dw_convt(zA[C:2 * C], pad2_sc, wdw2_ref[...], bdw2_ref[...], y2_sc, 0, **geo2)
    z2_d2 = (jnp.dot(w2T_d2_ref[...], y2_sc[...], preferred_element_type=jnp.float32)
             + b2_d2_ref[...])
    z2_d2 = _gn_act(z2_d2, g2_d2_ref[...], be2_d2_ref[...], mix2_d2_ref[...],
                    1.0 / float(gsz * n2))
    u_d2 = _scse(z2_d2, wsse_d2_ref[...], wfc1_d2_ref[...], wfc2_d2_ref[...],
                 1.0 / float(n2))                                             # (C, n2)

    # ---- resize head: layer1 + GroupNorm + act (u_d2 never leaves VMEM) ------
    z_rz = (jnp.dot(w1T_rz_ref[...], u_d2, preferred_element_type=jnp.float32)
            + b1_rz_ref[...])
    z_rz = _gn_act(z_rz, g_rz_ref[...], be_rz_ref[...], mix_rz_ref[...],
                   1.0 / float(gsz * n2))

    # ---- depthwise transposed convs for d1 / resize / d3, channel-stacked ----
    _dw_convt(zA[0:C], pad1_sc, wdw1_ref[...], bdw1_ref[...], yall_sc, 0, **geo1)
    _dw_convt(z_rz, padr_sc, wdwr_ref[...], bdwr_ref[...], yall_sc, C, **geor)
    _dw_convt(zA[2 * C:3 * C], pad3_sc, wdw3_ref[...], bdw3_ref[...], yall_sc, 2 * C, **geo3)

    # ---- stacked tail [d1 | resize | d3]: layer2(+shuffle fold) + GN + act ----
    z2 = (jnp.dot(w2T_all_ref[...], yall_sc[...], preferred_element_type=jnp.float32)
          + b2_all_ref[...])
    z2 = _gn_act(z2, g2_all_ref[...], be2_all_ref[...], mix2_all_ref[...],
                 1.0 / float(gsz * n_out))

    # ---- stacked scSE and the channel-concatenated output --------------------
    out = _scse(z2, wsse_all_ref[...], wfc1_all_ref[...], wfc2_all_ref[...],
                1.0 / float(n_out))                                           # (3C, n_out)
    o_ref[0] = out.astype(o_ref.dtype)


# ---------------------------------------------------------------------------
# Wrapper
# ---------------------------------------------------------------------------
_WEIGHT_ORDER = (
    "w1T_all", "b1_all", "g1_all", "be1_all", "mixA",
    "wdw1", "bdw1", "wdw2", "bdw2", "wdwr", "bdwr", "wdw3", "bdw3",
    "w2T_d2", "b2_d2", "g2_d2", "be2_d2", "mix2_d2",
    "wsse_d2", "wfc1_d2", "wfc2_d2",
    "w1T_rz", "b1_rz", "g_rz", "be_rz", "mix_rz",
    "w2T_all", "b2_all", "g2_all", "be2_all", "mix2_all",
    "wsse_all", "wfc1_all", "wfc2_all",
)


def _geom(K, dil, pad, H, W):
    L = dil * (K - 1) - pad
    assert L >= 0  # TODO(synk): padding > dilation*(K-1) not supported
    Ho = H + dil * (K - 1) - 2 * pad
    Wo = W + dil * (K - 1) - 2 * pad
    return dict(K=K, dil=dil, H=H, W=W, L=L, Ho=Ho, Wo=Wo, Hp=H + 2 * L, Wp=W + 2 * L)


def basic_block_upsample_down(x, fused, k1, k2, k3, s1, s2, s3, pp1, pp2, pp3, y=None):
    """Forward of BasicBlock_upsample_down as ONE fused pallas_call."""
    # TODO(synk): stride > 1 (input-dilated) transposed conv not implemented; every
    # configuration used by BasicBlock_upsample_down here has stride == 1.
    assert s1 == s2 == s3 == 1
    B, C_in, H, W = x.shape
    C = fused["wdw1"].shape[0]

    geo1 = _geom(k1, 3, pp1, H, W)
    geo2 = _geom(k2, 2, pp2, H, W)
    geor = _geom(2, 1, 0, geo2["Ho"], geo2["Wo"])
    geo3 = _geom(k3, 1, pp3, H, W)
    assert (geo1["Ho"], geo1["Wo"]) == (geor["Ho"], geor["Wo"]) == (geo3["Ho"], geo3["Wo"])
    Ho, Wo = geo1["Ho"], geo1["Wo"]
    n_out = Ho * Wo
    n2 = geo2["Ho"] * geo2["Wo"]

    xf = x.reshape(B, C_in, H * W)                     # zero-cost lane-dense layout
    weights = [fused[k] for k in _WEIGHT_ORDER]

    kernel = functools.partial(_basic_block_kernel, C=C,
                               geo1=geo1, geo2=geo2, geor=geor, geo3=geo3)

    def _rep(shape):
        nd = len(shape)
        return pl.BlockSpec(shape, lambda b, nd=nd: (0,) * nd)

    out = pl.pallas_call(
        kernel,
        out_shape=jax.ShapeDtypeStruct((B, 3 * C, n_out), jnp.float32),
        grid=(B,),
        in_specs=[pl.BlockSpec((1, C_in, H * W), lambda b: (b, 0, 0))]
                 + [_rep(tuple(w.shape)) for w in weights],
        out_specs=pl.BlockSpec((1, 3 * C, n_out), lambda b: (b, 0, 0)),
        scratch_shapes=[
            pltpu.VMEM((geo1["Hp"], C, geo1["Wp"]), jnp.float32),  # d1 pad slab
            pltpu.VMEM((geo2["Hp"], C, geo2["Wp"]), jnp.float32),  # d2 pad slab
            pltpu.VMEM((geor["Hp"], C, geor["Wp"]), jnp.float32),  # resize pad slab
            pltpu.VMEM((geo3["Hp"], C, geo3["Wp"]), jnp.float32),  # d3 pad slab
            pltpu.VMEM((3 * C, n_out), jnp.float32),               # stacked dw outputs
            pltpu.VMEM((C, n2), jnp.float32),                      # d2 dw output
        ],
        compiler_params=pltpu.CompilerParams(dimension_semantics=("parallel",)),
    )(xf, *weights)

    r = out.reshape(B, 3 * C, Ho, Wo)
    if y is not None:
        r = jnp.concatenate([r, y], axis=1)
    return r


# ---------------------------------------------------------------------------
# Parameter construction (mirrors the module __init__ shapes)
# ---------------------------------------------------------------------------
def init_dilated_params(key, C_in, C_out, K):
    assert C_out % GN_GROUPS == 0
    ks = jax.random.split(key, 9)

    def rnd(k, shape, scale=0.2):
        return (scale * jax.random.normal(k, shape)).astype(jnp.float32)

    # layer1: ConvTranspose2d(C_in, C_out, 1); weight (C_in, C_out, 1, 1) -> out = W^T x + b
    w1 = rnd(ks[0], (C_in, C_out))
    b1 = rnd(ks[1], (C_out, 1), 0.1)
    # layer3: depthwise ConvTranspose2d(C_out, C_out, K, groups=C_out, dilation)
    wdw = rnd(ks[2], (C_out, K, K))
    bdw = rnd(ks[3], (C_out, 1), 0.1)
    # layer2: ConvTranspose2d(C_out, C_out, 1)
    w2 = rnd(ks[4], (C_out, C_out))
    b2 = rnd(ks[5], (C_out, 1), 0.1)
    # shared GroupNorm(4, C_out) affine params (the SAME self.GL applied twice)
    gamma = jnp.ones((C_out, 1), jnp.float32)
    beta = jnp.zeros((C_out, 1), jnp.float32)
    gid = jnp.arange(C_out) // (C_out // GN_GROUPS)
    mix1 = (gid[:, None] == gid[None, :]).astype(jnp.float32)

    # channel_shuffle(groups=3) folded into layer2 / second-GN params:
    # shuffled[n] = unshuffled[perm[n]], perm[n] = (n%3)*(C//3) + n//3 (no-op if C%3 != 0)
    if C_out % 3 == 0:
        n = jnp.arange(C_out)
        perm = (n % 3) * (C_out // 3) + n // 3
    else:
        perm = jnp.arange(C_out)
    w2T = jnp.transpose(w2)
    gid2 = gid[perm]
    mix2 = (gid2[:, None] == gid2[None, :]).astype(jnp.float32)

    # scSE: sSE Conv2d(C,1,1,bias=False); SeModule Linear(C, C//3) / Linear(C//3, C)
    w_sse = rnd(ks[6], (1, C_out))
    c_red = C_out // 3
    wfc1 = rnd(ks[7], (c_red, C_out))
    wfc2 = rnd(ks[8], (C_out, c_red))

    return dict(
        # kernel-side (pre-transposed / shuffle-folded)
        w1T=jnp.transpose(w1), b1=b1, gamma=gamma, beta=beta, mix1=mix1,
        wdw_flip=wdw[:, ::-1, ::-1].reshape(C_out, K * K), bdw=bdw,
        w2T_sh=w2T[perm, :], b2_sh=b2[perm, :],
        gamma2=gamma[perm, :], beta2=beta[perm, :], mix2=mix2,
        w_sse=w_sse, wfc1=wfc1, wfc2=wfc2, K=K,
        # raw copies used only by the pure-JAX reference
        w1=w1, wdw=wdw, w2=w2, b2=b2,
    )


def _block_diag(mats):
    rows = sum(m.shape[0] for m in mats)
    cols = sum(m.shape[1] for m in mats)
    out = jnp.zeros((rows, cols), jnp.float32)
    r = c = 0
    for m in mats:
        out = out.at[r:r + m.shape[0], c:c + m.shape[1]].set(m)
        r += m.shape[0]
        c += m.shape[1]
    return out


def build_fused_params(p_d1, p_d2, p_d3, p_rz):
    """Assemble stacked / block-diagonal weights once at init (zero runtime cost)."""
    C = p_d1["w1T"].shape[0]
    head = (p_d1, p_d2, p_d3)          # stacked layer1 order
    tail = (p_d1, p_rz, p_d3)          # output channel order: [d1 | resize | d3]
    return dict(
        w1T_all=jnp.concatenate([p["w1T"] for p in head], axis=0),
        b1_all=jnp.concatenate([p["b1"] for p in head], axis=0),
        g1_all=jnp.concatenate([p["gamma"] for p in head], axis=0),
        be1_all=jnp.concatenate([p["beta"] for p in head], axis=0),
        mixA=_block_diag([p["mix1"] for p in head]),
        wdw1=p_d1["wdw_flip"], bdw1=p_d1["bdw"],
        wdw2=p_d2["wdw_flip"], bdw2=p_d2["bdw"],
        wdwr=p_rz["wdw_flip"], bdwr=p_rz["bdw"],
        wdw3=p_d3["wdw_flip"], bdw3=p_d3["bdw"],
        w2T_d2=p_d2["w2T_sh"], b2_d2=p_d2["b2_sh"],
        g2_d2=p_d2["gamma2"], be2_d2=p_d2["beta2"], mix2_d2=p_d2["mix2"],
        wsse_d2=jnp.tile(p_d2["w_sse"], (C, 1)),
        wfc1_d2=p_d2["wfc1"], wfc2_d2=p_d2["wfc2"],
        w1T_rz=p_rz["w1T"], b1_rz=p_rz["b1"],
        g_rz=p_rz["gamma"], be_rz=p_rz["beta"], mix_rz=p_rz["mix1"],
        w2T_all=_block_diag([p["w2T_sh"] for p in tail]),
        b2_all=jnp.concatenate([p["b2_sh"] for p in tail], axis=0),
        g2_all=jnp.concatenate([p["gamma2"] for p in tail], axis=0),
        be2_all=jnp.concatenate([p["beta2"] for p in tail], axis=0),
        mix2_all=_block_diag([p["mix2"] for p in tail]),
        wsse_all=_block_diag([jnp.tile(p["w_sse"], (C, 1)) for p in tail]),
        wfc1_all=_block_diag([p["wfc1"] for p in tail]),
        wfc2_all=_block_diag([p["wfc2"] for p in tail]),
    )


# ---------------------------------------------------------------------------
# Pure-JAX reference (direct transcription of the PyTorch module)
# ---------------------------------------------------------------------------
_HI = jax.lax.Precision.HIGHEST


def _ref_act(x):
    hs = x * jnp.clip(x + 3.0, 0.0, 6.0) / 6.0
    other = jnp.clip(x, 0.0, 6.0) + 0.01 * jnp.minimum(x, 0.0)
    return jnp.where((x >= -3.0) & (x <= 3.0), hs, other)


def _ref_groupnorm(x, gamma, beta):
    B, C, H, W = x.shape
    xg = x.reshape(B, GN_GROUPS, C // GN_GROUPS, H, W)
    mean = jnp.mean(xg, axis=(2, 3, 4), keepdims=True)
    var = jnp.mean((xg - mean) ** 2, axis=(2, 3, 4), keepdims=True)
    xn = ((xg - mean) / jnp.sqrt(var + GN_EPS)).reshape(B, C, H, W)
    return xn * gamma.reshape(1, C, 1, 1) + beta.reshape(1, C, 1, 1)


def _ref_dw_convt(x, w, b, K, d, p):
    B, C, H, W = x.shape
    Hf, Wf = H + d * (K - 1), W + d * (K - 1)
    out = jnp.zeros((B, C, Hf, Wf), x.dtype)
    for ky in range(K):
        for kx in range(K):
            out = out.at[:, :, ky * d:ky * d + H, kx * d:kx * d + W].add(
                x * w[:, ky, kx].reshape(1, C, 1, 1))
    return out[:, :, p:Hf - p, p:Wf - p] + b.reshape(1, C, 1, 1)


def _ref_channel_shuffle(x, groups=3):
    B, C, H, W = x.shape
    if C % groups:
        return x
    cpg = C // groups
    return x.reshape(B, groups, cpg, H, W).transpose(0, 2, 1, 3, 4).reshape(B, C, H, W)


def _ref_scse(x, w_sse, wfc1, wfc2):
    B, C, H, W = x.shape
    y = jnp.mean(x, axis=(2, 3))
    h = jnp.maximum(jnp.einsum('rc,bc->br', wfc1, y, precision=_HI), 0.0)
    s = jnp.clip(jnp.einsum('cr,br->bc', wfc2, h, precision=_HI) / 6.0 + 0.5, 0.0, 1.0)
    u_cse = x * s[:, :, None, None]
    q = jax.nn.sigmoid(jnp.einsum('oc,bchw->bohw', w_sse, x, precision=_HI))
    return u_cse + x * q


def _ref_dilated_block(x, p, pad, dilation):
    K = p["K"]
    z = jnp.einsum('io,bihw->bohw', p["w1"], x, precision=_HI) + p["b1"].reshape(1, -1, 1, 1)
    z = _ref_act(_ref_groupnorm(z, p["gamma"], p["beta"]))
    z = _ref_dw_convt(z, p["wdw"], p["bdw"], K, dilation, pad)
    z = jnp.einsum('io,bihw->bohw', p["w2"], z, precision=_HI) + p["b2"].reshape(1, -1, 1, 1)
    z = _ref_act(_ref_groupnorm(z, p["gamma"], p["beta"]))
    z = _ref_channel_shuffle(z)
    return _ref_scse(z, p["w_sse"], p["wfc1"], p["wfc2"])


def _ref_basic_block(x, p_d1, p_d2, p_d3, p_rz, pp1, pp2, pp3, y=None):
    x1 = _ref_dilated_block(x, p_d1, pp1, 3)
    x2 = _ref_dilated_block(_ref_dilated_block(x, p_d2, pp2, 2), p_rz, 0, 1)
    x3 = _ref_dilated_block(x, p_d3, pp3, 1)
    r = jnp.concatenate([x1, x2, x3], axis=1)
    if y is not None:
        r = jnp.concatenate([r, y], axis=1)
    return r


# ---------------------------------------------------------------------------
if __name__ == "__main__":
    key = jax.random.PRNGKey(0)
    B, c1, c2 = 2, 4, 12           # c2 divisible by 4 (GroupNorm) and by 3 (shuffle / SE)
    H = W = 8
    # (k, s, p) chosen so that d1, resize(d2), d3 all produce 9x9 spatial maps
    k1, s1, p1 = 2, 1, 1           # dilation 3 -> 9x9
    k2, s2, p2 = 3, 1, 2           # dilation 2 -> 8x8, then resize(k=2,s=1,p=0,d=1) -> 9x9
    k3, s3, p3 = 2, 1, 0           # dilation 1 -> 9x9

    kx, k_d1, k_d2, k_d3, k_rz = jax.random.split(key, 5)
    x = jax.random.normal(kx, (B, c1, H, W), dtype=jnp.float32)

    p_d1 = init_dilated_params(k_d1, c1, c2, k1)
    p_d2 = init_dilated_params(k_d2, c1, c2, k2)
    p_d3 = init_dilated_params(k_d3, c1, c2, k3)
    p_rz = init_dilated_params(k_rz, c2, c2, 2)
    fused = build_fused_params(p_d1, p_d2, p_d3, p_rz)

    fwd = jax.jit(lambda inp: basic_block_upsample_down(
        inp, fused, k1, k2, k3, s1, s2, s3, p1, p2, p3))
    out = jax.block_until_ready(fwd(x))
    assert out.shape == (B, 3 * c2, 9, 9), out.shape
    assert bool(jnp.all(jnp.isfinite(out)))

    ref = _ref_basic_block(x, p_d1, p_d2, p_d3, p_rz, p1, p2, p3)
    np.testing.assert_allclose(np.asarray(out), np.asarray(ref), rtol=1e-3, atol=1e-3)
    print("KERNEL_OK")
</pallas_src>

<mosaic_0001>
module attributes {stable_mosaic.version = 11 : i64} {
  func.func @_basic_block_kernel(%arg0: i32, %arg1: memref<1x4x64xf32, #tpu.memory_space<vmem>>, %arg2: memref<36x4xf32, #tpu.memory_space<vmem>>, %arg3: memref<36x1xf32, #tpu.memory_space<vmem>>, %arg4: memref<36x1xf32, #tpu.memory_space<vmem>>, %arg5: memref<36x1xf32, #tpu.memory_space<vmem>>, %arg6: memref<36x36xf32, #tpu.memory_space<vmem>>, %arg7: memref<12x4xf32, #tpu.memory_space<vmem>>, %arg8: memref<12x1xf32, #tpu.memory_space<vmem>>, %arg9: memref<12x9xf32, #tpu.memory_space<vmem>>, %arg10: memref<12x1xf32, #tpu.memory_space<vmem>>, %arg11: memref<12x4xf32, #tpu.memory_space<vmem>>, %arg12: memref<12x1xf32, #tpu.memory_space<vmem>>, %arg13: memref<12x4xf32, #tpu.memory_space<vmem>>, %arg14: memref<12x1xf32, #tpu.memory_space<vmem>>, %arg15: memref<12x12xf32, #tpu.memory_space<vmem>>, %arg16: memref<12x1xf32, #tpu.memory_space<vmem>>, %arg17: memref<12x1xf32, #tpu.memory_space<vmem>>, %arg18: memref<12x1xf32, #tpu.memory_space<vmem>>, %arg19: memref<12x12xf32, #tpu.memory_space<vmem>>, %arg20: memref<12x12xf32, #tpu.memory_space<vmem>>, %arg21: memref<4x12xf32, #tpu.memory_space<vmem>>, %arg22: memref<12x4xf32, #tpu.memory_space<vmem>>, %arg23: memref<12x12xf32, #tpu.memory_space<vmem>>, %arg24: memref<12x1xf32, #tpu.memory_space<vmem>>, %arg25: memref<12x1xf32, #tpu.memory_space<vmem>>, %arg26: memref<12x1xf32, #tpu.memory_space<vmem>>, %arg27: memref<12x12xf32, #tpu.memory_space<vmem>>, %arg28: memref<36x36xf32, #tpu.memory_space<vmem>>, %arg29: memref<36x1xf32, #tpu.memory_space<vmem>>, %arg30: memref<36x1xf32, #tpu.memory_space<vmem>>, %arg31: memref<36x1xf32, #tpu.memory_space<vmem>>, %arg32: memref<36x36xf32, #tpu.memory_space<vmem>>, %arg33: memref<36x36xf32, #tpu.memory_space<vmem>>, %arg34: memref<12x36xf32, #tpu.memory_space<vmem>>, %arg35: memref<36x12xf32, #tpu.memory_space<vmem>>, %arg36: memref<1x36x81xf32, #tpu.memory_space<vmem>>, %arg37: memref<12x12x12xf32, #tpu.memory_space<vmem>>, %arg38: memref<12x12x12xf32, #tpu.memory_space<vmem>>, %arg39: memref<10x12x10xf32, #tpu.memory_space<vmem>>, %arg40: memref<10x12x10xf32, #tpu.memory_space<vmem>>, %arg41: memref<36x81xf32, #tpu.memory_space<vmem>>, %arg42: memref<12x64xf32, #tpu.memory_space<vmem>>) attributes {dimension_semantics = [#tpu.dimension_semantics<parallel>], iteration_bounds = array<i64: 2>, scalar_prefetch = 0 : i64, scratch_operands = 6 : i64, tpu.core_type = #tpu.core_type<tc>, window_params = [{transform_indices = @transform_0, window_bounds = array<i64: 1, 4, 64>}, {pipeline_mode = #tpu.pipeline_mode<synchronous>, transform_indices = @transform_1, window_bounds = array<i64: 36, 4>}, {pipeline_mode = #tpu.pipeline_mode<synchronous>, transform_indices = @transform_2, window_bounds = array<i64: 36, 1>}, {pipeline_mode = #tpu.pipeline_mode<synchronous>, transform_indices = @transform_3, window_bounds = array<i64: 36, 1>}, {pipeline_mode = #tpu.pipeline_mode<synchronous>, transform_indices = @transform_4, window_bounds = array<i64: 36, 1>}, {pipeline_mode = #tpu.pipeline_mode<synchronous>, transform_indices = @transform_5, window_bounds = array<i64: 36, 36>}, {pipeline_mode = #tpu.pipeline_mode<synchronous>, transform_indices = @transform_6, window_bounds = array<i64: 12, 4>}, {pipeline_mode = #tpu.pipeline_mode<synchronous>, transform_indices = @transform_7, window_bounds = array<i64: 12, 1>}, {pipeline_mode = #tpu.pipeline_mode<synchronous>, transform_indices = @transform_8, window_bounds = array<i64: 12, 9>}, {pipeline_mode = #tpu.pipeline_mode<synchronous>, transform_indices = @transform_9, window_bounds = array<i64: 12, 1>}, {pipeline_mode = #tpu.pipeline_mode<synchronous>, transform_indices = @transform_10, window_bounds = array<i64: 12, 4>}, {pipeline_mode = #tpu.pipeline_mode<synchronous>, transform_indices = @transform_11, window_bounds = array<i64: 12, 1>}, {pipeline_mode = #tpu.pipeline_mode<synchronous>, transform_indices = @transform_12, window_bounds = array<i64: 12, 4>}, {pipeline_mode = #tpu.pipeline_mode<synchronous>, transform_indices = @transform_13, window_bounds = array<i64: 12, 1>}, {pipeline_mode = #tpu.pipeline_mode<synchronous>, transform_indices = @transform_14, window_bounds = array<i64: 12, 12>}, {pipeline_mode = #tpu.pipeline_mode<synchronous>, transform_indices = @transform_15, window_bounds = array<i64: 12, 1>}, {pipeline_mode = #tpu.pipeline_mode<synchronous>, transform_indices = @transform_16, window_bounds = array<i64: 12, 1>}, {pipeline_mode = #tpu.pipeline_mode<synchronous>, transform_indices = @transform_17, window_bounds = array<i64: 12, 1>}, {pipeline_mode = #tpu.pipeline_mode<synchronous>, transform_indices = @transform_18, window_bounds = array<i64: 12, 12>}, {pipeline_mode = #tpu.pipeline_mode<synchronous>, transform_indices = @transform_19, window_bounds = array<i64: 12, 12>}, {pipeline_mode = #tpu.pipeline_mode<synchronous>, transform_indices = @transform_20, window_bounds = array<i64: 4, 12>}, {pipeline_mode = #tpu.pipeline_mode<synchronous>, transform_indices = @transform_21, window_bounds = array<i64: 12, 4>}, {pipeline_mode = #tpu.pipeline_mode<synchronous>, transform_indices = @transform_22, window_bounds = array<i64: 12, 12>}, {pipeline_mode = #tpu.pipeline_mode<synchronous>, transform_indices = @transform_23, window_bounds = array<i64: 12, 1>}, {pipeline_mode = #tpu.pipeline_mode<synchronous>, transform_indices = @transform_24, window_bounds = array<i64: 12, 1>}, {pipeline_mode = #tpu.pipeline_mode<synchronous>, transform_indices = @transform_25, window_bounds = array<i64: 12, 1>}, {pipeline_mode = #tpu.pipeline_mode<synchronous>, transform_indices = @transform_26, window_bounds = array<i64: 12, 12>}, {pipeline_mode = #tpu.pipeline_mode<synchronous>, transform_indices = @transform_27, window_bounds = array<i64: 36, 36>}, {pipeline_mode = #tpu.pipeline_mode<synchronous>, transform_indices = @transform_28, window_bounds = array<i64: 36, 1>}, {pipeline_mode = #tpu.pipeline_mode<synchronous>, transform_indices = @transform_29, window_bounds = array<i64: 36, 1>}, {pipeline_mode = #tpu.pipeline_mode<synchronous>, transform_indices = @transform_30, window_bounds = array<i64: 36, 1>}, {pipeline_mode = #tpu.pipeline_mode<synchronous>, transform_indices = @transform_31, window_bounds = array<i64: 36, 36>}, {pipeline_mode = #tpu.pipeline_mode<synchronous>, transform_indices = @transform_32, window_bounds = array<i64: 36, 36>}, {pipeline_mode = #tpu.pipeline_mode<synchronous>, transform_indices = @transform_33, window_bounds = array<i64: 12, 36>}, {pipeline_mode = #tpu.pipeline_mode<synchronous>, transform_indices = @transform_34, window_bounds = array<i64: 36, 12>}, {transform_indices = @transform_35, window_bounds = array<i64: 1, 36, 81>}]} {
    %c0 = arith.constant 0 : index
    %c0_0 = arith.constant 0 : index
    %c0_1 = arith.constant 0 : index
    %0 = vector.load %arg1[%c0, %c0_0, %c0_1] : memref<1x4x64xf32, #tpu.memory_space<vmem>>, vector<1x4x64xf32>
    %1 = vector.shape_cast %0 : vector<1x4x64xf32> to vector<4x64xf32>
    %c0_2 = arith.constant 0 : index
    %c0_3 = arith.constant 0 : index
    %2 = vector.load %arg2[%c0_2, %c0_3] : memref<36x4xf32, #tpu.memory_space<vmem>>, vector<36x4xf32>
    %cst = arith.constant dense<0.000000e+00> : vector<36x64xf32>
    %3 = tpu.matmul %2, %1, %cst {dimension_numbers = #tpu.dot_dimension_numbers<[1], [0], [0], [1], [0, 0, 1, 1], [], []>} : vector<36x4xf32>, vector<4x64xf32>, vector<36x64xf32> -> vector<36x64xf32>
    %c0_4 = arith.constant 0 : index
    %c0_5 = arith.constant 0 : index
    %4 = vector.load %arg3[%c0_4, %c0_5] : memref<36x1xf32, #tpu.memory_space<vmem>>, vector<36x1xf32>
    %5 = vector.broadcast %4 : vector<36x1xf32> to vector<36x64xf32>
    %6 = arith.addf %3, %5 : vector<36x64xf32>
    %c0_6 = arith.constant 0 : index
    %c0_7 = arith.constant 0 : index
    %7 = vector.load %arg4[%c0_6, %c0_7] : memref<36x1xf32, #tpu.memory_space<vmem>>, vector<36x1xf32>
    %c0_8 = arith.constant 0 : index
    %c0_9 = arith.constant 0 : index
    %8 = vector.load %arg5[%c0_8, %c0_9] : memref<36x1xf32, #tpu.memory_space<vmem>>, vector<36x1xf32>
    %c0_10 = arith.constant 0 : index
    %c0_11 = arith.constant 0 : index
    %9 = vector.load %arg6[%c0_10, %c0_11] : memref<36x36xf32, #tpu.memory_space<vmem>>, vector<36x36xf32>
    %cst_12 = arith.constant dense<0.000000e+00> : vector<36xf32>
    %10 = vector.multi_reduction <add>, %6, %cst_12 [1] : vector<36x64xf32> to vector<36xf32>
    %11 = vector.shape_cast %10 : vector<36xf32> to vector<36x1xf32>
    %12 = arith.mulf %6, %6 : vector<36x64xf32>
    %cst_13 = arith.constant dense<0.000000e+00> : vector<36xf32>
    %13 = vector.multi_reduction <add>, %12, %cst_13 [1] : vector<36x64xf32> to vector<36xf32>
    %14 = vector.shape_cast %13 : vector<36xf32> to vector<36x1xf32>
    %cst_14 = arith.constant dense<0.000000e+00> : vector<36x1xf32>
    %15 = tpu.matmul %9, %11, %cst_14 {dimension_numbers = #tpu.dot_dimension_numbers<[1], [0], [0], [1], [0, 0, 1, 1], [], []>} : vector<36x36xf32>, vector<36x1xf32>, vector<36x1xf32> -> vector<36x1xf32>
    %cst_15 = arith.constant 0.00520833349 : f32
    %16 = vector.broadcast %cst_15 : f32 to vector<36x1xf32>
    %17 = arith.mulf %15, %16 : vector<36x1xf32>
    %cst_16 = arith.constant dense<0.000000e+00> : vector<36x1xf32>
    %18 = tpu.matmul %9, %14, %cst_16 {dimension_numbers = #tpu.dot_dimension_numbers<[1], [0], [0], [1], [0, 0, 1, 1], [], []>} : vector<36x36xf32>, vector<36x1xf32>, vector<36x1xf32> -> vector<36x1xf32>
    %cst_17 = arith.constant 0.00520833349 : f32
    %19 = vector.broadcast %cst_17 : f32 to vector<36x1xf32>
    %20 = arith.mulf %18, %19 : vector<36x1xf32>
    %21 = arith.mulf %17, %17 : vector<36x1xf32>
    %22 = arith.subf %20, %21 : vector<36x1xf32>
    %cst_18 = arith.constant 9.99999974E-6 : f32
    %23 = vector.broadcast %cst_18 : f32 to vector<36x1xf32>
    %24 = arith.addf %22, %23 : vector<36x1xf32>
    %25 = math.rsqrt %24 : vector<36x1xf32>
    %26 = arith.mulf %7, %25 : vector<36x1xf32>
    %27 = vector.broadcast %26 : vector<36x1xf32> to vector<36x64xf32>
    %28 = arith.mulf %6, %27 : vector<36x64xf32>
    %29 = arith.mulf %17, %26 : vector<36x1xf32>
    %30 = arith.subf %8, %29 : vector<36x1xf32>
    %31 = vector.broadcast %30 : vector<36x1xf32> to vector<36x64xf32>
    %32 = arith.addf %28, %31 : vector<36x64xf32>
    %cst_19 = arith.constant 3.000000e+00 : f32
    %33 = vector.broadcast %cst_19 : f32 to vector<36x64xf32>
    %34 = arith.addf %32, %33 : vector<36x64xf32>
    %cst_20 = arith.constant 0.000000e+00 : f32
    %cst_21 = arith.constant 6.000000e+00 : f32
    %35 = vector.broadcast %cst_20 : f32 to vector<36x64xf32>
    %36 = arith.maximumf %35, %34 : vector<36x64xf32>
    %37 = vector.broadcast %cst_21 : f32 to vector<36x64xf32>
    %38 = arith.minimumf %37, %36 : vector<36x64xf32>
    %39 = arith.mulf %32, %38 : vector<36x64xf32>
    %cst_22 = arith.constant 0.166666672 : f32
    %40 = vector.broadcast %cst_22 : f32 to vector<36x64xf32>
    %41 = arith.mulf %39, %40 : vector<36x64xf32>
    %cst_23 = arith.constant 0.000000e+00 : f32
    %cst_24 = arith.constant 6.000000e+00 : f32
    %42 = vector.broadcast %cst_23 : f32 to vector<36x64xf32>
    %43 = arith.maximumf %42, %32 : vector<36x64xf32>
    %44 = vector.broadcast %cst_24 : f32 to vector<36x64xf32>
    %45 = arith.minimumf %44, %43 : vector<36x64xf32>
    %cst_25 = arith.constant 0.000000e+00 : f32
    %46 = vector.broadcast %cst_25 : f32 to vector<36x64xf32>
    %47 = arith.minimumf %32, %46 : vector<36x64xf32>
    %cst_26 = arith.constant 0.00999999977 : f32
    %48 = vector.broadcast %cst_26 : f32 to vector<36x64xf32>
    %49 = arith.mulf %48, %47 : vector<36x64xf32>
    %50 = arith.addf %45, %49 : vector<36x64xf32>
    %cst_27 = arith.constant -3.000000e+00 : f32
    %51 = vector.broadcast %cst_27 : f32 to vector<36x64xf32>
    %52 = arith.cmpf oge, %32, %51 : vector<36x64xf32>
    %cst_28 = arith.constant 3.000000e+00 : f32
    %53 = vector.broadcast %cst_28 : f32 to vector<36x64xf32>
    %54 = arith.cmpf ole, %32, %53 : vector<36x64xf32>
    %55 = arith.andi %52, %54 : vector<36x64xi1>
    %56 = arith.select %55, %41, %50 : vector<36x64xi1>, vector<36x64xf32>
    %57 = vector.extract_strided_slice %56 {offsets = [12, 0], sizes = [12, 64], strides = [1, 1]} : vector<36x64xf32> to vector<12x64xf32>
    %c0_29 = arith.constant 0 : index
    %c0_30 = arith.constant 0 : index
    %58 = vector.load %arg9[%c0_29, %c0_30] : memref<12x9xf32, #tpu.memory_space<vmem>>, vector<12x9xf32>
    %c0_31 = arith.constant 0 : index
    %c0_32 = arith.constant 0 : index
    %59 = vector.load %arg10[%c0_31, %c0_32] : memref<12x1xf32, #tpu.memory_space<vmem>>, vector<12x1xf32>
    %cst_33 = arith.constant 0.000000e+00 : f32
    %60 = vector.broadcast %cst_33 : f32 to vector<12x12x12xf32>
    %c0_34 = arith.constant 0 : index
    %c0_35 = arith.constant 0 : index
    %c0_36 = arith.constant 0 : index
    %61 = vector.load %arg38[%c0_34, %c0_35, %c0_36] : memref<12x12x12xf32, #tpu.memory_space<vmem>>, vector<12x12x12xf32>
    tpu.vector_store %arg38[%c0_34, %c0_35, %c0_36], %60 {strides = array<i32>} : memref<12x12x12xf32, #tpu.memory_space<vmem>>, vector<12x12x12xf32>,
    %62 = vector.extract_strided_slice %57 {offsets = [0, 0], sizes = [12, 8], strides = [1, 1]} : vector<12x64xf32> to vector<12x8xf32>
    %c2 = arith.constant 2 : index
    %c0_37 = arith.constant 0 : index
    %c2_38 = arith.constant 2 : index
    %63 = vector.load %arg38[%c2, %c0_37, %c2_38] : memref<12x12x12xf32, #tpu.memory_space<vmem>>, vector<1x12x8xf32>
    %64 = vector.shape_cast %63 : vector<1x12x8xf32> to vector<12x8xf32>
    %65 = vector.shape_cast %62 : vector<12x8xf32> to vector<1x12x8xf32>
    tpu.vector_store %arg38[%c2, %c0_37, %c2_38], %65 {strides = array<i32>} : memref<12x12x12xf32, #tpu.memory_space<vmem>>, vector<1x12x8xf32>,
    %66 = vector.extract_strided_slice %57 {offsets = [0, 8], sizes = [12, 8], strides = [1, 1]} : vector<12x64xf32> to vector<12x8xf32>
    %c3 = arith.constant 3 : index
    %c0_39 = arith.constant 0 : index
    %c2_40 = arith.constant 2 : index
    %67 = vector.load %arg38[%c3, %c0_39, %c2_40] : memref<12x12x12xf32, #tpu.memory_space<vmem>>, vector<1x12x8xf32>
    %68 = vector.shape_cast %67 : vector<1x12x8xf32> to vector<12x8xf32>
    %69 = vector.shape_cast %66 : vector<12x8xf32> to vector<1x12x8xf32>
    tpu.vector_store %arg38[%c3, %c0_39, %c2_40], %69 {strides = array<i32>} : memref<12x12x12xf32, #tpu.memory_space<vmem>>, vector<1x12x8xf32>,
    %70 = vector.extract_strided_slice %57 {offsets = [0, 16], sizes = [12, 8], strides = [1, 1]} : vector<12x64xf32> to vector<12x8xf32>
    %c4 = arith.constant 4 : index
    %c0_41 = arith.constant 0 : index
    %c2_42 = arith.constant 2 : index
    %71 = vector.load %arg38[%c4, %c0_41, %c2_42] : memref<12x12x12xf32, #tpu.memory_space<vmem>>, vector<1x12x8xf32>
    %72 = vector.shape_cast %71 : vector<1x12x8xf32> to vector<12x8xf32>
    %73 = vector.shape_cast %70 : vector<12x8xf32> to vector<1x12x8xf32>
    tpu.vector_store %arg38[%c4, %c0_41, %c2_42], %73 {strides = array<i32>} : memref<12x12x12xf32, #tpu.memory_space<vmem>>, vector<1x12x8xf32>,
    %74 = vector.extract_strided_slice %57 {offsets = [0, 24], sizes = [12, 8], strides = [1, 1]} : vector<12x64xf32> to vector<12x8xf32>
    %c5 = arith.constant 5 : index
    %c0_43 = arith.constant 0 : index
    %c2_44 = arith.constant 2 : index
    %75 = vector.load %arg38[%c5, %c0_43, %c2_44] : memref<12x12x12xf32, #tpu.memory_space<vmem>>, vector<1x12x8xf32>
    %76 = vector.shape_cast %75 : vector<1x12x8xf32> to vector<12x8xf32>
    %77 = vector.shape_cast %74 : vector<12x8xf32> to vector<1x12x8xf32>
    tpu.vector_store %arg38[%c5, %c0_43, %c2_44], %77 {strides = array<i32>} : memref<12x12x12xf32, #tpu.memory_space<vmem>>, vector<1x12x8xf32>,
    %78 = vector.extract_strided_slice %57 {offsets = [0, 32], sizes = [12, 8], strides = [1, 1]} : vector<12x64xf32> to vector<12x8xf32>
    %c6 = arith.constant 6 : index
    %c0_45 = arith.constant 0 : index
    %c2_46 = arith.constant 2 : index
    %79 = vector.load %arg38[%c6, %c0_45, %c2_46] : memref<12x12x12xf32, #tpu.memory_space<vmem>>, vector<1x12x8xf32>
    %80 = vector.shape_cast %79 : vector<1x12x8xf32> to vector<12x8xf32>
    %81 = vector.shape_cast %78 : vector<12x8xf32> to vector<1x12x8xf32>
    tpu.vector_store %arg38[%c6, %c0_45, %c2_46], %81 {strides = array<i32>} : memref<12x12x12xf32, #tpu.memory_space<vmem>>, vector<1x12x8xf32>,
    %82 = vector.extract_strided_slice %57 {offsets = [0, 40], sizes = [12, 8], strides = [1, 1]} : vector<12x64xf32> to vector<12x8xf32>
    %c7 = arith.constant 7 : index
    %c0_47 = arith.constant 0 : index
    %c2_48 = arith.constant 2 : index
    %83 = vector.load %arg38[%c7, %c0_47, %c2_48] : memref<12x12x12xf32, #tpu.memory_space<vmem>>, vector<1x12x8xf32>
    %84 = vector.shape_cast %83 : vector<1x12x8xf32> to vector<12x8xf32>
    %85 = vector.shape_cast %82 : vector<12x8xf32> to vector<1x12x8xf32>
    tpu.vector_store %arg38[%c7, %c0_47, %c2_48], %85 {strides = array<i32>} : memref<12x12x12xf32, #tpu.memory_space<vmem>>, vector<1x12x8xf32>,
    %86 = vector.extract_strided_slice %57 {offsets = [0, 48], sizes = [12, 8], strides = [1, 1]} : vector<12x64xf32> to vector<12x8xf32>
    %c8 = arith.constant 8 : index
    %c0_49 = arith.constant 0 : index
    %c2_50 = arith.constant 2 : index
    %87 = vector.load %arg38[%c8, %c0_49, %c2_50] : memref<12x12x12xf32, #tpu.memory_space<vmem>>, vector<1x12x8xf32>
    %88 = vector.shape_cast %87 : vector<1x12x8xf32> to vector<12x8xf32>
    %89 = vector.shape_cast %86 : vector<12x8xf32> to vector<1x12x8xf32>
    tpu.vector_store %arg38[%c8, %c0_49, %c2_50], %89 {strides = array<i32>} : memref<12x12x12xf32, #tpu.memory_space<vmem>>, vector<1x12x8xf32>,
    %90 = vector.extract_strided_slice %57 {offsets = [0, 56], sizes = [12, 8], strides = [1, 1]} : vector<12x64xf32> to vector<12x8xf32>
    %c9 = arith.constant 9 : index
    %c0_51 = arith.constant 0 : index
    %c2_52 = arith.constant 2 : index
    %91 = vector.load %arg38[%c9, %c0_51, %c2_52] : memref<12x12x12xf32, #tpu.memory_space<vmem>>, vector<1x12x8xf32>
    %92 = vector.shape_cast %91 : vector<1x12x8xf32> to vector<12x8xf32>
    %93 = vector.shape_cast %90 : vector<12x8xf32> to vector<1x12x8xf32>
    tpu.vector_store %arg38[%c9, %c0_51, %c2_52], %93 {strides = array<i32>} : memref<12x12x12xf32, #tpu.memory_space<vmem>>, vector<1x12x8xf32>,
    %cst_53 = arith.constant 0.000000e+00 : f32
    %94 = vector.broadcast %cst_53 : f32 to vector<12x8xf32>
    %c0_54 = arith.constant 0 : index
    %c0_55 = arith.constant 0 : index
    %c0_56 = arith.constant 0 : index
    %95 = vector.load %arg38[%c0_54, %c0_55, %c0_56] : memref<12x12x12xf32, #tpu.memory_space<vmem>>, vector<1x12x12xf32>
    %96 = vector.shape_cast %95 : vector<1x12x12xf32> to vector<12x12xf32>
    %97 = vector.extract_strided_slice %58 {offsets = [0, 0], sizes = [12, 1], strides = [1, 1]} : vector<12x9xf32> to vector<12x1xf32>
    %98 = vector.extract_strided_slice %96 {offsets = [0, 0], sizes = [12, 8], strides = [1, 1]} : vector<12x12xf32> to vector<12x8xf32>
    %99 = vector.broadcast %97 : vector<12x1xf32> to vector<12x8xf32>
    %100 = arith.mulf %99, %98 : vector<12x8xf32>
    %101 = arith.addf %94, %100 : vector<12x8xf32>
    %102 = vector.extract_strided_slice %58 {offsets = [0, 1], sizes = [12, 1], strides = [1, 1]} : vector<12x9xf32> to vector<12x1xf32>
    %103 = vector.extract_strided_slice %96 {offsets = [0, 2], sizes = [12, 8], strides = [1, 1]} : vector<12x12xf32> to vector<12x8xf32>
    %104 = vector.broadcast %102 : vector<12x1xf32> to vector<12x8xf32>
    %105 = arith.mulf %104, %103 : vector<12x8xf32>
    %106 = arith.addf %101, %105 : vector<12x8xf32>
    %107 = vector.extract_strided_slice %58 {offsets = [0, 2], sizes = [12, 1], strides = [1, 1]} : vector<12x9xf32> to vector<12x1xf32>
    %108 = vector.extract_strided_slice %96 {offsets = [0, 4], sizes = [12, 8], strides = [1, 1]} : vector<12x12xf32> to vector<12x8xf32>
    %109 = vector.broadcast %107 : vector<12x1xf32> to vector<12x8xf32>
    %110 = arith.mulf %109, %108 : vector<12x8xf32>
    %111 = arith.addf %106, %110 : vector<12x8xf32>
    %c2_57 = arith.constant 2 : index
    %c0_58 = arith.constant 0 : index
    %c0_59 = arith.constant 0 : index
    %112 = vector.load %arg38[%c2_57, %c0_58, %c0_59] : memref<12x12x12xf32, #tpu.memory_space<vmem>>, vector<1x12x12xf32>
    %113 = vector.shape_cast %112 : vector<1x12x12xf32> to vector<12x12xf32>
    %114 = vector.extract_strided_slice %58 {offsets = [0, 3], sizes = [12, 1], strides = [1, 1]} : vector<12x9xf32> to vector<12x1xf32>
    %115 = vector.extract_strided_slice %113 {offsets = [0, 0], sizes = [12, 8], strides = [1, 1]} : vector<12x12xf32> to vector<12x8xf32>
    %116 = vector.broadcast %114 : vector<12x1xf32> to vector<12x8xf32>
    %117 = arith.mulf %116, %115 : vector<12x8xf32>
    %118 = arith.addf %111, %117 : vector<12x8xf32>
    %119 = vector.extract_strided_slice %58 {offsets = [0, 4], sizes = [12, 1], strides = [1, 1]} : vector<12x9xf32> to vector<12x1xf32>
    %120 = vector.extract_strided_slice %113 {offsets = [0, 2], sizes = [12, 8], strides = [1, 1]} : vector<12x12xf32> to vector<12x8xf32>
    %121 = vector.broadcast %119 : vector<12x1xf32> to vector<12x8xf32>
    %122 = arith.mulf %121, %120 : vector<12x8xf32>
    %123 = arith.addf %118, %122 : vector<12x8xf32>
    %124 = vector.extract_strided_slice %58 {offsets = [0, 5], sizes = [12, 1], strides = [1, 1]} : vector<12x9xf32> to vector<12x1xf32>
    %125 = vector.extract_strided_slice %113 {offsets = [0, 4], sizes = [12, 8], strides = [1, 1]} : vector<12x12xf32> to vector<12x8xf32>
    %126 = vector.broadcast %124 : vector<12x1xf32> to vector<12x8xf32>
    %127 = arith.mulf %126, %125 : vector<12x8xf32>
    %128 = arith.addf %123, %127 : vector<12x8xf32>
    %c4_60 = arith.constant 4 : index
    %c0_61 = arith.constant 0 : index
    %c0_62 = arith.constant 0 : index
    %129 = vector.load %arg38[%c4_60, %c0_61, %c0_62] : memref<12x12x12xf32, #tpu.memory_space<vmem>>, vector<1x12x12xf32>
    %130 = vector.shape_cast %129 : vector<1x12x12xf32> to vector<12x12xf32>
    %131 = vector.extract_strided_slice %58 {offsets = [0, 6], sizes = [12, 1], strides = [1, 1]} : vector<12x9xf32> to vector<12x1xf32>
    %132 = vector.extract_strided_slice %130 {offsets = [0, 0], sizes = [12, 8], strides = [1, 1]} : vector<12x12xf32> to vector<12x8xf32>
    %133 = vector.broadcast %131 : vector<12x1xf32> to vector<12x8xf32>
    %134 = arith.mulf %133, %132 : vector<12x8xf32>
    %135 = arith.addf %128, %134 : vector<12x8xf32>
    %136 = vector.extract_strided_slice %58 {offsets = [0, 7], sizes = [12, 1], strides = [1, 1]} : vector<12x9xf32> to vector<12x1xf32>
    %137 = vector.extract_strided_slice %130 {offsets = [0, 2], sizes = [12, 8], strides = [1, 1]} : vector<12x12xf32> to vector<12x8xf32>
    %138 = vector.broadcast %136 : vector<12x1xf32> to vector<12x8xf32>
    %139 = arith.mulf %138, %137 : vector<12x8xf32>
    %140 = arith.addf %135, %139 : vector<12x8xf32>
    %141 = vector.extract_strided_slice %58 {offsets = [0, 8], sizes = [12, 1], strides = [1, 1]} : vector<12x9xf32> to vector<12x1xf32>
    %142 = vector.extract_strided_slice %130 {offsets = [0, 4], sizes = [12, 8], strides = [1, 1]} : vector<12x12xf32> to vector<12x8xf32>
    %143 = vector.broadcast %141 : vector<12x1xf32> to vector<12x8xf32>
    %144 = arith.mulf %143, %142 : vector<12x8xf32>
    %145 = arith.addf %140, %144 : vector<12x8xf32>
    %146 = vector.broadcast %59 : vector<12x1xf32> to vector<12x8xf32>
    %147 = arith.addf %145, %146 : vector<12x8xf32>
    %c0_63 = arith.constant 0 : index
    %c0_64 = arith.constant 0 : index
    %148 = vector.load %arg42[%c0_63, %c0_64] : memref<12x64xf32, #tpu.memory_space<vmem>>, vector<12x8xf32>
    tpu.vector_store %arg42[%c0_63, %c0_64], %147 {strides = array<i32>} : memref<12x64xf32, #tpu.memory_space<vmem>>, vector<12x8xf32>,
    %cst_65 = arith.constant 0.000000e+00 : f32
    %149 = vector.broadcast %cst_65 : f32 to vector<12x8xf32>
    %c1 = arith.constant 1 : index
    %c0_66 = arith.constant 0 : index
    %c0_67 = arith.constant 0 : index
    %150 = vector.load %arg38[%c1, %c0_66, %c0_67] : memref<12x12x12xf32, #tpu.memory_space<vmem>>, vector<1x12x12xf32>
    %151 = vector.shape_cast %150 : vector<1x12x12xf32> to vector<12x12xf32>
    %152 = vector.extract_strided_slice %58 {offsets = [0, 0], sizes = [12, 1], strides = [1, 1]} : vector<12x9xf32> to vector<12x1xf32>
    %153 = vector.extract_strided_slice %151 {offsets = [0, 0], sizes = [12, 8], strides = [1, 1]} : vector<12x12xf32> to vector<12x8xf32>
    %154 = vector.broadcast %152 : vector<12x1xf32> to vector<12x8xf32>
    %155 = arith.mulf %154, %153 : vector<12x8xf32>
    %156 = arith.addf %149, %155 : vector<12x8xf32>
    %157 = vector.extract_strided_slice %58 {offsets = [0, 1], sizes = [12, 1], strides = [1, 1]} : vector<12x9xf32> to vector<12x1xf32>
    %158 = vector.extract_strided_slice %151 {offsets = [0, 2], sizes = [12, 8], strides = [1, 1]} : vector<12x12xf32> to vector<12x8xf32>
    %159 = vector.broadcast %157 : vector<12x1xf32> to vector<12x8xf32>
    %160 = arith.mulf %159, %158 : vector<12x8xf32>
    %161 = arith.addf %156, %160 : vector<12x8xf32>
    %162 = vector.extract_strided_slice %58 {offsets = [0, 2], sizes = [12, 1], strides = [1, 1]} : vector<12x9xf32> to vector<12x1xf32>
    %163 = vector.extract_strided_slice %151 {offsets = [0, 4], sizes = [12, 8], strides = [1, 1]} : vector<12x12xf32> to vector<12x8xf32>
    %164 = vector.broadcast %162 : vector<12x1xf32> to vector<12x8xf32>
    %165 = arith.mulf %164, %163 : vector<12x8xf32>
    %166 = arith.addf %161, %165 : vector<12x8xf32>
    %c3_68 = arith.constant 3 : index
    %c0_69 = arith.constant 0 : index
    %c0_70 = arith.constant 0 : index
    %167 = vector.load %arg38[%c3_68, %c0_69, %c0_70] : memref<12x12x12xf32, #tpu.memory_space<vmem>>, vector<1x12x12xf32>
    %168 = vector.shape_cast %167 : vector<1x12x12xf32> to vector<12x12xf32>
    %169 = vector.extract_strided_slice %58 {offsets = [0, 3], sizes = [12, 1], strides = [1, 1]} : vector<12x9xf32> to vector<12x1xf32>
    %170 = vector.extract_strided_slice %168 {offsets = [0, 0], sizes = [12, 8], strides = [1, 1]} : vector<12x12xf32> to vector<12x8xf32>
    %171 = vector.broadcast %169 : vector<12x1xf32> to vector<12x8xf32>
    %172 = arith.mulf %171, %170 : vector<12x8xf32>
    %173 = arith.addf %166, %172 : vector<12x8xf32>
    %174 = vector.extract_strided_slice %58 {offsets = [0, 4], sizes = [12, 1], strides = [1, 1]} : vector<12x9xf32> to vector<12x1xf32>
    %175 = vector.extract_strided_slice %168 {offsets = [0, 2], sizes = [12, 8], strides = [1, 1]} : vector<12x12xf32> to vector<12x8xf32>
    %176 = vector.broadcast %174 : vector<12x1xf32> to vector<12x8xf32>
    %177 = arith.mulf %176, %175 : vector<12x8xf32>
    %178 = arith.addf %173, %177 : vector<12x8xf32>
    %179 = vector.extract_strided_slice %58 {offsets = [0, 5], sizes = [12, 1], strides = [1, 1]} : vector<12x9xf32> to vector<12x1xf32>
    %180 = vector.extract_strided_slice %168 {offsets = [0, 4], sizes = [12, 8], strides = [1, 1]} : vector<12x12xf32> to vector<12x8xf32>
    %181 = vector.broadcast %179 : vector<12x1xf32> to vector<12x8xf32>
    %182 = arith.mulf %181, %180 : vector<12x8xf32>
    %183 = arith.addf %178, %182 : vector<12x8xf32>
    %c5_71 = arith.constant 5 : index
    %c0_72 = arith.constant 0 : index
    %c0_73 = arith.constant 0 : index
    %184 = vector.load %arg38[%c5_71, %c0_72, %c0_73] : memref<12x12x12xf32, #tpu.memory_space<vmem>>, vector<1x12x12xf32>
    %185 = vector.shape_cast %184 : vector<1x12x12xf32> to vector<12x12xf32>
    %186 = vector.extract_strided_slice %58 {offsets = [0, 6], sizes = [12, 1], strides = [1, 1]} : vector<12x9xf32> to vector<12x1xf32>
    %187 = vector.extract_strided_slice %185 {offsets = [0, 0], sizes = [12, 8], strides = [1, 1]} : vector<12x12xf32> to vector<12x8xf32>
    %188 = vector.broadcast %186 : vector<12x1xf32> to vector<12x8xf32>
    %189 = arith.mulf %188, %187 : vector<12x8xf32>
    %190 = arith.addf %183, %189 : vector<12x8xf32>
    %191 = vector.extract_strided_slice %58 {offsets = [0, 7], sizes = [12, 1], strides = [1, 1]} : vector<12x9xf32> to vector<12x1xf32>
    %192 = vector.extract_strided_slice %185 {offsets = [0, 2], sizes = [12, 8], strides = [1, 1]} : vector<12x12xf32> to vector<12x8xf32>
    %193 = vector.broadcast %191 : vector<12x1xf32> to vector<12x8xf32>
    %194 = arith.mulf %193, %192 : vector<12x8xf32>
    %195 = arith.addf %190, %194 : vector<12x8xf32>
    %196 = vector.extract_strided_slice %58 {offsets = [0, 8], sizes = [12, 1], strides = [1, 1]} : vector<12x9xf32> to vector<12x1xf32>
    %197 = vector.extract_strided_slice %185 {offsets = [0, 4], sizes = [12, 8], strides = [1, 1]} : vector<12x12xf32> to vector<12x8xf32>
    %198 = vector.broadcast %196 : vector<12x1xf32> to vector<12x8xf32>
    %199 = arith.mulf %198, %197 : vector<12x8xf32>
    %200 = arith.addf %195, %199 : vector<12x8xf32>
    %201 = vector.broadcast %59 : vector<12x1xf32> to vector<12x8xf32>
    %202 = arith.addf %200, %201 : vector<12x8xf32>
    %c0_74 = arith.constant 0 : index
    %c8_75 = arith.constant 8 : index
    %203 = vector.load %arg42[%c0_74, %c8_75] : memref<12x64xf32, #tpu.memory_space<vmem>>, vector<12x8xf32>
    tpu.vector_store %arg42[%c0_74, %c8_75], %202 {strides = array<i32>} : memref<12x64xf32, #tpu.memory_space<vmem>>, vector<12x8xf32>,
    %cst_76 = arith.constant 0.000000e+00 : f32
    %204 = vector.broadcast %cst_76 : f32 to vector<12x8xf32>
    %c2_77 = arith.constant 2 : index
    %c0_78 = arith.constant 0 : index
    %c0_79 = arith.constant 0 : index
    %205 = vector.load %arg38[%c2_77, %c0_78, %c0_79] : memref<12x12x12xf32, #tpu.memory_space<vmem>>, vector<1x12x12xf32>
    %206 = vector.shape_cast %205 : vector<1x12x12xf32> to vector<12x12xf32>
    %207 = vector.extract_strided_slice %58 {offsets = [0, 0], sizes = [12, 1], strides = [1, 1]} : vector<12x9xf32> to vector<12x1xf32>
    %208 = vector.extract_strided_slice %206 {offsets = [0, 0], sizes = [12, 8], strides = [1, 1]} : vector<12x12xf32> to vector<12x8xf32>
    %209 = vector.broadcast %207 : vector<12x1xf32> to vector<12x8xf32>
    %210 = arith.mulf %209, %208 : vector<12x8xf32>
    %211 = arith.addf %204, %210 : vector<12x8xf32>
    %212 = vector.extract_strided_slice %58 {offsets = [0, 1], sizes = [12, 1], strides = [1, 1]} : vector<12x9xf32> to vector<12x1xf32>
    %213 = vector.extract_strided_slice %206 {offsets = [0, 2], sizes = [12, 8], strides = [1, 1]} : vector<12x12xf32> to vector<12x8xf32>
    %214 = vector.broadcast %212 : vector<12x1xf32> to vector<12x8xf32>
    %215 = arith.mulf %214, %213 : vector<12x8xf32>
    %216 = arith.addf %211, %215 : vector<12x8xf32>
    %217 = vector.extract_strided_slice %58 {offsets = [0, 2], sizes = [12, 1], strides = [1, 1]} : vector<12x9xf32> to vector<12x1xf32>
    %218 = vector.extract_strided_slice %206 {offsets = [0, 4], sizes = [12, 8], strides = [1, 1]} : vector<12x12xf32> to vector<12x8xf32>
    %219 = vector.broadcast %217 : vector<12x1xf32> to vector<12x8xf32>
    %220 = arith.mulf %219, %218 : vector<12x8xf32>
    %221 = arith.addf %216, %220 : vector<12x8xf32>
    %c4_80 = arith.constant 4 : index
    %c0_81 = arith.constant 0 : index
    %c0_82 = arith.constant 0 : index
    %222 = vector.load %arg38[%c4_80, %c0_81, %c0_82] : memref<12x12x12xf32, #tpu.memory_space<vmem>>, vector<1x12x12xf32>
    %223 = vector.shape_cast %222 : vector<1x12x12xf32> to vector<12x12xf32>
    %224 = vector.extract_strided_slice %58 {offsets = [0, 3], sizes = [12, 1], strides = [1, 1]} : vector<12x9xf32> to vector<12x1xf32>
    %225 = vector.extract_strided_slice %223 {offsets = [0, 0], sizes = [12, 8], strides = [1, 1]} : vector<12x12xf32> to vector<12x8xf32>
    %226 = vector.broadcast %224 : vector<12x1xf32> to vector<12x8xf32>
    %227 = arith.mulf %226, %225 : vector<12x8xf32>
    %228 = arith.addf %221, %227 : vector<12x8xf32>
    %229 = vector.extract_strided_slice %58 {offsets = [0, 4], sizes = [12, 1], strides = [1, 1]} : vector<12x9xf32> to vector<12x1xf32>
    %230 = vector.extract_strided_slice %223 {offsets = [0, 2], sizes = [12, 8], strides = [1, 1]} : vector<12x12xf32> to vector<12x8xf32>
    %231 = vector.broadcast %229 : vector<12x1xf32> to vector<12x8xf32>
    %232 = arith.mulf %231, %230 : vector<12x8xf32>
    %233 = arith.addf %228, %232 : vector<12x8xf32>
    %234 = vector.extract_strided_slice %58 {offsets = [0, 5], sizes = [12, 1], strides = [1, 1]} : vector<12x9xf32> to vector<12x1xf32>
    %235 = vector.extract_strided_slice %223 {offsets = [0, 4], sizes = [12, 8], strides = [1, 1]} : vector<12x12xf32> to vector<12x8xf32>
    %236 = vector.broadcast %234 : vector<12x1xf32> to vector<12x8xf32>
    %237 = arith.mulf %236, %235 : vector<12x8xf32>
    %238 = arith.addf %233, %237 : vector<12x8xf32>
    %c6_83 = arith.constant 6 : index
    %c0_84 = arith.constant 0 : index
    %c0_85 = arith.constant 0 : index
    %239 = vector.load %arg38[%c6_83, %c0_84, %c0_85] : memref<12x12x12xf32, #tpu.memory_space<vmem>>, vector<1x12x12xf32>
    %240 = vector.shape_cast %239 : vector<1x12x12xf32> to vector<12x12xf32>
    %241 = vector.extract_strided_slice %58 {offsets = [0, 6], sizes = [12, 1], strides = [1, 1]} : vector<12x9xf32> to vector<12x1xf32>
    %242 = vector.extract_strided_slice %240 {offsets = [0, 0], sizes = [12, 8], strides = [1, 1]} : vector<12x12xf32> to vector<12x8xf32>
    %243 = vector.broadcast %241 : vector<12x1xf32> to vector<12x8xf32>
    %244 = arith.mulf %243, %242 : vector<12x8xf32>
    %245 = arith.addf %238, %244 : vector<12x8xf32>
    %246 = vector.extract_strided_slice %58 {offsets = [0, 7], sizes = [12, 1], strides = [1, 1]} : vector<12x9xf32> to vector<12x1xf32>
    %247 = vector.extract_strided_slice %240 {offsets = [0, 2], sizes = [12, 8], strides = [1, 1]} : vector<12x12xf32> to vector<12x8xf32>
    %248 = vector.broadcast %246 : vector<12x1xf32> to vector<12x8xf32>
    %249 = arith.mulf %248, %247 : vector<12x8xf32>
    %250 = arith.addf %245, %249 : vector<12x8xf32>
    %251 = vector.extract_strided_slice %58 {offsets = [0, 8], sizes = [12, 1], strides = [1, 1]} : vector<12x9xf32> to vector<12x1xf32>
    %252 = vector.extract_strided_slice %240 {offsets = [0, 4], sizes = [12, 8], strides = [1, 1]} : vector<12x12xf32> to vector<12x8xf32>
    %253 = vector.broadcast %251 : vector<12x1xf32> to vector<12x8xf32>
    %254 = arith.mulf %253, %252 : vector<12x8xf32>
    %255 = arith.addf %250, %254 : vector<12x8xf32>
    %256 = vector.broadcast %59 : vector<12x1xf32> to vector<12x8xf32>
    %257 = arith.addf %255, %256 : vector<12x8xf32>
    %c0_86 = arith.constant 0 : index
    %c16 = arith.constant 16 : index
    %258 = vector.load %arg42[%c0_86, %c16] : memref<12x64xf32, #tpu.memory_space<vmem>>, vector<12x8xf32>
    tpu.vector_store %arg42[%c0_86, %c16], %257 {strides = array<i32>} : memref<12x64xf32, #tpu.memory_space<vmem>>, vector<12x8xf32>,
    %cst_87 = arith.constant 0.000000e+00 : f32
    %259 = vector.broadcast %cst_87 : f32 to vector<12x8xf32>
    %c3_88 = arith.constant 3 : index
    %c0_89 = arith.constant 0 : index
    %c0_90 = arith.constant 0 : index
    %260 = vector.load %arg38[%c3_88, %c0_89, %c0_90] : memref<12x12x12xf32, #tpu.memory_space<vmem>>, vector<1x12x12xf32>
    %261 = vector.shape_cast %260 : vector<1x12x12xf32> to vector<12x12xf32>
    %262 = vector.extract_strided_slice %58 {offsets = [0, 0], sizes = [12, 1], strides = [1, 1]} : vector<12x9xf32> to vector<12x1xf32>
    %263 = vector.extract_strided_slice %261 {offsets = [0, 0], sizes = [12, 8], strides = [1, 1]} : vector<12x12xf32> to vector<12x8xf32>
    %264 = vector.broadcast %262 : vector<12x1xf32> to vector<12x8xf32>
    %265 = arith.mulf %264, %263 : vector<12x8xf32>
    %266 = arith.addf %259, %265 : vector<12x8xf32>
    %267 = vector.extract_strided_slice %58 {offsets = [0, 1], sizes = [12, 1], strides = [1, 1]} : vector<12x9xf32> to vector<12x1xf32>
    %268 = vector.extract_strided_slice %261 {offsets = [0, 2], sizes = [12, 8], strides = [1, 1]} : vector<12x12xf32> to vector<12x8xf32>
    %269 = vector.broadcast %267 : vector<12x1xf32> to vector<12x8xf32>
    %270 = arith.mulf %269, %268 : vector<12x8xf32>
    %271 = arith.addf %266, %270 : vector<12x8xf32>
    %272 = vector.extract_strided_slice %58 {offsets = [0, 2], sizes = [12, 1], strides = [1, 1]} : vector<12x9xf32> to vector<12x1xf32>
    %273 = vector.extract_strided_slice %261 {offsets = [0, 4], sizes = [12, 8], strides = [1, 1]} : vector<12x12xf32> to vector<12x8xf32>
    %274 = vector.broadcast %272 : vector<12x1xf32> to vector<12x8xf32>
    %275 = arith.mulf %274, %273 : vector<12x8xf32>
    %276 = arith.addf %271, %275 : vector<12x8xf32>
    %c5_91 = arith.constant 5 : index
    %c0_92 = arith.constant 0 : index
    %c0_93 = arith.constant 0 : index
    %277 = vector.load %arg38[%c5_91, %c0_92, %c0_93] : memref<12x12x12xf32, #tpu.memory_space<vmem>>, vector<1x12x12xf32>
    %278 = vector.shape_cast %277 : vector<1x12x12xf32> to vector<12x12xf32>
    %279 = vector.extract_strided_slice %58 {offsets = [0, 3], sizes = [12, 1], strides = [1, 1]} : vector<12x9xf32> to vector<12x1xf32>
    %280 = vector.extract_strided_slice %278 {offsets = [0, 0], sizes = [12, 8], strides = [1, 1]} : vector<12x12xf32> to vector<12x8xf32>
    %281 = vector.broadcast %279 : vector<12x1xf32> to vector<12x8xf32>
    %282 = arith.mulf %281, %280 : vector<12x8xf32>
    %283 = arith.addf %276, %282 : vector<12x8xf32>
    %284 = vector.extract_strided_slice %58 {offsets = [0, 4], sizes = [12, 1], strides = [1, 1]} : vector<12x9xf32> to vector<12x1xf32>
    %285 = vector.extract_strided_slice %278 {offsets = [0, 2], sizes = [12, 8], strides = [1, 1]} : vector<12x12xf32> to vector<12x8xf32>
    %286 = vector.broadcast %284 : vector<12x1xf32> to vector<12x8xf32>
    %287 = arith.mulf %286, %285 : vector<12x8xf32>
    %288 = arith.addf %283, %287 : vector<12x8xf32>
    %289 = vector.extract_strided_slice %58 {offsets = [0, 5], sizes = [12, 1], strides = [1, 1]} : vector<12x9xf32> to vector<12x1xf32>
    %290 = vector.extract_strided_slice %278 {offsets = [0, 4], sizes = [12, 8], strides = [1, 1]} : vector<12x12xf32> to vector<12x8xf32>
    %291 = vector.broadcast %289 : vector<12x1xf32> to vector<12x8xf32>
    %292 = arith.mulf %291, %290 : vector<12x8xf32>
    %293 = arith.addf %288, %292 : vector<12x8xf32>
    %c7_94 = arith.constant 7 : index
    %c0_95 = arith.constant 0 : index
    %c0_96 = arith.constant 0 : index
    %294 = vector.load %arg38[%c7_94, %c0_95, %c0_96] : memref<12x12x12xf32, #tpu.memory_space<vmem>>, vector<1x12x12xf32>
    %295 = vector.shape_cast %294 : vector<1x12x12xf32> to vector<12x12xf32>
    %296 = vector.extract_strided_slice %58 {offsets = [0, 6], sizes = [12, 1], strides = [1, 1]} : vector<12x9xf32> to vector<12x1xf32>
    %297 = vector.extract_strided_slice %295 {offsets = [0, 0], sizes = [12, 8], strides = [1, 1]} : vector<12x12xf32> to vector<12x8xf32>
    %298 = vector.broadcast %296 : vector<12x1xf32> to vector<12x8xf32>
    %299 = arith.mulf %298, %297 : vector<12x8xf32>
    %300 = arith.addf %293, %299 : vector<12x8xf32>
    %301 = vector.extract_strided_slice %58 {offsets = [0, 7], sizes = [12, 1], strides = [1, 1]} : vector<12x9xf32> to vector<12x1xf32>
    %302 = vector.extract_strided_slice %295 {offsets = [0, 2], sizes = [12, 8], strides = [1, 1]} : vector<12x12xf32> to vector<12x8xf32>
    %303 = vector.broadcast %301 : vector<12x1xf32> to vector<12x8xf32>
    %304 = arith.mulf %303, %302 : vector<12x8xf32>
    %305 = arith.addf %300, %304 : vector<12x8xf32>
    %306 = vector.extract_strided_slice %58 {offsets = [0, 8], sizes = [12, 1], strides = [1, 1]} : vector<12x9xf32> to vector<12x1xf32>
    %307 = vector.extract_strided_slice %295 {offsets = [0, 4], sizes = [12, 8], strides = [1, 1]} : vector<12x12xf32> to vector<12x8xf32>
    %308 = vector.broadcast %306 : vector<12x1xf32> to vector<12x8xf32>
    %309 = arith.mulf %308, %307 : vector<12x8xf32>
    %310 = arith.addf %305, %309 : vector<12x8xf32>
    %311 = vector.broadcast %59 : vector<12x1xf32> to vector<12x8xf32>
    %312 = arith.addf %310, %311 : vector<12x8xf32>
    %c0_97 = arith.constant 0 : index
    %c24 = arith.constant 24 : index
    %313 = vector.load %arg42[%c0_97, %c24] : memref<12x64xf32, #tpu.memory_space<vmem>>, vector<12x8xf32>
    tpu.vector_store %arg42[%c0_97, %c24], %312 {strides = array<i32>} : memref<12x64xf32, #tpu.memory_space<vmem>>, vector<12x8xf32>,
    %cst_98 = arith.constant 0.000000e+00 : f32
    %314 = vector.broadcast %cst_98 : f32 to vector<12x8xf32>
    %c4_99 = arith.constant 4 : index
    %c0_100 = arith.constant 0 : index
    %c0_101 = arith.constant 0 : index
    %315 = vector.load %arg38[%c4_99, %c0_100, %c0_101] : memref<12x12x12xf32, #tpu.memory_space<vmem>>, vector<1x12x12xf32>
    %316 = vector.shape_cast %315 : vector<1x12x12xf32> to vector<12x12xf32>
    %317 = vector.extract_strided_slice %58 {offsets = [0, 0], sizes = [12, 1], strides = [1, 1]} : vector<12x9xf32> to vector<12x1xf32>
    %318 = vector.extract_strided_slice %316 {offsets = [0, 0], sizes = [12, 8], strides = [1, 1]} : vector<12x12xf32> to vector<12x8xf32>
    %319 = vector.broadcast %317 : vector<12x1xf32> to vector<12x8xf32>
    %320 = arith.mulf %319, %318 : vector<12x8xf32>
    %321 = arith.addf %314, %320 : vector<12x8xf32>
    %322 = vector.extract_strided_slice %58 {offsets = [0, 1], sizes = [12, 1], strides = [1, 1]} : vector<12x9xf32> to vector<12x1xf32>
    %323 = vector.extract_strided_slice %316 {offsets = [0, 2], sizes = [12, 8], strides = [1, 1]} : vector<12x12xf32> to vector<12x8xf32>
    %324 = vector.broadcast %322 : vector<12x1xf32> to vector<12x8xf32>
    %325 = arith.mulf %324, %323 : vector<12x8xf32>
    %326 = arith.addf %321, %325 : vector<12x8xf32>
    %327 = vector.extract_strided_slice %58 {offsets = [0, 2], sizes = [12, 1], strides = [1, 1]} : vector<12x9xf32> to vector<12x1xf32>
    %328 = vector.extract_strided_slice %316 {offsets = [0, 4], sizes = [12, 8], strides = [1, 1]} : vector<12x12xf32> to vector<12x8xf32>
    %329 = vector.broadcast %327 : vector<12x1xf32> to vector<12x8xf32>
    %330 = arith.mulf %329, %328 : vector<12x8xf32>
    %331 = arith.addf %326, %330 : vector<12x8xf32>
    %c6_102 = arith.constant 6 : index
    %c0_103 = arith.constant 0 : index
    %c0_104 = arith.constant 0 : index
    %332 = vector.load %arg38[%c6_102, %c0_103, %c0_104] : memref<12x12x12xf32, #tpu.memory_space<vmem>>, vector<1x12x12xf32>
    %333 = vector.shape_cast %332 : vector<1x12x12xf32> to vector<12x12xf32>
    %334 = vector.extract_strided_slice %58 {offsets = [0, 3], sizes = [12, 1], strides = [1, 1]} : vector<12x9xf32> to vector<12x1xf32>
    %335 = vector.extract_strided_slice %333 {offsets = [0, 0], sizes = [12, 8], strides = [1, 1]} : vector<12x12xf32> to vector<12x8xf32>
    %336 = vector.broadcast %334 : vector<12x1xf32> to vector<12x8xf32>
    %337 = arith.mulf %336, %335 : vector<12x8xf32>
    %338 = arith.addf %331, %337 : vector<12x8xf32>
    %339 = vector.extract_strided_slice %58 {offsets = [0, 4], sizes = [12, 1], strides = [1, 1]} : vector<12x9xf32> to vector<12x1xf32>
    %340 = vector.extract_strided_slice %333 {offsets = [0, 2], sizes = [12, 8], strides = [1, 1]} : vector<12x12xf32> to vector<12x8xf32>
    %341 = vector.broadcast %339 : vector<12x1xf32> to vector<12x8xf32>
    %342 = arith.mulf %341, %340 : vector<12x8xf32>
    %343 = arith.addf %338, %342 : vector<12x8xf32>
    %344 = vector.extract_strided_slice %58 {offsets = [0, 5], sizes = [12, 1], strides = [1, 1]} : vector<12x9xf32> to vector<12x1xf32>
    %345 = vector.extract_strided_slice %333 {offsets = [0, 4], sizes = [12, 8], strides = [1, 1]} : vector<12x12xf32> to vector<12x8xf32>
    %346 = vector.broadcast %344 : vector<12x1xf32> to vector<12x8xf32>
    %347 = arith.mulf %346, %345 : vector<12x8xf32>
    %348 = arith.addf %343, %347 : vector<12x8xf32>
    %c8_105 = arith.constant 8 : index
    %c0_106 = arith.constant 0 : index
    %c0_107 = arith.constant 0 : index
    %349 = vector.load %arg38[%c8_105, %c0_106, %c0_107] : memref<12x12x12xf32, #tpu.memory_space<vmem>>, vector<1x12x12xf32>
    %350 = vector.shape_cast %349 : vector<1x12x12xf32> to vector<12x12xf32>
    %351 = vector.extract_strided_slice %58 {offsets = [0, 6], sizes = [12, 1], strides = [1, 1]} : vector<12x9xf32> to vector<12x1xf32>
    %352 = vector.extract_strided_slice %350 {offsets = [0, 0], sizes = [12, 8], strides = [1, 1]} : vector<12x12xf32> to vector<12x8xf32>
    %353 = vector.broadcast %351 : vector<12x1xf32> to vector<12x8xf32>
    %354 = arith.mulf %353, %352 : vector<12x8xf32>
    %355 = arith.addf %348, %354 : vector<12x8xf32>
    %356 = vector.extract_strided_slice %58 {offsets = [0, 7], sizes = [12, 1], strides = [1, 1]} : vector<12x9xf32> to vector<12x1xf32>
    %357 = vector.extract_strided_slice %350 {offsets = [0, 2], sizes = [12, 8], strides = [1, 1]} : vector<12x12xf32> to vector<12x8xf32>
    %358 = vector.broadcast %356 : vector<12x1xf32> to vector<12x8xf32>
    %359 = arith.mulf %358, %357 : vector<12x8xf32>
    %360 = arith.addf %355, %359 : vector<12x8xf32>
    %361 = vector.extract_strided_slice %58 {offsets = [0, 8], sizes = [12, 1], strides = [1, 1]} : vector<12x9xf32> to vector<12x1xf32>
    %362 = vector.extract_strided_slice %350 {offsets = [0, 4], sizes = [12, 8], strides = [1, 1]} : vector<12x12xf32> to vector<12x8xf32>
    %363 = vector.broadcast %361 : vector<12x1xf32> to vector<12x8xf32>
    %364 = arith.mulf %363, %362 : vector<12x8xf32>
    %365 = arith.addf %360, %364 : vector<12x8xf32>
    %366 = vector.broadcast %59 : vector<12x1xf32> to vector<12x8xf32>
    %367 = arith.addf %365, %366 : vector<12x8xf32>
    %c0_108 = arith.constant 0 : index
    %c32 = arith.constant 32 : index
    %368 = vector.load %arg42[%c0_108, %c32] : memref<12x64xf32, #tpu.memory_space<vmem>>, vector<12x8xf32>
    tpu.vector_store %arg42[%c0_108, %c32], %367 {strides = array<i32>} : memref<12x64xf32, #tpu.memory_space<vmem>>, vector<12x8xf32>,
    %cst_109 = arith.constant 0.000000e+00 : f32
    %369 = vector.broadcast %cst_109 : f32 to vector<12x8xf32>
    %c5_110 = arith.constant 5 : index
    %c0_111 = arith.constant 0 : index
    %c0_112 = arith.constant 0 : index
    %370 = vector.load %arg38[%c5_110, %c0_111, %c0_112] : memref<12x12x12xf32, #tpu.memory_space<vmem>>, vector<1x12x12xf32>
    %371 = vector.shape_cast %370 : vector<1x12x12xf32> to vector<12x12xf32>
    %372 = vector.extract_strided_slice %58 {offsets = [0, 0], sizes = [12, 1], strides = [1, 1]} : vector<12x9xf32> to vector<12x1xf32>
    %373 = vector.extract_strided_slice %371 {offsets = [0, 0], sizes = [12, 8], strides = [1, 1]} : vector<12x12xf32> to vector<12x8xf32>
    %374 = vector.broadcast %372 : vector<12x1xf32> to vector<12x8xf32>
    %375 = arith.mulf %374, %373 : vector<12x8xf32>
    %376 = arith.addf %369, %375 : vector<12x8xf32>
    %377 = vector.extract_strided_slice %58 {offsets = [0, 1], sizes = [12, 1], strides = [1, 1]} : vector<12x9xf32> to vector<12x1xf32>
    %378 = vector.extract_strided_slice %371 {offsets = [0, 2], sizes = [12, 8], strides = [1, 1]} : vector<12x12xf32> to vector<12x8xf32>
    %379 = vector.broadcast %377 : vector<12x1xf32> to vector<12x8xf32>
    %380 = arith.mulf %379, %378 : vector<12x8xf32>
    %381 = arith.addf %376, %380 : vector<12x8xf32>
    %382 = vector.extract_strided_slice %58 {offsets = [0, 2], sizes = [12, 1], strides = [1, 1]} : vector<12x9xf32> to vector<12x1xf32>
    %383 = vector.extract_strided_slice %371 {offsets = [0, 4], sizes = [12, 8], strides = [1, 1]} : vector<12x12xf32> to vector<12x8xf32>
    %384 = vector.broadcast %382 : vector<12x1xf32> to vector<12x8xf32>
    %385 = arith.mulf %384, %383 : vector<12x8xf32>
    %386 = arith.addf %381, %385 : vector<12x8xf32>
    %c7_113 = arith.constant 7 : index
    %c0_114 = arith.constant 0 : index
    %c0_115 = arith.constant 0 : index
    %387 = vector.load %arg38[%c7_113, %c0_114, %c0_115] : memref<12x12x12xf32, #tpu.memory_space<vmem>>, vector<1x12x12xf32>
    %388 = vector.shape_cast %387 : vector<1x12x12xf32> to vector<12x12xf32>
    %389 = vector.extract_strided_slice %58 {offsets = [0, 3], sizes = [12, 1], strides = [1, 1]} : vector<12x9xf32> to vector<12x1xf32>
    %390 = vector.extract_strided_slice %388 {offsets = [0, 0], sizes = [12, 8], strides = [1, 1]} : vector<12x12xf32> to vector<12x8xf32>
    %391 = vector.broadcast %389 : vector<12x1xf32> to vector<12x8xf32>
    %392 = arith.mulf %391, %390 : vector<12x8xf32>
    %393 = arith.addf %386, %392 : vector<12x8xf32>
    %394 = vector.extract_strided_slice %58 {offsets = [0, 4], sizes = [12, 1], strides = [1, 1]} : vector<12x9xf32> to vector<12x1xf32>
    %395 = vector.extract_strided_slice %388 {offsets = [0, 2], sizes = [12, 8], strides = [1, 1]} : vector<12x12xf32> to vector<12x8xf32>
    %396 = vector.broadcast %394 : vector<12x1xf32> to vector<12x8xf32>
    %397 = arith.mulf %396, %395 : vector<12x8xf32>
    %398 = arith.addf %393, %397 : vector<12x8xf32>
    %399 = vector.extract_strided_slice %58 {offsets = [0, 5], sizes = [12, 1], strides = [1, 1]} : vector<12x9xf32> to vector<12x1xf32>
    %400 = vector.extract_strided_slice %388 {offsets = [0, 4], sizes = [12, 8], strides = [1, 1]} : vector<12x12xf32> to vector<12x8xf32>
    %401 = vector.broadcast %399 : vector<12x1xf32> to vector<12x8xf32>
    %402 = arith.mulf %401, %400 : vector<12x8xf32>
    %403 = arith.addf %398, %402 : vector<12x8xf32>
    %c9_116 = arith.constant 9 : index
    %c0_117 = arith.constant 0 : index
    %c0_118 = arith.constant 0 : index
    %404 = vector.load %arg38[%c9_116, %c0_117, %c0_118] : memref<12x12x12xf32, #tpu.memory_space<vmem>>, vector<1x12x12xf32>
    %405 = vector.shape_cast %404 : vector<1x12x12xf32> to vector<12x12xf32>
    %406 = vector.extract_strided_slice %58 {offsets = [0, 6], sizes = [12, 1], strides = [1, 1]} : vector<12x9xf32> to vector<12x1xf32>
    %407 = vector.extract_strided_slice %405 {offsets = [0, 0], sizes = [12, 8], strides = [1, 1]} : vector<12x12xf32> to vector<12x8xf32>
    %408 = vector.broadcast %406 : vector<12x1xf32> to vector<12x8xf32>
    %409 = arith.mulf %408, %407 : vector<12x8xf32>
    %410 = arith.addf %403, %409 : vector<12x8xf32>
    %411 = vector.extract_strided_slice %58 {offsets = [0, 7], sizes = [12, 1], strides = [1, 1]} : vector<12x9xf32> to vector<12x1xf32>
    %412 = vector.extract_strided_slice %405 {offsets = [0, 2], sizes = [12, 8], strides = [1, 1]} : vector<12x12xf32> to vector<12x8xf32>
    %413 = vector.broadcast %411 : vector<12x1xf32> to vector<12x8xf32>
    %414 = arith.mulf %413, %412 : vector<12x8xf32>
    %415 = arith.addf %410, %414 : vector<12x8xf32>
    %416 = vector.extract_strided_slice %58 {offsets = [0, 8], sizes = [12, 1], strides = [1, 1]} : vector<12x9xf32> to vector<12x1xf32>
    %417 = vector.extract_strided_slice %405 {offsets = [0, 4], sizes = [12, 8], strides = [1, 1]} : vector<12x12xf32> to vector<12x8xf32>
    %418 = vector.broadcast %416 : vector<12x1xf32> to vector<12x8xf32>
    %419 = arith.mulf %418, %417 : vector<12x8xf32>
    %420 = arith.addf %415, %419 : vector<12x8xf32>
    %421 = vector.broadcast %59 : vector<12x1xf32> to vector<12x8xf32>
    %422 = arith.addf %420, %421 : vector<12x8xf32>
    %c0_119 = arith.constant 0 : index
    %c40 = arith.constant 40 : index
    %423 = vector.load %arg42[%c0_119, %c40] : memref<12x64xf32, #tpu.memory_space<vmem>>, vector<12x8xf32>
    tpu.vector_store %arg42[%c0_119, %c40], %422 {strides = array<i32>} : memref<12x64xf32, #tpu.memory_space<vmem>>, vector<12x8xf32>,
    %cst_120 = arith.constant 0.000000e+00 : f32
    %424 = vector.broadcast %cst_120 : f32 to vector<12x8xf32>
    %c6_121 = arith.constant 6 : index
    %c0_122 = arith.constant 0 : index
    %c0_123 = arith.constant 0 : index
    %425 = vector.load %arg38[%c6_121, %c0_122, %c0_123] : memref<12x12x12xf32, #tpu.memory_space<vmem>>, vector<1x12x12xf32>
    %426 = vector.shape_cast %425 : vector<1x12x12xf32> to vector<12x12xf32>
    %427 = vector.extract_strided_slice %58 {offsets = [0, 0], sizes = [12, 1], strides = [1, 1]} : vector<12x9xf32> to vector<12x1xf32>
    %428 = vector.extract_strided_slice %426 {offsets = [0, 0], sizes = [12, 8], strides = [1, 1]} : vector<12x12xf32> to vector<12x8xf32>
    %429 = vector.broadcast %427 : vector<12x1xf32> to vector<12x8xf32>
    %430 = arith.mulf %429, %428 : vector<12x8xf32>
    %431 = arith.addf %424, %430 : vector<12x8xf32>
    %432 = vector.extract_strided_slice %58 {offsets = [0, 1], sizes = [12, 1], strides = [1, 1]} : vector<12x9xf32> to vector<12x1xf32>
    %433 = vector.extract_strided_slice %426 {offsets = [0, 2], sizes = [12, 8], strides = [1, 1]} : vector<12x12xf32> to vector<12x8xf32>
    %434 = vector.broadcast %432 : vector<12x1xf32> to vector<12x8xf32>
    %435 = arith.mulf %434, %433 : vector<12x8xf32>
    %436 = arith.addf %431, %435 : vector<12x8xf32>
    %437 = vector.extract_strided_slice %58 {offsets = [0, 2], sizes = [12, 1], strides = [1, 1]} : vector<12x9xf32> to vector<12x1xf32>
    %438 = vector.extract_strided_slice %426 {offsets = [0, 4], sizes = [12, 8], strides = [1, 1]} : vector<12x12xf32> to vector<12x8xf32>
    %439 = vector.broadcast %437 : vector<12x1xf32> to vector<12x8xf32>
    %440 = arith.mulf %439, %438 : vector<12x8xf32>
    %441 = arith.addf %436, %440 : vector<12x8xf32>
    %c8_124 = arith.constant 8 : index
    %c0_125 = arith.constant 0 : index
    %c0_126 = arith.constant 0 : index
    %442 = vector.load %arg38[%c8_124, %c0_125, %c0_126] : memref<12x12x12xf32, #tpu.memory_space<vmem>>, vector<1x12x12xf32>
    %443 = vector.shape_cast %442 : vector<1x12x12xf32> to vector<12x12xf32>
    %444 = vector.extract_strided_slice %58 {offsets = [0, 3], sizes = [12, 1], strides = [1, 1]} : vector<12x9xf32> to vector<12x1xf32>
    %445 = vector.extract_strided_slice %443 {offsets = [0, 0], sizes = [12, 8], strides = [1, 1]} : vector<12x12xf32> to vector<12x8xf32>
    %446 = vector.broadcast %444 : vector<12x1xf32> to vector<12x8xf32>
    %447 = arith.mulf %446, %445 : vector<12x8xf32>
    %448 = arith.addf %441, %447 : vector<12x8xf32>
    %449 = vector.extract_strided_slice %58 {offsets = [0, 4], sizes = [12, 1], strides = [1, 1]} : vector<12x9xf32> to vector<12x1xf32>
    %450 = vector.extract_strided_slice %443 {offsets = [0, 2], sizes = [12, 8], strides = [1, 1]} : vector<12x12xf32> to vector<12x8xf32>
    %451 = vector.broadcast %449 : vector<12x1xf32> to vector<12x8xf32>
    %452 = arith.mulf %451, %450 : vector<12x8xf32>
    %453 = arith.addf %448, %452 : vector<12x8xf32>
    %454 = vector.extract_strided_slice %58 {offsets = [0, 5], sizes = [12, 1], strides = [1, 1]} : vector<12x9xf32> to vector<12x1xf32>
    %455 = vector.extract_strided_slice %443 {offsets = [0, 4], sizes = [12, 8], strides = [1, 1]} : vector<12x12xf32> to vector<12x8xf32>
    %456 = vector.broadcast %454 : vector<12x1xf32> to vector<12x8xf32>
    %457 = arith.mulf %456, %455 : vector<12x8xf32>
    %458 = arith.addf %453, %457 : vector<12x8xf32>
    %c10 = arith.constant 10 : index
    %c0_127 = arith.constant 0 : index
    %c0_128 = arith.constant 0 : index
    %459 = vector.load %arg38[%c10, %c0_127, %c0_128] : memref<12x12x12xf32, #tpu.memory_space<vmem>>, vector<1x12x12xf32>
    %460 = vector.shape_cast %459 : vector<1x12x12xf32> to vector<12x12xf32>
    %461 = vector.extract_strided_slice %58 {offsets = [0, 6], sizes = [12, 1], strides = [1, 1]} : vector<12x9xf32> to vector<12x1xf32>
    %462 = vector.extract_strided_slice %460 {offsets = [0, 0], sizes = [12, 8], strides = [1, 1]} : vector<12x12xf32> to vector<12x8xf32>
    %463 = vector.broadcast %461 : vector<12x1xf32> to vector<12x8xf32>
    %464 = arith.mulf %463, %462 : vector<12x8xf32>
    %465 = arith.addf %458, %464 : vector<12x8xf32>
    %466 = vector.extract_strided_slice %58 {offsets = [0, 7], sizes = [12, 1], strides = [1, 1]} : vector<12x9xf32> to vector<12x1xf32>
    %467 = vector.extract_strided_slice %460 {offsets = [0, 2], sizes = [12, 8], strides = [1, 1]} : vector<12x12xf32> to vector<12x8xf32>
    %468 = vector.broadcast %466 : vector<12x1xf32> to vector<12x8xf32>
    %469 = arith.mulf %468, %467 : vector<12x8xf32>
    %470 = arith.addf %465, %469 : vector<12x8xf32>
    %471 = vector.extract_strided_slice %58 {offsets = [0, 8], sizes = [12, 1], strides = [1, 1]} : vector<12x9xf32> to vector<12x1xf32>
    %472 = vector.extract_strided_slice %460 {offsets = [0, 4], sizes = [12, 8], strides = [1, 1]} : vector<12x12xf32> to vector<12x8xf32>
    %473 = vector.broadcast %471 : vector<12x1xf32> to vector<12x8xf32>
    %474 = arith.mulf %473, %472 : vector<12x8xf32>
    %475 = arith.addf %470, %474 : vector<12x8xf32>
    %476 = vector.broadcast %59 : vector<12x1xf32> to vector<12x8xf32>
    %477 = arith.addf %475, %476 : vector<12x8xf32>
    %c0_129 = arith.constant 0 : index
    %c48 = arith.constant 48 : index
    %478 = vector.load %arg42[%c0_129, %c48] : memref<12x64xf32, #tpu.memory_space<vmem>>, vector<12x8xf32>
    tpu.vector_store %arg42[%c0_129, %c48], %477 {strides = array<i32>} : memref<12x64xf32, #tpu.memory_space<vmem>>, vector<12x8xf32>,
    %cst_130 = arith.constant 0.000000e+00 : f32
    %479 = vector.broadcast %cst_130 : f32 to vector<12x8xf32>
    %c7_131 = arith.constant 7 : index
    %c0_132 = arith.constant 0 : index
    %c0_133 = arith.constant 0 : index
    %480 = vector.load %arg38[%c7_131, %c0_132, %c0_133] : memref<12x12x12xf32, #tpu.memory_space<vmem>>, vector<1x12x12xf32>
    %481 = vector.shape_cast %480 : vector<1x12x12xf32> to vector<12x12xf32>
    %482 = vector.extract_strided_slice %58 {offsets = [0, 0], sizes = [12, 1], strides = [1, 1]} : vector<12x9xf32> to vector<12x1xf32>
    %483 = vector.extract_strided_slice %481 {offsets = [0, 0], sizes = [12, 8], strides = [1, 1]} : vector<12x12xf32> to vector<12x8xf32>
    %484 = vector.broadcast %482 : vector<12x1xf32> to vector<12x8xf32>
    %485 = arith.mulf %484, %483 : vector<12x8xf32>
    %486 = arith.addf %479, %485 : vector<12x8xf32>
    %487 = vector.extract_strided_slice %58 {offsets = [0, 1], sizes = [12, 1], strides = [1, 1]} : vector<12x9xf32> to vector<12x1xf32>
    %488 = vector.extract_strided_slice %481 {offsets = [0, 2], sizes = [12, 8], strides = [1, 1]} : vector<12x12xf32> to vector<12x8xf32>
    %489 = vector.broadcast %487 : vector<12x1xf32> to vector<12x8xf32>
    %490 = arith.mulf %489, %488 : vector<12x8xf32>
    %491 = arith.addf %486, %490 : vector<12x8xf32>
    %492 = vector.extract_strided_slice %58 {offsets = [0, 2], sizes = [12, 1], strides = [1, 1]} : vector<12x9xf32> to vector<12x1xf32>
    %493 = vector.extract_strided_slice %481 {offsets = [0, 4], sizes = [12, 8], strides = [1, 1]} : vector<12x12xf32> to vector<12x8xf32>
    %494 = vector.broadcast %492 : vector<12x1xf32> to vector<12x8xf32>
    %495 = arith.mulf %494, %493 : vector<12x8xf32>
    %496 = arith.addf %491, %495 : vector<12x8xf32>
    %c9_134 = arith.constant 9 : index
    %c0_135 = arith.constant 0 : index
    %c0_136 = arith.constant 0 : index
    %497 = vector.load %arg38[%c9_134, %c0_135, %c0_136] : memref<12x12x12xf32, #tpu.memory_space<vmem>>, vector<1x12x12xf32>
    %498 = vector.shape_cast %497 : vector<1x12x12xf32> to vector<12x12xf32>
    %499 = vector.extract_strided_slice %58 {offsets = [0, 3], sizes = [12, 1], strides = [1, 1]} : vector<12x9xf32> to vector<12x1xf32>
    %500 = vector.extract_strided_slice %498 {offsets = [0, 0], sizes = [12, 8], strides = [1, 1]} : vector<12x12xf32> to vector<12x8xf32>
    %501 = vector.broadcast %499 : vector<12x1xf32> to vector<12x8xf32>
    %502 = arith.mulf %501, %500 : vector<12x8xf32>
    %503 = arith.addf %496, %502 : vector<12x8xf32>
    %504 = vector.extract_strided_slice %58 {offsets = [0, 4], sizes = [12, 1], strides = [1, 1]} : vector<12x9xf32> to vector<12x1xf32>
    %505 = vector.extract_strided_slice %498 {offsets = [0, 2], sizes = [12, 8], strides = [1, 1]} : vector<12x12xf32> to vector<12x8xf32>
    %506 = vector.broadcast %504 : vector<12x1xf32> to vector<12x8xf32>
    %507 = arith.mulf %506, %505 : vector<12x8xf32>
    %508 = arith.addf %503, %507 : vector<12x8xf32>
    %509 = vector.extract_strided_slice %58 {offsets = [0, 5], sizes = [12, 1], strides = [1, 1]} : vector<12x9xf32> to vector<12x1xf32>
    %510 = vector.extract_strided_slice %498 {offsets = [0, 4], sizes = [12, 8], strides = [1, 1]} : vector<12x12xf32> to vector<12x8xf32>
    %511 = vector.broadcast %509 : vector<12x1xf32> to vector<12x8xf32>
    %512 = arith.mulf %511, %510 : vector<12x8xf32>
    %513 = arith.addf %508, %512 : vector<12x8xf32>
    %c11 = arith.constant 11 : index
    %c0_137 = arith.constant 0 : index
    %c0_138 = arith.constant 0 : index
    %514 = vector.load %arg38[%c11, %c0_137, %c0_138] : memref<12x12x12xf32, #tpu.memory_space<vmem>>, vector<1x12x12xf32>
    %515 = vector.shape_cast %514 : vector<1x12x12xf32> to vector<12x12xf32>
    %516 = vector.extract_strided_slice %58 {offsets = [0, 6], sizes = [12, 1], strides = [1, 1]} : vector<12x9xf32> to vector<12x1xf32>
    %517 = vector.extract_strided_slice %515 {offsets = [0, 0], sizes = [12, 8], strides = [1, 1]} : vector<12x12xf32> to vector<12x8xf32>
    %518 = vector.broadcast %516 : vector<12x1xf32> to vector<12x8xf32>
    %519 = arith.mulf %518, %517 : vector<12x8xf32>
    %520 = arith.addf %513, %519 : vector<12x8xf32>
    %521 = vector.extract_strided_slice %58 {offsets = [0, 7], sizes = [12, 1], strides = [1, 1]} : vector<12x9xf32> to vector<12x1xf32>
    %522 = vector.extract_strided_slice %515 {offsets = [0, 2], sizes = [12, 8], strides = [1, 1]} : vector<12x12xf32> to vector<12x8xf32>
    %523 = vector.broadcast %521 : vector<12x1xf32> to vector<12x8xf32>
    %524 = arith.mulf %523, %522 : vector<12x8xf32>
    %525 = arith.addf %520, %524 : vector<12x8xf32>
    %526 = vector.extract_strided_slice %58 {offsets = [0, 8], sizes = [12, 1], strides = [1, 1]} : vector<12x9xf32> to vector<12x1xf32>
    %527 = vector.extract_strided_slice %515 {offsets = [0, 4], sizes = [12, 8], strides = [1, 1]} : vector<12x12xf32> to vector<12x8xf32>
    %528 = vector.broadcast %526 : vector<12x1xf32> to vector<12x8xf32>
    %529 = arith.mulf %528, %527 : vector<12x8xf32>
    %530 = arith.addf %525, %529 : vector<12x8xf32>
    %531 = vector.broadcast %59 : vector<12x1xf32> to vector<12x8xf32>
    %532 = arith.addf %530, %531 : vector<12x8xf32>
    %c0_139 = arith.constant 0 : index
    %c56 = arith.constant 56 : index
    %533 = vector.load %arg42[%c0_139, %c56] : memref<12x64xf32, #tpu.memory_space<vmem>>, vector<12x8xf32>
    tpu.vector_store %arg42[%c0_139, %c56], %532 {strides = array<i32>} : memref<12x64xf32, #tpu.memory_space<vmem>>, vector<12x8xf32>,
    %c0_140 = arith.constant 0 : index
    %c0_141 = arith.constant 0 : index
    %534 = vector.load %arg15[%c0_140, %c0_141] : memref<12x12xf32, #tpu.memory_space<vmem>>, vector<12x12xf32>
    %c0_142 = arith.constant 0 : index
    %c0_143 = arith.constant 0 : index
    %535 = vector.load %arg42[%c0_142, %c0_143] : memref<12x64xf32, #tpu.memory_space<vmem>>, vector<12x64xf32>
    %cst_144 = arith.constant dense<0.000000e+00> : vector<12x64xf32>
    %536 = tpu.matmul %534, %535, %cst_144 {dimension_numbers = #tpu.dot_dimension_numbers<[1], [0], [0], [1], [0, 0, 1, 1], [], []>} : vector<12x12xf32>, vector<12x64xf32>, vector<12x64xf32> -> vector<12x64xf32>
    %c0_145 = arith.constant 0 : index
    %c0_146 = arith.constant 0 : index
    %537 = vector.load %arg16[%c0_145, %c0_146] : memref<12x1xf32, #tpu.memory_space<vmem>>, vector<12x1xf32>
    %538 = vector.broadcast %537 : vector<12x1xf32> to vector<12x64xf32>
    %539 = arith.addf %536, %538 : vector<12x64xf32>
    %c0_147 = arith.constant 0 : index
    %c0_148 = arith.constant 0 : index
    %540 = vector.load %arg17[%c0_147, %c0_148] : memref<12x1xf32, #tpu.memory_space<vmem>>, vector<12x1xf32>
    %c0_149 = arith.constant 0 : index
    %c0_150 = arith.constant 0 : index
    %541 = vector.load %arg18[%c0_149, %c0_150] : memref<12x1xf32, #tpu.memory_space<vmem>>, vector<12x1xf32>
    %c0_151 = arith.constant 0 : index
    %c0_152 = arith.constant 0 : index
    %542 = vector.load %arg19[%c0_151, %c0_152] : memref<12x12xf32, #tpu.memory_space<vmem>>, vector<12x12xf32>
    %cst_153 = arith.constant dense<0.000000e+00> : vector<12xf32>
    %543 = vector.multi_reduction <add>, %539, %cst_153 [1] : vector<12x64xf32> to vector<12xf32>
    %544 = vector.shape_cast %543 : vector<12xf32> to vector<12x1xf32>
    %545 = arith.mulf %539, %539 : vector<12x64xf32>
    %cst_154 = arith.constant dense<0.000000e+00> : vector<12xf32>
    %546 = vector.multi_reduction <add>, %545, %cst_154 [1] : vector<12x64xf32> to vector<12xf32>
    %547 = vector.shape_cast %546 : vector<12xf32> to vector<12x1xf32>
    %cst_155 = arith.constant dense<0.000000e+00> : vector<12x1xf32>
    %548 = tpu.matmul %542, %544, %cst_155 {dimension_numbers = #tpu.dot_dimension_numbers<[1], [0], [0], [1], [0, 0, 1, 1], [], []>} : vector<12x12xf32>, vector<12x1xf32>, vector<12x1xf32> -> vector<12x1xf32>
    %cst_156 = arith.constant 0.00520833349 : f32
    %549 = vector.broadcast %cst_156 : f32 to vector<12x1xf32>
    %550 = arith.mulf %548, %549 : vector<12x1xf32>
    %cst_157 = arith.constant dense<0.000000e+00> : vector<12x1xf32>
    %551 = tpu.matmul %542, %547, %cst_157 {dimension_numbers = #tpu.dot_dimension_numbers<[1], [0], [0], [1], [0, 0, 1, 1], [], []>} : vector<12x12xf32>, vector<12x1xf32>, vector<12x1xf32> -> vector<12x1xf32>
    %cst_158 = arith.constant 0.00520833349 : f32
    %552 = vector.broadcast %cst_158 : f32 to vector<12x1xf32>
    %553 = arith.mulf %551, %552 : vector<12x1xf32>
    %554 = arith.mulf %550, %550 : vector<12x1xf32>
    %555 = arith.subf %553, %554 : vector<12x1xf32>
    %cst_159 = arith.constant 9.99999974E-6 : f32
    %556 = vector.broadcast %cst_159 : f32 to vector<12x1xf32>
    %557 = arith.addf %555, %556 : vector<12x1xf32>
    %558 = math.rsqrt %557 : vector<12x1xf32>
    %559 = arith.mulf %540, %558 : vector<12x1xf32>
    %560 = vector.broadcast %559 : vector<12x1xf32> to vector<12x64xf32>
    %561 = arith.mulf %539, %560 : vector<12x64xf32>
    %562 = arith.mulf %550, %559 : vector<12x1xf32>
    %563 = arith.subf %541, %562 : vector<12x1xf32>
    %564 = vector.broadcast %563 : vector<12x1xf32> to vector<12x64xf32>
    %565 = arith.addf %561, %564 : vector<12x64xf32>
    %cst_160 = arith.constant 3.000000e+00 : f32
    %566 = vector.broadcast %cst_160 : f32 to vector<12x64xf32>
    %567 = arith.addf %565, %566 : vector<12x64xf32>
    %cst_161 = arith.constant 0.000000e+00 : f32
    %cst_162 = arith.constant 6.000000e+00 : f32
    %568 = vector.broadcast %cst_161 : f32 to vector<12x64xf32>
    %569 = arith.maximumf %568, %567 : vector<12x64xf32>
    %570 = vector.broadcast %cst_162 : f32 to vector<12x64xf32>
    %571 = arith.minimumf %570, %569 : vector<12x64xf32>
    %572 = arith.mulf %565, %571 : vector<12x64xf32>
    %cst_163 = arith.constant 0.166666672 : f32
    %573 = vector.broadcast %cst_163 : f32 to vector<12x64xf32>
    %574 = arith.mulf %572, %573 : vector<12x64xf32>
    %cst_164 = arith.constant 0.000000e+00 : f32
    %cst_165 = arith.constant 6.000000e+00 : f32
    %575 = vector.broadcast %cst_164 : f32 to vector<12x64xf32>
    %576 = arith.maximumf %575, %565 : vector<12x64xf32>
    %577 = vector.broadcast %cst_165 : f32 to vector<12x64xf32>
    %578 = arith.minimumf %577, %576 : vector<12x64xf32>
    %cst_166 = arith.constant 0.000000e+00 : f32
    %579 = vector.broadcast %cst_166 : f32 to vector<12x64xf32>
    %580 = arith.minimumf %565, %579 : vector<12x64xf32>
    %cst_167 = arith.constant 0.00999999977 : f32
    %581 = vector.broadcast %cst_167 : f32 to vector<12x64xf32>
    %582 = arith.mulf %581, %580 : vector<12x64xf32>
    %583 = arith.addf %578, %582 : vector<12x64xf32>
    %cst_168 = arith.constant -3.000000e+00 : f32
    %584 = vector.broadcast %cst_168 : f32 to vector<12x64xf32>
    %585 = arith.cmpf oge, %565, %584 : vector<12x64xf32>
    %cst_169 = arith.constant 3.000000e+00 : f32
    %586 = vector.broadcast %cst_169 : f32 to vector<12x64xf32>
    %587 = arith.cmpf ole, %565, %586 : vector<12x64xf32>
    %588 = arith.andi %585, %587 : vector<12x64xi1>
    %589 = arith.select %588, %574, %583 : vector<12x64xi1>, vector<12x64xf32>
    %c0_170 = arith.constant 0 : index
    %c0_171 = arith.constant 0 : index
    %590 = vector.load %arg20[%c0_170, %c0_171] : memref<12x12xf32, #tpu.memory_space<vmem>>, vector<12x12xf32>
    %c0_172 = arith.constant 0 : index
    %c0_173 = arith.constant 0 : index
    %591 = vector.load %arg21[%c0_172, %c0_173] : memref<4x12xf32, #tpu.memory_space<vmem>>, vector<4x12xf32>
    %c0_174 = arith.constant 0 : index
    %c0_175 = arith.constant 0 : index
    %592 = vector.load %arg22[%c0_174, %c0_175] : memref<12x4xf32, #tpu.memory_space<vmem>>, vector<12x4xf32>
    %cst_176 = arith.constant dense<0.000000e+00> : vector<12xf32>
    %593 = vector.multi_reduction <add>, %589, %cst_176 [1] : vector<12x64xf32> to vector<12xf32>
    %594 = vector.shape_cast %593 : vector<12xf32> to vector<12x1xf32>
    %cst_177 = arith.constant 1.562500e-02 : f32
    %595 = vector.broadcast %cst_177 : f32 to vector<12x1xf32>
    %596 = arith.mulf %594, %595 : vector<12x1xf32>
    %cst_178 = arith.constant dense<0.000000e+00> : vector<4x1xf32>
    %597 = tpu.matmul %591, %596, %cst_178 {dimension_numbers = #tpu.dot_dimension_numbers<[1], [0], [0], [1], [0, 0, 1, 1], [], []>} : vector<4x12xf32>, vector<12x1xf32>, vector<4x1xf32> -> vector<4x1xf32>
    %cst_179 = arith.constant 0.000000e+00 : f32
    %598 = vector.broadcast %cst_179 : f32 to vector<4x1xf32>
    %599 = arith.maximumf %597, %598 : vector<4x1xf32>
    %cst_180 = arith.constant dense<0.000000e+00> : vector<12x1xf32>
    %600 = tpu.matmul %592, %599, %cst_180 {dimension_numbers = #tpu.dot_dimension_numbers<[1], [0], [0], [1], [0, 0, 1, 1], [], []>} : vector<12x4xf32>, vector<4x1xf32>, vector<12x1xf32> -> vector<12x1xf32>
    %cst_181 = arith.constant 0.166666672 : f32
    %601 = vector.broadcast %cst_181 : f32 to vector<12x1xf32>
    %602 = arith.mulf %600, %601 : vector<12x1xf32>
    %cst_182 = arith.constant 5.000000e-01 : f32
    %603 = vector.broadcast %cst_182 : f32 to vector<12x1xf32>
    %604 = arith.addf %602, %603 : vector<12x1xf32>
    %cst_183 = arith.constant 0.000000e+00 : f32
    %cst_184 = arith.constant 1.000000e+00 : f32
    %605 = vector.broadcast %cst_183 : f32 to vector<12x1xf32>
    %606 = arith.maximumf %605, %604 : vector<12x1xf32>
    %607 = vector.broadcast %cst_184 : f32 to vector<12x1xf32>
    %608 = arith.minimumf %607, %606 : vector<12x1xf32>
    %cst_185 = arith.constant dense<0.000000e+00> : vector<12x64xf32>
    %609 = tpu.matmul %590, %589, %cst_185 {dimension_numbers = #tpu.dot_dimension_numbers<[1], [0], [0], [1], [0, 0, 1, 1], [], []>} : vector<12x12xf32>, vector<12x64xf32>, vector<12x64xf32> -> vector<12x64xf32>
    %610 = arith.negf %609 : vector<12x64xf32>
    %611 = math.exp %610 : vector<12x64xf32>
    %cst_186 = arith.constant 1.000000e+00 : f32
    %612 = vector.broadcast %cst_186 : f32 to vector<12x64xf32>
    %613 = arith.addf %612, %611 : vector<12x64xf32>
    %614 = arith.divf %612, %613 : vector<12x64xf32>
    %615 = vector.broadcast %608 : vector<12x1xf32> to vector<12x64xf32>
    %616 = arith.addf %615, %614 : vector<12x64xf32>
    %617 = arith.mulf %589, %616 : vector<12x64xf32>
    %c0_187 = arith.constant 0 : index
    %c0_188 = arith.constant 0 : index
    %618 = vector.load %arg23[%c0_187, %c0_188] : memref<12x12xf32, #tpu.memory_space<vmem>>, vector<12x12xf32>
    %cst_189 = arith.constant dense<0.000000e+00> : vector<12x64xf32>
    %619 = tpu.matmul %618, %617, %cst_189 {dimension_numbers = #tpu.dot_dimension_numbers<[1], [0], [0], [1], [0, 0, 1, 1], [], []>} : vector<12x12xf32>, vector<12x64xf32>, vector<12x64xf32> -> vector<12x64xf32>
    %c0_190 = arith.constant 0 : index
    %c0_191 = arith.constant 0 : index
    %620 = vector.load %arg24[%c0_190, %c0_191] : memref<12x1xf32, #tpu.memory_space<vmem>>, vector<12x1xf32>
    %621 = vector.broadcast %620 : vector<12x1xf32> to vector<12x64xf32>
    %622 = arith.addf %619, %621 : vector<12x64xf32>
    %c0_192 = arith.constant 0 : index
    %c0_193 = arith.constant 0 : index
    %623 = vector.load %arg25[%c0_192, %c0_193] : memref<12x1xf32, #tpu.memory_space<vmem>>, vector<12x1xf32>
    %c0_194 = arith.constant 0 : index
    %c0_195 = arith.constant 0 : index
    %624 = vector.load %arg26[%c0_194, %c0_195] : memref<12x1xf32, #tpu.memory_space<vmem>>, vector<12x1xf32>
    %c0_196 = arith.constant 0 : index
    %c0_197 = arith.constant 0 : index
    %625 = vector.load %arg27[%c0_196, %c0_197] : memref<12x12xf32, #tpu.memory_space<vmem>>, vector<12x12xf32>
    %cst_198 = arith.constant dense<0.000000e+00> : vector<12xf32>
    %626 = vector.multi_reduction <add>, %622, %cst_198 [1] : vector<12x64xf32> to vector<12xf32>
    %627 = vector.shape_cast %626 : vector<12xf32> to vector<12x1xf32>
    %628 = arith.mulf %622, %622 : vector<12x64xf32>
    %cst_199 = arith.constant dense<0.000000e+00> : vector<12xf32>
    %629 = vector.multi_reduction <add>, %628, %cst_199 [1] : vector<12x64xf32> to vector<12xf32>
    %630 = vector.shape_cast %629 : vector<12xf32> to vector<12x1xf32>
    %cst_200 = arith.constant dense<0.000000e+00> : vector<12x1xf32>
    %631 = tpu.matmul %625, %627, %cst_200 {dimension_numbers = #tpu.dot_dimension_numbers<[1], [0], [0], [1], [0, 0, 1, 1], [], []>} : vector<12x12xf32>, vector<12x1xf32>, vector<12x1xf32> -> vector<12x1xf32>
    %cst_201 = arith.constant 0.00520833349 : f32
    %632 = vector.broadcast %cst_201 : f32 to vector<12x1xf32>
    %633 = arith.mulf %631, %632 : vector<12x1xf32>
    %cst_202 = arith.constant dense<0.000000e+00> : vector<12x1xf32>
    %634 = tpu.matmul %625, %630, %cst_202 {dimension_numbers = #tpu.dot_dimension_numbers<[1], [0], [0], [1], [0, 0, 1, 1], [], []>} : vector<12x12xf32>, vector<12x1xf32>, vector<12x1xf32> -> vector<12x1xf32>
    %cst_203 = arith.constant 0.00520833349 : f32
    %635 = vector.broadcast %cst_203 : f32 to vector<12x1xf32>
    %636 = arith.mulf %634, %635 : vector<12x1xf32>
    %637 = arith.mulf %633, %633 : vector<12x1xf32>
    %638 = arith.subf %636, %637 : vector<12x1xf32>
    %cst_204 = arith.constant 9.99999974E-6 : f32
    %639 = vector.broadcast %cst_204 : f32 to vector<12x1xf32>
    %640 = arith.addf %638, %639 : vector<12x1xf32>
    %641 = math.rsqrt %640 : vector<12x1xf32>
    %642 = arith.mulf %623, %641 : vector<12x1xf32>
    %643 = vector.broadcast %642 : vector<12x1xf32> to vector<12x64xf32>
    %644 = arith.mulf %622, %643 : vector<12x64xf32>
    %645 = arith.mulf %633, %642 : vector<12x1xf32>
    %646 = arith.subf %624, %645 : vector<12x1xf32>
    %647 = vector.broadcast %646 : vector<12x1xf32> to vector<12x64xf32>
    %648 = arith.addf %644, %647 : vector<12x64xf32>
    %cst_205 = arith.constant 3.000000e+00 : f32
    %649 = vector.broadcast %cst_205 : f32 to vector<12x64xf32>
    %650 = arith.addf %648, %649 : vector<12x64xf32>
    %cst_206 = arith.constant 0.000000e+00 : f32
    %cst_207 = arith.constant 6.000000e+00 : f32
    %651 = vector.broadcast %cst_206 : f32 to vector<12x64xf32>
    %652 = arith.maximumf %651, %650 : vector<12x64xf32>
    %653 = vector.broadcast %cst_207 : f32 to vector<12x64xf32>
    %654 = arith.minimumf %653, %652 : vector<12x64xf32>
    %655 = arith.mulf %648, %654 : vector<12x64xf32>
    %cst_208 = arith.constant 0.166666672 : f32
    %656 = vector.broadcast %cst_208 : f32 to vector<12x64xf32>
    %657 = arith.mulf %655, %656 : vector<12x64xf32>
    %cst_209 = arith.constant 0.000000e+00 : f32
    %cst_210 = arith.constant 6.000000e+00 : f32
    %658 = vector.broadcast %cst_209 : f32 to vector<12x64xf32>
    %659 = arith.maximumf %658, %648 : vector<12x64xf32>
    %660 = vector.broadcast %cst_210 : f32 to vector<12x64xf32>
    %661 = arith.minimumf %660, %659 : vector<12x64xf32>
    %cst_211 = arith.constant 0.000000e+00 : f32
    %662 = vector.broadcast %cst_211 : f32 to vector<12x64xf32>
    %663 = arith.minimumf %648, %662 : vector<12x64xf32>
    %cst_212 = arith.constant 0.00999999977 : f32
    %664 = vector.broadcast %cst_212 : f32 to vector<12x64xf32>
    %665 = arith.mulf %664, %663 : vector<12x64xf32>
    %666 = arith.addf %661, %665 : vector<12x64xf32>
    %cst_213 = arith.constant -3.000000e+00 : f32
    %667 = vector.broadcast %cst_213 : f32 to vector<12x64xf32>
    %668 = arith.cmpf oge, %648, %667 : vector<12x64xf32>
    %cst_214 = arith.constant 3.000000e+00 : f32
    %669 = vector.broadcast %cst_214 : f32 to vector<12x64xf32>
    %670 = arith.cmpf ole, %648, %669 : vector<12x64xf32>
    %671 = arith.andi %668, %670 : vector<12x64xi1>
    %672 = arith.select %671, %657, %666 : vector<12x64xi1>, vector<12x64xf32>
    %673 = vector.extract_strided_slice %56 {offsets = [0, 0], sizes = [12, 64], strides = [1, 1]} : vector<36x64xf32> to vector<12x64xf32>
    %c0_215 = arith.constant 0 : index
    %c0_216 = arith.constant 0 : index
    %674 = vector.load %arg7[%c0_215, %c0_216] : memref<12x4xf32, #tpu.memory_space<vmem>>, vector<12x4xf32>
    %c0_217 = arith.constant 0 : index
    %c0_218 = arith.constant 0 : index
    %675 = vector.load %arg8[%c0_217, %c0_218] : memref<12x1xf32, #tpu.memory_space<vmem>>, vector<12x1xf32>
    %cst_219 = arith.constant 0.000000e+00 : f32
    %676 = vector.broadcast %cst_219 : f32 to vector<12x12x12xf32>
    %c0_220 = arith.constant 0 : index
    %c0_221 = arith.constant 0 : index
    %c0_222 = arith.constant 0 : index
    %677 = vector.load %arg37[%c0_220, %c0_221, %c0_222] : memref<12x12x12xf32, #tpu.memory_space<vmem>>, vector<12x12x12xf32>
    tpu.vector_store %arg37[%c0_220, %c0_221, %c0_222], %676 {strides = array<i32>} : memref<12x12x12xf32, #tpu.memory_space<vmem>>, vector<12x12x12xf32>,
    %678 = vector.extract_strided_slice %673 {offsets = [0, 0], sizes = [12, 8], strides = [1, 1]} : vector<12x64xf32> to vector<12x8xf32>
    %c2_223 = arith.constant 2 : index
    %c0_224 = arith.constant 0 : index
    %c2_225 = arith.constant 2 : index
    %679 = vector.load %arg37[%c2_223, %c0_224, %c2_225] : memref<12x12x12xf32, #tpu.memory_space<vmem>>, vector<1x12x8xf32>
    %680 = vector.shape_cast %679 : vector<1x12x8xf32> to vector<12x8xf32>
    %681 = vector.shape_cast %678 : vector<12x8xf32> to vector<1x12x8xf32>
    tpu.vector_store %arg37[%c2_223, %c0_224, %c2_225], %681 {strides = array<i32>} : memref<12x12x12xf32, #tpu.memory_space<vmem>>, vector<1x12x8xf32>,
    %682 = vector.extract_strided_slice %673 {offsets = [0, 8], sizes = [12, 8], strides = [1, 1]} : vector<12x64xf32> to vector<12x8xf32>
    %c3_226 = arith.constant 3 : index
    %c0_227 = arith.constant 0 : index
    %c2_228 = arith.constant 2 : index
    %683 = vector.load %arg37[%c3_226, %c0_227, %c2_228] : memref<12x12x12xf32, #tpu.memory_space<vmem>>, vector<1x12x8xf32>
    %684 = vector.shape_cast %683 : vector<1x12x8xf32> to vector<12x8xf32>
    %685 = vector.shape_cast %682 : vector<12x8xf32> to vector<1x12x8xf32>
    tpu.vector_store %arg37[%c3_226, %c0_227, %c2_228], %685 {strides = array<i32>} : memref<12x12x12xf32, #tpu.memory_space<vmem>>, vector<1x12x8xf32>,
    %686 = vector.extract_strided_slice %673 {offsets = [0, 16], sizes = [12, 8], strides = [1, 1]} : vector<12x64xf32> to vector<12x8xf32>
    %c4_229 = arith.constant 4 : index
    %c0_230 = arith.constant 0 : index
    %c2_231 = arith.constant 2 : index
    %687 = vector.load %arg37[%c4_229, %c0_230, %c2_231] : memref<12x12x12xf32, #tpu.memory_space<vmem>>, vector<1x12x8xf32>
    %688 = vector.shape_cast %687 : vector<1x12x8xf32> to vector<12x8xf32>
    %689 = vector.shape_cast %686 : vector<12x8xf32> to vector<1x12x8xf32>
    tpu.vector_store %arg37[%c4_229, %c0_230, %c2_231], %689 {strides = array<i32>} : memref<12x12x12xf32, #tpu.memory_space<vmem>>, vector<1x12x8xf32>,
    %690 = vector.extract_strided_slice %673 {offsets = [0, 24], sizes = [12, 8], strides = [1, 1]} : vector<12x64xf32> to vector<12x8xf32>
    %c5_232 = arith.constant 5 : index
    %c0_233 = arith.constant 0 : index
    %c2_234 = arith.constant 2 : index
    %691 = vector.load %arg37[%c5_232, %c0_233, %c2_234] : memref<12x12x12xf32, #tpu.memory_space<vmem>>, vector<1x12x8xf32>
    %692 = vector.shape_cast %691 : vector<1x12x8xf32> to vector<12x8xf32>
    %693 = vector.shape_cast %690 : vector<12x8xf32> to vector<1x12x8xf32>
    tpu.vector_store %arg37[%c5_232, %c0_233, %c2_234], %693 {strides = array<i32>} : memref<12x12x12xf32, #tpu.memory_space<vmem>>, vector<1x12x8xf32>,
    %694 = vector.extract_strided_slice %673 {offsets = [0, 32], sizes = [12, 8], strides = [1, 1]} : vector<12x64xf32> to vector<12x8xf32>
    %c6_235 = arith.constant 6 : index
    %c0_236 = arith.constant 0 : index
    %c2_237 = arith.constant 2 : index
    %695 = vector.load %arg37[%c6_235, %c0_236, %c2_237] : memref<12x12x12xf32, #tpu.memory_space<vmem>>, vector<1x12x8xf32>
    %696 = vector.shape_cast %695 : vector<1x12x8xf32> to vector<12x8xf32>
    %697 = vector.shape_cast %694 : vector<12x8xf32> to vector<1x12x8xf32>
    tpu.vector_store %arg37[%c6_235, %c0_236, %c2_237], %697 {strides = array<i32>} : memref<12x12x12xf32, #tpu.memory_space<vmem>>, vector<1x12x8xf32>,
    %698 = vector.extract_strided_slice %673 {offsets = [0, 40], sizes = [12, 8], strides = [1, 1]} : vector<12x64xf32> to vector<12x8xf32>
    %c7_238 = arith.constant 7 : index
    %c0_239 = arith.constant 0 : index
    %c2_240 = arith.constant 2 : index
    %699 = vector.load %arg37[%c7_238, %c0_239, %c2_240] : memref<12x12x12xf32, #tpu.memory_space<vmem>>, vector<1x12x8xf32>
    %700 = vector.shape_cast %699 : vector<1x12x8xf32> to vector<12x8xf32>
    %701 = vector.shape_cast %698 : vector<12x8xf32> to vector<1x12x8xf32>
    tpu.vector_store %arg37[%c7_238, %c0_239, %c2_240], %701 {strides = array<i32>} : memref<12x12x12xf32, #tpu.memory_space<vmem>>, vector<1x12x8xf32>,
    %702 = vector.extract_strided_slice %673 {offsets = [0, 48], sizes = [12, 8], strides = [1, 1]} : vector<12x64xf32> to vector<12x8xf32>
    %c8_241 = arith.constant 8 : index
    %c0_242 = arith.constant 0 : index
    %c2_243 = arith.constant 2 : index
    %703 = vector.load %arg37[%c8_241, %c0_242, %c2_243] : memref<12x12x12xf32, #tpu.memory_space<vmem>>, vector<1x12x8xf32>
    %704 = vector.shape_cast %703 : vector<1x12x8xf32> to vector<12x8xf32>
    %705 = vector.shape_cast %702 : vector<12x8xf32> to vector<1x12x8xf32>
    tpu.vector_store %arg37[%c8_241, %c0_242, %c2_243], %705 {strides = array<i32>} : memref<12x12x12xf32, #tpu.memory_space<vmem>>, vector<1x12x8xf32>,
    %706 = vector.extract_strided_slice %673 {offsets = [0, 56], sizes = [12, 8], strides = [1, 1]} : vector<12x64xf32> to vector<12x8xf32>
    %c9_244 = arith.constant 9 : index
    %c0_245 = arith.constant 0 : index
    %c2_246 = arith.constant 2 : index
    %707 = vector.load %arg37[%c9_244, %c0_245, %c2_246] : memref<12x12x12xf32, #tpu.memory_space<vmem>>, vector<1x12x8xf32>
    %708 = vector.shape_cast %707 : vector<1x12x8xf32> to vector<12x8xf32>
    %709 = vector.shape_cast %706 : vector<12x8xf32> to vector<1x12x8xf32>
    tpu.vector_store %arg37[%c9_244, %c0_245, %c2_246], %709 {strides = array<i32>} : memref<12x12x12xf32, #tpu.memory_space<vmem>>, vector<1x12x8xf32>,
    %cst_247 = arith.constant 0.000000e+00 : f32
    %710 = vector.broadcast %cst_247 : f32 to vector<12x9xf32>
    %c0_248 = arith.constant 0 : index
    %c0_249 = arith.constant 0 : index
    %c0_250 = arith.constant 0 : index
    %711 = vector.load %arg37[%c0_248, %c0_249, %c0_250] : memref<12x12x12xf32, #tpu.memory_space<vmem>>, vector<1x12x12xf32>
    %712 = vector.shape_cast %711 : vector<1x12x12xf32> to vector<12x12xf32>
    %713 = vector.extract_strided_slice %674 {offsets = [0, 0], sizes = [12, 1], strides = [1, 1]} : vector<12x4xf32> to vector<12x1xf32>
    %714 = vector.extract_strided_slice %712 {offsets = [0, 0], sizes = [12, 9], strides = [1, 1]} : vector<12x12xf32> to vector<12x9xf32>
    %715 = vector.broadcast %713 : vector<12x1xf32> to vector<12x9xf32>
    %716 = arith.mulf %715, %714 : vector<12x9xf32>
    %717 = arith.addf %710, %716 : vector<12x9xf32>
    %718 = vector.extract_strided_slice %674 {offsets = [0, 1], sizes = [12, 1], strides = [1, 1]} : vector<12x4xf32> to vector<12x1xf32>
    %719 = vector.extract_strided_slice %712 {offsets = [0, 3], sizes = [12, 9], strides = [1, 1]} : vector<12x12xf32> to vector<12x9xf32>
    %720 = vector.broadcast %718 : vector<12x1xf32> to vector<12x9xf32>
    %721 = arith.mulf %720, %719 : vector<12x9xf32>
    %722 = arith.addf %717, %721 : vector<12x9xf32>
    %c3_251 = arith.constant 3 : index
    %c0_252 = arith.constant 0 : index
    %c0_253 = arith.constant 0 : index
    %723 = vector.load %arg37[%c3_251, %c0_252, %c0_253] : memref<12x12x12xf32, #tpu.memory_space<vmem>>, vector<1x12x12xf32>
    %724 = vector.shape_cast %723 : vector<1x12x12xf32> to vector<12x12xf32>
    %725 = vector.extract_strided_slice %674 {offsets = [0, 2], sizes = [12, 1], strides = [1, 1]} : vector<12x4xf32> to vector<12x1xf32>
    %726 = vector.extract_strided_slice %724 {offsets = [0, 0], sizes = [12, 9], strides = [1, 1]} : vector<12x12xf32> to vector<12x9xf32>
    %727 = vector.broadcast %725 : vector<12x1xf32> to vector<12x9xf32>
    %728 = arith.mulf %727, %726 : vector<12x9xf32>
    %729 = arith.addf %722, %728 : vector<12x9xf32>
    %730 = vector.extract_strided_slice %674 {offsets = [0, 3], sizes = [12, 1], strides = [1, 1]} : vector<12x4xf32> to vector<12x1xf32>
    %731 = vector.extract_strided_slice %724 {offsets = [0, 3], sizes = [12, 9], strides = [1, 1]} : vector<12x12xf32> to vector<12x9xf32>
    %732 = vector.broadcast %730 : vector<12x1xf32> to vector<12x9xf32>
    %733 = arith.mulf %732, %731 : vector<12x9xf32>
    %734 = arith.addf %729, %733 : vector<12x9xf32>
    %735 = vector.broadcast %675 : vector<12x1xf32> to vector<12x9xf32>
    %736 = arith.addf %734, %735 : vector<12x9xf32>
    %c0_254 = arith.constant 0 : index
    %c0_255 = arith.constant 0 : index
    %737 = vector.load %arg41[%c0_254, %c0_255] : memref<36x81xf32, #tpu.memory_space<vmem>>, vector<12x9xf32>
    tpu.vector_store %arg41[%c0_254, %c0_255], %736 {strides = array<i32>} : memref<36x81xf32, #tpu.memory_space<vmem>>, vector<12x9xf32>,
    %cst_256 = arith.constant 0.000000e+00 : f32
    %738 = vector.broadcast %cst_256 : f32 to vector<12x9xf32>
    %c1_257 = arith.constant 1 : index
    %c0_258 = arith.constant 0 : index
    %c0_259 = arith.constant 0 : index
    %739 = vector.load %arg37[%c1_257, %c0_258, %c0_259] : memref<12x12x12xf32, #tpu.memory_space<vmem>>, vector<1x12x12xf32>
    %740 = vector.shape_cast %739 : vector<1x12x12xf32> to vector<12x12xf32>
    %741 = vector.extract_strided_slice %674 {offsets = [0, 0], sizes = [12, 1], strides = [1, 1]} : vector<12x4xf32> to vector<12x1xf32>
    %742 = vector.extract_strided_slice %740 {offsets = [0, 0], sizes = [12, 9], strides = [1, 1]} : vector<12x12xf32> to vector<12x9xf32>
    %743 = vector.broadcast %741 : vector<12x1xf32> to vector<12x9xf32>
    %744 = arith.mulf %743, %742 : vector<12x9xf32>
    %745 = arith.addf %738, %744 : vector<12x9xf32>
    %746 = vector.extract_strided_slice %674 {offsets = [0, 1], sizes = [12, 1], strides = [1, 1]} : vector<12x4xf32> to vector<12x1xf32>
    %747 = vector.extract_strided_slice %740 {offsets = [0, 3], sizes = [12, 9], strides = [1, 1]} : vector<12x12xf32> to vector<12x9xf32>
    %748 = vector.broadcast %746 : vector<12x1xf32> to vector<12x9xf32>
    %749 = arith.mulf %748, %747 : vector<12x9xf32>
    %750 = arith.addf %745, %749 : vector<12x9xf32>
    %c4_260 = arith.constant 4 : index
    %c0_261 = arith.constant 0 : index
    %c0_262 = arith.constant 0 : index
    %751 = vector.load %arg37[%c4_260, %c0_261, %c0_262] : memref<12x12x12xf32, #tpu.memory_space<vmem>>, vector<1x12x12xf32>
    %752 = vector.shape_cast %751 : vector<1x12x12xf32> to vector<12x12xf32>
    %753 = vector.extract_strided_slice %674 {offsets = [0, 2], sizes = [12, 1], strides = [1, 1]} : vector<12x4xf32> to vector<12x1xf32>
    %754 = vector.extract_strided_slice %752 {offsets = [0, 0], sizes = [12, 9], strides = [1, 1]} : vector<12x12xf32> to vector<12x9xf32>
    %755 = vector.broadcast %753 : vector<12x1xf32> to vector<12x9xf32>
    %756 = arith.mulf %755, %754 : vector<12x9xf32>
    %757 = arith.addf %750, %756 : vector<12x9xf32>
    %758 = vector.extract_strided_slice %674 {offsets = [0, 3], sizes = [12, 1], strides = [1, 1]} : vector<12x4xf32> to vector<12x1xf32>
    %759 = vector.extract_strided_slice %752 {offsets = [0, 3], sizes = [12, 9], strides = [1, 1]} : vector<12x12xf32> to vector<12x9xf32>
    %760 = vector.broadcast %758 : vector<12x1xf32> to vector<12x9xf32>
    %761 = arith.mulf %760, %759 : vector<12x9xf32>
    %762 = arith.addf %757, %761 : vector<12x9xf32>
    %763 = vector.broadcast %675 : vector<12x1xf32> to vector<12x9xf32>
    %764 = arith.addf %762, %763 : vector<12x9xf32>
    %c0_263 = arith.constant 0 : index
    %c9_264 = arith.constant 9 : index
    %765 = vector.load %arg41[%c0_263, %c9_264] : memref<36x81xf32, #tpu.memory_space<vmem>>, vector<12x9xf32>
    tpu.vector_store %arg41[%c0_263, %c9_264], %764 {strides = array<i32>} : memref<36x81xf32, #tpu.memory_space<vmem>>, vector<12x9xf32>,
    %cst_265 = arith.constant 0.000000e+00 : f32
    %766 = vector.broadcast %cst_265 : f32 to vector<12x9xf32>
    %c2_266 = arith.constant 2 : index
    %c0_267 = arith.constant 0 : index
    %c0_268 = arith.constant 0 : index
    %767 = vector.load %arg37[%c2_266, %c0_267, %c0_268] : memref<12x12x12xf32, #tpu.memory_space<vmem>>, vector<1x12x12xf32>
    %768 = vector.shape_cast %767 : vector<1x12x12xf32> to vector<12x12xf32>
    %769 = vector.extract_strided_slice %674 {offsets = [0, 0], sizes = [12, 1], strides = [1, 1]} : vector<12x4xf32> to vector<12x1xf32>
    %770 = vector.extract_strided_slice %768 {offsets = [0, 0], sizes = [12, 9], strides = [1, 1]} : vector<12x12xf32> to vector<12x9xf32>
    %771 = vector.broadcast %769 : vector<12x1xf32> to vector<12x9xf32>
    %772 = arith.mulf %771, %770 : vector<12x9xf32>
    %773 = arith.addf %766, %772 : vector<12x9xf32>
    %774 = vector.extract_strided_slice %674 {offsets = [0, 1], sizes = [12, 1], strides = [1, 1]} : vector<12x4xf32> to vector<12x1xf32>
    %775 = vector.extract_strided_slice %768 {offsets = [0, 3], sizes = [12, 9], strides = [1, 1]} : vector<12x12xf32> to vector<12x9xf32>
    %776 = vector.broadcast %774 : vector<12x1xf32> to vector<12x9xf32>
    %777 = arith.mulf %776, %775 : vector<12x9xf32>
    %778 = arith.addf %773, %777 : vector<12x9xf32>
    %c5_269 = arith.constant 5 : index
    %c0_270 = arith.constant 0 : index
    %c0_271 = arith.constant 0 : index
    %779 = vector.load %arg37[%c5_269, %c0_270, %c0_271] : memref<12x12x12xf32, #tpu.memory_space<vmem>>, vector<1x12x12xf32>
    %780 = vector.shape_cast %779 : vector<1x12x12xf32> to vector<12x12xf32>
    %781 = vector.extract_strided_slice %674 {offsets = [0, 2], sizes = [12, 1], strides = [1, 1]} : vector<12x4xf32> to vector<12x1xf32>
    %782 = vector.extract_strided_slice %780 {offsets = [0, 0], sizes = [12, 9], strides = [1, 1]} : vector<12x12xf32> to vector<12x9xf32>
    %783 = vector.broadcast %781 : vector<12x1xf32> to vector<12x9xf32>
    %784 = arith.mulf %783, %782 : vector<12x9xf32>
    %785 = arith.addf %778, %784 : vector<12x9xf32>
    %786 = vector.extract_strided_slice %674 {offsets = [0, 3], sizes = [12, 1], strides = [1, 1]} : vector<12x4xf32> to vector<12x1xf32>
    %787 = vector.extract_strided_slice %780 {offsets = [0, 3], sizes = [12, 9], strides = [1, 1]} : vector<12x12xf32> to vector<12x9xf32>
    %788 = vector.broadcast %786 : vector<12x1xf32> to vector<12x9xf32>
    %789 = arith.mulf %788, %787 : vector<12x9xf32>
    %790 = arith.addf %785, %789 : vector<12x9xf32>
    %791 = vector.broadcast %675 : vector<12x1xf32> to vector<12x9xf32>
    %792 = arith.addf %790, %791 : vector<12x9xf32>
    %c0_272 = arith.constant 0 : index
    %c18 = arith.constant 18 : index
    %793 = vector.load %arg41[%c0_272, %c18] : memref<36x81xf32, #tpu.memory_space<vmem>>, vector<12x9xf32>
    tpu.vector_store %arg41[%c0_272, %c18], %792 {strides = array<i32>} : memref<36x81xf32, #tpu.memory_space<vmem>>, vector<12x9xf32>,
    %cst_273 = arith.constant 0.000000e+00 : f32
    %794 = vector.broadcast %cst_273 : f32 to vector<12x9xf32>
    %c3_274 = arith.constant 3 : index
    %c0_275 = arith.constant 0 : index
    %c0_276 = arith.constant 0 : index
    %795 = vector.load %arg37[%c3_274, %c0_275, %c0_276] : memref<12x12x12xf32, #tpu.memory_space<vmem>>, vector<1x12x12xf32>
    %796 = vector.shape_cast %795 : vector<1x12x12xf32> to vector<12x12xf32>
    %797 = vector.extract_strided_slice %674 {offsets = [0, 0], sizes = [12, 1], strides = [1, 1]} : vector<12x4xf32> to vector<12x1xf32>
    %798 = vector.extract_strided_slice %796 {offsets = [0, 0], sizes = [12, 9], strides = [1, 1]} : vector<12x12xf32> to vector<12x9xf32>
    %799 = vector.broadcast %797 : vector<12x1xf32> to vector<12x9xf32>
    %800 = arith.mulf %799, %798 : vector<12x9xf32>
    %801 = arith.addf %794, %800 : vector<12x9xf32>
    %802 = vector.extract_strided_slice %674 {offsets = [0, 1], sizes = [12, 1], strides = [1, 1]} : vector<12x4xf32> to vector<12x1xf32>
    %803 = vector.extract_strided_slice %796 {offsets = [0, 3], sizes = [12, 9], strides = [1, 1]} : vector<12x12xf32> to vector<12x9xf32>
    %804 = vector.broadcast %802 : vector<12x1xf32> to vector<12x9xf32>
    %805 = arith.mulf %804, %803 : vector<12x9xf32>
    %806 = arith.addf %801, %805 : vector<12x9xf32>
    %c6_277 = arith.constant 6 : index
    %c0_278 = arith.constant 0 : index
    %c0_279 = arith.constant 0 : index
    %807 = vector.load %arg37[%c6_277, %c0_278, %c0_279] : memref<12x12x12xf32, #tpu.memory_space<vmem>>, vector<1x12x12xf32>
    %808 = vector.shape_cast %807 : vector<1x12x12xf32> to vector<12x12xf32>
    %809 = vector.extract_strided_slice %674 {offsets = [0, 2], sizes = [12, 1], strides = [1, 1]} : vector<12x4xf32> to vector<12x1xf32>
    %810 = vector.extract_strided_slice %808 {offsets = [0, 0], sizes = [12, 9], strides = [1, 1]} : vector<12x12xf32> to vector<12x9xf32>
    %811 = vector.broadcast %809 : vector<12x1xf32> to vector<12x9xf32>
    %812 = arith.mulf %811, %810 : vector<12x9xf32>
    %813 = arith.addf %806, %812 : vector<12x9xf32>
    %814 = vector.extract_strided_slice %674 {offsets = [0, 3], sizes = [12, 1], strides = [1, 1]} : vector<12x4xf32> to vector<12x1xf32>
    %815 = vector.extract_strided_slice %808 {offsets = [0, 3], sizes = [12, 9], strides = [1, 1]} : vector<12x12xf32> to vector<12x9xf32>
    %816 = vector.broadcast %814 : vector<12x1xf32> to vector<12x9xf32>
    %817 = arith.mulf %816, %815 : vector<12x9xf32>
    %818 = arith.addf %813, %817 : vector<12x9xf32>
    %819 = vector.broadcast %675 : vector<12x1xf32> to vector<12x9xf32>
    %820 = arith.addf %818, %819 : vector<12x9xf32>
    %c0_280 = arith.constant 0 : index
    %c27 = arith.constant 27 : index
    %821 = vector.load %arg41[%c0_280, %c27] : memref<36x81xf32, #tpu.memory_space<vmem>>, vector<12x9xf32>
    tpu.vector_store %arg41[%c0_280, %c27], %820 {strides = array<i32>} : memref<36x81xf32, #tpu.memory_space<vmem>>, vector<12x9xf32>,
    %cst_281 = arith.constant 0.000000e+00 : f32
    %822 = vector.broadcast %cst_281 : f32 to vector<12x9xf32>
    %c4_282 = arith.constant 4 : index
    %c0_283 = arith.constant 0 : index
    %c0_284 = arith.constant 0 : index
    %823 = vector.load %arg37[%c4_282, %c0_283, %c0_284] : memref<12x12x12xf32, #tpu.memory_space<vmem>>, vector<1x12x12xf32>
    %824 = vector.shape_cast %823 : vector<1x12x12xf32> to vector<12x12xf32>
    %825 = vector.extract_strided_slice %674 {offsets = [0, 0], sizes = [12, 1], strides = [1, 1]} : vector<12x4xf32> to vector<12x1xf32>
    %826 = vector.extract_strided_slice %824 {offsets = [0, 0], sizes = [12, 9], strides = [1, 1]} : vector<12x12xf32> to vector<12x9xf32>
    %827 = vector.broadcast %825 : vector<12x1xf32> to vector<12x9xf32>
    %828 = arith.mulf %827, %826 : vector<12x9xf32>
    %829 = arith.addf %822, %828 : vector<12x9xf32>
    %830 = vector.extract_strided_slice %674 {offsets = [0, 1], sizes = [12, 1], strides = [1, 1]} : vector<12x4xf32> to vector<12x1xf32>
    %831 = vector.extract_strided_slice %824 {offsets = [0, 3], sizes = [12, 9], strides = [1, 1]} : vector<12x12xf32> to vector<12x9xf32>
    %832 = vector.broadcast %830 : vector<12x1xf32> to vector<12x9xf32>
    %833 = arith.mulf %832, %831 : vector<12x9xf32>
    %834 = arith.addf %829, %833 : vector<12x9xf32>
    %c7_285 = arith.constant 7 : index
    %c0_286 = arith.constant 0 : index
    %c0_287 = arith.constant 0 : index
    %835 = vector.load %arg37[%c7_285, %c0_286, %c0_287] : memref<12x12x12xf32, #tpu.memory_space<vmem>>, vector<1x12x12xf32>
    %836 = vector.shape_cast %835 : vector<1x12x12xf32> to vector<12x12xf32>
    %837 = vector.extract_strided_slice %674 {offsets = [0, 2], sizes = [12, 1], strides = [1, 1]} : vector<12x4xf32> to vector<12x1xf32>
    %838 = vector.extract_strided_slice %836 {offsets = [0, 0], sizes = [12, 9], strides = [1, 1]} : vector<12x12xf32> to vector<12x9xf32>
    %839 = vector.broadcast %837 : vector<12x1xf32> to vector<12x9xf32>
    %840 = arith.mulf %839, %838 : vector<12x9xf32>
    %841 = arith.addf %834, %840 : vector<12x9xf32>
    %842 = vector.extract_strided_slice %674 {offsets = [0, 3], sizes = [12, 1], strides = [1, 1]} : vector<12x4xf32> to vector<12x1xf32>
    %843 = vector.extract_strided_slice %836 {offsets = [0, 3], sizes = [12, 9], strides = [1, 1]} : vector<12x12xf32> to vector<12x9xf32>
    %844 = vector.broadcast %842 : vector<12x1xf32> to vector<12x9xf32>
    %845 = arith.mulf %844, %843 : vector<12x9xf32>
    %846 = arith.addf %841, %845 : vector<12x9xf32>
    %847 = vector.broadcast %675 : vector<12x1xf32> to vector<12x9xf32>
    %848 = arith.addf %846, %847 : vector<12x9xf32>
    %c0_288 = arith.constant 0 : index
    %c36 = arith.constant 36 : index
    %849 = vector.load %arg41[%c0_288, %c36] : memref<36x81xf32, #tpu.memory_space<vmem>>, vector<12x9xf32>
    tpu.vector_store %arg41[%c0_288, %c36], %848 {strides = array<i32>} : memref<36x81xf32, #tpu.memory_space<vmem>>, vector<12x9xf32>,
    %cst_289 = arith.constant 0.000000e+00 : f32
    %850 = vector.broadcast %cst_289 : f32 to vector<12x9xf32>
    %c5_290 = arith.constant 5 : index
    %c0_291 = arith.constant 0 : index
    %c0_292 = arith.constant 0 : index
    %851 = vector.load %arg37[%c5_290, %c0_291, %c0_292] : memref<12x12x12xf32, #tpu.memory_space<vmem>>, vector<1x12x12xf32>
    %852 = vector.shape_cast %851 : vector<1x12x12xf32> to vector<12x12xf32>
    %853 = vector.extract_strided_slice %674 {offsets = [0, 0], sizes = [12, 1], strides = [1, 1]} : vector<12x4xf32> to vector<12x1xf32>
    %854 = vector.extract_strided_slice %852 {offsets = [0, 0], sizes = [12, 9], strides = [1, 1]} : vector<12x12xf32> to vector<12x9xf32>
    %855 = vector.broadcast %853 : vector<12x1xf32> to vector<12x9xf32>
    %856 = arith.mulf %855, %854 : vector<12x9xf32>
    %857 = arith.addf %850, %856 : vector<12x9xf32>
    %858 = vector.extract_strided_slice %674 {offsets = [0, 1], sizes = [12, 1], strides = [1, 1]} : vector<12x4xf32> to vector<12x1xf32>
    %859 = vector.extract_strided_slice %852 {offsets = [0, 3], sizes = [12, 9], strides = [1, 1]} : vector<12x12xf32> to vector<12x9xf32>
    %860 = vector.broadcast %858 : vector<12x1xf32> to vector<12x9xf32>
    %861 = arith.mulf %860, %859 : vector<12x9xf32>
    %862 = arith.addf %857, %861 : vector<12x9xf32>
    %c8_293 = arith.constant 8 : index
    %c0_294 = arith.constant 0 : index
    %c0_295 = arith.constant 0 : index
    %863 = vector.load %arg37[%c8_293, %c0_294, %c0_295] : memref<12x12x12xf32, #tpu.memory_space<vmem>>, vector<1x12x12xf32>
    %864 = vector.shape_cast %863 : vector<1x12x12xf32> to vector<12x12xf32>
    %865 = vector.extract_strided_slice %674 {offsets = [0, 2], sizes = [12, 1], strides = [1, 1]} : vector<12x4xf32> to vector<12x1xf32>
    %866 = vector.extract_strided_slice %864 {offsets = [0, 0], sizes = [12, 9], strides = [1, 1]} : vector<12x12xf32> to vector<12x9xf32>
    %867 = vector.broadcast %865 : vector<12x1xf32> to vector<12x9xf32>
    %868 = arith.mulf %867, %866 : vector<12x9xf32>
    %869 = arith.addf %862, %868 : vector<12x9xf32>
    %870 = vector.extract_strided_slice %674 {offsets = [0, 3], sizes = [12, 1], strides = [1, 1]} : vector<12x4xf32> to vector<12x1xf32>
    %871 = vector.extract_strided_slice %864 {offsets = [0, 3], sizes = [12, 9], strides = [1, 1]} : vector<12x12xf32> to vector<12x9xf32>
    %872 = vector.broadcast %870 : vector<12x1xf32> to vector<12x9xf32>
    %873 = arith.mulf %872, %871 : vector<12x9xf32>
    %874 = arith.addf %869, %873 : vector<12x9xf32>
    %875 = vector.broadcast %675 : vector<12x1xf32> to vector<12x9xf32>
    %876 = arith.addf %874, %875 : vector<12x9xf32>
    %c0_296 = arith.constant 0 : index
    %c45 = arith.constant 45 : index
    %877 = vector.load %arg41[%c0_296, %c45] : memref<36x81xf32, #tpu.memory_space<vmem>>, vector<12x9xf32>
    tpu.vector_store %arg41[%c0_296, %c45], %876 {strides = array<i32>} : memref<36x81xf32, #tpu.memory_space<vmem>>, vector<12x9xf32>,
    %cst_297 = arith.constant 0.000000e+00 : f32
    %878 = vector.broadcast %cst_297 : f32 to vector<12x9xf32>
    %c6_298 = arith.constant 6 : index
    %c0_299 = arith.constant 0 : index
    %c0_300 = arith.constant 0 : index
    %879 = vector.load %arg37[%c6_298, %c0_299, %c0_300] : memref<12x12x12xf32, #tpu.memory_space<vmem>>, vector<1x12x12xf32>
    %880 = vector.shape_cast %879 : vector<1x12x12xf32> to vector<12x12xf32>
    %881 = vector.extract_strided_slice %674 {offsets = [0, 0], sizes = [12, 1], strides = [1, 1]} : vector<12x4xf32> to vector<12x1xf32>
    %882 = vector.extract_strided_slice %880 {offsets = [0, 0], sizes = [12, 9], strides = [1, 1]} : vector<12x12xf32> to vector<12x9xf32>
    %883 = vector.broadcast %881 : vector<12x1xf32> to vector<12x9xf32>
    %884 = arith.mulf %883, %882 : vector<12x9xf32>
    %885 = arith.addf %878, %884 : vector<12x9xf32>
    %886 = vector.extract_strided_slice %674 {offsets = [0, 1], sizes = [12, 1], strides = [1, 1]} : vector<12x4xf32> to vector<12x1xf32>
    %887 = vector.extract_strided_slice %880 {offsets = [0, 3], sizes = [12, 9], strides = [1, 1]} : vector<12x12xf32> to vector<12x9xf32>
    %888 = vector.broadcast %886 : vector<12x1xf32> to vector<12x9xf32>
    %889 = arith.mulf %888, %887 : vector<12x9xf32>
    %890 = arith.addf %885, %889 : vector<12x9xf32>
    %c9_301 = arith.constant 9 : index
    %c0_302 = arith.constant 0 : index
    %c0_303 = arith.constant 0 : index
    %891 = vector.load %arg37[%c9_301, %c0_302, %c0_303] : memref<12x12x12xf32, #tpu.memory_space<vmem>>, vector<1x12x12xf32>
    %892 = vector.shape_cast %891 : vector<1x12x12xf32> to vector<12x12xf32>
    %893 = vector.extract_strided_slice %674 {offsets = [0, 2], sizes = [12, 1], strides = [1, 1]} : vector<12x4xf32> to vector<12x1xf32>
    %894 = vector.extract_strided_slice %892 {offsets = [0, 0], sizes = [12, 9], strides = [1, 1]} : vector<12x12xf32> to vector<12x9xf32>
    %895 = vector.broadcast %893 : vector<12x1xf32> to vector<12x9xf32>
    %896 = arith.mulf %895, %894 : vector<12x9xf32>
    %897 = arith.addf %890, %896 : vector<12x9xf32>
    %898 = vector.extract_strided_slice %674 {offsets = [0, 3], sizes = [12, 1], strides = [1, 1]} : vector<12x4xf32> to vector<12x1xf32>
    %899 = vector.extract_strided_slice %892 {offsets = [0, 3], sizes = [12, 9], strides = [1, 1]} : vector<12x12xf32> to vector<12x9xf32>
    %900 = vector.broadcast %898 : vector<12x1xf32> to vector<12x9xf32>
    %901 = arith.mulf %900, %899 : vector<12x9xf32>
    %902 = arith.addf %897, %901 : vector<12x9xf32>
    %903 = vector.broadcast %675 : vector<12x1xf32> to vector<12x9xf32>
    %904 = arith.addf %902, %903 : vector<12x9xf32>
    %c0_304 = arith.constant 0 : index
    %c54 = arith.constant 54 : index
    %905 = vector.load %arg41[%c0_304, %c54] : memref<36x81xf32, #tpu.memory_space<vmem>>, vector<12x9xf32>
    tpu.vector_store %arg41[%c0_304, %c54], %904 {strides = array<i32>} : memref<36x81xf32, #tpu.memory_space<vmem>>, vector<12x9xf32>,
    %cst_305 = arith.constant 0.000000e+00 : f32
    %906 = vector.broadcast %cst_305 : f32 to vector<12x9xf32>
    %c7_306 = arith.constant 7 : index
    %c0_307 = arith.constant 0 : index
    %c0_308 = arith.constant 0 : index
    %907 = vector.load %arg37[%c7_306, %c0_307, %c0_308] : memref<12x12x12xf32, #tpu.memory_space<vmem>>, vector<1x12x12xf32>
    %908 = vector.shape_cast %907 : vector<1x12x12xf32> to vector<12x12xf32>
    %909 = vector.extract_strided_slice %674 {offsets = [0, 0], sizes = [12, 1], strides = [1, 1]} : vector<12x4xf32> to vector<12x1xf32>
    %910 = vector.extract_strided_slice %908 {offsets = [0, 0], sizes = [12, 9], strides = [1, 1]} : vector<12x12xf32> to vector<12x9xf32>
    %911 = vector.broadcast %909 : vector<12x1xf32> to vector<12x9xf32>
    %912 = arith.mulf %911, %910 : vector<12x9xf32>
    %913 = arith.addf %906, %912 : vector<12x9xf32>
    %914 = vector.extract_strided_slice %674 {offsets = [0, 1], sizes = [12, 1], strides = [1, 1]} : vector<12x4xf32> to vector<12x1xf32>
    %915 = vector.extract_strided_slice %908 {offsets = [0, 3], sizes = [12, 9], strides = [1, 1]} : vector<12x12xf32> to vector<12x9xf32>
    %916 = vector.broadcast %914 : vector<12x1xf32> to vector<12x9xf32>
    %917 = arith.mulf %916, %915 : vector<12x9xf32>
    %918 = arith.addf %913, %917 : vector<12x9xf32>
    %c10_309 = arith.constant 10 : index
    %c0_310 = arith.constant 0 : index
    %c0_311 = arith.constant 0 : index
    %919 = vector.load %arg37[%c10_309, %c0_310, %c0_311] : memref<12x12x12xf32, #tpu.memory_space<vmem>>, vector<1x12x12xf32>
    %920 = vector.shape_cast %919 : vector<1x12x12xf32> to vector<12x12xf32>
    %921 = vector.extract_strided_slice %674 {offsets = [0, 2], sizes = [12, 1], strides = [1, 1]} : vector<12x4xf32> to vector<12x1xf32>
    %922 = vector.extract_strided_slice %920 {offsets = [0, 0], sizes = [12, 9], strides = [1, 1]} : vector<12x12xf32> to vector<12x9xf32>
    %923 = vector.broadcast %921 : vector<12x1xf32> to vector<12x9xf32>
    %924 = arith.mulf %923, %922 : vector<12x9xf32>
    %925 = arith.addf %918, %924 : vector<12x9xf32>
    %926 = vector.extract_strided_slice %674 {offsets = [0, 3], sizes = [12, 1], strides = [1, 1]} : vector<12x4xf32> to vector<12x1xf32>
    %927 = vector.extract_strided_slice %920 {offsets = [0, 3], sizes = [12, 9], strides = [1, 1]} : vector<12x12xf32> to vector<12x9xf32>
    %928 = vector.broadcast %926 : vector<12x1xf32> to vector<12x9xf32>
    %929 = arith.mulf %928, %927 : vector<12x9xf32>
    %930 = arith.addf %925, %929 : vector<12x9xf32>
    %931 = vector.broadcast %675 : vector<12x1xf32> to vector<12x9xf32>
    %932 = arith.addf %930, %931 : vector<12x9xf32>
    %c0_312 = arith.constant 0 : index
    %c63 = arith.constant 63 : index
    %933 = vector.load %arg41[%c0_312, %c63] : memref<36x81xf32, #tpu.memory_space<vmem>>, vector<12x9xf32>
    tpu.vector_store %arg41[%c0_312, %c63], %932 {strides = array<i32>} : memref<36x81xf32, #tpu.memory_space<vmem>>, vector<12x9xf32>,
    %cst_313 = arith.constant 0.000000e+00 : f32
    %934 = vector.broadcast %cst_313 : f32 to vector<12x9xf32>
    %c8_314 = arith.constant 8 : index
    %c0_315 = arith.constant 0 : index
    %c0_316 = arith.constant 0 : index
    %935 = vector.load %arg37[%c8_314, %c0_315, %c0_316] : memref<12x12x12xf32, #tpu.memory_space<vmem>>, vector<1x12x12xf32>
    %936 = vector.shape_cast %935 : vector<1x12x12xf32> to vector<12x12xf32>
    %937 = vector.extract_strided_slice %674 {offsets = [0, 0], sizes = [12, 1], strides = [1, 1]} : vector<12x4xf32> to vector<12x1xf32>
    %938 = vector.extract_strided_slice %936 {offsets = [0, 0], sizes = [12, 9], strides = [1, 1]} : vector<12x12xf32> to vector<12x9xf32>
    %939 = vector.broadcast %937 : vector<12x1xf32> to vector<12x9xf32>
    %940 = arith.mulf %939, %938 : vector<12x9xf32>
    %941 = arith.addf %934, %940 : vector<12x9xf32>
    %942 = vector.extract_strided_slice %674 {offsets = [0, 1], sizes = [12, 1], strides = [1, 1]} : vector<12x4xf32> to vector<12x1xf32>
    %943 = vector.extract_strided_slice %936 {offsets = [0, 3], sizes = [12, 9], strides = [1, 1]} : vector<12x12xf32> to vector<12x9xf32>
    %944 = vector.broadcast %942 : vector<12x1xf32> to vector<12x9xf32>
    %945 = arith.mulf %944, %943 : vector<12x9xf32>
    %946 = arith.addf %941, %945 : vector<12x9xf32>
    %c11_317 = arith.constant 11 : index
    %c0_318 = arith.constant 0 : index
    %c0_319 = arith.constant 0 : index
    %947 = vector.load %arg37[%c11_317, %c0_318, %c0_319] : memref<12x12x12xf32, #tpu.memory_space<vmem>>, vector<1x12x12xf32>
    %948 = vector.shape_cast %947 : vector<1x12x12xf32> to vector<12x12xf32>
    %949 = vector.extract_strided_slice %674 {offsets = [0, 2], sizes = [12, 1], strides = [1, 1]} : vector<12x4xf32> to vector<12x1xf32>
    %950 = vector.extract_strided_slice %948 {offsets = [0, 0], sizes = [12, 9], strides = [1, 1]} : vector<12x12xf32> to vector<12x9xf32>
    %951 = vector.broadcast %949 : vector<12x1xf32> to vector<12x9xf32>
    %952 = arith.mulf %951, %950 : vector<12x9xf32>
    %953 = arith.addf %946, %952 : vector<12x9xf32>
    %954 = vector.extract_strided_slice %674 {offsets = [0, 3], sizes = [12, 1], strides = [1, 1]} : vector<12x4xf32> to vector<12x1xf32>
    %955 = vector.extract_strided_slice %948 {offsets = [0, 3], sizes = [12, 9], strides = [1, 1]} : vector<12x12xf32> to vector<12x9xf32>
    %956 = vector.broadcast %954 : vector<12x1xf32> to vector<12x9xf32>
    %957 = arith.mulf %956, %955 : vector<12x9xf32>
    %958 = arith.addf %953, %957 : vector<12x9xf32>
    %959 = vector.broadcast %675 : vector<12x1xf32> to vector<12x9xf32>
    %960 = arith.addf %958, %959 : vector<12x9xf32>
    %c0_320 = arith.constant 0 : index
    %c72 = arith.constant 72 : index
    %961 = vector.load %arg41[%c0_320, %c72] : memref<36x81xf32, #tpu.memory_space<vmem>>, vector<12x9xf32>
    tpu.vector_store %arg41[%c0_320, %c72], %960 {strides = array<i32>} : memref<36x81xf32, #tpu.memory_space<vmem>>, vector<12x9xf32>,
    %c0_321 = arith.constant 0 : index
    %c0_322 = arith.constant 0 : index
    %962 = vector.load %arg11[%c0_321, %c0_322] : memref<12x4xf32, #tpu.memory_space<vmem>>, vector<12x4xf32>
    %c0_323 = arith.constant 0 : index
    %c0_324 = arith.constant 0 : index
    %963 = vector.load %arg12[%c0_323, %c0_324] : memref<12x1xf32, #tpu.memory_space<vmem>>, vector<12x1xf32>
    %cst_325 = arith.constant 0.000000e+00 : f32
    %964 = vector.broadcast %cst_325 : f32 to vector<10x12x10xf32>
    %c0_326 = arith.constant 0 : index
    %c0_327 = arith.constant 0 : index
    %c0_328 = arith.constant 0 : index
    %965 = vector.load %arg39[%c0_326, %c0_327, %c0_328] : memref<10x12x10xf32, #tpu.memory_space<vmem>>, vector<10x12x10xf32>
    tpu.vector_store %arg39[%c0_326, %c0_327, %c0_328], %964 {strides = array<i32>} : memref<10x12x10xf32, #tpu.memory_space<vmem>>, vector<10x12x10xf32>,
    %966 = vector.extract_strided_slice %672 {offsets = [0, 0], sizes = [12, 8], strides = [1, 1]} : vector<12x64xf32> to vector<12x8xf32>
    %c1_329 = arith.constant 1 : index
    %c0_330 = arith.constant 0 : index
    %c1_331 = arith.constant 1 : index
    %967 = vector.load %arg39[%c1_329, %c0_330, %c1_331] : memref<10x12x10xf32, #tpu.memory_space<vmem>>, vector<1x12x8xf32>
    %968 = vector.shape_cast %967 : vector<1x12x8xf32> to vector<12x8xf32>
    %969 = vector.shape_cast %966 : vector<12x8xf32> to vector<1x12x8xf32>
    tpu.vector_store %arg39[%c1_329, %c0_330, %c1_331], %969 {strides = array<i32>} : memref<10x12x10xf32, #tpu.memory_space<vmem>>, vector<1x12x8xf32>,
    %970 = vector.extract_strided_slice %672 {offsets = [0, 8], sizes = [12, 8], strides = [1, 1]} : vector<12x64xf32> to vector<12x8xf32>
    %c2_332 = arith.constant 2 : index
    %c0_333 = arith.constant 0 : index
    %c1_334 = arith.constant 1 : index
    %971 = vector.load %arg39[%c2_332, %c0_333, %c1_334] : memref<10x12x10xf32, #tpu.memory_space<vmem>>, vector<1x12x8xf32>
    %972 = vector.shape_cast %971 : vector<1x12x8xf32> to vector<12x8xf32>
    %973 = vector.shape_cast %970 : vector<12x8xf32> to vector<1x12x8xf32>
    tpu.vector_store %arg39[%c2_332, %c0_333, %c1_334], %973 {strides = array<i32>} : memref<10x12x10xf32, #tpu.memory_space<vmem>>, vector<1x12x8xf32>,
    %974 = vector.extract_strided_slice %672 {offsets = [0, 16], sizes = [12, 8], strides = [1, 1]} : vector<12x64xf32> to vector<12x8xf32>
    %c3_335 = arith.constant 3 : index
    %c0_336 = arith.constant 0 : index
    %c1_337 = arith.constant 1 : index
    %975 = vector.load %arg39[%c3_335, %c0_336, %c1_337] : memref<10x12x10xf32, #tpu.memory_space<vmem>>, vector<1x12x8xf32>
    %976 = vector.shape_cast %975 : vector<1x12x8xf32> to vector<12x8xf32>
    %977 = vector.shape_cast %974 : vector<12x8xf32> to vector<1x12x8xf32>
    tpu.vector_store %arg39[%c3_335, %c0_336, %c1_337], %977 {strides = array<i32>} : memref<10x12x10xf32, #tpu.memory_space<vmem>>, vector<1x12x8xf32>,
    %978 = vector.extract_strided_slice %672 {offsets = [0, 24], sizes = [12, 8], strides = [1, 1]} : vector<12x64xf32> to vector<12x8xf32>
    %c4_338 = arith.constant 4 : index
    %c0_339 = arith.constant 0 : index
    %c1_340 = arith.constant 1 : index
    %979 = vector.load %arg39[%c4_338, %c0_339, %c1_340] : memref<10x12x10xf32, #tpu.memory_space<vmem>>, vector<1x12x8xf32>
    %980 = vector.shape_cast %979 : vector<1x12x8xf32> to vector<12x8xf32>
    %981 = vector.shape_cast %978 : vector<12x8xf32> to vector<1x12x8xf32>
    tpu.vector_store %arg39[%c4_338, %c0_339, %c1_340], %981 {strides = array<i32>} : memref<10x12x10xf32, #tpu.memory_space<vmem>>, vector<1x12x8xf32>,
    %982 = vector.extract_strided_slice %672 {offsets = [0, 32], sizes = [12, 8], strides = [1, 1]} : vector<12x64xf32> to vector<12x8xf32>
    %c5_341 = arith.constant 5 : index
    %c0_342 = arith.constant 0 : index
    %c1_343 = arith.constant 1 : index
    %983 = vector.load %arg39[%c5_341, %c0_342, %c1_343] : memref<10x12x10xf32, #tpu.memory_space<vmem>>, vector<1x12x8xf32>
    %984 = vector.shape_cast %983 : vector<1x12x8xf32> to vector<12x8xf32>
    %985 = vector.shape_cast %982 : vector<12x8xf32> to vector<1x12x8xf32>
    tpu.vector_store %arg39[%c5_341, %c0_342, %c1_343], %985 {strides = array<i32>} : memref<10x12x10xf32, #tpu.memory_space<vmem>>, vector<1x12x8xf32>,
    %986 = vector.extract_strided_slice %672 {offsets = [0, 40], sizes = [12, 8], strides = [1, 1]} : vector<12x64xf32> to vector<12x8xf32>
    %c6_344 = arith.constant 6 : index
    %c0_345 = arith.constant 0 : index
    %c1_346 = arith.constant 1 : index
    %987 = vector.load %arg39[%c6_344, %c0_345, %c1_346] : memref<10x12x10xf32, #tpu.memory_space<vmem>>, vector<1x12x8xf32>
    %988 = vector.shape_cast %987 : vector<1x12x8xf32> to vector<12x8xf32>
    %989 = vector.shape_cast %986 : vector<12x8xf32> to vector<1x12x8xf32>
    tpu.vector_store %arg39[%c6_344, %c0_345, %c1_346], %989 {strides = array<i32>} : memref<10x12x10xf32, #tpu.memory_space<vmem>>, vector<1x12x8xf32>,
    %990 = vector.extract_strided_slice %672 {offsets = [0, 48], sizes = [12, 8], strides = [1, 1]} : vector<12x64xf32> to vector<12x8xf32>
    %c7_347 = arith.constant 7 : index
    %c0_348 = arith.constant 0 : index
    %c1_349 = arith.constant 1 : index
    %991 = vector.load %arg39[%c7_347, %c0_348, %c1_349] : memref<10x12x10xf32, #tpu.memory_space<vmem>>, vector<1x12x8xf32>
    %992 = vector.shape_cast %991 : vector<1x12x8xf32> to vector<12x8xf32>
    %993 = vector.shape_cast %990 : vector<12x8xf32> to vector<1x12x8xf32>
    tpu.vector_store %arg39[%c7_347, %c0_348, %c1_349], %993 {strides = array<i32>} : memref<10x12x10xf32, #tpu.memory_space<vmem>>, vector<1x12x8xf32>,
    %994 = vector.extract_strided_slice %672 {offsets = [0, 56], sizes = [12, 8], strides = [1, 1]} : vector<12x64xf32> to vector<12x8xf32>
    %c8_350 = arith.constant 8 : index
    %c0_351 = arith.constant 0 : index
    %c1_352 = arith.constant 1 : index
    %995 = vector.load %arg39[%c8_350, %c0_351, %c1_352] : memref<10x12x10xf32, #tpu.memory_space<vmem>>, vector<1x12x8xf32>
    %996 = vector.shape_cast %995 : vector<1x12x8xf32> to vector<12x8xf32>
    %997 = vector.shape_cast %994 : vector<12x8xf32> to vector<1x12x8xf32>
    tpu.vector_store %arg39[%c8_350, %c0_351, %c1_352], %997 {strides = array<i32>} : memref<10x12x10xf32, #tpu.memory_space<vmem>>, vector<1x12x8xf32>,
    %cst_353 = arith.constant 0.000000e+00 : f32
    %998 = vector.broadcast %cst_353 : f32 to vector<12x9xf32>
    %c0_354 = arith.constant 0 : index
    %c0_355 = arith.constant 0 : index
    %c0_356 = arith.constant 0 : index
    %999 = vector.load %arg39[%c0_354, %c0_355, %c0_356] : memref<10x12x10xf32, #tpu.memory_space<vmem>>, vector<1x12x10xf32>
    %1000 = vector.shape_cast %999 : vector<1x12x10xf32> to vector<12x10xf32>
    %1001 = vector.extract_strided_slice %962 {offsets = [0, 0], sizes = [12, 1], strides = [1, 1]} : vector<12x4xf32> to vector<12x1xf32>
    %1002 = vector.extract_strided_slice %1000 {offsets = [0, 0], sizes = [12, 9], strides = [1, 1]} : vector<12x10xf32> to vector<12x9xf32>
    %1003 = vector.broadcast %1001 : vector<12x1xf32> to vector<12x9xf32>
    %1004 = arith.mulf %1003, %1002 : vector<12x9xf32>
    %1005 = arith.addf %998, %1004 : vector<12x9xf32>
    %1006 = vector.extract_strided_slice %962 {offsets = [0, 1], sizes = [12, 1], strides = [1, 1]} : vector<12x4xf32> to vector<12x1xf32>
    %1007 = vector.extract_strided_slice %1000 {offsets = [0, 1], sizes = [12, 9], strides = [1, 1]} : vector<12x10xf32> to vector<12x9xf32>
    %1008 = vector.broadcast %1006 : vector<12x1xf32> to vector<12x9xf32>
    %1009 = arith.mulf %1008, %1007 : vector<12x9xf32>
    %1010 = arith.addf %1005, %1009 : vector<12x9xf32>
    %c1_357 = arith.constant 1 : index
    %c0_358 = arith.constant 0 : index
    %c0_359 = arith.constant 0 : index
    %1011 = vector.load %arg39[%c1_357, %c0_358, %c0_359] : memref<10x12x10xf32, #tpu.memory_space<vmem>>, vector<1x12x10xf32>
    %1012 = vector.shape_cast %1011 : vector<1x12x10xf32> to vector<12x10xf32>
    %1013 = vector.extract_strided_slice %962 {offsets = [0, 2], sizes = [12, 1], strides = [1, 1]} : vector<12x4xf32> to vector<12x1xf32>
    %1014 = vector.extract_strided_slice %1012 {offsets = [0, 0], sizes = [12, 9], strides = [1, 1]} : vector<12x10xf32> to vector<12x9xf32>
    %1015 = vector.broadcast %1013 : vector<12x1xf32> to vector<12x9xf32>
    %1016 = arith.mulf %1015, %1014 : vector<12x9xf32>
    %1017 = arith.addf %1010, %1016 : vector<12x9xf32>
    %1018 = vector.extract_strided_slice %962 {offsets = [0, 3], sizes = [12, 1], strides = [1, 1]} : vector<12x4xf32> to vector<12x1xf32>
    %1019 = vector.extract_strided_slice %1012 {offsets = [0, 1], sizes = [12, 9], strides = [1, 1]} : vector<12x10xf32> to vector<12x9xf32>
    %1020 = vector.broadcast %1018 : vector<12x1xf32> to vector<12x9xf32>
    %1021 = arith.mulf %1020, %1019 : vector<12x9xf32>
    %1022 = arith.addf %1017, %1021 : vector<12x9xf32>
    %1023 = vector.broadcast %963 : vector<12x1xf32> to vector<12x9xf32>
    %1024 = arith.addf %1022, %1023 : vector<12x9xf32>
    %c12 = arith.constant 12 : index
    %c0_360 = arith.constant 0 : index
    %1025 = vector.load %arg41[%c12, %c0_360] : memref<36x81xf32, #tpu.memory_space<vmem>>, vector<12x9xf32>
    tpu.vector_store %arg41[%c12, %c0_360], %1024 {strides = array<i32>} : memref<36x81xf32, #tpu.memory_space<vmem>>, vector<12x9xf32>,
    %cst_361 = arith.constant 0.000000e+00 : f32
    %1026 = vector.broadcast %cst_361 : f32 to vector<12x9xf32>
    %c1_362 = arith.constant 1 : index
    %c0_363 = arith.constant 0 : index
    %c0_364 = arith.constant 0 : index
    %1027 = vector.load %arg39[%c1_362, %c0_363, %c0_364] : memref<10x12x10xf32, #tpu.memory_space<vmem>>, vector<1x12x10xf32>
    %1028 = vector.shape_cast %1027 : vector<1x12x10xf32> to vector<12x10xf32>
    %1029 = vector.extract_strided_slice %962 {offsets = [0, 0], sizes = [12, 1], strides = [1, 1]} : vector<12x4xf32> to vector<12x1xf32>
    %1030 = vector.extract_strided_slice %1028 {offsets = [0, 0], sizes = [12, 9], strides = [1, 1]} : vector<12x10xf32> to vector<12x9xf32>
    %1031 = vector.broadcast %1029 : vector<12x1xf32> to vector<12x9xf32>
    %1032 = arith.mulf %1031, %1030 : vector<12x9xf32>
    %1033 = arith.addf %1026, %1032 : vector<12x9xf32>
    %1034 = vector.extract_strided_slice %962 {offsets = [0, 1], sizes = [12, 1], strides = [1, 1]} : vector<12x4xf32> to vector<12x1xf32>
    %1035 = vector.extract_strided_slice %1028 {offsets = [0, 1], sizes = [12, 9], strides = [1, 1]} : vector<12x10xf32> to vector<12x9xf32>
    %1036 = vector.broadcast %1034 : vector<12x1xf32> to vector<12x9xf32>
    %1037 = arith.mulf %1036, %1035 : vector<12x9xf32>
    %1038 = arith.addf %1033, %1037 : vector<12x9xf32>
    %c2_365 = arith.constant 2 : index
    %c0_366 = arith.constant 0 : index
    %c0_367 = arith.constant 0 : index
    %1039 = vector.load %arg39[%c2_365, %c0_366, %c0_367] : memref<10x12x10xf32, #tpu.memory_space<vmem>>, vector<1x12x10xf32>
    %1040 = vector.shape_cast %1039 : vector<1x12x10xf32> to vector<12x10xf32>
    %1041 = vector.extract_strided_slice %962 {offsets = [0, 2], sizes = [12, 1], strides = [1, 1]} : vector<12x4xf32> to vector<12x1xf32>
    %1042 = vector.extract_strided_slice %1040 {offsets = [0, 0], sizes = [12, 9], strides = [1, 1]} : vector<12x10xf32> to vector<12x9xf32>
    %1043 = vector.broadcast %1041 : vector<12x1xf32> to vector<12x9xf32>
    %1044 = arith.mulf %1043, %1042 : vector<12x9xf32>
    %1045 = arith.addf %1038, %1044 : vector<12x9xf32>
    %1046 = vector.extract_strided_slice %962 {offsets = [0, 3], sizes = [12, 1], strides = [1, 1]} : vector<12x4xf32> to vector<12x1xf32>
    %1047 = vector.extract_strided_slice %1040 {offsets = [0, 1], sizes = [12, 9], strides = [1, 1]} : vector<12x10xf32> to vector<12x9xf32>
    %1048 = vector.broadcast %1046 : vector<12x1xf32> to vector<12x9xf32>
    %1049 = arith.mulf %1048, %1047 : vector<12x9xf32>
    %1050 = arith.addf %1045, %1049 : vector<12x9xf32>
    %1051 = vector.broadcast %963 : vector<12x1xf32> to vector<12x9xf32>
    %1052 = arith.addf %1050, %1051 : vector<12x9xf32>
    %c12_368 = arith.constant 12 : index
    %c9_369 = arith.constant 9 : index
    %1053 = vector.load %arg41[%c12_368, %c9_369] : memref<36x81xf32, #tpu.memory_space<vmem>>, vector<12x9xf32>
    tpu.vector_store %arg41[%c12_368, %c9_369], %1052 {strides = array<i32>} : memref<36x81xf32, #tpu.memory_space<vmem>>, vector<12x9xf32>,
    %cst_370 = arith.constant 0.000000e+00 : f32
    %1054 = vector.broadcast %cst_370 : f32 to vector<12x9xf32>
    %c2_371 = arith.constant 2 : index
    %c0_372 = arith.constant 0 : index
    %c0_373 = arith.constant 0 : index
    %1055 = vector.load %arg39[%c2_371, %c0_372, %c0_373] : memref<10x12x10xf32, #tpu.memory_space<vmem>>, vector<1x12x10xf32>
    %1056 = vector.shape_cast %1055 : vector<1x12x10xf32> to vector<12x10xf32>
    %1057 = vector.extract_strided_slice %962 {offsets = [0, 0], sizes = [12, 1], strides = [1, 1]} : vector<12x4xf32> to vector<12x1xf32>
    %1058 = vector.extract_strided_slice %1056 {offsets = [0, 0], sizes = [12, 9], strides = [1, 1]} : vector<12x10xf32> to vector<12x9xf32>
    %1059 = vector.broadcast %1057 : vector<12x1xf32> to vector<12x9xf32>
    %1060 = arith.mulf %1059, %1058 : vector<12x9xf32>
    %1061 = arith.addf %1054, %1060 : vector<12x9xf32>
    %1062 = vector.extract_strided_slice %962 {offsets = [0, 1], sizes = [12, 1], strides = [1, 1]} : vector<12x4xf32> to vector<12x1xf32>
    %1063 = vector.extract_strided_slice %1056 {offsets = [0, 1], sizes = [12, 9], strides = [1, 1]} : vector<12x10xf32> to vector<12x9xf32>
    %1064 = vector.broadcast %1062 : vector<12x1xf32> to vector<12x9xf32>
    %1065 = arith.mulf %1064, %1063 : vector<12x9xf32>
    %1066 = arith.addf %1061, %1065 : vector<12x9xf32>
    %c3_374 = arith.constant 3 : index
    %c0_375 = arith.constant 0 : index
    %c0_376 = arith.constant 0 : index
    %1067 = vector.load %arg39[%c3_374, %c0_375, %c0_376] : memref<10x12x10xf32, #tpu.memory_space<vmem>>, vector<1x12x10xf32>
    %1068 = vector.shape_cast %1067 : vector<1x12x10xf32> to vector<12x10xf32>
    %1069 = vector.extract_strided_slice %962 {offsets = [0, 2], sizes = [12, 1], strides = [1, 1]} : vector<12x4xf32> to vector<12x1xf32>
    %1070 = vector.extract_strided_slice %1068 {offsets = [0, 0], sizes = [12, 9], strides = [1, 1]} : vector<12x10xf32> to vector<12x9xf32>
    %1071 = vector.broadcast %1069 : vector<12x1xf32> to vector<12x9xf32>
    %1072 = arith.mulf %1071, %1070 : vector<12x9xf32>
    %1073 = arith.addf %1066, %1072 : vector<12x9xf32>
    %1074 = vector.extract_strided_slice %962 {offsets = [0, 3], sizes = [12, 1], strides = [1, 1]} : vector<12x4xf32> to vector<12x1xf32>
    %1075 = vector.extract_strided_slice %1068 {offsets = [0, 1], sizes = [12, 9], strides = [1, 1]} : vector<12x10xf32> to vector<12x9xf32>
    %1076 = vector.broadcast %1074 : vector<12x1xf32> to vector<12x9xf32>
    %1077 = arith.mulf %1076, %1075 : vector<12x9xf32>
    %1078 = arith.addf %1073, %1077 : vector<12x9xf32>
    %1079 = vector.broadcast %963 : vector<12x1xf32> to vector<12x9xf32>
    %1080 = arith.addf %1078, %1079 : vector<12x9xf32>
    %c12_377 = arith.constant 12 : index
    %c18_378 = arith.constant 18 : index
    %1081 = vector.load %arg41[%c12_377, %c18_378] : memref<36x81xf32, #tpu.memory_space<vmem>>, vector<12x9xf32>
    tpu.vector_store %arg41[%c12_377, %c18_378], %1080 {strides = array<i32>} : memref<36x81xf32, #tpu.memory_space<vmem>>, vector<12x9xf32>,
    %cst_379 = arith.constant 0.000000e+00 : f32
    %1082 = vector.broadcast %cst_379 : f32 to vector<12x9xf32>
    %c3_380 = arith.constant 3 : index
    %c0_381 = arith.constant 0 : index
    %c0_382 = arith.constant 0 : index
    %1083 = vector.load %arg39[%c3_380, %c0_381, %c0_382] : memref<10x12x10xf32, #tpu.memory_space<vmem>>, vector<1x12x10xf32>
    %1084 = vector.shape_cast %1083 : vector<1x12x10xf32> to vector<12x10xf32>
    %1085 = vector.extract_strided_slice %962 {offsets = [0, 0], sizes = [12, 1], strides = [1, 1]} : vector<12x4xf32> to vector<12x1xf32>
    %1086 = vector.extract_strided_slice %1084 {offsets = [0, 0], sizes = [12, 9], strides = [1, 1]} : vector<12x10xf32> to vector<12x9xf32>
    %1087 = vector.broadcast %1085 : vector<12x1xf32> to vector<12x9xf32>
    %1088 = arith.mulf %1087, %1086 : vector<12x9xf32>
    %1089 = arith.addf %1082, %1088 : vector<12x9xf32>
    %1090 = vector.extract_strided_slice %962 {offsets = [0, 1], sizes = [12, 1], strides = [1, 1]} : vector<12x4xf32> to vector<12x1xf32>
    %1091 = vector.extract_strided_slice %1084 {offsets = [0, 1], sizes = [12, 9], strides = [1, 1]} : vector<12x10xf32> to vector<12x9xf32>
    %1092 = vector.broadcast %1090 : vector<12x1xf32> to vector<12x9xf32>
    %1093 = arith.mulf %1092, %1091 : vector<12x9xf32>
    %1094 = arith.addf %1089, %1093 : vector<12x9xf32>
    %c4_383 = arith.constant 4 : index
    %c0_384 = arith.constant 0 : index
    %c0_385 = arith.constant 0 : index
    %1095 = vector.load %arg39[%c4_383, %c0_384, %c0_385] : memref<10x12x10xf32, #tpu.memory_space<vmem>>, vector<1x12x10xf32>
    %1096 = vector.shape_cast %1095 : vector<1x12x10xf32> to vector<12x10xf32>
    %1097 = vector.extract_strided_slice %962 {offsets = [0, 2], sizes = [12, 1], strides = [1, 1]} : vector<12x4xf32> to vector<12x1xf32>
    %1098 = vector.extract_strided_slice %1096 {offsets = [0, 0], sizes = [12, 9], strides = [1, 1]} : vector<12x10xf32> to vector<12x9xf32>
    %1099 = vector.broadcast %1097 : vector<12x1xf32> to vector<12x9xf32>
    %1100 = arith.mulf %1099, %1098 : vector<12x9xf32>
    %1101 = arith.addf %1094, %1100 : vector<12x9xf32>
    %1102 = vector.extract_strided_slice %962 {offsets = [0, 3], sizes = [12, 1], strides = [1, 1]} : vector<12x4xf32> to vector<12x1xf32>
    %1103 = vector.extract_strided_slice %1096 {offsets = [0, 1], sizes = [12, 9], strides = [1, 1]} : vector<12x10xf32> to vector<12x9xf32>
    %1104 = vector.broadcast %1102 : vector<12x1xf32> to vector<12x9xf32>
    %1105 = arith.mulf %1104, %1103 : vector<12x9xf32>
    %1106 = arith.addf %1101, %1105 : vector<12x9xf32>
    %1107 = vector.broadcast %963 : vector<12x1xf32> to vector<12x9xf32>
    %1108 = arith.addf %1106, %1107 : vector<12x9xf32>
    %c12_386 = arith.constant 12 : index
    %c27_387 = arith.constant 27 : index
    %1109 = vector.load %arg41[%c12_386, %c27_387] : memref<36x81xf32, #tpu.memory_space<vmem>>, vector<12x9xf32>
    tpu.vector_store %arg41[%c12_386, %c27_387], %1108 {strides = array<i32>} : memref<36x81xf32, #tpu.memory_space<vmem>>, vector<12x9xf32>,
    %cst_388 = arith.constant 0.000000e+00 : f32
    %1110 = vector.broadcast %cst_388 : f32 to vector<12x9xf32>
    %c4_389 = arith.constant 4 : index
    %c0_390 = arith.constant 0 : index
    %c0_391 = arith.constant 0 : index
    %1111 = vector.load %arg39[%c4_389, %c0_390, %c0_391] : memref<10x12x10xf32, #tpu.memory_space<vmem>>, vector<1x12x10xf32>
    %1112 = vector.shape_cast %1111 : vector<1x12x10xf32> to vector<12x10xf32>
    %1113 = vector.extract_strided_slice %962 {offsets = [0, 0], sizes = [12, 1], strides = [1, 1]} : vector<12x4xf32> to vector<12x1xf32>
    %1114 = vector.extract_strided_slice %1112 {offsets = [0, 0], sizes = [12, 9], strides = [1, 1]} : vector<12x10xf32> to vector<12x9xf32>
    %1115 = vector.broadcast %1113 : vector<12x1xf32> to vector<12x9xf32>
    %1116 = arith.mulf %1115, %1114 : vector<12x9xf32>
    %1117 = arith.addf %1110, %1116 : vector<12x9xf32>
    %1118 = vector.extract_strided_slice %962 {offsets = [0, 1], sizes = [12, 1], strides = [1, 1]} : vector<12x4xf32> to vector<12x1xf32>
    %1119 = vector.extract_strided_slice %1112 {offsets = [0, 1], sizes = [12, 9], strides = [1, 1]} : vector<12x10xf32> to vector<12x9xf32>
    %1120 = vector.broadcast %1118 : vector<12x1xf32> to vector<12x9xf32>
    %1121 = arith.mulf %1120, %1119 : vector<12x9xf32>
    %1122 = arith.addf %1117, %1121 : vector<12x9xf32>
    %c5_392 = arith.constant 5 : index
    %c0_393 = arith.constant 0 : index
    %c0_394 = arith.constant 0 : index
    %1123 = vector.load %arg39[%c5_392, %c0_393, %c0_394] : memref<10x12x10xf32, #tpu.memory_space<vmem>>, vector<1x12x10xf32>
    %1124 = vector.shape_cast %1123 : vector<1x12x10xf32> to vector<12x10xf32>
    %1125 = vector.extract_strided_slice %962 {offsets = [0, 2], sizes = [12, 1], strides = [1, 1]} : vector<12x4xf32> to vector<12x1xf32>
    %1126 = vector.extract_strided_slice %1124 {offsets = [0, 0], sizes = [12, 9], strides = [1, 1]} : vector<12x10xf32> to vector<12x9xf32>
    %1127 = vector.broadcast %1125 : vector<12x1xf32> to vector<12x9xf32>
    %1128 = arith.mulf %1127, %1126 : vector<12x9xf32>
    %1129 = arith.addf %1122, %1128 : vector<12x9xf32>
    %1130 = vector.extract_strided_slice %962 {offsets = [0, 3], sizes = [12, 1], strides = [1, 1]} : vector<12x4xf32> to vector<12x1xf32>
    %1131 = vector.extract_strided_slice %1124 {offsets = [0, 1], sizes = [12, 9], strides = [1, 1]} : vector<12x10xf32> to vector<12x9xf32>
    %1132 = vector.broadcast %1130 : vector<12x1xf32> to vector<12x9xf32>
    %1133 = arith.mulf %1132, %1131 : vector<12x9xf32>
    %1134 = arith.addf %1129, %1133 : vector<12x9xf32>
    %1135 = vector.broadcast %963 : vector<12x1xf32> to vector<12x9xf32>
    %1136 = arith.addf %1134, %1135 : vector<12x9xf32>
    %c12_395 = arith.constant 12 : index
    %c36_396 = arith.constant 36 : index
    %1137 = vector.load %arg41[%c12_395, %c36_396] : memref<36x81xf32, #tpu.memory_space<vmem>>, vector<12x9xf32>
    tpu.vector_store %arg41[%c12_395, %c36_396], %1136 {strides = array<i32>} : memref<36x81xf32, #tpu.memory_space<vmem>>, vector<12x9xf32>,
    %cst_397 = arith.constant 0.000000e+00 : f32
    %1138 = vector.broadcast %cst_397 : f32 to vector<12x9xf32>
    %c5_398 = arith.constant 5 : index
    %c0_399 = arith.constant 0 : index
    %c0_400 = arith.constant 0 : index
    %1139 = vector.load %arg39[%c5_398, %c0_399, %c0_400] : memref<10x12x10xf32, #tpu.memory_space<vmem>>, vector<1x12x10xf32>
    %1140 = vector.shape_cast %1139 : vector<1x12x10xf32> to vector<12x10xf32>
    %1141 = vector.extract_strided_slice %962 {offsets = [0, 0], sizes = [12, 1], strides = [1, 1]} : vector<12x4xf32> to vector<12x1xf32>
    %1142 = vector.extract_strided_slice %1140 {offsets = [0, 0], sizes = [12, 9], strides = [1, 1]} : vector<12x10xf32> to vector<12x9xf32>
    %1143 = vector.broadcast %1141 : vector<12x1xf32> to vector<12x9xf32>
    %1144 = arith.mulf %1143, %1142 : vector<12x9xf32>
    %1145 = arith.addf %1138, %1144 : vector<12x9xf32>
    %1146 = vector.extract_strided_slice %962 {offsets = [0, 1], sizes = [12, 1], strides = [1, 1]} : vector<12x4xf32> to vector<12x1xf32>
    %1147 = vector.extract_strided_slice %1140 {offsets = [0, 1], sizes = [12, 9], strides = [1, 1]} : vector<12x10xf32> to vector<12x9xf32>
    %1148 = vector.broadcast %1146 : vector<12x1xf32> to vector<12x9xf32>
    %1149 = arith.mulf %1148, %1147 : vector<12x9xf32>
    %1150 = arith.addf %1145, %1149 : vector<12x9xf32>
    %c6_401 = arith.constant 6 : index
    %c0_402 = arith.constant 0 : index
    %c0_403 = arith.constant 0 : index
    %1151 = vector.load %arg39[%c6_401, %c0_402, %c0_403] : memref<10x12x10xf32, #tpu.memory_space<vmem>>, vector<1x12x10xf32>
    %1152 = vector.shape_cast %1151 : vector<1x12x10xf32> to vector<12x10xf32>
    %1153 = vector.extract_strided_slice %962 {offsets = [0, 2], sizes = [12, 1], strides = [1, 1]} : vector<12x4xf32> to vector<12x1xf32>
    %1154 = vector.extract_strided_slice %1152 {offsets = [0, 0], sizes = [12, 9], strides = [1, 1]} : vector<12x10xf32> to vector<12x9xf32>
    %1155 = vector.broadcast %1153 : vector<12x1xf32> to vector<12x9xf32>
    %1156 = arith.mulf %1155, %1154 : vector<12x9xf32>
    %1157 = arith.addf %1150, %1156 : vector<12x9xf32>
    %1158 = vector.extract_strided_slice %962 {offsets = [0, 3], sizes = [12, 1], strides = [1, 1]} : vector<12x4xf32> to vector<12x1xf32>
    %1159 = vector.extract_strided_slice %1152 {offsets = [0, 1], sizes = [12, 9], strides = [1, 1]} : vector<12x10xf32> to vector<12x9xf32>
    %1160 = vector.broadcast %1158 : vector<12x1xf32> to vector<12x9xf32>
    %1161 = arith.mulf %1160, %1159 : vector<12x9xf32>
    %1162 = arith.addf %1157, %1161 : vector<12x9xf32>
    %1163 = vector.broadcast %963 : vector<12x1xf32> to vector<12x9xf32>
    %1164 = arith.addf %1162, %1163 : vector<12x9xf32>
    %c12_404 = arith.constant 12 : index
    %c45_405 = arith.constant 45 : index
    %1165 = vector.load %arg41[%c12_404, %c45_405] : memref<36x81xf32, #tpu.memory_space<vmem>>, vector<12x9xf32>
    tpu.vector_store %arg41[%c12_404, %c45_405], %1164 {strides = array<i32>} : memref<36x81xf32, #tpu.memory_space<vmem>>, vector<12x9xf32>,
    %cst_406 = arith.constant 0.000000e+00 : f32
    %1166 = vector.broadcast %cst_406 : f32 to vector<12x9xf32>
    %c6_407 = arith.constant 6 : index
    %c0_408 = arith.constant 0 : index
    %c0_409 = arith.constant 0 : index
    %1167 = vector.load %arg39[%c6_407, %c0_408, %c0_409] : memref<10x12x10xf32, #tpu.memory_space<vmem>>, vector<1x12x10xf32>
    %1168 = vector.shape_cast %1167 : vector<1x12x10xf32> to vector<12x10xf32>
    %1169 = vector.extract_strided_slice %962 {offsets = [0, 0], sizes = [12, 1], strides = [1, 1]} : vector<12x4xf32> to vector<12x1xf32>
    %1170 = vector.extract_strided_slice %1168 {offsets = [0, 0], sizes = [12, 9], strides = [1, 1]} : vector<12x10xf32> to vector<12x9xf32>
    %1171 = vector.broadcast %1169 : vector<12x1xf32> to vector<12x9xf32>
    %1172 = arith.mulf %1171, %1170 : vector<12x9xf32>
    %1173 = arith.addf %1166, %1172 : vector<12x9xf32>
    %1174 = vector.extract_strided_slice %962 {offsets = [0, 1], sizes = [12, 1], strides = [1, 1]} : vector<12x4xf32> to vector<12x1xf32>
    %1175 = vector.extract_strided_slice %1168 {offsets = [0, 1], sizes = [12, 9], strides = [1, 1]} : vector<12x10xf32> to vector<12x9xf32>
    %1176 = vector.broadcast %1174 : vector<12x1xf32> to vector<12x9xf32>
    %1177 = arith.mulf %1176, %1175 : vector<12x9xf32>
    %1178 = arith.addf %1173, %1177 : vector<12x9xf32>
    %c7_410 = arith.constant 7 : index
    %c0_411 = arith.constant 0 : index
    %c0_412 = arith.constant 0 : index
    %1179 = vector.load %arg39[%c7_410, %c0_411, %c0_412] : memref<10x12x10xf32, #tpu.memory_space<vmem>>, vector<1x12x10xf32>
    %1180 = vector.shape_cast %1179 : vector<1x12x10xf32> to vector<12x10xf32>
    %1181 = vector.extract_strided_slice %962 {offsets = [0, 2], sizes = [12, 1], strides = [1, 1]} : vector<12x4xf32> to vector<12x1xf32>
    %1182 = vector.extract_strided_slice %1180 {offsets = [0, 0], sizes = [12, 9], strides = [1, 1]} : vector<12x10xf32> to vector<12x9xf32>
    %1183 = vector.broadcast %1181 : vector<12x1xf32> to vector<12x9xf32>
    %1184 = arith.mulf %1183, %1182 : vector<12x9xf32>
    %1185 = arith.addf %1178, %1184 : vector<12x9xf32>
    %1186 = vector.extract_strided_slice %962 {offsets = [0, 3], sizes = [12, 1], strides = [1, 1]} : vector<12x4xf32> to vector<12x1xf32>
    %1187 = vector.extract_strided_slice %1180 {offsets = [0, 1], sizes = [12, 9], strides = [1, 1]} : vector<12x10xf32> to vector<12x9xf32>
    %1188 = vector.broadcast %1186 : vector<12x1xf32> to vector<12x9xf32>
    %1189 = arith.mulf %1188, %1187 : vector<12x9xf32>
    %1190 = arith.addf %1185, %1189 : vector<12x9xf32>
    %1191 = vector.broadcast %963 : vector<12x1xf32> to vector<12x9xf32>
    %1192 = arith.addf %1190, %1191 : vector<12x9xf32>
    %c12_413 = arith.constant 12 : index
    %c54_414 = arith.constant 54 : index
    %1193 = vector.load %arg41[%c12_413, %c54_414] : memref<36x81xf32, #tpu.memory_space<vmem>>, vector<12x9xf32>
    tpu.vector_store %arg41[%c12_413, %c54_414], %1192 {strides = array<i32>} : memref<36x81xf32, #tpu.memory_space<vmem>>, vector<12x9xf32>,
    %cst_415 = arith.constant 0.000000e+00 : f32
    %1194 = vector.broadcast %cst_415 : f32 to vector<12x9xf32>
    %c7_416 = arith.constant 7 : index
    %c0_417 = arith.constant 0 : index
    %c0_418 = arith.constant 0 : index
    %1195 = vector.load %arg39[%c7_416, %c0_417, %c0_418] : memref<10x12x10xf32, #tpu.memory_space<vmem>>, vector<1x12x10xf32>
    %1196 = vector.shape_cast %1195 : vector<1x12x10xf32> to vector<12x10xf32>
    %1197 = vector.extract_strided_slice %962 {offsets = [0, 0], sizes = [12, 1], strides = [1, 1]} : vector<12x4xf32> to vector<12x1xf32>
    %1198 = vector.extract_strided_slice %1196 {offsets = [0, 0], sizes = [12, 9], strides = [1, 1]} : vector<12x10xf32> to vector<12x9xf32>
    %1199 = vector.broadcast %1197 : vector<12x1xf32> to vector<12x9xf32>
    %1200 = arith.mulf %1199, %1198 : vector<12x9xf32>
    %1201 = arith.addf %1194, %1200 : vector<12x9xf32>
    %1202 = vector.extract_strided_slice %962 {offsets = [0, 1], sizes = [12, 1], strides = [1, 1]} : vector<12x4xf32> to vector<12x1xf32>
    %1203 = vector.extract_strided_slice %1196 {offsets = [0, 1], sizes = [12, 9], strides = [1, 1]} : vector<12x10xf32> to vector<12x9xf32>
    %1204 = vector.broadcast %1202 : vector<12x1xf32> to vector<12x9xf32>
    %1205 = arith.mulf %1204, %1203 : vector<12x9xf32>
    %1206 = arith.addf %1201, %1205 : vector<12x9xf32>
    %c8_419 = arith.constant 8 : index
    %c0_420 = arith.constant 0 : index
    %c0_421 = arith.constant 0 : index
    %1207 = vector.load %arg39[%c8_419, %c0_420, %c0_421] : memref<10x12x10xf32, #tpu.memory_space<vmem>>, vector<1x12x10xf32>
    %1208 = vector.shape_cast %1207 : vector<1x12x10xf32> to vector<12x10xf32>
    %1209 = vector.extract_strided_slice %962 {offsets = [0, 2], sizes = [12, 1], strides = [1, 1]} : vector<12x4xf32> to vector<12x1xf32>
    %1210 = vector.extract_strided_slice %1208 {offsets = [0, 0], sizes = [12, 9], strides = [1, 1]} : vector<12x10xf32> to vector<12x9xf32>
    %1211 = vector.broadcast %1209 : vector<12x1xf32> to vector<12x9xf32>
    %1212 = arith.mulf %1211, %1210 : vector<12x9xf32>
    %1213 = arith.addf %1206, %1212 : vector<12x9xf32>
    %1214 = vector.extract_strided_slice %962 {offsets = [0, 3], sizes = [12, 1], strides = [1, 1]} : vector<12x4xf32> to vector<12x1xf32>
    %1215 = vector.extract_strided_slice %1208 {offsets = [0, 1], sizes = [12, 9], strides = [1, 1]} : vector<12x10xf32> to vector<12x9xf32>
    %1216 = vector.broadcast %1214 : vector<12x1xf32> to vector<12x9xf32>
    %1217 = arith.mulf %1216, %1215 : vector<12x9xf32>
    %1218 = arith.addf %1213, %1217 : vector<12x9xf32>
    %1219 = vector.broadcast %963 : vector<12x1xf32> to vector<12x9xf32>
    %1220 = arith.addf %1218, %1219 : vector<12x9xf32>
    %c12_422 = arith.constant 12 : index
    %c63_423 = arith.constant 63 : index
    %1221 = vector.load %arg41[%c12_422, %c63_423] : memref<36x81xf32, #tpu.memory_space<vmem>>, vector<12x9xf32>
    tpu.vector_store %arg41[%c12_422, %c63_423], %1220 {strides = array<i32>} : memref<36x81xf32, #tpu.memory_space<vmem>>, vector<12x9xf32>,
    %cst_424 = arith.constant 0.000000e+00 : f32
    %1222 = vector.broadcast %cst_424 : f32 to vector<12x9xf32>
    %c8_425 = arith.constant 8 : index
    %c0_426 = arith.constant 0 : index
    %c0_427 = arith.constant 0 : index
    %1223 = vector.load %arg39[%c8_425, %c0_426, %c0_427] : memref<10x12x10xf32, #tpu.memory_space<vmem>>, vector<1x12x10xf32>
    %1224 = vector.shape_cast %1223 : vector<1x12x10xf32> to vector<12x10xf32>
    %1225 = vector.extract_strided_slice %962 {offsets = [0, 0], sizes = [12, 1], strides = [1, 1]} : vector<12x4xf32> to vector<12x1xf32>
    %1226 = vector.extract_strided_slice %1224 {offsets = [0, 0], sizes = [12, 9], strides = [1, 1]} : vector<12x10xf32> to vector<12x9xf32>
    %1227 = vector.broadcast %1225 : vector<12x1xf32> to vector<12x9xf32>
    %1228 = arith.mulf %1227, %1226 : vector<12x9xf32>
    %1229 = arith.addf %1222, %1228 : vector<12x9xf32>
    %1230 = vector.extract_strided_slice %962 {offsets = [0, 1], sizes = [12, 1], strides = [1, 1]} : vector<12x4xf32> to vector<12x1xf32>
    %1231 = vector.extract_strided_slice %1224 {offsets = [0, 1], sizes = [12, 9], strides = [1, 1]} : vector<12x10xf32> to vector<12x9xf32>
    %1232 = vector.broadcast %1230 : vector<12x1xf32> to vector<12x9xf32>
    %1233 = arith.mulf %1232, %1231 : vector<12x9xf32>
    %1234 = arith.addf %1229, %1233 : vector<12x9xf32>
    %c9_428 = arith.constant 9 : index
    %c0_429 = arith.constant 0 : index
    %c0_430 = arith.constant 0 : index
    %1235 = vector.load %arg39[%c9_428, %c0_429, %c0_430] : memref<10x12x10xf32, #tpu.memory_space<vmem>>, vector<1x12x10xf32>
    %1236 = vector.shape_cast %1235 : vector<1x12x10xf32> to vector<12x10xf32>
    %1237 = vector.extract_strided_slice %962 {offsets = [0, 2], sizes = [12, 1], strides = [1, 1]} : vector<12x4xf32> to vector<12x1xf32>
    %1238 = vector.extract_strided_slice %1236 {offsets = [0, 0], sizes = [12, 9], strides = [1, 1]} : vector<12x10xf32> to vector<12x9xf32>
    %1239 = vector.broadcast %1237 : vector<12x1xf32> to vector<12x9xf32>
    %1240 = arith.mulf %1239, %1238 : vector<12x9xf32>
    %1241 = arith.addf %1234, %1240 : vector<12x9xf32>
    %1242 = vector.extract_strided_slice %962 {offsets = [0, 3], sizes = [12, 1], strides = [1, 1]} : vector<12x4xf32> to vector<12x1xf32>
    %1243 = vector.extract_strided_slice %1236 {offsets = [0, 1], sizes = [12, 9], strides = [1, 1]} : vector<12x10xf32> to vector<12x9xf32>
    %1244 = vector.broadcast %1242 : vector<12x1xf32> to vector<12x9xf32>
    %1245 = arith.mulf %1244, %1243 : vector<12x9xf32>
    %1246 = arith.addf %1241, %1245 : vector<12x9xf32>
    %1247 = vector.broadcast %963 : vector<12x1xf32> to vector<12x9xf32>
    %1248 = arith.addf %1246, %1247 : vector<12x9xf32>
    %c12_431 = arith.constant 12 : index
    %c72_432 = arith.constant 72 : index
    %1249 = vector.load %arg41[%c12_431, %c72_432] : memref<36x81xf32, #tpu.memory_space<vmem>>, vector<12x9xf32>
    tpu.vector_store %arg41[%c12_431, %c72_432], %1248 {strides = array<i32>} : memref<36x81xf32, #tpu.memory_space<vmem>>, vector<12x9xf32>,
    %1250 = vector.extract_strided_slice %56 {offsets = [24, 0], sizes = [12, 64], strides = [1, 1]} : vector<36x64xf32> to vector<12x64xf32>
    %c0_433 = arith.constant 0 : index
    %c0_434 = arith.constant 0 : index
    %1251 = vector.load %arg13[%c0_433, %c0_434] : memref<12x4xf32, #tpu.memory_space<vmem>>, vector<12x4xf32>
    %c0_435 = arith.constant 0 : index
    %c0_436 = arith.constant 0 : index
    %1252 = vector.load %arg14[%c0_435, %c0_436] : memref<12x1xf32, #tpu.memory_space<vmem>>, vector<12x1xf32>
    %cst_437 = arith.constant 0.000000e+00 : f32
    %1253 = vector.broadcast %cst_437 : f32 to vector<10x12x10xf32>
    %c0_438 = arith.constant 0 : index
    %c0_439 = arith.constant 0 : index
    %c0_440 = arith.constant 0 : index
    %1254 = vector.load %arg40[%c0_438, %c0_439, %c0_440] : memref<10x12x10xf32, #tpu.memory_space<vmem>>, vector<10x12x10xf32>
    tpu.vector_store %arg40[%c0_438, %c0_439, %c0_440], %1253 {strides = array<i32>} : memref<10x12x10xf32, #tpu.memory_space<vmem>>, vector<10x12x10xf32>,
    %1255 = vector.extract_strided_slice %1250 {offsets = [0, 0], sizes = [12, 8], strides = [1, 1]} : vector<12x64xf32> to vector<12x8xf32>
    %c1_441 = arith.constant 1 : index
    %c0_442 = arith.constant 0 : index
    %c1_443 = arith.constant 1 : index
    %1256 = vector.load %arg40[%c1_441, %c0_442, %c1_443] : memref<10x12x10xf32, #tpu.memory_space<vmem>>, vector<1x12x8xf32>
    %1257 = vector.shape_cast %1256 : vector<1x12x8xf32> to vector<12x8xf32>
    %1258 = vector.shape_cast %1255 : vector<12x8xf32> to vector<1x12x8xf32>
    tpu.vector_store %arg40[%c1_441, %c0_442, %c1_443], %1258 {strides = array<i32>} : memref<10x12x10xf32, #tpu.memory_space<vmem>>, vector<1x12x8xf32>,
    %1259 = vector.extract_strided_slice %1250 {offsets = [0, 8], sizes = [12, 8], strides = [1, 1]} : vector<12x64xf32> to vector<12x8xf32>
    %c2_444 = arith.constant 2 : index
    %c0_445 = arith.constant 0 : index
    %c1_446 = arith.constant 1 : index
    %1260 = vector.load %arg40[%c2_444, %c0_445, %c1_446] : memref<10x12x10xf32, #tpu.memory_space<vmem>>, vector<1x12x8xf32>
    %1261 = vector.shape_cast %1260 : vector<1x12x8xf32> to vector<12x8xf32>
    %1262 = vector.shape_cast %1259 : vector<12x8xf32> to vector<1x12x8xf32>
    tpu.vector_store %arg40[%c2_444, %c0_445, %c1_446], %1262 {strides = array<i32>} : memref<10x12x10xf32, #tpu.memory_space<vmem>>, vector<1x12x8xf32>,
    %1263 = vector.extract_strided_slice %1250 {offsets = [0, 16], sizes = [12, 8], strides = [1, 1]} : vector<12x64xf32> to vector<12x8xf32>
    %c3_447 = arith.constant 3 : index
    %c0_448 = arith.constant 0 : index
    %c1_449 = arith.constant 1 : index
    %1264 = vector.load %arg40[%c3_447, %c0_448, %c1_449] : memref<10x12x10xf32, #tpu.memory_space<vmem>>, vector<1x12x8xf32>
    %1265 = vector.shape_cast %1264 : vector<1x12x8xf32> to vector<12x8xf32>
    %1266 = vector.shape_cast %1263 : vector<12x8xf32> to vector<1x12x8xf32>
    tpu.vector_store %arg40[%c3_447, %c0_448, %c1_449], %1266 {strides = array<i32>} : memref<10x12x10xf32, #tpu.memory_space<vmem>>, vector<1x12x8xf32>,
    %1267 = vector.extract_strided_slice %1250 {offsets = [0, 24], sizes = [12, 8], strides = [1, 1]} : vector<12x64xf32> to vector<12x8xf32>
    %c4_450 = arith.constant 4 : index
    %c0_451 = arith.constant 0 : index
    %c1_452 = arith.constant 1 : index
    %1268 = vector.load %arg40[%c4_450, %c0_451, %c1_452] : memref<10x12x10xf32, #tpu.memory_space<vmem>>, vector<1x12x8xf32>
    %1269 = vector.shape_cast %1268 : vector<1x12x8xf32> to vector<12x8xf32>
    %1270 = vector.shape_cast %1267 : vector<12x8xf32> to vector<1x12x8xf32>
    tpu.vector_store %arg40[%c4_450, %c0_451, %c1_452], %1270 {strides = array<i32>} : memref<10x12x10xf32, #tpu.memory_space<vmem>>, vector<1x12x8xf32>,
    %1271 = vector.extract_strided_slice %1250 {offsets = [0, 32], sizes = [12, 8], strides = [1, 1]} : vector<12x64xf32> to vector<12x8xf32>
    %c5_453 = arith.constant 5 : index
    %c0_454 = arith.constant 0 : index
    %c1_455 = arith.constant 1 : index
    %1272 = vector.load %arg40[%c5_453, %c0_454, %c1_455] : memref<10x12x10xf32, #tpu.memory_space<vmem>>, vector<1x12x8xf32>
    %1273 = vector.shape_cast %1272 : vector<1x12x8xf32> to vector<12x8xf32>
    %1274 = vector.shape_cast %1271 : vector<12x8xf32> to vector<1x12x8xf32>
    tpu.vector_store %arg40[%c5_453, %c0_454, %c1_455], %1274 {strides = array<i32>} : memref<10x12x10xf32, #tpu.memory_space<vmem>>, vector<1x12x8xf32>,
    %1275 = vector.extract_strided_slice %1250 {offsets = [0, 40], sizes = [12, 8], strides = [1, 1]} : vector<12x64xf32> to vector<12x8xf32>
    %c6_456 = arith.constant 6 : index
    %c0_457 = arith.constant 0 : index
    %c1_458 = arith.constant 1 : index
    %1276 = vector.load %arg40[%c6_456, %c0_457, %c1_458] : memref<10x12x10xf32, #tpu.memory_space<vmem>>, vector<1x12x8xf32>
    %1277 = vector.shape_cast %1276 : vector<1x12x8xf32> to vector<12x8xf32>
    %1278 = vector.shape_cast %1275 : vector<12x8xf32> to vector<1x12x8xf32>
    tpu.vector_store %arg40[%c6_456, %c0_457, %c1_458], %1278 {strides = array<i32>} : memref<10x12x10xf32, #tpu.memory_space<vmem>>, vector<1x12x8xf32>,
    %1279 = vector.extract_strided_slice %1250 {offsets = [0, 48], sizes = [12, 8], strides = [1, 1]} : vector<12x64xf32> to vector<12x8xf32>
    %c7_459 = arith.constant 7 : index
    %c0_460 = arith.constant 0 : index
    %c1_461 = arith.constant 1 : index
    %1280 = vector.load %arg40[%c7_459, %c0_460, %c1_461] : memref<10x12x10xf32, #tpu.memory_space<vmem>>, vector<1x12x8xf32>
    %1281 = vector.shape_cast %1280 : vector<1x12x8xf32> to vector<12x8xf32>
    %1282 = vector.shape_cast %1279 : vector<12x8xf32> to vector<1x12x8xf32>
    tpu.vector_store %arg40[%c7_459, %c0_460, %c1_461], %1282 {strides = array<i32>} : memref<10x12x10xf32, #tpu.memory_space<vmem>>, vector<1x12x8xf32>,
    %1283 = vector.extract_strided_slice %1250 {offsets = [0, 56], sizes = [12, 8], strides = [1, 1]} : vector<12x64xf32> to vector<12x8xf32>
    %c8_462 = arith.constant 8 : index
    %c0_463 = arith.constant 0 : index
    %c1_464 = arith.constant 1 : index
    %1284 = vector.load %arg40[%c8_462, %c0_463, %c1_464] : memref<10x12x10xf32, #tpu.memory_space<vmem>>, vector<1x12x8xf32>
    %1285 = vector.shape_cast %1284 : vector<1x12x8xf32> to vector<12x8xf32>
    %1286 = vector.shape_cast %1283 : vector<12x8xf32> to vector<1x12x8xf32>
    tpu.vector_store %arg40[%c8_462, %c0_463, %c1_464], %1286 {strides = array<i32>} : memref<10x12x10xf32, #tpu.memory_space<vmem>>, vector<1x12x8xf32>,
    %cst_465 = arith.constant 0.000000e+00 : f32
    %1287 = vector.broadcast %cst_465 : f32 to vector<12x9xf32>
    %c0_466 = arith.constant 0 : index
    %c0_467 = arith.constant 0 : index
    %c0_468 = arith.constant 0 : index
    %1288 = vector.load %arg40[%c0_466, %c0_467, %c0_468] : memref<10x12x10xf32, #tpu.memory_space<vmem>>, vector<1x12x10xf32>
    %1289 = vector.shape_cast %1288 : vector<1x12x10xf32> to vector<12x10xf32>
    %1290 = vector.extract_strided_slice %1251 {offsets = [0, 0], sizes = [12, 1], strides = [1, 1]} : vector<12x4xf32> to vector<12x1xf32>
    %1291 = vector.extract_strided_slice %1289 {offsets = [0, 0], sizes = [12, 9], strides = [1, 1]} : vector<12x10xf32> to vector<12x9xf32>
    %1292 = vector.broadcast %1290 : vector<12x1xf32> to vector<12x9xf32>
    %1293 = arith.mulf %1292, %1291 : vector<12x9xf32>
    %1294 = arith.addf %1287, %1293 : vector<12x9xf32>
    %1295 = vector.extract_strided_slice %1251 {offsets = [0, 1], sizes = [12, 1], strides = [1, 1]} : vector<12x4xf32> to vector<12x1xf32>
    %1296 = vector.extract_strided_slice %1289 {offsets = [0, 1], sizes = [12, 9], strides = [1, 1]} : vector<12x10xf32> to vector<12x9xf32>
    %1297 = vector.broadcast %1295 : vector<12x1xf32> to vector<12x9xf32>
    %1298 = arith.mulf %1297, %1296 : vector<12x9xf32>
    %1299 = arith.addf %1294, %1298 : vector<12x9xf32>
    %c1_469 = arith.constant 1 : index
    %c0_470 = arith.constant 0 : index
    %c0_471 = arith.constant 0 : index
    %1300 = vector.load %arg40[%c1_469, %c0_470, %c0_471] : memref<10x12x10xf32, #tpu.memory_space<vmem>>, vector<1x12x10xf32>
    %1301 = vector.shape_cast %1300 : vector<1x12x10xf32> to vector<12x10xf32>
    %1302 = vector.extract_strided_slice %1251 {offsets = [0, 2], sizes = [12, 1], strides = [1, 1]} : vector<12x4xf32> to vector<12x1xf32>
    %1303 = vector.extract_strided_slice %1301 {offsets = [0, 0], sizes = [12, 9], strides = [1, 1]} : vector<12x10xf32> to vector<12x9xf32>
    %1304 = vector.broadcast %1302 : vector<12x1xf32> to vector<12x9xf32>
    %1305 = arith.mulf %1304, %1303 : vector<12x9xf32>
    %1306 = arith.addf %1299, %1305 : vector<12x9xf32>
    %1307 = vector.extract_strided_slice %1251 {offsets = [0, 3], sizes = [12, 1], strides = [1, 1]} : vector<12x4xf32> to vector<12x1xf32>
    %1308 = vector.extract_strided_slice %1301 {offsets = [0, 1], sizes = [12, 9], strides = [1, 1]} : vector<12x10xf32> to vector<12x9xf32>
    %1309 = vector.broadcast %1307 : vector<12x1xf32> to vector<12x9xf32>
    %1310 = arith.mulf %1309, %1308 : vector<12x9xf32>
    %1311 = arith.addf %1306, %1310 : vector<12x9xf32>
    %1312 = vector.broadcast %1252 : vector<12x1xf32> to vector<12x9xf32>
    %1313 = arith.addf %1311, %1312 : vector<12x9xf32>
    %c24_472 = arith.constant 24 : index
    %c0_473 = arith.constant 0 : index
    %1314 = vector.load %arg41[%c24_472, %c0_473] : memref<36x81xf32, #tpu.memory_space<vmem>>, vector<12x9xf32>
    tpu.vector_store %arg41[%c24_472, %c0_473], %1313 {strides = array<i32>} : memref<36x81xf32, #tpu.memory_space<vmem>>, vector<12x9xf32>,
    %cst_474 = arith.constant 0.000000e+00 : f32
    %1315 = vector.broadcast %cst_474 : f32 to vector<12x9xf32>
    %c1_475 = arith.constant 1 : index
    %c0_476 = arith.constant 0 : index
    %c0_477 = arith.constant 0 : index
    %1316 = vector.load %arg40[%c1_475, %c0_476, %c0_477] : memref<10x12x10xf32, #tpu.memory_space<vmem>>, vector<1x12x10xf32>
    %1317 = vector.shape_cast %1316 : vector<1x12x10xf32> to vector<12x10xf32>
    %1318 = vector.extract_strided_slice %1251 {offsets = [0, 0], sizes = [12, 1], strides = [1, 1]} : vector<12x4xf32> to vector<12x1xf32>
    %1319 = vector.extract_strided_slice %1317 {offsets = [0, 0], sizes = [12, 9], strides = [1, 1]} : vector<12x10xf32> to vector<12x9xf32>
    %1320 = vector.broadcast %1318 : vector<12x1xf32> to vector<12x9xf32>
    %1321 = arith.mulf %1320, %1319 : vector<12x9xf32>
    %1322 = arith.addf %1315, %1321 : vector<12x9xf32>
    %1323 = vector.extract_strided_slice %1251 {offsets = [0, 1], sizes = [12, 1], strides = [1, 1]} : vector<12x4xf32> to vector<12x1xf32>
    %1324 = vector.extract_strided_slice %1317 {offsets = [0, 1], sizes = [12, 9], strides = [1, 1]} : vector<12x10xf32> to vector<12x9xf32>
    %1325 = vector.broadcast %1323 : vector<12x1xf32> to vector<12x9xf32>
    %1326 = arith.mulf %1325, %1324 : vector<12x9xf32>
    %1327 = arith.addf %1322, %1326 : vector<12x9xf32>
    %c2_478 = arith.constant 2 : index
    %c0_479 = arith.constant 0 : index
    %c0_480 = arith.constant 0 : index
    %1328 = vector.load %arg40[%c2_478, %c0_479, %c0_480] : memref<10x12x10xf32, #tpu.memory_space<vmem>>, vector<1x12x10xf32>
    %1329 = vector.shape_cast %1328 : vector<1x12x10xf32> to vector<12x10xf32>
    %1330 = vector.extract_strided_slice %1251 {offsets = [0, 2], sizes = [12, 1], strides = [1, 1]} : vector<12x4xf32> to vector<12x1xf32>
    %1331 = vector.extract_strided_slice %1329 {offsets = [0, 0], sizes = [12, 9], strides = [1, 1]} : vector<12x10xf32> to vector<12x9xf32>
    %1332 = vector.broadcast %1330 : vector<12x1xf32> to vector<12x9xf32>
    %1333 = arith.mulf %1332, %1331 : vector<12x9xf32>
    %1334 = arith.addf %1327, %1333 : vector<12x9xf32>
    %1335 = vector.extract_strided_slice %1251 {offsets = [0, 3], sizes = [12, 1], strides = [1, 1]} : vector<12x4xf32> to vector<12x1xf32>
    %1336 = vector.extract_strided_slice %1329 {offsets = [0, 1], sizes = [12, 9], strides = [1, 1]} : vector<12x10xf32> to vector<12x9xf32>
    %1337 = vector.broadcast %1335 : vector<12x1xf32> to vector<12x9xf32>
    %1338 = arith.mulf %1337, %1336 : vector<12x9xf32>
    %1339 = arith.addf %1334, %1338 : vector<12x9xf32>
    %1340 = vector.broadcast %1252 : vector<12x1xf32> to vector<12x9xf32>
    %1341 = arith.addf %1339, %1340 : vector<12x9xf32>
    %c24_481 = arith.constant 24 : index
    %c9_482 = arith.constant 9 : index
    %1342 = vector.load %arg41[%c24_481, %c9_482] : memref<36x81xf32, #tpu.memory_space<vmem>>, vector<12x9xf32>
    tpu.vector_store %arg41[%c24_481, %c9_482], %1341 {strides = array<i32>} : memref<36x81xf32, #tpu.memory_space<vmem>>, vector<12x9xf32>,
    %cst_483 = arith.constant 0.000000e+00 : f32
    %1343 = vector.broadcast %cst_483 : f32 to vector<12x9xf32>
    %c2_484 = arith.constant 2 : index
    %c0_485 = arith.constant 0 : index
    %c0_486 = arith.constant 0 : index
    %1344 = vector.load %arg40[%c2_484, %c0_485, %c0_486] : memref<10x12x10xf32, #tpu.memory_space<vmem>>, vector<1x12x10xf32>
    %1345 = vector.shape_cast %1344 : vector<1x12x10xf32> to vector<12x10xf32>
    %1346 = vector.extract_strided_slice %1251 {offsets = [0, 0], sizes = [12, 1], strides = [1, 1]} : vector<12x4xf32> to vector<12x1xf32>
    %1347 = vector.extract_strided_slice %1345 {offsets = [0, 0], sizes = [12, 9], strides = [1, 1]} : vector<12x10xf32> to vector<12x9xf32>
    %1348 = vector.broadcast %1346 : vector<12x1xf32> to vector<12x9xf32>
    %1349 = arith.mulf %1348, %1347 : vector<12x9xf32>
    %1350 = arith.addf %1343, %1349 : vector<12x9xf32>
    %1351 = vector.extract_strided_slice %1251 {offsets = [0, 1], sizes = [12, 1], strides = [1, 1]} : vector<12x4xf32> to vector<12x1xf32>
    %1352 = vector.extract_strided_slice %1345 {offsets = [0, 1], sizes = [12, 9], strides = [1, 1]} : vector<12x10xf32> to vector<12x9xf32>
    %1353 = vector.broadcast %1351 : vector<12x1xf32> to vector<12x9xf32>
    %1354 = arith.mulf %1353, %1352 : vector<12x9xf32>
    %1355 = arith.addf %1350, %1354 : vector<12x9xf32>
    %c3_487 = arith.constant 3 : index
    %c0_488 = arith.constant 0 : index
    %c0_489 = arith.constant 0 : index
    %1356 = vector.load %arg40[%c3_487, %c0_488, %c0_489] : memref<10x12x10xf32, #tpu.memory_space<vmem>>, vector<1x12x10xf32>
    %1357 = vector.shape_cast %1356 : vector<1x12x10xf32> to vector<12x10xf32>
    %1358 = vector.extract_strided_slice %1251 {offsets = [0, 2], sizes = [12, 1], strides = [1, 1]} : vector<12x4xf32> to vector<12x1xf32>
    %1359 = vector.extract_strided_slice %1357 {offsets = [0, 0], sizes = [12, 9], strides = [1, 1]} : vector<12x10xf32> to vector<12x9xf32>
    %1360 = vector.broadcast %1358 : vector<12x1xf32> to vector<12x9xf32>
    %1361 = arith.mulf %1360, %1359 : vector<12x9xf32>
    %1362 = arith.addf %1355, %1361 : vector<12x9xf32>
    %1363 = vector.extract_strided_slice %1251 {offsets = [0, 3], sizes = [12, 1], strides = [1, 1]} : vector<12x4xf32> to vector<12x1xf32>
    %1364 = vector.extract_strided_slice %1357 {offsets = [0, 1], sizes = [12, 9], strides = [1, 1]} : vector<12x10xf32> to vector<12x9xf32>
    %1365 = vector.broadcast %1363 : vector<12x1xf32> to vector<12x9xf32>
    %1366 = arith.mulf %1365, %1364 : vector<12x9xf32>
    %1367 = arith.addf %1362, %1366 : vector<12x9xf32>
    %1368 = vector.broadcast %1252 : vector<12x1xf32> to vector<12x9xf32>
    %1369 = arith.addf %1367, %1368 : vector<12x9xf32>
    %c24_490 = arith.constant 24 : index
    %c18_491 = arith.constant 18 : index
    %1370 = vector.load %arg41[%c24_490, %c18_491] : memref<36x81xf32, #tpu.memory_space<vmem>>, vector<12x9xf32>
    tpu.vector_store %arg41[%c24_490, %c18_491], %1369 {strides = array<i32>} : memref<36x81xf32, #tpu.memory_space<vmem>>, vector<12x9xf32>,
    %cst_492 = arith.constant 0.000000e+00 : f32
    %1371 = vector.broadcast %cst_492 : f32 to vector<12x9xf32>
    %c3_493 = arith.constant 3 : index
    %c0_494 = arith.constant 0 : index
    %c0_495 = arith.constant 0 : index
    %1372 = vector.load %arg40[%c3_493, %c0_494, %c0_495] : memref<10x12x10xf32, #tpu.memory_space<vmem>>, vector<1x12x10xf32>
    %1373 = vector.shape_cast %1372 : vector<1x12x10xf32> to vector<12x10xf32>
    %1374 = vector.extract_strided_slice %1251 {offsets = [0, 0], sizes = [12, 1], strides = [1, 1]} : vector<12x4xf32> to vector<12x1xf32>
    %1375 = vector.extract_strided_slice %1373 {offsets = [0, 0], sizes = [12, 9], strides = [1, 1]} : vector<12x10xf32> to vector<12x9xf32>
    %1376 = vector.broadcast %1374 : vector<12x1xf32> to vector<12x9xf32>
    %1377 = arith.mulf %1376, %1375 : vector<12x9xf32>
    %1378 = arith.addf %1371, %1377 : vector<12x9xf32>
    %1379 = vector.extract_strided_slice %1251 {offsets = [0, 1], sizes = [12, 1], strides = [1, 1]} : vector<12x4xf32> to vector<12x1xf32>
    %1380 = vector.extract_strided_slice %1373 {offsets = [0, 1], sizes = [12, 9], strides = [1, 1]} : vector<12x10xf32> to vector<12x9xf32>
    %1381 = vector.broadcast %1379 : vector<12x1xf32> to vector<12x9xf32>
    %1382 = arith.mulf %1381, %1380 : vector<12x9xf32>
    %1383 = arith.addf %1378, %1382 : vector<12x9xf32>
    %c4_496 = arith.constant 4 : index
    %c0_497 = arith.constant 0 : index
    %c0_498 = arith.constant 0 : index
    %1384 = vector.load %arg40[%c4_496, %c0_497, %c0_498] : memref<10x12x10xf32, #tpu.memory_space<vmem>>, vector<1x12x10xf32>
    %1385 = vector.shape_cast %1384 : vector<1x12x10xf32> to vector<12x10xf32>
    %1386 = vector.extract_strided_slice %1251 {offsets = [0, 2], sizes = [12, 1], strides = [1, 1]} : vector<12x4xf32> to vector<12x1xf32>
    %1387 = vector.extract_strided_slice %1385 {offsets = [0, 0], sizes = [12, 9], strides = [1, 1]} : vector<12x10xf32> to vector<12x9xf32>
    %1388 = vector.broadcast %1386 : vector<12x1xf32> to vector<12x9xf32>
    %1389 = arith.mulf %1388, %1387 : vector<12x9xf32>
    %1390 = arith.addf %1383, %1389 : vector<12x9xf32>
    %1391 = vector.extract_strided_slice %1251 {offsets = [0, 3], sizes = [12, 1], strides = [1, 1]} : vector<12x4xf32> to vector<12x1xf32>
    %1392 = vector.extract_strided_slice %1385 {offsets = [0, 1], sizes = [12, 9], strides = [1, 1]} : vector<12x10xf32> to vector<12x9xf32>
    %1393 = vector.broadcast %1391 : vector<12x1xf32> to vector<12x9xf32>
    %1394 = arith.mulf %1393, %1392 : vector<12x9xf32>
    %1395 = arith.addf %1390, %1394 : vector<12x9xf32>
    %1396 = vector.broadcast %1252 : vector<12x1xf32> to vector<12x9xf32>
    %1397 = arith.addf %1395, %1396 : vector<12x9xf32>
    %c24_499 = arith.constant 24 : index
    %c27_500 = arith.constant 27 : index
    %1398 = vector.load %arg41[%c24_499, %c27_500] : memref<36x81xf32, #tpu.memory_space<vmem>>, vector<12x9xf32>
    tpu.vector_store %arg41[%c24_499, %c27_500], %1397 {strides = array<i32>} : memref<36x81xf32, #tpu.memory_space<vmem>>, vector<12x9xf32>,
    %cst_501 = arith.constant 0.000000e+00 : f32
    %1399 = vector.broadcast %cst_501 : f32 to vector<12x9xf32>
    %c4_502 = arith.constant 4 : index
    %c0_503 = arith.constant 0 : index
    %c0_504 = arith.constant 0 : index
    %1400 = vector.load %arg40[%c4_502, %c0_503, %c0_504] : memref<10x12x10xf32, #tpu.memory_space<vmem>>, vector<1x12x10xf32>
    %1401 = vector.shape_cast %1400 : vector<1x12x10xf32> to vector<12x10xf32>
    %1402 = vector.extract_strided_slice %1251 {offsets = [0, 0], sizes = [12, 1], strides = [1, 1]} : vector<12x4xf32> to vector<12x1xf32>
    %1403 = vector.extract_strided_slice %1401 {offsets = [0, 0], sizes = [12, 9], strides = [1, 1]} : vector<12x10xf32> to vector<12x9xf32>
    %1404 = vector.broadcast %1402 : vector<12x1xf32> to vector<12x9xf32>
    %1405 = arith.mulf %1404, %1403 : vector<12x9xf32>
    %1406 = arith.addf %1399, %1405 : vector<12x9xf32>
    %1407 = vector.extract_strided_slice %1251 {offsets = [0, 1], sizes = [12, 1], strides = [1, 1]} : vector<12x4xf32> to vector<12x1xf32>
    %1408 = vector.extract_strided_slice %1401 {offsets = [0, 1], sizes = [12, 9], strides = [1, 1]} : vector<12x10xf32> to vector<12x9xf32>
    %1409 = vector.broadcast %1407 : vector<12x1xf32> to vector<12x9xf32>
    %1410 = arith.mulf %1409, %1408 : vector<12x9xf32>
    %1411 = arith.addf %1406, %1410 : vector<12x9xf32>
    %c5_505 = arith.constant 5 : index
    %c0_506 = arith.constant 0 : index
    %c0_507 = arith.constant 0 : index
    %1412 = vector.load %arg40[%c5_505, %c0_506, %c0_507] : memref<10x12x10xf32, #tpu.memory_space<vmem>>, vector<1x12x10xf32>
    %1413 = vector.shape_cast %1412 : vector<1x12x10xf32> to vector<12x10xf32>
    %1414 = vector.extract_strided_slice %1251 {offsets = [0, 2], sizes = [12, 1], strides = [1, 1]} : vector<12x4xf32> to vector<12x1xf32>
    %1415 = vector.extract_strided_slice %1413 {offsets = [0, 0], sizes = [12, 9], strides = [1, 1]} : vector<12x10xf32> to vector<12x9xf32>
    %1416 = vector.broadcast %1414 : vector<12x1xf32> to vector<12x9xf32>
    %1417 = arith.mulf %1416, %1415 : vector<12x9xf32>
    %1418 = arith.addf %1411, %1417 : vector<12x9xf32>
    %1419 = vector.extract_strided_slice %1251 {offsets = [0, 3], sizes = [12, 1], strides = [1, 1]} : vector<12x4xf32> to vector<12x1xf32>
    %1420 = vector.extract_strided_slice %1413 {offsets = [0, 1], sizes = [12, 9], strides = [1, 1]} : vector<12x10xf32> to vector<12x9xf32>
    %1421 = vector.broadcast %1419 : vector<12x1xf32> to vector<12x9xf32>
    %1422 = arith.mulf %1421, %1420 : vector<12x9xf32>
    %1423 = arith.addf %1418, %1422 : vector<12x9xf32>
    %1424 = vector.broadcast %1252 : vector<12x1xf32> to vector<12x9xf32>
    %1425 = arith.addf %1423, %1424 : vector<12x9xf32>
    %c24_508 = arith.constant 24 : index
    %c36_509 = arith.constant 36 : index
    %1426 = vector.load %arg41[%c24_508, %c36_509] : memref<36x81xf32, #tpu.memory_space<vmem>>, vector<12x9xf32>
    tpu.vector_store %arg41[%c24_508, %c36_509], %1425 {strides = array<i32>} : memref<36x81xf32, #tpu.memory_space<vmem>>, vector<12x9xf32>,
    %cst_510 = arith.constant 0.000000e+00 : f32
    %1427 = vector.broadcast %cst_510 : f32 to vector<12x9xf32>
    %c5_511 = arith.constant 5 : index
    %c0_512 = arith.constant 0 : index
    %c0_513 = arith.constant 0 : index
    %1428 = vector.load %arg40[%c5_511, %c0_512, %c0_513] : memref<10x12x10xf32, #tpu.memory_space<vmem>>, vector<1x12x10xf32>
    %1429 = vector.shape_cast %1428 : vector<1x12x10xf32> to vector<12x10xf32>
    %1430 = vector.extract_strided_slice %1251 {offsets = [0, 0], sizes = [12, 1], strides = [1, 1]} : vector<12x4xf32> to vector<12x1xf32>
    %1431 = vector.extract_strided_slice %1429 {offsets = [0, 0], sizes = [12, 9], strides = [1, 1]} : vector<12x10xf32> to vector<12x9xf32>
    %1432 = vector.broadcast %1430 : vector<12x1xf32> to vector<12x9xf32>
    %1433 = arith.mulf %1432, %1431 : vector<12x9xf32>
    %1434 = arith.addf %1427, %1433 : vector<12x9xf32>
    %1435 = vector.extract_strided_slice %1251 {offsets = [0, 1], sizes = [12, 1], strides = [1, 1]} : vector<12x4xf32> to vector<12x1xf32>
    %1436 = vector.extract_strided_slice %1429 {offsets = [0, 1], sizes = [12, 9], strides = [1, 1]} : vector<12x10xf32> to vector<12x9xf32>
    %1437 = vector.broadcast %1435 : vector<12x1xf32> to vector<12x9xf32>
    %1438 = arith.mulf %1437, %1436 : vector<12x9xf32>
    %1439 = arith.addf %1434, %1438 : vector<12x9xf32>
    %c6_514 = arith.constant 6 : index
    %c0_515 = arith.constant 0 : index
    %c0_516 = arith.constant 0 : index
    %1440 = vector.load %arg40[%c6_514, %c0_515, %c0_516] : memref<10x12x10xf32, #tpu.memory_space<vmem>>, vector<1x12x10xf32>
    %1441 = vector.shape_cast %1440 : vector<1x12x10xf32> to vector<12x10xf32>
    %1442 = vector.extract_strided_slice %1251 {offsets = [0, 2], sizes = [12, 1], strides = [1, 1]} : vector<12x4xf32> to vector<12x1xf32>
    %1443 = vector.extract_strided_slice %1441 {offsets = [0, 0], sizes = [12, 9], strides = [1, 1]} : vector<12x10xf32> to vector<12x9xf32>
    %1444 = vector.broadcast %1442 : vector<12x1xf32> to vector<12x9xf32>
    %1445 = arith.mulf %1444, %1443 : vector<12x9xf32>
    %1446 = arith.addf %1439, %1445 : vector<12x9xf32>
    %1447 = vector.extract_strided_slice %1251 {offsets = [0, 3], sizes = [12, 1], strides = [1, 1]} : vector<12x4xf32> to vector<12x1xf32>
    %1448 = vector.extract_strided_slice %1441 {offsets = [0, 1], sizes = [12, 9], strides = [1, 1]} : vector<12x10xf32> to vector<12x9xf32>
    %1449 = vector.broadcast %1447 : vector<12x1xf32> to vector<12x9xf32>
    %1450 = arith.mulf %1449, %1448 : vector<12x9xf32>
    %1451 = arith.addf %1446, %1450 : vector<12x9xf32>
    %1452 = vector.broadcast %1252 : vector<12x1xf32> to vector<12x9xf32>
    %1453 = arith.addf %1451, %1452 : vector<12x9xf32>
    %c24_517 = arith.constant 24 : index
    %c45_518 = arith.constant 45 : index
    %1454 = vector.load %arg41[%c24_517, %c45_518] : memref<36x81xf32, #tpu.memory_space<vmem>>, vector<12x9xf32>
    tpu.vector_store %arg41[%c24_517, %c45_518], %1453 {strides = array<i32>} : memref<36x81xf32, #tpu.memory_space<vmem>>, vector<12x9xf32>,
    %cst_519 = arith.constant 0.000000e+00 : f32
    %1455 = vector.broadcast %cst_519 : f32 to vector<12x9xf32>
    %c6_520 = arith.constant 6 : index
    %c0_521 = arith.constant 0 : index
    %c0_522 = arith.constant 0 : index
    %1456 = vector.load %arg40[%c6_520, %c0_521, %c0_522] : memref<10x12x10xf32, #tpu.memory_space<vmem>>, vector<1x12x10xf32>
    %1457 = vector.shape_cast %1456 : vector<1x12x10xf32> to vector<12x10xf32>
    %1458 = vector.extract_strided_slice %1251 {offsets = [0, 0], sizes = [12, 1], strides = [1, 1]} : vector<12x4xf32> to vector<12x1xf32>
    %1459 = vector.extract_strided_slice %1457 {offsets = [0, 0], sizes = [12, 9], strides = [1, 1]} : vector<12x10xf32> to vector<12x9xf32>
    %1460 = vector.broadcast %1458 : vector<12x1xf32> to vector<12x9xf32>
    %1461 = arith.mulf %1460, %1459 : vector<12x9xf32>
    %1462 = arith.addf %1455, %1461 : vector<12x9xf32>
    %1463 = vector.extract_strided_slice %1251 {offsets = [0, 1], sizes = [12, 1], strides = [1, 1]} : vector<12x4xf32> to vector<12x1xf32>
    %1464 = vector.extract_strided_slice %1457 {offsets = [0, 1], sizes = [12, 9], strides = [1, 1]} : vector<12x10xf32> to vector<12x9xf32>
    %1465 = vector.broadcast %1463 : vector<12x1xf32> to vector<12x9xf32>
    %1466 = arith.mulf %1465, %1464 : vector<12x9xf32>
    %1467 = arith.addf %1462, %1466 : vector<12x9xf32>
    %c7_523 = arith.constant 7 : index
    %c0_524 = arith.constant 0 : index
    %c0_525 = arith.constant 0 : index
    %1468 = vector.load %arg40[%c7_523, %c0_524, %c0_525] : memref<10x12x10xf32, #tpu.memory_space<vmem>>, vector<1x12x10xf32>
    %1469 = vector.shape_cast %1468 : vector<1x12x10xf32> to vector<12x10xf32>
    %1470 = vector.extract_strided_slice %1251 {offsets = [0, 2], sizes = [12, 1], strides = [1, 1]} : vector<12x4xf32> to vector<12x1xf32>
    %1471 = vector.extract_strided_slice %1469 {offsets = [0, 0], sizes = [12, 9], strides = [1, 1]} : vector<12x10xf32> to vector<12x9xf32>
    %1472 = vector.broadcast %1470 : vector<12x1xf32> to vector<12x9xf32>
    %1473 = arith.mulf %1472, %1471 : vector<12x9xf32>
    %1474 = arith.addf %1467, %1473 : vector<12x9xf32>
    %1475 = vector.extract_strided_slice %1251 {offsets = [0, 3], sizes = [12, 1], strides = [1, 1]} : vector<12x4xf32> to vector<12x1xf32>
    %1476 = vector.extract_strided_slice %1469 {offsets = [0, 1], sizes = [12, 9], strides = [1, 1]} : vector<12x10xf32> to vector<12x9xf32>
    %1477 = vector.broadcast %1475 : vector<12x1xf32> to vector<12x9xf32>
    %1478 = arith.mulf %1477, %1476 : vector<12x9xf32>
    %1479 = arith.addf %1474, %1478 : vector<12x9xf32>
    %1480 = vector.broadcast %1252 : vector<12x1xf32> to vector<12x9xf32>
    %1481 = arith.addf %1479, %1480 : vector<12x9xf32>
    %c24_526 = arith.constant 24 : index
    %c54_527 = arith.constant 54 : index
    %1482 = vector.load %arg41[%c24_526, %c54_527] : memref<36x81xf32, #tpu.memory_space<vmem>>, vector<12x9xf32>
    tpu.vector_store %arg41[%c24_526, %c54_527], %1481 {strides = array<i32>} : memref<36x81xf32, #tpu.memory_space<vmem>>, vector<12x9xf32>,
    %cst_528 = arith.constant 0.000000e+00 : f32
    %1483 = vector.broadcast %cst_528 : f32 to vector<12x9xf32>
    %c7_529 = arith.constant 7 : index
    %c0_530 = arith.constant 0 : index
    %c0_531 = arith.constant 0 : index
    %1484 = vector.load %arg40[%c7_529, %c0_530, %c0_531] : memref<10x12x10xf32, #tpu.memory_space<vmem>>, vector<1x12x10xf32>
    %1485 = vector.shape_cast %1484 : vector<1x12x10xf32> to vector<12x10xf32>
    %1486 = vector.extract_strided_slice %1251 {offsets = [0, 0], sizes = [12, 1], strides = [1, 1]} : vector<12x4xf32> to vector<12x1xf32>
    %1487 = vector.extract_strided_slice %1485 {offsets = [0, 0], sizes = [12, 9], strides = [1, 1]} : vector<12x10xf32> to vector<12x9xf32>
    %1488 = vector.broadcast %1486 : vector<12x1xf32> to vector<12x9xf32>
    %1489 = arith.mulf %1488, %1487 : vector<12x9xf32>
    %1490 = arith.addf %1483, %1489 : vector<12x9xf32>
    %1491 = vector.extract_strided_slice %1251 {offsets = [0, 1], sizes = [12, 1], strides = [1, 1]} : vector<12x4xf32> to vector<12x1xf32>
    %1492 = vector.extract_strided_slice %1485 {offsets = [0, 1], sizes = [12, 9], strides = [1, 1]} : vector<12x10xf32> to vector<12x9xf32>
    %1493 = vector.broadcast %1491 : vector<12x1xf32> to vector<12x9xf32>
    %1494 = arith.mulf %1493, %1492 : vector<12x9xf32>
    %1495 = arith.addf %1490, %1494 : vector<12x9xf32>
    %c8_532 = arith.constant 8 : index
    %c0_533 = arith.constant 0 : index
    %c0_534 = arith.constant 0 : index
    %1496 = vector.load %arg40[%c8_532, %c0_533, %c0_534] : memref<10x12x10xf32, #tpu.memory_space<vmem>>, vector<1x12x10xf32>
    %1497 = vector.shape_cast %1496 : vector<1x12x10xf32> to vector<12x10xf32>
    %1498 = vector.extract_strided_slice %1251 {offsets = [0, 2], sizes = [12, 1], strides = [1, 1]} : vector<12x4xf32> to vector<12x1xf32>
    %1499 = vector.extract_strided_slice %1497 {offsets = [0, 0], sizes = [12, 9], strides = [1, 1]} : vector<12x10xf32> to vector<12x9xf32>
    %1500 = vector.broadcast %1498 : vector<12x1xf32> to vector<12x9xf32>
    %1501 = arith.mulf %1500, %1499 : vector<12x9xf32>
    %1502 = arith.addf %1495, %1501 : vector<12x9xf32>
    %1503 = vector.extract_strided_slice %1251 {offsets = [0, 3], sizes = [12, 1], strides = [1, 1]} : vector<12x4xf32> to vector<12x1xf32>
    %1504 = vector.extract_strided_slice %1497 {offsets = [0, 1], sizes = [12, 9], strides = [1, 1]} : vector<12x10xf32> to vector<12x9xf32>
    %1505 = vector.broadcast %1503 : vector<12x1xf32> to vector<12x9xf32>
    %1506 = arith.mulf %1505, %1504 : vector<12x9xf32>
    %1507 = arith.addf %1502, %1506 : vector<12x9xf32>
    %1508 = vector.broadcast %1252 : vector<12x1xf32> to vector<12x9xf32>
    %1509 = arith.addf %1507, %1508 : vector<12x9xf32>
    %c24_535 = arith.constant 24 : index
    %c63_536 = arith.constant 63 : index
    %1510 = vector.load %arg41[%c24_535, %c63_536] : memref<36x81xf32, #tpu.memory_space<vmem>>, vector<12x9xf32>
    tpu.vector_store %arg41[%c24_535, %c63_536], %1509 {strides = array<i32>} : memref<36x81xf32, #tpu.memory_space<vmem>>, vector<12x9xf32>,
    %cst_537 = arith.constant 0.000000e+00 : f32
    %1511 = vector.broadcast %cst_537 : f32 to vector<12x9xf32>
    %c8_538 = arith.constant 8 : index
    %c0_539 = arith.constant 0 : index
    %c0_540 = arith.constant 0 : index
    %1512 = vector.load %arg40[%c8_538, %c0_539, %c0_540] : memref<10x12x10xf32, #tpu.memory_space<vmem>>, vector<1x12x10xf32>
    %1513 = vector.shape_cast %1512 : vector<1x12x10xf32> to vector<12x10xf32>
    %1514 = vector.extract_strided_slice %1251 {offsets = [0, 0], sizes = [12, 1], strides = [1, 1]} : vector<12x4xf32> to vector<12x1xf32>
    %1515 = vector.extract_strided_slice %1513 {offsets = [0, 0], sizes = [12, 9], strides = [1, 1]} : vector<12x10xf32> to vector<12x9xf32>
    %1516 = vector.broadcast %1514 : vector<12x1xf32> to vector<12x9xf32>
    %1517 = arith.mulf %1516, %1515 : vector<12x9xf32>
    %1518 = arith.addf %1511, %1517 : vector<12x9xf32>
    %1519 = vector.extract_strided_slice %1251 {offsets = [0, 1], sizes = [12, 1], strides = [1, 1]} : vector<12x4xf32> to vector<12x1xf32>
    %1520 = vector.extract_strided_slice %1513 {offsets = [0, 1], sizes = [12, 9], strides = [1, 1]} : vector<12x10xf32> to vector<12x9xf32>
    %1521 = vector.broadcast %1519 : vector<12x1xf32> to vector<12x9xf32>
    %1522 = arith.mulf %1521, %1520 : vector<12x9xf32>
    %1523 = arith.addf %1518, %1522 : vector<12x9xf32>
    %c9_541 = arith.constant 9 : index
    %c0_542 = arith.constant 0 : index
    %c0_543 = arith.constant 0 : index
    %1524 = vector.load %arg40[%c9_541, %c0_542, %c0_543] : memref<10x12x10xf32, #tpu.memory_space<vmem>>, vector<1x12x10xf32>
    %1525 = vector.shape_cast %1524 : vector<1x12x10xf32> to vector<12x10xf32>
    %1526 = vector.extract_strided_slice %1251 {offsets = [0, 2], sizes = [12, 1], strides = [1, 1]} : vector<12x4xf32> to vector<12x1xf32>
    %1527 = vector.extract_strided_slice %1525 {offsets = [0, 0], sizes = [12, 9], strides = [1, 1]} : vector<12x10xf32> to vector<12x9xf32>
    %1528 = vector.broadcast %1526 : vector<12x1xf32> to vector<12x9xf32>
    %1529 = arith.mulf %1528, %1527 : vector<12x9xf32>
    %1530 = arith.addf %1523, %1529 : vector<12x9xf32>
    %1531 = vector.extract_strided_slice %1251 {offsets = [0, 3], sizes = [12, 1], strides = [1, 1]} : vector<12x4xf32> to vector<12x1xf32>
    %1532 = vector.extract_strided_slice %1525 {offsets = [0, 1], sizes = [12, 9], strides = [1, 1]} : vector<12x10xf32> to vector<12x9xf32>
    %1533 = vector.broadcast %1531 : vector<12x1xf32> to vector<12x9xf32>
    %1534 = arith.mulf %1533, %1532 : vector<12x9xf32>
    %1535 = arith.addf %1530, %1534 : vector<12x9xf32>
    %1536 = vector.broadcast %1252 : vector<12x1xf32> to vector<12x9xf32>
    %1537 = arith.addf %1535, %1536 : vector<12x9xf32>
    %c24_544 = arith.constant 24 : index
    %c72_545 = arith.constant 72 : index
    %1538 = vector.load %arg41[%c24_544, %c72_545] : memref<36x81xf32, #tpu.memory_space<vmem>>, vector<12x9xf32>
    tpu.vector_store %arg41[%c24_544, %c72_545], %1537 {strides = array<i32>} : memref<36x81xf32, #tpu.memory_space<vmem>>, vector<12x9xf32>,
    %c0_546 = arith.constant 0 : index
    %c0_547 = arith.constant 0 : index
    %1539 = vector.load %arg28[%c0_546, %c0_547] : memref<36x36xf32, #tpu.memory_space<vmem>>, vector<36x36xf32>
    %c0_548 = arith.constant 0 : index
    %c0_549 = arith.constant 0 : index
    %1540 = vector.load %arg41[%c0_548, %c0_549] : memref<36x81xf32, #tpu.memory_space<vmem>>, vector<36x81xf32>
    %cst_550 = arith.constant dense<0.000000e+00> : vector<36x81xf32>
    %1541 = tpu.matmul %1539, %1540, %cst_550 {dimension_numbers = #tpu.dot_dimension_numbers<[1], [0], [0], [1], [0, 0, 1, 1], [], []>} : vector<36x36xf32>, vector<36x81xf32>, vector<36x81xf32> -> vector<36x81xf32>
    %c0_551 = arith.constant 0 : index
    %c0_552 = arith.constant 0 : index
    %1542 = vector.load %arg29[%c0_551, %c0_552] : memref<36x1xf32, #tpu.memory_space<vmem>>, vector<36x1xf32>
    %1543 = vector.broadcast %1542 : vector<36x1xf32> to vector<36x81xf32>
    %1544 = arith.addf %1541, %1543 : vector<36x81xf32>
    %c0_553 = arith.constant 0 : index
    %c0_554 = arith.constant 0 : index
    %1545 = vector.load %arg30[%c0_553, %c0_554] : memref<36x1xf32, #tpu.memory_space<vmem>>, vector<36x1xf32>
    %c0_555 = arith.constant 0 : index
    %c0_556 = arith.constant 0 : index
    %1546 = vector.load %arg31[%c0_555, %c0_556] : memref<36x1xf32, #tpu.memory_space<vmem>>, vector<36x1xf32>
    %c0_557 = arith.constant 0 : index
    %c0_558 = arith.constant 0 : index
    %1547 = vector.load %arg32[%c0_557, %c0_558] : memref<36x36xf32, #tpu.memory_space<vmem>>, vector<36x36xf32>
    %cst_559 = arith.constant dense<0.000000e+00> : vector<36xf32>
    %1548 = vector.multi_reduction <add>, %1544, %cst_559 [1] : vector<36x81xf32> to vector<36xf32>
    %1549 = vector.shape_cast %1548 : vector<36xf32> to vector<36x1xf32>
    %1550 = arith.mulf %1544, %1544 : vector<36x81xf32>
    %cst_560 = arith.constant dense<0.000000e+00> : vector<36xf32>
    %1551 = vector.multi_reduction <add>, %1550, %cst_560 [1] : vector<36x81xf32> to vector<36xf32>
    %1552 = vector.shape_cast %1551 : vector<36xf32> to vector<36x1xf32>
    %cst_561 = arith.constant dense<0.000000e+00> : vector<36x1xf32>
    %1553 = tpu.matmul %1547, %1549, %cst_561 {dimension_numbers = #tpu.dot_dimension_numbers<[1], [0], [0], [1], [0, 0, 1, 1], [], []>} : vector<36x36xf32>, vector<36x1xf32>, vector<36x1xf32> -> vector<36x1xf32>
    %cst_562 = arith.constant 0.00411522621 : f32
    %1554 = vector.broadcast %cst_562 : f32 to vector<36x1xf32>
    %1555 = arith.mulf %1553, %1554 : vector<36x1xf32>
    %cst_563 = arith.constant dense<0.000000e+00> : vector<36x1xf32>
    %1556 = tpu.matmul %1547, %1552, %cst_563 {dimension_numbers = #tpu.dot_dimension_numbers<[1], [0], [0], [1], [0, 0, 1, 1], [], []>} : vector<36x36xf32>, vector<36x1xf32>, vector<36x1xf32> -> vector<36x1xf32>
    %cst_564 = arith.constant 0.00411522621 : f32
    %1557 = vector.broadcast %cst_564 : f32 to vector<36x1xf32>
    %1558 = arith.mulf %1556, %1557 : vector<36x1xf32>
    %1559 = arith.mulf %1555, %1555 : vector<36x1xf32>
    %1560 = arith.subf %1558, %1559 : vector<36x1xf32>
    %cst_565 = arith.constant 9.99999974E-6 : f32
    %1561 = vector.broadcast %cst_565 : f32 to vector<36x1xf32>
    %1562 = arith.addf %1560, %1561 : vector<36x1xf32>
    %1563 = math.rsqrt %1562 : vector<36x1xf32>
    %1564 = arith.mulf %1545, %1563 : vector<36x1xf32>
    %1565 = vector.broadcast %1564 : vector<36x1xf32> to vector<36x81xf32>
    %1566 = arith.mulf %1544, %1565 : vector<36x81xf32>
    %1567 = arith.mulf %1555, %1564 : vector<36x1xf32>
    %1568 = arith.subf %1546, %1567 : vector<36x1xf32>
    %1569 = vector.broadcast %1568 : vector<36x1xf32> to vector<36x81xf32>
    %1570 = arith.addf %1566, %1569 : vector<36x81xf32>
    %cst_566 = arith.constant 3.000000e+00 : f32
    %1571 = vector.broadcast %cst_566 : f32 to vector<36x81xf32>
    %1572 = arith.addf %1570, %1571 : vector<36x81xf32>
    %cst_567 = arith.constant 0.000000e+00 : f32
    %cst_568 = arith.constant 6.000000e+00 : f32
    %1573 = vector.broadcast %cst_567 : f32 to vector<36x81xf32>
    %1574 = arith.maximumf %1573, %1572 : vector<36x81xf32>
    %1575 = vector.broadcast %cst_568 : f32 to vector<36x81xf32>
    %1576 = arith.minimumf %1575, %1574 : vector<36x81xf32>
    %1577 = arith.mulf %1570, %1576 : vector<36x81xf32>
    %cst_569 = arith.constant 0.166666672 : f32
    %1578 = vector.broadcast %cst_569 : f32 to vector<36x81xf32>
    %1579 = arith.mulf %1577, %1578 : vector<36x81xf32>
    %cst_570 = arith.constant 0.000000e+00 : f32
    %cst_571 = arith.constant 6.000000e+00 : f32
    %1580 = vector.broadcast %cst_570 : f32 to vector<36x81xf32>
    %1581 = arith.maximumf %1580, %1570 : vector<36x81xf32>
    %1582 = vector.broadcast %cst_571 : f32 to vector<36x81xf32>
    %1583 = arith.minimumf %1582, %1581 : vector<36x81xf32>
    %cst_572 = arith.constant 0.000000e+00 : f32
    %1584 = vector.broadcast %cst_572 : f32 to vector<36x81xf32>
    %1585 = arith.minimumf %1570, %1584 : vector<36x81xf32>
    %cst_573 = arith.constant 0.00999999977 : f32
    %1586 = vector.broadcast %cst_573 : f32 to vector<36x81xf32>
    %1587 = arith.mulf %1586, %1585 : vector<36x81xf32>
    %1588 = arith.addf %1583, %1587 : vector<36x81xf32>
    %cst_574 = arith.constant -3.000000e+00 : f32
    %1589 = vector.broadcast %cst_574 : f32 to vector<36x81xf32>
    %1590 = arith.cmpf oge, %1570, %1589 : vector<36x81xf32>
    %cst_575 = arith.constant 3.000000e+00 : f32
    %1591 = vector.broadcast %cst_575 : f32 to vector<36x81xf32>
    %1592 = arith.cmpf ole, %1570, %1591 : vector<36x81xf32>
    %1593 = arith.andi %1590, %1592 : vector<36x81xi1>
    %1594 = arith.select %1593, %1579, %1588 : vector<36x81xi1>, vector<36x81xf32>
    %c0_576 = arith.constant 0 : index
    %c0_577 = arith.constant 0 : index
    %1595 = vector.load %arg33[%c0_576, %c0_577] : memref<36x36xf32, #tpu.memory_space<vmem>>, vector<36x36xf32>
    %c0_578 = arith.constant 0 : index
    %c0_579 = arith.constant 0 : index
    %1596 = vector.load %arg34[%c0_578, %c0_579] : memref<12x36xf32, #tpu.memory_space<vmem>>, vector<12x36xf32>
    %c0_580 = arith.constant 0 : index
    %c0_581 = arith.constant 0 : index
    %1597 = vector.load %arg35[%c0_580, %c0_581] : memref<36x12xf32, #tpu.memory_space<vmem>>, vector<36x12xf32>
    %cst_582 = arith.constant dense<0.000000e+00> : vector<36xf32>
    %1598 = vector.multi_reduction <add>, %1594, %cst_582 [1] : vector<36x81xf32> to vector<36xf32>
    %1599 = vector.shape_cast %1598 : vector<36xf32> to vector<36x1xf32>
    %cst_583 = arith.constant 0.0123456791 : f32
    %1600 = vector.broadcast %cst_583 : f32 to vector<36x1xf32>
    %1601 = arith.mulf %1599, %1600 : vector<36x1xf32>
    %cst_584 = arith.constant dense<0.000000e+00> : vector<12x1xf32>
    %1602 = tpu.matmul %1596, %1601, %cst_584 {dimension_numbers = #tpu.dot_dimension_numbers<[1], [0], [0], [1], [0, 0, 1, 1], [], []>} : vector<12x36xf32>, vector<36x1xf32>, vector<12x1xf32> -> vector<12x1xf32>
    %cst_585 = arith.constant 0.000000e+00 : f32
    %1603 = vector.broadcast %cst_585 : f32 to vector<12x1xf32>
    %1604 = arith.maximumf %1602, %1603 : vector<12x1xf32>
    %cst_586 = arith.constant dense<0.000000e+00> : vector<36x1xf32>
    %1605 = tpu.matmul %1597, %1604, %cst_586 {dimension_numbers = #tpu.dot_dimension_numbers<[1], [0], [0], [1], [0, 0, 1, 1], [], []>} : vector<36x12xf32>, vector<12x1xf32>, vector<36x1xf32> -> vector<36x1xf32>
    %cst_587 = arith.constant 0.166666672 : f32
    %1606 = vector.broadcast %cst_587 : f32 to vector<36x1xf32>
    %1607 = arith.mulf %1605, %1606 : vector<36x1xf32>
    %cst_588 = arith.constant 5.000000e-01 : f32
    %1608 = vector.broadcast %cst_588 : f32 to vector<36x1xf32>
    %1609 = arith.addf %1607, %1608 : vector<36x1xf32>
    %cst_589 = arith.constant 0.000000e+00 : f32
    %cst_590 = arith.constant 1.000000e+00 : f32
    %1610 = vector.broadcast %cst_589 : f32 to vector<36x1xf32>
    %1611 = arith.maximumf %1610, %1609 : vector<36x1xf32>
    %1612 = vector.broadcast %cst_590 : f32 to vector<36x1xf32>
    %1613 = arith.minimumf %1612, %1611 : vector<36x1xf32>
    %cst_591 = arith.constant dense<0.000000e+00> : vector<36x81xf32>
    %1614 = tpu.matmul %1595, %1594, %cst_591 {dimension_numbers = #tpu.dot_dimension_numbers<[1], [0], [0], [1], [0, 0, 1, 1], [], []>} : vector<36x36xf32>, vector<36x81xf32>, vector<36x81xf32> -> vector<36x81xf32>
    %1615 = arith.negf %1614 : vector<36x81xf32>
    %1616 = math.exp %1615 : vector<36x81xf32>
    %cst_592 = arith.constant 1.000000e+00 : f32
    %1617 = vector.broadcast %cst_592 : f32 to vector<36x81xf32>
    %1618 = arith.addf %1617, %1616 : vector<36x81xf32>
    %1619 = arith.divf %1617, %1618 : vector<36x81xf32>
    %1620 = vector.broadcast %1613 : vector<36x1xf32> to vector<36x81xf32>
    %1621 = arith.addf %1620, %1619 : vector<36x81xf32>
    %1622 = arith.mulf %1594, %1621 : vector<36x81xf32>
    %c0_593 = arith.constant 0 : index
    %c0_594 = arith.constant 0 : index
    %c0_595 = arith.constant 0 : index
    %1623 = vector.load %arg36[%c0_593, %c0_594, %c0_595] : memref<1x36x81xf32, #tpu.memory_space<vmem>>, vector<1x36x81xf32>
    %1624 = vector.shape_cast %1623 : vector<1x36x81xf32> to vector<36x81xf32>
    %1625 = vector.shape_cast %1622 : vector<36x81xf32> to vector<1x36x81xf32>
    tpu.vector_store %arg36[%c0_593, %c0_594, %c0_595], %1625 {strides = array<i32>} : memref<1x36x81xf32, #tpu.memory_space<vmem>>, vector<1x36x81xf32>,
    return
  }
  func.func @transform_0(%arg0: i32) -> (i32, i32, i32) {
    %c0_i32 = arith.constant 0 : i32
    %c0_i32_0 = arith.constant 0 : i32
    %c0_i32_1 = arith.constant 0 : i32
    return %arg0, %c0_i32, %c0_i32_0 : i32, i32, i32
  }
  func.func @transform_1(%arg0: i32) -> (i32, i32) {
    %c0_i32 = arith.constant 0 : i32
    %c0_i32_0 = arith.constant 0 : i32
    %c0_i32_1 = arith.constant 0 : i32
    return %c0_i32, %c0_i32_0 : i32, i32
  }
  func.func @transform_2(%arg0: i32) -> (i32, i32) {
    %c0_i32 = arith.constant 0 : i32
    %c0_i32_0 = arith.constant 0 : i32
    %c0_i32_1 = arith.constant 0 : i32
    return %c0_i32, %c0_i32_0 : i32, i32
  }
  func.func @transform_3(%arg0: i32) -> (i32, i32) {
    %c0_i32 = arith.constant 0 : i32
    %c0_i32_0 = arith.constant 0 : i32
    %c0_i32_1 = arith.constant 0 : i32
    return %c0_i32, %c0_i32_0 : i32, i32
  }
  func.func @transform_4(%arg0: i32) -> (i32, i32) {
    %c0_i32 = arith.constant 0 : i32
    %c0_i32_0 = arith.constant 0 : i32
    %c0_i32_1 = arith.constant 0 : i32
    return %c0_i32, %c0_i32_0 : i32, i32
  }
  func.func @transform_5(%arg0: i32) -> (i32, i32) {
    %c0_i32 = arith.constant 0 : i32
    %c0_i32_0 = arith.constant 0 : i32
    %c0_i32_1 = arith.constant 0 : i32
    return %c0_i32, %c0_i32_0 : i32, i32
  }
  func.func @transform_6(%arg0: i32) -> (i32, i32) {
    %c0_i32 = arith.constant 0 : i32
    %c0_i32_0 = arith.constant 0 : i32
    %c0_i32_1 = arith.constant 0 : i32
    return %c0_i32, %c0_i32_0 : i32, i32
  }
  func.func @transform_7(%arg0: i32) -> (i32, i32) {
    %c0_i32 = arith.constant 0 : i32
    %c0_i32_0 = arith.constant 0 : i32
    %c0_i32_1 = arith.constant 0 : i32
    return %c0_i32, %c0_i32_0 : i32, i32
  }
  func.func @transform_8(%arg0: i32) -> (i32, i32) {
    %c0_i32 = arith.constant 0 : i32
    %c0_i32_0 = arith.constant 0 : i32
    %c0_i32_1 = arith.constant 0 : i32
    return %c0_i32, %c0_i32_0 : i32, i32
  }
  func.func @transform_9(%arg0: i32) -> (i32, i32) {
    %c0_i32 = arith.constant 0 : i32
    %c0_i32_0 = arith.constant 0 : i32
    %c0_i32_1 = arith.constant 0 : i32
    return %c0_i32, %c0_i32_0 : i32, i32
  }
  func.func @transform_10(%arg0: i32) -> (i32, i32) {
    %c0_i32 = arith.constant 0 : i32
    %c0_i32_0 = arith.constant 0 : i32
    %c0_i32_1 = arith.constant 0 : i32
    return %c0_i32, %c0_i32_0 : i32, i32
  }
  func.func @transform_11(%arg0: i32) -> (i32, i32) {
    %c0_i32 = arith.constant 0 : i32
    %c0_i32_0 = arith.constant 0 : i32
    %c0_i32_1 = arith.constant 0 : i32
    return %c0_i32, %c0_i32_0 : i32, i32
  }
  func.func @transform_12(%arg0: i32) -> (i32, i32) {
    %c0_i32 = arith.constant 0 : i32
    %c0_i32_0 = arith.constant 0 : i32
    %c0_i32_1 = arith.constant 0 : i32
    return %c0_i32, %c0_i32_0 : i32, i32
  }
  func.func @transform_13(%arg0: i32) -> (i32, i32) {
    %c0_i32 = arith.constant 0 : i32
    %c0_i32_0 = arith.constant 0 : i32
    %c0_i32_1 = arith.constant 0 : i32
    return %c0_i32, %c0_i32_0 : i32, i32
  }
  func.func @transform_14(%arg0: i32) -> (i32, i32) {
    %c0_i32 = arith.constant 0 : i32
    %c0_i32_0 = arith.constant 0 : i32
    %c0_i32_1 = arith.constant 0 : i32
    return %c0_i32, %c0_i32_0 : i32, i32
  }
  func.func @transform_15(%arg0: i32) -> (i32, i32) {
    %c0_i32 = arith.constant 0 : i32
    %c0_i32_0 = arith.constant 0 : i32
    %c0_i32_1 = arith.constant 0 : i32
    return %c0_i32, %c0_i32_0 : i32, i32
  }
  func.func @transform_16(%arg0: i32) -> (i32, i32) {
    %c0_i32 = arith.constant 0 : i32
    %c0_i32_0 = arith.constant 0 : i32
    %c0_i32_1 = arith.constant 0 : i32
    return %c0_i32, %c0_i32_0 : i32, i32
  }
  func.func @transform_17(%arg0: i32) -> (i32, i32) {
    %c0_i32 = arith.constant 0 : i32
    %c0_i32_0 = arith.constant 0 : i32
    %c0_i32_1 = arith.constant 0 : i32
    return %c0_i32, %c0_i32_0 : i32, i32
  }
  func.func @transform_18(%arg0: i32) -> (i32, i32) {
    %c0_i32 = arith.constant 0 : i32
    %c0_i32_0 = arith.constant 0 : i32
    %c0_i32_1 = arith.constant 0 : i32
    return %c0_i32, %c0_i32_0 : i32, i32
  }
  func.func @transform_19(%arg0: i32) -> (i32, i32) {
    %c0_i32 = arith.constant 0 : i32
    %c0_i32_0 = arith.constant 0 : i32
    %c0_i32_1 = arith.constant 0 : i32
    return %c0_i32, %c0_i32_0 : i32, i32
  }
  func.func @transform_20(%arg0: i32) -> (i32, i32) {
    %c0_i32 = arith.constant 0 : i32
    %c0_i32_0 = arith.constant 0 : i32
    %c0_i32_1 = arith.constant 0 : i32
    return %c0_i32, %c0_i32_0 : i32, i32
  }
  func.func @transform_21(%arg0: i32) -> (i32, i32) {
    %c0_i32 = arith.constant 0 : i32
    %c0_i32_0 = arith.constant 0 : i32
    %c0_i32_1 = arith.constant 0 : i32
    return %c0_i32, %c0_i32_0 : i32, i32
  }
  func.func @transform_22(%arg0: i32) -> (i32, i32) {
    %c0_i32 = arith.constant 0 : i32
    %c0_i32_0 = arith.constant 0 : i32
    %c0_i32_1 = arith.constant 0 : i32
    return %c0_i32, %c0_i32_0 : i32, i32
  }
  func.func @transform_23(%arg0: i32) -> (i32, i32) {
    %c0_i32 = arith.constant 0 : i32
    %c0_i32_0 = arith.constant 0 : i32
    %c0_i32_1 = arith.constant 0 : i32
    return %c0_i32, %c0_i32_0 : i32, i32
  }
  func.func @transform_24(%arg0: i32) -> (i32, i32) {
    %c0_i32 = arith.constant 0 : i32
    %c0_i32_0 = arith.constant 0 : i32
    %c0_i32_1 = arith.constant 0 : i32
    return %c0_i32, %c0_i32_0 : i32, i32
  }
  func.func @transform_25(%arg0: i32) -> (i32, i32) {
    %c0_i32 = arith.constant 0 : i32
    %c0_i32_0 = arith.constant 0 : i32
    %c0_i32_1 = arith.constant 0 : i32
    return %c0_i32, %c0_i32_0 : i32, i32
  }
  func.func @transform_26(%arg0: i32) -> (i32, i32) {
    %c0_i32 = arith.constant 0 : i32
    %c0_i32_0 = arith.constant 0 : i32
    %c0_i32_1 = arith.constant 0 : i32
    return %c0_i32, %c0_i32_0 : i32, i32
  }
  func.func @transform_27(%arg0: i32) -> (i32, i32) {
    %c0_i32 = arith.constant 0 : i32
    %c0_i32_0 = arith.constant 0 : i32
    %c0_i32_1 = arith.constant 0 : i32
    return %c0_i32, %c0_i32_0 : i32, i32
  }
  func.func @transform_28(%arg0: i32) -> (i32, i32) {
    %c0_i32 = arith.constant 0 : i32
    %c0_i32_0 = arith.constant 0 : i32
    %c0_i32_1 = arith.constant 0 : i32
    return %c0_i32, %c0_i32_0 : i32, i32
  }
  func.func @transform_29(%arg0: i32) -> (i32, i32) {
    %c0_i32 = arith.constant 0 : i32
    %c0_i32_0 = arith.constant 0 : i32
    %c0_i32_1 = arith.constant 0 : i32
    return %c0_i32, %c0_i32_0 : i32, i32
  }
  func.func @transform_30(%arg0: i32) -> (i32, i32) {
    %c0_i32 = arith.constant 0 : i32
    %c0_i32_0 = arith.constant 0 : i32
    %c0_i32_1 = arith.constant 0 : i32
    return %c0_i32, %c0_i32_0 : i32, i32
  }
  func.func @transform_31(%arg0: i32) -> (i32, i32) {
    %c0_i32 = arith.constant 0 : i32
    %c0_i32_0 = arith.constant 0 : i32
    %c0_i32_1 = arith.constant 0 : i32
    return %c0_i32, %c0_i32_0 : i32, i32
  }
  func.func @transform_32(%arg0: i32) -> (i32, i32) {
    %c0_i32 = arith.constant 0 : i32
    %c0_i32_0 = arith.constant 0 : i32
    %c0_i32_1 = arith.constant 0 : i32
    return %c0_i32, %c0_i32_0 : i32, i32
  }
  func.func @transform_33(%arg0: i32) -> (i32, i32) {
    %c0_i32 = arith.constant 0 : i32
    %c0_i32_0 = arith.constant 0 : i32
    %c0_i32_1 = arith.constant 0 : i32
    return %c0_i32, %c0_i32_0 : i32, i32
  }
  func.func @transform_34(%arg0: i32) -> (i32, i32) {
    %c0_i32 = arith.constant 0 : i32
    %c0_i32_0 = arith.constant 0 : i32
    %c0_i32_1 = arith.constant 0 : i32
    return %c0_i32, %c0_i32_0 : i32, i32
  }
  func.func @transform_35(%arg0: i32) -> (i32, i32, i32) {
    %c0_i32 = arith.constant 0 : i32
    %c0_i32_0 = arith.constant 0 : i32
    %c0_i32_1 = arith.constant 0 : i32
    return %arg0, %c0_i32, %c0_i32_0 : i32, i32, i32
  }
}

</mosaic_0001>

<llo_original>
// kernel: _lambda_.1
$region0: #{_lambda_.1}
  #allocation0 [shape = 'u32[]', space=smem, size = 0x4, offset = 0x4, fixed_abs, tag = 'smem constant byte address 0x4 - core index']
  #allocation1 [shape = 'u32[72,128]{1,0:T(1,128)}', space=vmem, size = 0x9000, scoped, tag = 'internal scratch']
  #allocation2 [shape = 'f32[12,12,12]{2,1,0:T(8,128)}', space=vmem, size = 0x18000, scoped, tag = 'scratch operand']
  #allocation3 [shape = 'f32[12,12,12]{2,1,0:T(8,128)}', space=vmem, size = 0x18000, scoped, tag = 'scratch operand']
  #allocation4 [shape = 'f32[10,12,10]{2,1,0:T(8,128)}', space=vmem, size = 0x14000, scoped, tag = 'scratch operand']
  #allocation5 [shape = 'f32[10,12,10]{2,1,0:T(8,128)}', space=vmem, size = 0x14000, scoped, tag = 'scratch operand']
  #allocation6 [shape = 'f32[36,81]{1,0:T(8,128)}', space=vmem, size = 0x5000, scoped, tag = 'scratch operand']
  #allocation7 [shape = 'f32[12,64]{1,0:T(8,128)}', space=vmem, size = 0x2000, scoped, tag = 'scratch operand']
  %s0 = inlined_call_operand.smem [shape: u32[36], index: -1, kind: input, shape index: {}]
  %s1 = sld [smem:[%s0]]
  %s2 = scalar_lea.smem %s0, 1
  %s3 = sld [smem:[%s2]]
  %s4 = scalar_lea.smem %s0, 2
  %s5 = sld [smem:[%s4]]
  %s6 = scalar_lea.smem %s0, 3
  %s7 = sld [smem:[%s6]]
  %s8 = scalar_lea.smem %s0, 4
  %s9 = sld [smem:[%s8]]
  %s10 = scalar_lea.smem %s0, 5
  %s11 = sld [smem:[%s10]]
  %s12 = scalar_lea.smem %s0, 6
  %s13 = sld [smem:[%s12]]
  %s14 = scalar_lea.smem %s0, 7
  %s15 = sld [smem:[%s14]]
  %s16 = scalar_lea.smem %s0, 8
  %s17 = sld [smem:[%s16]]
  %s18 = scalar_lea.smem %s0, 9
  %s19 = sld [smem:[%s18]]
  %s20 = scalar_lea.smem %s0, 10
  %s21 = sld [smem:[%s20]]
  %s22 = scalar_lea.smem %s0, 11
  %s23 = sld [smem:[%s22]]
  %s24 = scalar_lea.smem %s0, 12
  %s25 = sld [smem:[%s24]]
  %s26 = scalar_lea.smem %s0, 13
  %s27 = sld [smem:[%s26]]
  %s28 = scalar_lea.smem %s0, 14
  %s29 = sld [smem:[%s28]]
  %s30 = scalar_lea.smem %s0, 15
  %s31 = sld [smem:[%s30]]
  %s32 = scalar_lea.smem %s0, 16
  %s33 = sld [smem:[%s32]]
  %s34 = scalar_lea.smem %s0, 17
  %s35 = sld [smem:[%s34]]
  %s36 = scalar_lea.smem %s0, 18
  %s37 = sld [smem:[%s36]]
  %s38 = scalar_lea.smem %s0, 19
  %s39 = sld [smem:[%s38]]
  %s40 = scalar_lea.smem %s0, 20
  %s41 = sld [smem:[%s40]]
  %s42 = scalar_lea.smem %s0, 21
  %s43 = sld [smem:[%s42]]
  %s44 = scalar_lea.smem %s0, 22
  %s45 = sld [smem:[%s44]]
  %s46 = scalar_lea.smem %s0, 23
  %s47 = sld [smem:[%s46]]
  %s48 = scalar_lea.smem %s0, 24
  %s49 = sld [smem:[%s48]]
  %s50 = scalar_lea.smem %s0, 25
  %s51 = sld [smem:[%s50]]
  %s52 = scalar_lea.smem %s0, 26
  %s53 = sld [smem:[%s52]]
  %s54 = scalar_lea.smem %s0, 27
  %s55 = sld [smem:[%s54]]
  %s56 = scalar_lea.smem %s0, 28
  %s57 = sld [smem:[%s56]]
  %s58 = scalar_lea.smem %s0, 29
  %s59 = sld [smem:[%s58]]
  %s60 = scalar_lea.smem %s0, 30
  %s61 = sld [smem:[%s60]]
  %s62 = scalar_lea.smem %s0, 31
  %s63 = sld [smem:[%s62]]
  %s64 = scalar_lea.smem %s0, 32
  %s65 = sld [smem:[%s64]]
  %s66 = scalar_lea.smem %s0, 33
  %s67 = sld [smem:[%s66]]
  %s68 = scalar_lea.smem %s0, 34
  %s69 = sld [smem:[%s68]]
  %s70 = scalar_lea.smem %s0, 35
  %s71 = sld [smem:[%s70]]
  %s72 = sld [smem:[#allocation0]]
  $region253: #{_lambda_.1} parent=0
    _
  %s74 = ssub.s32 1, %s72
  %s75 = scalar_select 0, %s74, %s72
  $region1: #{_lambda_.1} parent=0
    #allocation8 [shape = 'u8[20480]{0}', space=vmem, size = 0x5000, scoped, tag = 'input window, operand 1, single buffered']
    #allocation9 [shape = 's32[2]{0}', space=sflag, size = 0x8, scoped, tag = 'scoped memory for _lambda_.1']
    #allocation10 [shape = 'u8[20480]{0}', space=vmem, size = 0x5000, scoped, tag = 'input window, operand 2, single buffered']
    #allocation11 [shape = 's32[1]{0}', space=sflag, size = 0x4, scoped, tag = 'scoped memory for _lambda_.1']
    #allocation12 [shape = 'u8[20480]{0}', space=vmem, size = 0x5000, scoped, tag = 'input window, operand 5, single buffered']
    #allocation13 [shape = 'u8[8192]{0}', space=vmem, size = 0x2000, scoped, tag = 'input window, operand 6, single buffered']
    #allocation14 [shape = 's32[1]{0}', space=sflag, size = 0x4, scoped, tag = 'scoped memory for _lambda_.1']
    #allocation15 [shape = 'u8[8192]{0}', space=vmem, size = 0x2000, scoped, tag = 'input window, operand 7, single buffered']
    #allocation16 [shape = 'u8[8192]{0}', space=vmem, size = 0x2000, scoped, tag = 'input window, operand 8, single buffered']
    #allocation17 [shape = 's32[1]{0}', space=sflag, size = 0x4, scoped, tag = 'scoped memory for _lambda_.1']
    #allocation18 [shape = 'u8[8192]{0}', space=vmem, size = 0x2000, scoped, tag = 'input window, operand 9, single buffered']
    #allocation19 [shape = 'u8[8192]{0}', space=vmem, size = 0x2000, scoped, tag = 'input window, operand 10, single buffered']
    #allocation20 [shape = 's32[1]{0}', space=sflag, size = 0x4, scoped, tag = 'scoped memory for _lambda_.1']
    #allocation21 [shape = 'u8[8192]{0}', space=vmem, size = 0x2000, scoped, tag = 'input window, operand 11, single buffered']
    #allocation22 [shape = 'u8[8192]{0}', space=vmem, size = 0x2000, scoped, tag = 'input window, operand 12, single buffered']
    #allocation23 [shape = 's32[1]{0}', space=sflag, size = 0x4, scoped, tag = 'scoped memory for _lambda_.1']
    #allocation24 [shape = 'u8[8192]{0}', space=vmem, size = 0x2000, scoped, tag = 'input window, operand 13, single buffered']
    #allocation25 [shape = 'u8[8192]{0}', space=vmem, size = 0x2000, scoped, tag = 'input window, operand 14, single buffered']
    #allocation26 [shape = 's32[1]{0}', space=sflag, size = 0x4, scoped, tag = 'scoped memory for _lambda_.1']
    #allocation27 [shape = 'u8[8192]{0}', space=vmem, size = 0x2000, scoped, tag = 'input window, operand 15, single buffered']
    #allocation28 [shape = 'u8[8192]{0}', space=vmem, size = 0x2000, scoped, tag = 'input window, operand 18, single buffered']
    #allocation29 [shape = 's32[1]{0}', space=sflag, size = 0x4, scoped, tag = 'scoped memory for _lambda_.1']
    #allocation30 [shape = 'u8[8192]{0}', space=vmem, size = 0x2000, scoped, tag = 'input window, operand 19, single buffered']
    #allocation31 [shape = 'u8[8192]{0}', space=vmem, size = 0x2000, scoped, tag = 'input window, operand 21, single buffered']
    #allocation32 [shape = 's32[1]{0}', space=sflag, size = 0x4, scoped, tag = 'scoped memory for _lambda_.1']
    #allocation33 [shape = 'u8[8192]{0}', space=vmem, size = 0x2000, scoped, tag = 'input window, operand 22, single buffered']
    #allocation34 [shape = 'u8[8192]{0}', space=vmem, size = 0x2000, scoped, tag = 'input window, operand 23, single buffered']
    #allocation35 [shape = 's32[1]{0}', space=sflag, size = 0x4, scoped, tag = 'scoped memory for _lambda_.1']
    #allocation36 [shape = 'u8[8192]{0}', space=vmem, size = 0x2000, scoped, tag = 'input window, operand 26, single buffered']
    #allocation37 [shape = 'u8[8192]{0}', space=vmem, size = 0x2000, scoped, tag = 'input window, operand 33, single buffered']
    #allocation38 [shape = 's32[1]{0}', space=sflag, size = 0x4, scoped, tag = 'scoped memory for _lambda_.1']
    %76 = vsyncpa [#allocation9], 0
    %77 = vsyncpa [#allocation11], 0
    %78 = vsyncpa [#allocation14], 0
    %79 = vsyncpa [#allocation17], 0
    %80 = vsyncpa [#allocation20], 0
    %81 = vsyncpa [#allocation23], 0
    %82 = vsyncpa [#allocation26], 0
    %83 = vsyncpa [#allocation29], 0
    %84 = vsyncpa [#allocation32], 0
    %85 = vsyncpa [#allocation35], 0
    %86 = vsyncpa [#allocation38], 0
    loop: start=0, step=1, limit=4
    $region2: #{_lambda_.1} parent=1 // loop_pre_header
      _
    $region3: #{_lambda_.1} parent=1 // loop_header
      %s88 = sphi 0, %s92
      %p89 = scmp.ge.s32.totalorder %s88, 4
      %s98 = sphi 0, %s100
      %s101 = sphi 0, %s98
      %s102 = sphi 0, %s101
      %s118 = sphi 0, %s102
      %s122 = sphi 0, %s122
      %s124 = sphi 0, %s122
      %s125 = sphi 0, %s124
      %s139 = sphi 0, %s125
      %s143 = sphi 0, %s143
      %s145 = sphi 0, %s143
      %s146 = sphi 0, %s145
      %s160 = sphi 0, %s146
      %s164 = sphi 0, %s164
      %s166 = sphi 0, %s164
      %s167 = sphi 0, %s166
      %s181 = sphi 0, %s167
      %s185 = sphi 0, %s185
      %s187 = sphi 0, %s185
      %s188 = sphi 0, %s187
      %s202 = sphi 0, %s188
      %s206 = sphi 0, %s206
      %s208 = sphi 0, %s206
      %s209 = sphi 0, %s208
      %s223 = sphi 0, %s209
      %s227 = sphi 0, %s227
      %s229 = sphi 0, %s227
      %s230 = sphi 0, %s229
      %s244 = sphi 0, %s230
      %s248 = sphi 0, %s248
      %s250 = sphi 0, %s248
      %s251 = sphi 0, %s250
      %s265 = sphi 0, %s251
      %s269 = sphi 0, %s269
      %s271 = sphi 0, %s269
      %s272 = sphi 0, %s271
      %s286 = sphi 0, %s272
      %s290 = sphi 0, %s290
      %s292 = sphi 0, %s290
      %s293 = sphi 0, %s292
      %s307 = sphi 0, %s293
      %s311 = sphi 0, %s311
      %s313 = sphi 0, %s311
      %s314 = sphi 0, %s313
      %s328 = sphi 0, %s314
      %s332 = sphi 0, %s332
      %s334 = sphi 0, %s332
      %s335 = sphi 0, %s334
      %s349 = sphi 0, %s335
      %s353 = sphi 0, %s353
      %s355 = sphi 0, %s353
      %s356 = sphi 0, %s355
      %s370 = sphi 0, %s356
      %s374 = sphi 0, %s374
      %s376 = sphi 0, %s374
      %s377 = sphi 0, %s376
      %s391 = sphi 0, %s377
      %s395 = sphi 0, %s395
      %s397 = sphi 0, %s395
      %s398 = sphi 0, %s397
      %s412 = sphi 0, %s398
      %s416 = sphi 0, %s416
      %s418 = sphi 0, %s416
      %s419 = sphi 0, %s418
      %s433 = sphi 0, %s419
      %s437 = sphi 0, %s437
      %s439 = sphi 0, %s437
      %s440 = sphi 0, %s439
      %s454 = sphi 0, %s440
      %s458 = sphi 0, %s458
      %s460 = sphi 0, %s458
      %s461 = sphi 0, %s460
      %s475 = sphi 0, %s461
      %s479 = sphi 0, %s479
      %s481 = sphi 0, %s479
      %s482 = sphi 0, %s481
      %s496 = sphi 0, %s482
      %s500 = sphi 0, %s500
      %s502 = sphi 0, %s500
      %s503 = sphi 0, %s502
      %s517 = sphi 0, %s503
      %s521 = sphi 0, %s521
      %s523 = sphi 0, %s521
      %s524 = sphi 0, %s523
      %s538 = sphi 0, %s524
      %s542 = sphi 0, %s542
      %s544 = sphi 0, %s542
      %s545 = sphi 0, %s544
      %s559 = sphi 0, %s545
      %s563 = sphi 0, %s563
      %s565 = sphi 0, %s563
      %s566 = sphi 0, %s565
      %s580 = sphi 0, %s566
      %s584 = sphi 0, %s584
      %s586 = sphi 0, %s584
      %s587 = sphi 0, %s586
      %s601 = sphi 0, %s587
      %s605 = sphi 0, %s605
      %s607 = sphi 0, %s605
      %s608 = sphi 0, %s607
      %s622 = sphi 0, %s608
      %s626 = sphi 0, %s626
      %s628 = sphi 0, %s626
      %s629 = sphi 0, %s628
      %s643 = sphi 0, %s629
      %s647 = sphi 0, %s647
      %s649 = sphi 0, %s647
      %s650 = sphi 0, %s649
      %s664 = sphi 0, %s650
      %s668 = sphi 0, %s668
      %s670 = sphi 0, %s668
      %s671 = sphi 0, %s670
      %s685 = sphi 0, %s671
      %s689 = sphi 0, %s689
      %s691 = sphi 0, %s689
      %s692 = sphi 0, %s691
      %s706 = sphi 0, %s692
      %s710 = sphi 0, %s710
      %s712 = sphi 0, %s710
      %s713 = sphi 0, %s712
      %s727 = sphi 0, %s713
      %s731 = sphi 0, %s731
      %s733 = sphi 0, %s731
      %s734 = sphi 0, %s733
      %s748 = sphi 0, %s734
      %s752 = sphi 0, %s752
      %s754 = sphi 0, %s752
      %s755 = sphi 0, %s754
      %s769 = sphi 0, %s755
      %s773 = sphi 0, %s773
      %s775 = sphi 0, %s773
      %s776 = sphi 0, %s775
      %s790 = sphi 0, %s776
      %s794 = sphi 0, %s794
      %s796 = sphi 0, %s794
      %s797 = sphi 0, %s796
      %s811 = sphi 0, %s797
      %s815 = sphi 0, %s815
      %s817 = sphi 0, %s815
      %s818 = sphi 0, %s817
      %s832 = sphi 0, %s818
      %s838 = sphi 0, %s840
      %s841 = sphi 0, %s838
      %s842 = sphi 0, %s841
      %s858 = sphi 0, %s842
    $region4: #{_lambda_.1} parent=1 // loop_header_branch
      %91 = sbr.rel (%p89) target = $region8
    $region5: #{_lambda_.1} parent=1 // loop_body
      %s93 = ssub.s32 %s88, 1
      %s94 = ssub.s32 %s88, 2
      %s95 = sadd.s32 %s88, 1
      %s96 = ssub.s32 %s88, %s95
      %p97 = scmp.eq.s32.totalorder %s96, 0
      %s99 = sadd.s32 %s98, 1
      %s100 = scalar_select %p97, %s98, %s99
      %p103 = pneg %p97
      %p104 = scmp.eq.s32.totalorder %s88, 1
      %p105 = por %p103, %p104
      %p106 = scmp.ne.s32.totalorder %s98, %s101
      %p107 = scmp.eq.s32.totalorder %s88, 0
      %p108 = por %p106, %p107
      %p109 = scmp.ne.s32.totalorder %s98, %s101
      %p110 = scmp.eq.s32.totalorder %s93, 1
      %p111 = por %p109, %p110
      %p112 = scmp.ne.s32.totalorder %s101, %s102
      %p113 = scmp.eq.s32.totalorder %s93, 0
      %p114 = por %p112, %p113
      %p115 = scmp.ne.s32.totalorder %s101, %s102
      %p116 = scmp.eq.s32.totalorder %s94, 1
      %p117 = por %p115, %p116
      %p119 = scmp.ne.s32.totalorder %s102, %s118
      %p120 = scmp.eq.s32.totalorder %s94, 0
      %p121 = por %p119, %p120
      %s123 = sadd.s32 %s122, 1
      %p126 = scmp.eq.s32.totalorder %s88, 1
      %p127 = scmp.ne.s32.totalorder %s122, %s124
      %p128 = scmp.eq.s32.totalorder %s88, 0
      %p129 = por %p127, %p128
      %p130 = scmp.ne.s32.totalorder %s122, %s124
      %p131 = scmp.eq.s32.totalorder %s93, 1
      %p132 = por %p130, %p131
      %p133 = scmp.ne.s32.totalorder %s124, %s125
      %p134 = scmp.eq.s32.totalorder %s93, 0
      %p135 = por %p133, %p134
      %p136 = scmp.ne.s32.totalorder %s124, %s125
      %p137 = scmp.eq.s32.totalorder %s94, 1
      %p138 = por %p136, %p137
      %p140 = scmp.ne.s32.totalorder %s125, %s139
      %p141 = scmp.eq.s32.totalorder %s94, 0
      %p142 = por %p140, %p141
      %s144 = sadd.s32 %s143, 1
      %p147 = scmp.eq.s32.totalorder %s88, 1
      %p148 = scmp.ne.s32.totalorder %s143, %s145
      %p149 = scmp.eq.s32.totalorder %s88, 0
      %p150 = por %p148, %p149
      %p151 = scmp.ne.s32.totalorder %s143, %s145
      %p152 = scmp.eq.s32.totalorder %s93, 1
      %p153 = por %p151, %p152
      %p154 = scmp.ne.s32.totalorder %s145, %s146
      %p155 = scmp.eq.s32.totalorder %s93, 0
      %p156 = por %p154, %p155
      %p157 = scmp.ne.s32.totalorder %s145, %s146
      %p158 = scmp.eq.s32.totalorder %s94, 1
      %p159 = por %p157, %p158
      %p161 = scmp.ne.s32.totalorder %s146, %s160
      %p162 = scmp.eq.s32.totalorder %s94, 0
      %p163 = por %p161, %p162
      %s165 = sadd.s32 %s164, 1
      %p168 = scmp.eq.s32.totalorder %s88, 1
      %p169 = scmp.ne.s32.totalorder %s164, %s166
      %p170 = scmp.eq.s32.totalorder %s88, 0
      %p171 = por %p169, %p170
      %p172 = scmp.ne.s32.totalorder %s164, %s166
      %p173 = scmp.eq.s32.totalorder %s93, 1
      %p174 = por %p172, %p173
      %p175 = scmp.ne.s32.totalorder %s166, %s167
      %p176 = scmp.eq.s32.totalorder %s93, 0
      %p177 = por %p175, %p176
      %p178 = scmp.ne.s32.totalorder %s166, %s167
      %p179 = scmp.eq.s32.totalorder %s94, 1
      %p180 = por %p178, %p179
      %p182 = scmp.ne.s32.totalorder %s167, %s181
      %p183 = scmp.eq.s32.totalorder %s94, 0
      %p184 = por %p182, %p183
      %s186 = sadd.s32 %s185, 1
      %p189 = scmp.eq.s32.totalorder %s88, 1
      %p190 = scmp.ne.s32.totalorder %s185, %s187
      %p191 = scmp.eq.s32.totalorder %s88, 0
      %p192 = por %p190, %p191
      %p193 = scmp.ne.s32.totalorder %s185, %s187
      %p194 = scmp.eq.s32.totalorder %s93, 1
      %p195 = por %p193, %p194
      %p196 = scmp.ne.s32.totalorder %s187, %s188
      %p197 = scmp.eq.s32.totalorder %s93, 0
      %p198 = por %p196, %p197
      %p199 = scmp.ne.s32.totalorder %s187, %s188
      %p200 = scmp.eq.s32.totalorder %s94, 1
      %p201 = por %p199, %p200
      %p203 = scmp.ne.s32.totalorder %s188, %s202
      %p204 = scmp.eq.s32.totalorder %s94, 0
      %p205 = por %p203, %p204
      %s207 = sadd.s32 %s206, 1
      %p210 = scmp.eq.s32.totalorder %s88, 1
      %p211 = scmp.ne.s32.totalorder %s206, %s208
      %p212 = scmp.eq.s32.totalorder %s88, 0
      %p213 = por %p211, %p212
      %p214 = scmp.ne.s32.totalorder %s206, %s208
      %p215 = scmp.eq.s32.totalorder %s93, 1
      %p216 = por %p214, %p215
      %p217 = scmp.ne.s32.totalorder %s208, %s209
      %p218 = scmp.eq.s32.totalorder %s93, 0
      %p219 = por %p217, %p218
      %p220 = scmp.ne.s32.totalorder %s208, %s209
      %p221 = scmp.eq.s32.totalorder %s94, 1
      %p222 = por %p220, %p221
      %p224 = scmp.ne.s32.totalorder %s209, %s223
      %p225 = scmp.eq.s32.totalorder %s94, 0
      %p226 = por %p224, %p225
      %s228 = sadd.s32 %s227, 1
      %p231 = scmp.eq.s32.totalorder %s88, 1
      %p232 = scmp.ne.s32.totalorder %s227, %s229
      %p233 = scmp.eq.s32.totalorder %s88, 0
      %p234 = por %p232, %p233
      %p235 = scmp.ne.s32.totalorder %s227, %s229
      %p236 = scmp.eq.s32.totalorder %s93, 1
      %p237 = por %p235, %p236
      %p238 = scmp.ne.s32.totalorder %s229, %s230
      %p239 = scmp.eq.s32.totalorder %s93, 0
      %p240 = por %p238, %p239
      %p241 = scmp.ne.s32.totalorder %s229, %s230
      %p242 = scmp.eq.s32.totalorder %s94, 1
      %p243 = por %p241, %p242
      %p245 = scmp.ne.s32.totalorder %s230, %s244
      %p246 = scmp.eq.s32.totalorder %s94, 0
      %p247 = por %p245, %p246
      %s249 = sadd.s32 %s248, 1
      %p252 = scmp.eq.s32.totalorder %s88, 1
      %p253 = scmp.ne.s32.totalorder %s248, %s250
      %p254 = scmp.eq.s32.totalorder %s88, 0
      %p255 = por %p253, %p254
      %p256 = scmp.ne.s32.totalorder %s248, %s250
      %p257 = scmp.eq.s32.totalorder %s93, 1
      %p258 = por %p256, %p257
      %p259 = scmp.ne.s32.totalorder %s250, %s251
      %p260 = scmp.eq.s32.totalorder %s93, 0
      %p261 = por %p259, %p260
      %p262 = scmp.ne.s32.totalorder %s250, %s251
      %p263 = scmp.eq.s32.totalorder %s94, 1
      %p264 = por %p262, %p263
      %p266 = scmp.ne.s32.totalorder %s251, %s265
      %p267 = scmp.eq.s32.totalorder %s94, 0
      %p268 = por %p266, %p267
      %s270 = sadd.s32 %s269, 1
      %p273 = scmp.eq.s32.totalorder %s88, 1
      %p274 = scmp.ne.s32.totalorder %s269, %s271
      %p275 = scmp.eq.s32.totalorder %s88, 0
      %p276 = por %p274, %p275
      %p277 = scmp.ne.s32.totalorder %s269, %s271
      %p278 = scmp.eq.s32.totalorder %s93, 1
      %p279 = por %p277, %p278
      %p280 = scmp.ne.s32.totalorder %s271, %s272
      %p281 = scmp.eq.s32.totalorder %s93, 0
      %p282 = por %p280, %p281
      %p283 = scmp.ne.s32.totalorder %s271, %s272
      %p284 = scmp.eq.s32.totalorder %s94, 1
      %p285 = por %p283, %p284
      %p287 = scmp.ne.s32.totalorder %s272, %s286
      %p288 = scmp.eq.s32.totalorder %s94, 0
      %p289 = por %p287, %p288
      %s291 = sadd.s32 %s290, 1
      %p294 = scmp.eq.s32.totalorder %s88, 1
      %p295 = scmp.ne.s32.totalorder %s290, %s292
      %p296 = scmp.eq.s32.totalorder %s88, 0
      %p297 = por %p295, %p296
      %p298 = scmp.ne.s32.totalorder %s290, %s292
      %p299 = scmp.eq.s32.totalorder %s93, 1
      %p300 = por %p298, %p299
      %p301 = scmp.ne.s32.totalorder %s292, %s293
      %p302 = scmp.eq.s32.totalorder %s93, 0
      %p303 = por %p301, %p302
      %p304 = scmp.ne.s32.totalorder %s292, %s293
      %p305 = scmp.eq.s32.totalorder %s94, 1
      %p306 = por %p304, %p305
      %p308 = scmp.ne.s32.totalorder %s293, %s307
      %p309 = scmp.eq.s32.totalorder %s94, 0
      %p310 = por %p308, %p309
      %s312 = sadd.s32 %s311, 1
      %p315 = scmp.eq.s32.totalorder %s88, 1
      %p316 = scmp.ne.s32.totalorder %s311, %s313
      %p317 = scmp.eq.s32.totalorder %s88, 0
      %p318 = por %p316, %p317
      %p319 = scmp.ne.s32.totalorder %s311, %s313
      %p320 = scmp.eq.s32.totalorder %s93, 1
      %p321 = por %p319, %p320
      %p322 = scmp.ne.s32.totalorder %s313, %s314
      %p323 = scmp.eq.s32.totalorder %s93, 0
      %p324 = por %p322, %p323
      %p325 = scmp.ne.s32.totalorder %s313, %s314
      %p326 = scmp.eq.s32.totalorder %s94, 1
      %p327 = por %p325, %p326
      %p329 = scmp.ne.s32.totalorder %s314, %s328
      %p330 = scmp.eq.s32.totalorder %s94, 0
      %p331 = por %p329, %p330
      %s333 = sadd.s32 %s332, 1
      %p336 = scmp.eq.s32.totalorder %s88, 1
      %p337 = scmp.ne.s32.totalorder %s332, %s334
      %p338 = scmp.eq.s32.totalorder %s88, 0
      %p339 = por %p337, %p338
      %p340 = scmp.ne.s32.totalorder %s332, %s334
      %p341 = scmp.eq.s32.totalorder %s93, 1
      %p342 = por %p340, %p341
      %p343 = scmp.ne.s32.totalorder %s334, %s335
      %p344 = scmp.eq.s32.totalorder %s93, 0
      %p345 = por %p343, %p344
      %p346 = scmp.ne.s32.totalorder %s334, %s335
      %p347 = scmp.eq.s32.totalorder %s94, 1
      %p348 = por %p346, %p347
      %p350 = scmp.ne.s32.totalorder %s335, %s349
      %p351 = scmp.eq.s32.totalorder %s94, 0
      %p352 = por %p350, %p351
      %s354 = sadd.s32 %s353, 1
      %p357 = scmp.eq.s32.totalorder %s88, 1
      %p358 = scmp.ne.s32.totalorder %s353, %s355
      %p359 = scmp.eq.s32.totalorder %s88, 0
      %p360 = por %p358, %p359
      %p361 = scmp.ne.s32.totalorder %s353, %s355
      %p362 = scmp.eq.s32.totalorder %s93, 1
      %p363 = por %p361, %p362
      %p364 = scmp.ne.s32.totalorder %s355, %s356
      %p365 = scmp.eq.s32.totalorder %s93, 0
      %p366 = por %p364, %p365
      %p367 = scmp.ne.s32.totalorder %s355, %s356
      %p368 = scmp.eq.s32.totalorder %s94, 1
      %p369 = por %p367, %p368
      %p371 = scmp.ne.s32.totalorder %s356, %s370
      %p372 = scmp.eq.s32.totalorder %s94, 0
      %p373 = por %p371, %p372
      %s375 = sadd.s32 %s374, 1
      %p378 = scmp.eq.s32.totalorder %s88, 1
      %p379 = scmp.ne.s32.totalorder %s374, %s376
      %p380 = scmp.eq.s32.totalorder %s88, 0
      %p381 = por %p379, %p380
      %p382 = scmp.ne.s32.totalorder %s374, %s376
      %p383 = scmp.eq.s32.totalorder %s93, 1
      %p384 = por %p382, %p383
      %p385 = scmp.ne.s32.totalorder %s376, %s377
      %p386 = scmp.eq.s32.totalorder %s93, 0
      %p387 = por %p385, %p386
      %p388 = scmp.ne.s32.totalorder %s376, %s377
      %p389 = scmp.eq.s32.totalorder %s94, 1
      %p390 = por %p388, %p389
      %p392 = scmp.ne.s32.totalorder %s377, %s391
      %p393 = scmp.eq.s32.totalorder %s94, 0
      %p394 = por %p392, %p393
      %s396 = sadd.s32 %s395, 1
      %p399 = scmp.eq.s32.totalorder %s88, 1
      %p400 = scmp.ne.s32.totalorder %s395, %s397
      %p401 = scmp.eq.s32.totalorder %s88, 0
      %p402 = por %p400, %p401
      %p403 = scmp.ne.s32.totalorder %s395, %s397
      %p404 = scmp.eq.s32.totalorder %s93, 1
      %p405 = por %p403, %p404
      %p406 = scmp.ne.s32.totalorder %s397, %s398
      %p407 = scmp.eq.s32.totalorder %s93, 0
      %p408 = por %p406, %p407
      %p409 = scmp.ne.s32.totalorder %s397, %s398
      %p410 = scmp.eq.s32.totalorder %s94, 1
      %p411 = por %p409, %p410
      %p413 = scmp.ne.s32.totalorder %s398, %s412
      %p414 = scmp.eq.s32.totalorder %s94, 0
      %p415 = por %p413, %p414
      %s417 = sadd.s32 %s416, 1
      %p420 = scmp.eq.s32.totalorder %s88, 1
      %p421 = scmp.ne.s32.totalorder %s416, %s418
      %p422 = scmp.eq.s32.totalorder %s88, 0
      %p423 = por %p421, %p422
      %p424 = scmp.ne.s32.totalorder %s416, %s418
      %p425 = scmp.eq.s32.totalorder %s93, 1
      %p426 = por %p424, %p425
      %p427 = scmp.ne.s32.totalorder %s418, %s419
      %p428 = scmp.eq.s32.totalorder %s93, 0
      %p429 = por %p427, %p428
      %p430 = scmp.ne.s32.totalorder %s418, %s419
      %p431 = scmp.eq.s32.totalorder %s94, 1
      %p432 = por %p430, %p431
      %p434 = scmp.ne.s32.totalorder %s419, %s433
      %p435 = scmp.eq.s32.totalorder %s94, 0
      %p436 = por %p434, %p435
      %s438 = sadd.s32 %s437, 1
      %p441 = scmp.eq.s32.totalorder %s88, 1
      %p442 = scmp.ne.s32.totalorder %s437, %s439
      %p443 = scmp.eq.s32.totalorder %s88, 0
      %p444 = por %p442, %p443
      %p445 = scmp.ne.s32.totalorder %s437, %s439
      %p446 = scmp.eq.s32.totalorder %s93, 1
      %p447 = por %p445, %p446
      %p448 = scmp.ne.s32.totalorder %s439, %s440
      %p449 = scmp.eq.s32.totalorder %s93, 0
      %p450 = por %p448, %p449
      %p451 = scmp.ne.s32.totalorder %s439, %s440
      %p452 = scmp.eq.s32.totalorder %s94, 1
      %p453 = por %p451, %p452
      %p455 = scmp.ne.s32.totalorder %s440, %s454
      %p456 = scmp.eq.s32.totalorder %s94, 0
      %p457 = por %p455, %p456
      %s459 = sadd.s32 %s458, 1
      %p462 = scmp.eq.s32.totalorder %s88, 1
      %p463 = scmp.ne.s32.totalorder %s458, %s460
      %p464 = scmp.eq.s32.totalorder %s88, 0
      %p465 = por %p463, %p464
      %p466 = scmp.ne.s32.totalorder %s458, %s460
      %p467 = scmp.eq.s32.totalorder %s93, 1
      %p468 = por %p466, %p467
      %p469 = scmp.ne.s32.totalorder %s460, %s461
      %p470 = scmp.eq.s32.totalorder %s93, 0
      %p471 = por %p469, %p470
      %p472 = scmp.ne.s32.totalorder %s460, %s461
      %p473 = scmp.eq.s32.totalorder %s94, 1
      %p474 = por %p472, %p473
      %p476 = scmp.ne.s32.totalorder %s461, %s475
      %p477 = scmp.eq.s32.totalorder %s94, 0
      %p478 = por %p476, %p477
      %s480 = sadd.s32 %s479, 1
      %p483 = scmp.eq.s32.totalorder %s88, 1
      %p484 = scmp.ne.s32.totalorder %s479, %s481
      %p485 = scmp.eq.s32.totalorder %s88, 0
      %p486 = por %p484, %p485
      %p487 = scmp.ne.s32.totalorder %s479, %s481
      %p488 = scmp.eq.s32.totalorder %s93, 1
      %p489 = por %p487, %p488
      %p490 = scmp.ne.s32.totalorder %s481, %s482
      %p491 = scmp.eq.s32.totalorder %s93, 0
      %p492 = por %p490, %p491
      %p493 = scmp.ne.s32.totalorder %s481, %s482
      %p494 = scmp.eq.s32.totalorder %s94, 1
      %p495 = por %p493, %p494
      %p497 = scmp.ne.s32.totalorder %s482, %s496
      %p498 = scmp.eq.s32.totalorder %s94, 0
      %p499 = por %p497, %p498
      %s501 = sadd.s32 %s500, 1
      %p504 = scmp.eq.s32.totalorder %s88, 1
      %p505 = scmp.ne.s32.totalorder %s500, %s502
      %p506 = scmp.eq.s32.totalorder %s88, 0
      %p507 = por %p505, %p506
      %p508 = scmp.ne.s32.totalorder %s500, %s502
      %p509 = scmp.eq.s32.totalorder %s93, 1
      %p510 = por %p508, %p509
      %p511 = scmp.ne.s32.totalorder %s502, %s503
      %p512 = scmp.eq.s32.totalorder %s93, 0
      %p513 = por %p511, %p512
      %p514 = scmp.ne.s32.totalorder %s502, %s503
      %p515 = scmp.eq.s32.totalorder %s94, 1
      %p516 = por %p514, %p515
      %p518 = scmp.ne.s32.totalorder %s503, %s517
      %p519 = scmp.eq.s32.totalorder %s94, 0
      %p520 = por %p518, %p519
      %s522 = sadd.s32 %s521, 1
      %p525 = scmp.eq.s32.totalorder %s88, 1
      %p526 = scmp.ne.s32.totalorder %s521, %s523
      %p527 = scmp.eq.s32.totalorder %s88, 0
      %p528 = por %p526, %p527
      %p529 = scmp.ne.s32.totalorder %s521, %s523
      %p530 = scmp.eq.s32.totalorder %s93, 1
      %p531 = por %p529, %p530
      %p532 = scmp.ne.s32.totalorder %s523, %s524
      %p533 = scmp.eq.s32.totalorder %s93, 0
      %p534 = por %p532, %p533
      %p535 = scmp.ne.s32.totalorder %s523, %s524
      %p536 = scmp.eq.s32.totalorder %s94, 1
      %p537 = por %p535, %p536
      %p539 = scmp.ne.s32.totalorder %s524, %s538
      %p540 = scmp.eq.s32.totalorder %s94, 0
      %p541 = por %p539, %p540
      %s543 = sadd.s32 %s542, 1
      %p546 = scmp.eq.s32.totalorder %s88, 1
      %p547 = scmp.ne.s32.totalorder %s542, %s544
      %p548 = scmp.eq.s32.totalorder %s88, 0
      %p549 = por %p547, %p548
      %p550 = scmp.ne.s32.totalorder %s542, %s544
      %p551 = scmp.eq.s32.totalorder %s93, 1
      %p552 = por %p550, %p551
      %p553 = scmp.ne.s32.totalorder %s544, %s545
      %p554 = scmp.eq.s32.totalorder %s93, 0
      %p555 = por %p553, %p554
      %p556 = scmp.ne.s32.totalorder %s544, %s545
      %p557 = scmp.eq.s32.totalorder %s94, 1
      %p558 = por %p556, %p557
      %p560 = scmp.ne.s32.totalorder %s545, %s559
      %p561 = scmp.eq.s32.totalorder %s94, 0
      %p562 = por %p560, %p561
      %s564 = sadd.s32 %s563, 1
      %p567 = scmp.eq.s32.totalorder %s88, 1
      %p568 = scmp.ne.s32.totalorder %s563, %s565
      %p569 = scmp.eq.s32.totalorder %s88, 0
      %p570 = por %p568, %p569
      %p571 = scmp.ne.s32.totalorder %s563, %s565
      %p572 = scmp.eq.s32.totalorder %s93, 1
      %p573 = por %p571, %p572
      %p574 = scmp.ne.s32.totalorder %s565, %s566
      %p575 = scmp.eq.s32.totalorder %s93, 0
      %p576 = por %p574, %p575
      %p577 = scmp.ne.s32.totalorder %s565, %s566
      %p578 = scmp.eq.s32.totalorder %s94, 1
      %p579 = por %p577, %p578
      %p581 = scmp.ne.s32.totalorder %s566, %s580
      %p582 = scmp.eq.s32.totalorder %s94, 0
      %p583 = por %p581, %p582
      %s585 = sadd.s32 %s584, 1
      %p588 = scmp.eq.s32.totalorder %s88, 1
      %p589 = scmp.ne.s32.totalorder %s584, %s586
      %p590 = scmp.eq.s32.totalorder %s88, 0
      %p591 = por %p589, %p590
      %p592 = scmp.ne.s32.totalorder %s584, %s586
      %p593 = scmp.eq.s32.totalorder %s93, 1
      %p594 = por %p592, %p593
      %p595 = scmp.ne.s32.totalorder %s586, %s587
      %p596 = scmp.eq.s32.totalorder %s93, 0
      %p597 = por %p595, %p596
      %p598 = scmp.ne.s32.totalorder %s586, %s587
      %p599 = scmp.eq.s32.totalorder %s94, 1
      %p600 = por %p598, %p599
      %p602 = scmp.ne.s32.totalorder %s587, %s601
      %p603 = scmp.eq.s32.totalorder %s94, 0
      %p604 = por %p602, %p603
      %s606 = sadd.s32 %s605, 1
      %p609 = scmp.eq.s32.totalorder %s88, 1
      %p610 = scmp.ne.s32.totalorder %s605, %s607
      %p611 = scmp.eq.s32.totalorder %s88, 0
      %p612 = por %p610, %p611
      %p613 = scmp.ne.s32.totalorder %s605, %s607
      %p614 = scmp.eq.s32.totalorder %s93, 1
      %p615 = por %p613, %p614
      %p616 = scmp.ne.s32.totalorder %s607, %s608
      %p617 = scmp.eq.s32.totalorder %s93, 0
      %p618 = por %p616, %p617
      %p619 = scmp.ne.s32.totalorder %s607, %s608
      %p620 = scmp.eq.s32.totalorder %s94, 1
      %p621 = por %p619, %p620
      %p623 = scmp.ne.s32.totalorder %s608, %s622
      %p624 = scmp.eq.s32.totalorder %s94, 0
      %p625 = por %p623, %p624
      %s627 = sadd.s32 %s626, 1
      %p630 = scmp.eq.s32.totalorder %s88, 1
      %p631 = scmp.ne.s32.totalorder %s626, %s628
      %p632 = scmp.eq.s32.totalorder %s88, 0
      %p633 = por %p631, %p632
      %p634 = scmp.ne.s32.totalorder %s626, %s628
      %p635 = scmp.eq.s32.totalorder %s93, 1
      %p636 = por %p634, %p635
      %p637 = scmp.ne.s32.totalorder %s628, %s629
      %p638 = scmp.eq.s32.totalorder %s93, 0
      %p639 = por %p637, %p638
      %p640 = scmp.ne.s32.totalorder %s628, %s629
      %p641 = scmp.eq.s32.totalorder %s94, 1
      %p642 = por %p640, %p641
      %p644 = scmp.ne.s32.totalorder %s629, %s643
      %p645 = scmp.eq.s32.totalorder %s94, 0
      %p646 = por %p644, %p645
      %s648 = sadd.s32 %s647, 1
      %p651 = scmp.eq.s32.totalorder %s88, 1
      %p652 = scmp.ne.s32.totalorder %s647, %s649
      %p653 = scmp.eq.s32.totalorder %s88, 0
      %p654 = por %p652, %p653
      %p655 = scmp.ne.s32.totalorder %s647, %s649
      %p656 = scmp.eq.s32.totalorder %s93, 1
      %p657 = por %p655, %p656
      %p658 = scmp.ne.s32.totalorder %s649, %s650
      %p659 = scmp.eq.s32.totalorder %s93, 0
      %p660 = por %p658, %p659
      %p661 = scmp.ne.s32.totalorder %s649, %s650
      %p662 = scmp.eq.s32.totalorder %s94, 1
      %p663 = por %p661, %p662
      %p665 = scmp.ne.s32.totalorder %s650, %s664
      %p666 = scmp.eq.s32.totalorder %s94, 0
      %p667 = por %p665, %p666
      %s669 = sadd.s32 %s668, 1
      %p672 = scmp.eq.s32.totalorder %s88, 1
      %p673 = scmp.ne.s32.totalorder %s668, %s670
      %p674 = scmp.eq.s32.totalorder %s88, 0
      %p675 = por %p673, %p674
      %p676 = scmp.ne.s32.totalorder %s668, %s670
      %p677 = scmp.eq.s32.totalorder %s93, 1
      %p678 = por %p676, %p677
      %p679 = scmp.ne.s32.totalorder %s670, %s671
      %p680 = scmp.eq.s32.totalorder %s93, 0
      %p681 = por %p679, %p680
      %p682 = scmp.ne.s32.totalorder %s670, %s671
      %p683 = scmp.eq.s32.totalorder %s94, 1
      %p684 = por %p682, %p683
      %p686 = scmp.ne.s32.totalorder %s671, %s685
      %p687 = scmp.eq.s32.totalorder %s94, 0
      %p688 = por %p686, %p687
      %s690 = sadd.s32 %s689, 1
      %p693 = scmp.eq.s32.totalorder %s88, 1
      %p694 = scmp.ne.s32.totalorder %s689, %s691
      %p695 = scmp.eq.s32.totalorder %s88, 0
      %p696 = por %p694, %p695
      %p697 = scmp.ne.s32.totalorder %s689, %s691
      %p698 = scmp.eq.s32.totalorder %s93, 1
      %p699 = por %p697, %p698
      %p700 = scmp.ne.s32.totalorder %s691, %s692
      %p701 = scmp.eq.s32.totalorder %s93, 0
      %p702 = por %p700, %p701
      %p703 = scmp.ne.s32.totalorder %s691, %s692
      %p704 = scmp.eq.s32.totalorder %s94, 1
      %p705 = por %p703, %p704
      %p707 = scmp.ne.s32.totalorder %s692, %s706
      %p708 = scmp.eq.s32.totalorder %s94, 0
      %p709 = por %p707, %p708
      %s711 = sadd.s32 %s710, 1
      %p714 = scmp.eq.s32.totalorder %s88, 1
      %p715 = scmp.ne.s32.totalorder %s710, %s712
      %p716 = scmp.eq.s32.totalorder %s88, 0
      %p717 = por %p715, %p716
      %p718 = scmp.ne.s32.totalorder %s710, %s712
      %p719 = scmp.eq.s32.totalorder %s93, 1
      %p720 = por %p718, %p719
      %p721 = scmp.ne.s32.totalorder %s712, %s713
      %p722 = scmp.eq.s32.totalorder %s93, 0
      %p723 = por %p721, %p722
      %p724 = scmp.ne.s32.totalorder %s712, %s713
      %p725 = scmp.eq.s32.totalorder %s94, 1
      %p726 = por %p724, %p725
      %p728 = scmp.ne.s32.totalorder %s713, %s727
      %p729 = scmp.eq.s32.totalorder %s94, 0
      %p730 = por %p728, %p729
      %s732 = sadd.s32 %s731, 1
      %p735 = scmp.eq.s32.totalorder %s88, 1
      %p736 = scmp.ne.s32.totalorder %s731, %s733
      %p737 = scmp.eq.s32.totalorder %s88, 0
      %p738 = por %p736, %p737
      %p739 = scmp.ne.s32.totalorder %s731, %s733
      %p740 = scmp.eq.s32.totalorder %s93, 1
      %p741 = por %p739, %p740
      %p742 = scmp.ne.s32.totalorder %s733, %s734
      %p743 = scmp.eq.s32.totalorder %s93, 0
      %p744 = por %p742, %p743
      %p745 = scmp.ne.s32.totalorder %s733, %s734
      %p746 = scmp.eq.s32.totalorder %s94, 1
      %p747 = por %p745, %p746
      %p749 = scmp.ne.s32.totalorder %s734, %s748
      %p750 = scmp.eq.s32.totalorder %s94, 0
      %p751 = por %p749, %p750
      %s753 = sadd.s32 %s752, 1
      %p756 = scmp.eq.s32.totalorder %s88, 1
      %p757 = scmp.ne.s32.totalorder %s752, %s754
      %p758 = scmp.eq.s32.totalorder %s88, 0
      %p759 = por %p757, %p758
      %p760 = scmp.ne.s32.totalorder %s752, %s754
      %p761 = scmp.eq.s32.totalorder %s93, 1
      %p762 = por %p760, %p761
      %p763 = scmp.ne.s32.totalorder %s754, %s755
      %p764 = scmp.eq.s32.totalorder %s93, 0
      %p765 = por %p763, %p764
      %p766 = scmp.ne.s32.totalorder %s754, %s755
      %p767 = scmp.eq.s32.totalorder %s94, 1
      %p768 = por %p766, %p767
      %p770 = scmp.ne.s32.totalorder %s755, %s769
      %p771 = scmp.eq.s32.totalorder %s94, 0
      %p772 = por %p770, %p771
      %s774 = sadd.s32 %s773, 1
      %p777 = scmp.eq.s32.totalorder %s88, 1
      %p778 = scmp.ne.s32.totalorder %s773, %s775
      %p779 = scmp.eq.s32.totalorder %s88, 0
      %p780 = por %p778, %p779
      %p781 = scmp.ne.s32.totalorder %s773, %s775
      %p782 = scmp.eq.s32.totalorder %s93, 1
      %p783 = por %p781, %p782
      %p784 = scmp.ne.s32.totalorder %s775, %s776
      %p785 = scmp.eq.s32.totalorder %s93, 0
      %p786 = por %p784, %p785
      %p787 = scmp.ne.s32.totalorder %s775, %s776
      %p788 = scmp.eq.s32.totalorder %s94, 1
      %p789 = por %p787, %p788
      %p791 = scmp.ne.s32.totalorder %s776, %s790
      %p792 = scmp.eq.s32.totalorder %s94, 0
      %p793 = por %p791, %p792
      %s795 = sadd.s32 %s794, 1
      %p798 = scmp.eq.s32.totalorder %s88, 1
      %p799 = scmp.ne.s32.totalorder %s794, %s796
      %p800 = scmp.eq.s32.totalorder %s88, 0
      %p801 = por %p799, %p800
      %p802 = scmp.ne.s32.totalorder %s794, %s796
      %p803 = scmp.eq.s32.totalorder %s93, 1
      %p804 = por %p802, %p803
      %p805 = scmp.ne.s32.totalorder %s796, %s797
      %p806 = scmp.eq.s32.totalorder %s93, 0
      %p807 = por %p805, %p806
      %p808 = scmp.ne.s32.totalorder %s796, %s797
      %p809 = scmp.eq.s32.totalorder %s94, 1
      %p810 = por %p808, %p809
      %p812 = scmp.ne.s32.totalorder %s797, %s811
      %p813 = scmp.eq.s32.totalorder %s94, 0
      %p814 = por %p812, %p813
      %s816 = sadd.s32 %s815, 1
      %p819 = scmp.eq.s32.totalorder %s88, 1
      %p820 = scmp.ne.s32.totalorder %s815, %s817
      %p821 = scmp.eq.s32.totalorder %s88, 0
      %p822 = por %p820, %p821
      %p823 = scmp.ne.s32.totalorder %s815, %s817
      %p824 = scmp.eq.s32.totalorder %s93, 1
      %p825 = por %p823, %p824
      %p826 = scmp.ne.s32.totalorder %s817, %s818
      %p827 = scmp.eq.s32.totalorder %s93, 0
      %p828 = por %p826, %p827
      %p829 = scmp.ne.s32.totalorder %s817, %s818
      %p830 = scmp.eq.s32.totalorder %s94, 1
      %p831 = por %p829, %p830
      %p833 = scmp.ne.s32.totalorder %s818, %s832
      %p834 = scmp.eq.s32.totalorder %s94, 0
      %p835 = por %p833, %p834
      %s836 = ssub.s32 %s88, %s95
      %p837 = scmp.eq.s32.totalorder %s836, 0
      %s839 = sadd.s32 %s838, 1
      %s840 = scalar_select %p837, %s838, %s839
      %p843 = pneg %p837
      %p844 = scmp.eq.s32.totalorder %s88, 1
      %p845 = por %p843, %p844
      %p846 = scmp.ne.s32.totalorder %s838, %s841
      %p847 = scmp.eq.s32.totalorder %s88, 0
      %p848 = por %p846, %p847
      %p849 = scmp.ne.s32.totalorder %s838, %s841
      %p850 = scmp.eq.s32.totalorder %s93, 1
      %p851 = por %p849, %p850
      %p852 = scmp.ne.s32.totalorder %s841, %s842
      %p853 = scmp.eq.s32.totalorder %s93, 0
      %p854 = por %p852, %p853
      %p855 = scmp.ne.s32.totalorder %s841, %s842
      %p856 = scmp.eq.s32.totalorder %s94, 1
      %p857 = por %p855, %p856
      %p859 = scmp.ne.s32.totalorder %s842, %s858
      %p860 = scmp.eq.s32.totalorder %s94, 0
      %p861 = por %p859, %p860
      %p862 = scmp.le.s32.totalorder 1, %s88
      %p863 = scmp.lt.s32.totalorder %s88, 3
      %p864 = pnand %p862, %p863
      %p865 = pneg %p864
      // Predicated region
      $region9: #{_lambda_.1} parent=5 // pred_check
        _
      $region10: #{_lambda_.1} parent=5 // pred_check_branch
        %867 = sbr.rel (%p864) target = $region12
      $region11: #{_lambda_.1} parent=5 // pred_region
        %s868 = ssub.s32 %s88, 1
        // Predicated region
        $region13: #{_lambda_.1} parent=11 // pred_check
          %p869 = pneg %p135
        $region14: #{_lambda_.1} parent=11 // pred_check_branch
          %871 = sbr.rel (%p869) target = $region16
        $region15: #{_lambda_.1} parent=11 // pred_region
          %873 = vsyncadd [#allocation9], 0
          %s874 = sshll.u32 %s3, 4
          %s875 = int_to_ptr.hbm [resolvable:$true] %s874
          %s876 = sshll.u32 [#allocation8], 4
          %s877 = int_to_ptr.vmem [resolvable:$true] %s876
          %882 = dma.hbm_to_vmem [thread:$0]  %s875, 640, %s877, [#allocation9], 128, 128, 8
        $region16: #{_lambda_.1} parent=11 // pred_fallthru
          _
        // Predicated region
        $region17: #{_lambda_.1} parent=11 // pred_check
          %p883 = pneg %p156
        $region18: #{_lambda_.1} parent=11 // pred_check_branch
          %885 = sbr.rel (%p883) target = $region20
        $region19: #{_lambda_.1} parent=11 // pred_region
          %887 = vsyncadd [#allocation11], 0
          %s888 = sshll.u32 %s5, 4
          %s889 = int_to_ptr.hbm [resolvable:$true] %s888
          %s890 = sshll.u32 [#allocation10], 4
          %s891 = int_to_ptr.vmem [resolvable:$true] %s890
          %896 = dma.hbm_to_vmem [thread:$0]  %s889, 640, %s891, [#allocation11], 128, 128, 8
        $region20: #{_lambda_.1} parent=11 // pred_fallthru
          _
        // Predicated region
        $region21: #{_lambda_.1} parent=11 // pred_check
          %p897 = pneg %p177
        $region22: #{_lambda_.1} parent=11 // pred_check_branch
          %899 = sbr.rel (%p897) target = $region24
        $region23: #{_lambda_.1} parent=11 // pred_region
          _
        $region24: #{_lambda_.1} parent=11 // pred_fallthru
          _
        // Predicated region
        $region25: #{_lambda_.1} parent=11 // pred_check
          %p900 = pneg %p198
        $region26: #{_lambda_.1} parent=11 // pred_check_branch
          %902 = sbr.rel (%p900) target = $region28
        $region27: #{_lambda_.1} parent=11 // pred_region
          _
        $region28: #{_lambda_.1} parent=11 // pred_fallthru
          _
        // Predicated region
        $region29: #{_lambda_.1} parent=11 // pred_check
          %p903 = pneg %p219
        $region30: #{_lambda_.1} parent=11 // pred_check_branch
          %905 = sbr.rel (%p903) target = $region32
        $region31: #{_lambda_.1} parent=11 // pred_region
          %907 = vsyncadd [#allocation11], 0
          %s908 = sshll.u32 %s11, 4
          %s909 = int_to_ptr.hbm [resolvable:$true] %s908
          %s910 = sshll.u32 [#allocation12], 4
          %s911 = int_to_ptr.vmem [resolvable:$true] %s910
          %916 = dma.hbm_to_vmem [thread:$0]  %s909, 640, %s911, [#allocation11], 128, 128, 8
        $region32: #{_lambda_.1} parent=11 // pred_fallthru
          _
        // Predicated region
        $region33: #{_lambda_.1} parent=11 // pred_check
          %p917 = pneg %p240
        $region34: #{_lambda_.1} parent=11 // pred_check_branch
          %919 = sbr.rel (%p917) target = $region36
        $region35: #{_lambda_.1} parent=11 // pred_region
          %921 = vsyncadd [#allocation14], 0
          %s922 = sshll.u32 %s13, 4
          %s923 = int_to_ptr.hbm [resolvable:$true] %s922
          %s924 = sshll.u32 [#allocation13], 4
          %s925 = int_to_ptr.vmem [resolvable:$true] %s924
          %930 = dma.hbm_to_vmem [thread:$0]  %s923, 256, %s925, [#allocation14], 128, 128, 8
        $region36: #{_lambda_.1} parent=11 // pred_fallthru
          _
        // Predicated region
        $region37: #{_lambda_.1} parent=11 // pred_check
          %p931 = pneg %p261
        $region38: #{_lambda_.1} parent=11 // pred_check_branch
          %933 = sbr.rel (%p931) target = $region40
        $region39: #{_lambda_.1} parent=11 // pred_region
          %935 = vsyncadd [#allocation14], 0
          %s936 = sshll.u32 %s15, 4
          %s937 = int_to_ptr.hbm [resolvable:$true] %s936
          %s938 = sshll.u32 [#allocation15], 4
          %s939 = int_to_ptr.vmem [resolvable:$true] %s938
          %944 = dma.hbm_to_vmem [thread:$0]  %s937, 256, %s939, [#allocation14], 128, 128, 8
        $region40: #{_lambda_.1} parent=11 // pred_fallthru
          _
        // Predicated region
        $region41: #{_lambda_.1} parent=11 // pred_check
          %p945 = pneg %p282
        $region42: #{_lambda_.1} parent=11 // pred_check_branch
          %947 = sbr.rel (%p945) target = $region44
        $region43: #{_lambda_.1} parent=11 // pred_region
          %949 = vsyncadd [#allocation17], 0
          %s950 = sshll.u32 %s17, 4
          %s951 = int_to_ptr.hbm [resolvable:$true] %s950
          %s952 = sshll.u32 [#allocation16], 4
          %s953 = int_to_ptr.vmem [resolvable:$true] %s952
          %958 = dma.hbm_to_vmem [thread:$0]  %s951, 256, %s953, [#allocation17], 128, 128, 8
        $region44: #{_lambda_.1} parent=11 // pred_fallthru
          _
        // Predicated region
        $region45: #{_lambda_.1} parent=11 // pred_check
          %p959 = pneg %p303
        $region46: #{_lambda_.1} parent=11 // pred_check_branch
          %961 = sbr.rel (%p959) target = $region48
        $region47: #{_lambda_.1} parent=11 // pred_region
          %963 = vsyncadd [#allocation17], 0
          %s964 = sshll.u32 %s19, 4
          %s965 = int_to_ptr.hbm [resolvable:$true] %s964
          %s966 = sshll.u32 [#allocation18], 4
          %s967 = int_to_ptr.vmem [resolvable:$true] %s966
          %972 = dma.hbm_to_vmem [thread:$0]  %s965, 256, %s967, [#allocation17], 128, 128, 8
        $region48: #{_lambda_.1} parent=11 // pred_fallthru
          _
        // Predicated region
        $region49: #{_lambda_.1} parent=11 // pred_check
          %p973 = pneg %p324
        $region50: #{_lambda_.1} parent=11 // pred_check_branch
          %975 = sbr.rel (%p973) target = $region52
        $region51: #{_lambda_.1} parent=11 // pred_region
          %977 = vsyncadd [#allocation20], 0
          %s978 = sshll.u32 %s21, 4
          %s979 = int_to_ptr.hbm [resolvable:$true] %s978
          %s980 = sshll.u32 [#allocation19], 4
          %s981 = int_to_ptr.vmem [resolvable:$true] %s980
          %986 = dma.hbm_to_vmem [thread:$0]  %s979, 256, %s981, [#allocation20], 128, 128, 8
        $region52: #{_lambda_.1} parent=11 // pred_fallthru
          _
        // Predicated region
        $region53: #{_lambda_.1} parent=11 // pred_check
          %p987 = pneg %p345
        $region54: #{_lambda_.1} parent=11 // pred_check_branch
          %989 = sbr.rel (%p987) target = $region56
        $region55: #{_lambda_.1} parent=11 // pred_region
          %991 = vsyncadd [#allocation20], 0
          %s992 = sshll.u32 %s23, 4
          %s993 = int_to_ptr.hbm [resolvable:$true] %s992
          %s994 = sshll.u32 [#allocation21], 4
          %s995 = int_to_ptr.vmem [resolvable:$true] %s994
          %1000 = dma.hbm_to_vmem [thread:$0]  %s993, 256, %s995, [#allocation20], 128, 128, 8
        $region56: #{_lambda_.1} parent=11 // pred_fallthru
          _
        // Predicated region
        $region57: #{_lambda_.1} parent=11 // pred_check
          %p1001 = pneg %p366
        $region58: #{_lambda_.1} parent=11 // pred_check_branch
          %1003 = sbr.rel (%p1001) target = $region60
        $region59: #{_lambda_.1} parent=11 // pred_region
          %1005 = vsyncadd [#allocation23], 0
          %s1006 = sshll.u32 %s25, 4
          %s1007 = int_to_ptr.hbm [resolvable:$true] %s1006
          %s1008 = sshll.u32 [#allocation22], 4
          %s1009 = int_to_ptr.vmem [resolvable:$true] %s1008
          %1014 = dma.hbm_to_vmem [thread:$0]  %s1007, 256, %s1009, [#allocation23], 128, 128, 8
        $region60: #{_lambda_.1} parent=11 // pred_fallthru
          _
        // Predicated region
        $region61: #{_lambda_.1} parent=11 // pred_check
          %p1015 = pneg %p387
        $region62: #{_lambda_.1} parent=11 // pred_check_branch
          %1017 = sbr.rel (%p1015) target = $region64
        $region63: #{_lambda_.1} parent=11 // pred_region
          %1019 = vsyncadd [#allocation23], 0
          %s1020 = sshll.u32 %s27, 4
          %s1021 = int_to_ptr.hbm [resolvable:$true] %s1020
          %s1022 = sshll.u32 [#allocation24], 4
          %s1023 = int_to_ptr.vmem [resolvable:$true] %s1022
          %1028 = dma.hbm_to_vmem [thread:$0]  %s1021, 256, %s1023, [#allocation23], 128, 128, 8
        $region64: #{_lambda_.1} parent=11 // pred_fallthru
          _
        // Predicated region
        $region65: #{_lambda_.1} parent=11 // pred_check
          %p1029 = pneg %p408
        $region66: #{_lambda_.1} parent=11 // pred_check_branch
          %1031 = sbr.rel (%p1029) target = $region68
        $region67: #{_lambda_.1} parent=11 // pred_region
          %1033 = vsyncadd [#allocation26], 0
          %s1034 = sshll.u32 %s29, 4
          %s1035 = int_to_ptr.hbm [resolvable:$true] %s1034
          %s1036 = sshll.u32 [#allocation25], 4
          %s1037 = int_to_ptr.vmem [resolvable:$true] %s1036
          %1042 = dma.hbm_to_vmem [thread:$0]  %s1035, 256, %s1037, [#allocation26], 128, 128, 8
        $region68: #{_lambda_.1} parent=11 // pred_fallthru
          _
        // Predicated region
        $region69: #{_lambda_.1} parent=11 // pred_check
          %p1043 = pneg %p429
        $region70: #{_lambda_.1} parent=11 // pred_check_branch
          %1045 = sbr.rel (%p1043) target = $region72
        $region71: #{_lambda_.1} parent=11 // pred_region
          %1047 = vsyncadd [#allocation26], 0
          %s1048 = sshll.u32 %s31, 4
          %s1049 = int_to_ptr.hbm [resolvable:$true] %s1048
          %s1050 = sshll.u32 [#allocation27], 4
          %s1051 = int_to_ptr.vmem [resolvable:$true] %s1050
          %1056 = dma.hbm_to_vmem [thread:$0]  %s1049, 256, %s1051, [#allocation26], 128, 128, 8
        $region72: #{_lambda_.1} parent=11 // pred_fallthru
          _
        // Predicated region
        $region73: #{_lambda_.1} parent=11 // pred_check
          %p1057 = pneg %p450
        $region74: #{_lambda_.1} parent=11 // pred_check_branch
          %1059 = sbr.rel (%p1057) target = $region76
        $region75: #{_lambda_.1} parent=11 // pred_region
          _
        $region76: #{_lambda_.1} parent=11 // pred_fallthru
          _
        // Predicated region
        $region77: #{_lambda_.1} parent=11 // pred_check
          %p1060 = pneg %p471
        $region78: #{_lambda_.1} parent=11 // pred_check_branch
          %1062 = sbr.rel (%p1060) target = $region80
        $region79: #{_lambda_.1} parent=11 // pred_region
          _
        $region80: #{_lambda_.1} parent=11 // pred_fallthru
          _
        // Predicated region
        $region81: #{_lambda_.1} parent=11 // pred_check
          %p1063 = pneg %p492
        $region82: #{_lambda_.1} parent=11 // pred_check_branch
          %1065 = sbr.rel (%p1063) target = $region84
        $region83: #{_lambda_.1} parent=11 // pred_region
          %1067 = vsyncadd [#allocation29], 0
          %s1068 = sshll.u32 %s37, 4
          %s1069 = int_to_ptr.hbm [resolvable:$true] %s1068
          %s1070 = sshll.u32 [#allocation28], 4
          %s1071 = int_to_ptr.vmem [resolvable:$true] %s1070
          %1076 = dma.hbm_to_vmem [thread:$0]  %s1069, 256, %s1071, [#allocation29], 128, 128, 8
        $region84: #{_lambda_.1} parent=11 // pred_fallthru
          _
        // Predicated region
        $region85: #{_lambda_.1} parent=11 // pred_check
          %p1077 = pneg %p513
        $region86: #{_lambda_.1} parent=11 // pred_check_branch
          %1079 = sbr.rel (%p1077) target = $region88
        $region87: #{_lambda_.1} parent=11 // pred_region
          %1081 = vsyncadd [#allocation29], 0
          %s1082 = sshll.u32 %s39, 4
          %s1083 = int_to_ptr.hbm [resolvable:$true] %s1082
          %s1084 = sshll.u32 [#allocation30], 4
          %s1085 = int_to_ptr.vmem [resolvable:$true] %s1084
          %1090 = dma.hbm_to_vmem [thread:$0]  %s1083, 256, %s1085, [#allocation29], 128, 128, 8
        $region88: #{_lambda_.1} parent=11 // pred_fallthru
          _
        // Predicated region
        $region89: #{_lambda_.1} parent=11 // pred_check
          %p1091 = pneg %p534
        $region90: #{_lambda_.1} parent=11 // pred_check_branch
          %1093 = sbr.rel (%p1091) target = $region92
        $region91: #{_lambda_.1} parent=11 // pred_region
          _
        $region92: #{_lambda_.1} parent=11 // pred_fallthru
          _
        // Predicated region
        $region93: #{_lambda_.1} parent=11 // pred_check
          %p1094 = pneg %p555
        $region94: #{_lambda_.1} parent=11 // pred_check_branch
          %1096 = sbr.rel (%p1094) target = $region96
        $region95: #{_lambda_.1} parent=11 // pred_region
          %1098 = vsyncadd [#allocation32], 0
          %s1099 = sshll.u32 %s43, 4
          %s1100 = int_to_ptr.hbm [resolvable:$true] %s1099
          %s1101 = sshll.u32 [#allocation31], 4
          %s1102 = int_to_ptr.vmem [resolvable:$true] %s1101
          %1107 = dma.hbm_to_vmem [thread:$0]  %s1100, 256, %s1102, [#allocation32], 128, 128, 8
        $region96: #{_lambda_.1} parent=11 // pred_fallthru
          _
        // Predicated region
        $region97: #{_lambda_.1} parent=11 // pred_check
          %p1108 = pneg %p576
        $region98: #{_lambda_.1} parent=11 // pred_check_branch
          %1110 = sbr.rel (%p1108) target = $region100
        $region99: #{_lambda_.1} parent=11 // pred_region
          %1112 = vsyncadd [#allocation32], 0
          %s1113 = sshll.u32 %s45, 4
          %s1114 = int_to_ptr.hbm [resolvable:$true] %s1113
          %s1115 = sshll.u32 [#allocation33], 4
          %s1116 = int_to_ptr.vmem [resolvable:$true] %s1115
          %1121 = dma.hbm_to_vmem [thread:$0]  %s1114, 256, %s1116, [#allocation32], 128, 128, 8
        $region100: #{_lambda_.1} parent=11 // pred_fallthru
          _
        // Predicated region
        $region101: #{_lambda_.1} parent=11 // pred_check
          %p1122 = pneg %p597
        $region102: #{_lambda_.1} parent=11 // pred_check_branch
          %1124 = sbr.rel (%p1122) target = $region104
        $region103: #{_lambda_.1} parent=11 // pred_region
          %1126 = vsyncadd [#allocation35], 0
          %s1127 = sshll.u32 %s47, 4
          %s1128 = int_to_ptr.hbm [resolvable:$true] %s1127
          %s1129 = sshll.u32 [#allocation34], 4
          %s1130 = int_to_ptr.vmem [resolvable:$true] %s1129
          %1135 = dma.hbm_to_vmem [thread:$0]  %s1128, 256, %s1130, [#allocation35], 128, 128, 8
        $region104: #{_lambda_.1} parent=11 // pred_fallthru
          _
        // Predicated region
        $region105: #{_lambda_.1} parent=11 // pred_check
          %p1136 = pneg %p618
        $region106: #{_lambda_.1} parent=11 // pred_check_branch
          %1138 = sbr.rel (%p1136) target = $region108
        $region107: #{_lambda_.1} parent=11 // pred_region
          _
        $region108: #{_lambda_.1} parent=11 // pred_fallthru
          _
        // Predicated region
        $region109: #{_lambda_.1} parent=11 // pred_check
          %p1139 = pneg %p639
        $region110: #{_lambda_.1} parent=11 // pred_check_branch
          %1141 = sbr.rel (%p1139) target = $region112
        $region111: #{_lambda_.1} parent=11 // pred_region
          _
        $region112: #{_lambda_.1} parent=11 // pred_fallthru
          _
        // Predicated region
        $region113: #{_lambda_.1} parent=11 // pred_check
          %p1142 = pneg %p660
        $region114: #{_lambda_.1} parent=11 // pred_check_branch
          %1144 = sbr.rel (%p1142) target = $region116
        $region115: #{_lambda_.1} parent=11 // pred_region
          %1146 = vsyncadd [#allocation35], 0
          %s1147 = sshll.u32 %s53, 4
          %s1148 = int_to_ptr.hbm [resolvable:$true] %s1147
          %s1149 = sshll.u32 [#allocation36], 4
          %s1150 = int_to_ptr.vmem [resolvable:$true] %s1149
          %1155 = dma.hbm_to_vmem [thread:$0]  %s1148, 256, %s1150, [#allocation35], 128, 128, 8
        $region116: #{_lambda_.1} parent=11 // pred_fallthru
          _
        // Predicated region
        $region117: #{_lambda_.1} parent=11 // pred_check
          %p1156 = pneg %p681
        $region118: #{_lambda_.1} parent=11 // pred_check_branch
          %1158 = sbr.rel (%p1156) target = $region120
        $region119: #{_lambda_.1} parent=11 // pred_region
          _
        $region120: #{_lambda_.1} parent=11 // pred_fallthru
          _
        // Predicated region
        $region121: #{_lambda_.1} parent=11 // pred_check
          %p1159 = pneg %p702
        $region122: #{_lambda_.1} parent=11 // pred_check_branch
          %1161 = sbr.rel (%p1159) target = $region124
        $region123: #{_lambda_.1} parent=11 // pred_region
          _
        $region124: #{_lambda_.1} parent=11 // pred_fallthru
          _
        // Predicated region
        $region125: #{_lambda_.1} parent=11 // pred_check
          %p1162 = pneg %p723
        $region126: #{_lambda_.1} parent=11 // pred_check_branch
          %1164 = sbr.rel (%p1162) target = $region128
        $region127: #{_lambda_.1} parent=11 // pred_region
          _
        $region128: #{_lambda_.1} parent=11 // pred_fallthru
          _
        // Predicated region
        $region129: #{_lambda_.1} parent=11 // pred_check
          %p1165 = pneg %p744
        $region130: #{_lambda_.1} parent=11 // pred_check_branch
          %1167 = sbr.rel (%p1165) target = $region132
        $region131: #{_lambda_.1} parent=11 // pred_region
          _
        $region132: #{_lambda_.1} parent=11 // pred_fallthru
          _
        // Predicated region
        $region133: #{_lambda_.1} parent=11 // pred_check
          %p1168 = pneg %p765
        $region134: #{_lambda_.1} parent=11 // pred_check_branch
          %1170 = sbr.rel (%p1168) target = $region136
        $region135: #{_lambda_.1} parent=11 // pred_region
          _
        $region136: #{_lambda_.1} parent=11 // pred_fallthru
          _
        // Predicated region
        $region137: #{_lambda_.1} parent=11 // pred_check
          %p1171 = pneg %p786
        $region138: #{_lambda_.1} parent=11 // pred_check_branch
          %1173 = sbr.rel (%p1171) target = $region140
        $region139: #{_lambda_.1} parent=11 // pred_region
          _
        $region140: #{_lambda_.1} parent=11 // pred_fallthru
          _
        // Predicated region
        $region141: #{_lambda_.1} parent=11 // pred_check
          %p1174 = pneg %p807
        $region142: #{_lambda_.1} parent=11 // pred_check_branch
          %1176 = sbr.rel (%p1174) target = $region144
        $region143: #{_lambda_.1} parent=11 // pred_region
          %1178 = vsyncadd [#allocation38], 0
          %s1179 = sshll.u32 %s67, 4
          %s1180 = int_to_ptr.hbm [resolvable:$true] %s1179
          %s1181 = sshll.u32 [#allocation37], 4
          %s1182 = int_to_ptr.vmem [resolvable:$true] %s1181
          %1187 = dma.hbm_to_vmem [thread:$0]  %s1180, 256, %s1182, [#allocation38], 128, 128, 8
        $region144: #{_lambda_.1} parent=11 // pred_fallthru
          _
        // Predicated region
        $region145: #{_lambda_.1} parent=11 // pred_check
          %p1188 = pneg %p828
        $region146: #{_lambda_.1} parent=11 // pred_check_branch
          %1190 = sbr.rel (%p1188) target = $region148
        $region147: #{_lambda_.1} parent=11 // pred_region
          _
        $region148: #{_lambda_.1} parent=11 // pred_fallthru
          _
      $region12: #{_lambda_.1} parent=5 // pred_fallthru
        _
      %p1191 = scmp.lt.s32.totalorder %s88, 2
      // Predicated region
      $region149: #{_lambda_.1} parent=5 // pred_check
        %p1192 = pneg %p1191
      $region150: #{_lambda_.1} parent=5 // pred_check_branch
        %1194 = sbr.rel (%p1192) target = $region152
      $region151: #{_lambda_.1} parent=5 // pred_region
        // Predicated region
        $region153: #{_lambda_.1} parent=151 // pred_check
          %p1195 = pneg %p108
        $region154: #{_lambda_.1} parent=151 // pred_check_branch
          %1197 = sbr.rel (%p1195) target = $region156
        $region155: #{_lambda_.1} parent=151 // pred_region
          %p1198 = scmp.lt.s32.totalorder %s88, 1
          %s1199 = scalar_select %p1198, %s88, 1
          %s1200 = smul.addr %s1199, 4
          %s1201 = scalar_lea.vmem %s1, %s1200
        $region156: #{_lambda_.1} parent=151 // pred_fallthru
          _
      $region152: #{_lambda_.1} parent=5 // pred_fallthru
        _
      %p1202 = scmp.le.s32.totalorder 1, %s88
      %p1203 = scmp.lt.s32.totalorder %s88, 3
      %p1204 = pnand %p1202, %p1203
      %p1205 = pneg %p1204
      // Predicated region
      $region157: #{_lambda_.1} parent=5 // pred_check
        _
      $region158: #{_lambda_.1} parent=5 // pred_check_branch
        %1207 = sbr.rel (%p1204) target = $region160
      $region159: #{_lambda_.1} parent=5 // pred_region
        %s1208 = ssub.s32 %s88, 1
        // Predicated region
        $region161: #{_lambda_.1} parent=159 // pred_check
          %p1209 = pneg %p135
        $region162: #{_lambda_.1} parent=159 // pred_check_branch
          %1211 = sbr.rel (%p1209) target = $region164
        $region163: #{_lambda_.1} parent=159 // pred_region
          %1213 = dma.done [#allocation9], 640
        $region164: #{_lambda_.1} parent=159 // pred_fallthru
          _
        // Predicated region
        $region165: #{_lambda_.1} parent=159 // pred_check
          %p1214 = pneg %p156
        $region166: #{_lambda_.1} parent=159 // pred_check_branch
          %1216 = sbr.rel (%p1214) target = $region168
        $region167: #{_lambda_.1} parent=159 // pred_region
          %1218 = dma.done [#allocation11], 640
        $region168: #{_lambda_.1} parent=159 // pred_fallthru
          _
        // Predicated region
        $region169: #{_lambda_.1} parent=159 // pred_check
          %p1219 = pneg %p219
        $region170: #{_lambda_.1} parent=159 // pred_check_branch
          %1221 = sbr.rel (%p1219) target = $region172
        $region171: #{_lambda_.1} parent=159 // pred_region
          %1223 = dma.done [#allocation11], 640
        $region172: #{_lambda_.1} parent=159 // pred_fallthru
          _
        // Predicated region
        $region173: #{_lambda_.1} parent=159 // pred_check
          %p1224 = pneg %p240
        $region174: #{_lambda_.1} parent=159 // pred_check_branch
          %1226 = sbr.rel (%p1224) target = $region176
        $region175: #{_lambda_.1} parent=159 // pred_region
          %1228 = dma.done [#allocation14], 256
        $region176: #{_lambda_.1} parent=159 // pred_fallthru
          _
        // Predicated region
        $region177: #{_lambda_.1} parent=159 // pred_check
          %p1229 = pneg %p261
        $region178: #{_lambda_.1} parent=159 // pred_check_branch
          %1231 = sbr.rel (%p1229) target = $region180
        $region179: #{_lambda_.1} parent=159 // pred_region
          %1233 = dma.done [#allocation14], 256
        $region180: #{_lambda_.1} parent=159 // pred_fallthru
          _
        // Predicated region
        $region181: #{_lambda_.1} parent=159 // pred_check
          %p1234 = pneg %p282
        $region182: #{_lambda_.1} parent=159 // pred_check_branch
          %1236 = sbr.rel (%p1234) target = $region184
        $region183: #{_lambda_.1} parent=159 // pred_region
          %1238 = dma.done [#allocation17], 256
        $region184: #{_lambda_.1} parent=159 // pred_fallthru
          _
        // Predicated region
        $region185: #{_lambda_.1} parent=159 // pred_check
          %p1239 = pneg %p303
        $region186: #{_lambda_.1} parent=159 // pred_check_branch
          %1241 = sbr.rel (%p1239) target = $region188
        $region187: #{_lambda_.1} parent=159 // pred_region
          %1243 = dma.done [#allocation17], 256
        $region188: #{_lambda_.1} parent=159 // pred_fallthru
          _
        // Predicated region
        $region189: #{_lambda_.1} parent=159 // pred_check
          %p1244 = pneg %p324
        $region190: #{_lambda_.1} parent=159 // pred_check_branch
          %1246 = sbr.rel (%p1244) target = $region192
        $region191: #{_lambda_.1} parent=159 // pred_region
          %1248 = dma.done [#allocation20], 256
        $region192: #{_lambda_.1} parent=159 // pred_fallthru
          _
        // Predicated region
        $region193: #{_lambda_.1} parent=159 // pred_check
          %p1249 = pneg %p345
        $region194: #{_lambda_.1} parent=159 // pred_check_branch
          %1251 = sbr.rel (%p1249) target = $region196
        $region195: #{_lambda_.1} parent=159 // pred_region
          %1253 = dma.done [#allocation20], 256
        $region196: #{_lambda_.1} parent=159 // pred_fallthru
          _
        // Predicated region
        $region197: #{_lambda_.1} parent=159 // pred_check
          %p1254 = pneg %p366
        $region198: #{_lambda_.1} parent=159 // pred_check_branch
          %1256 = sbr.rel (%p1254) target = $region200
        $region199: #{_lambda_.1} parent=159 // pred_region
          %1258 = dma.done [#allocation23], 256
        $region200: #{_lambda_.1} parent=159 // pred_fallthru
          _
        // Predicated region
        $region201: #{_lambda_.1} parent=159 // pred_check
          %p1259 = pneg %p387
        $region202: #{_lambda_.1} parent=159 // pred_check_branch
          %1261 = sbr.rel (%p1259) target = $region204
        $region203: #{_lambda_.1} parent=159 // pred_region
          %1263 = dma.done [#allocation23], 256
        $region204: #{_lambda_.1} parent=159 // pred_fallthru
          _
        // Predicated region
        $region205: #{_lambda_.1} parent=159 // pred_check
          %p1264 = pneg %p408
        $region206: #{_lambda_.1} parent=159 // pred_check_branch
          %1266 = sbr.rel (%p1264) target = $region208
        $region207: #{_lambda_.1} parent=159 // pred_region
          %1268 = dma.done [#allocation26], 256
        $region208: #{_lambda_.1} parent=159 // pred_fallthru
          _
        // Predicated region
        $region209: #{_lambda_.1} parent=159 // pred_check
          %p1269 = pneg %p429
        $region210: #{_lambda_.1} parent=159 // pred_check_branch
          %1271 = sbr.rel (%p1269) target = $region212
        $region211: #{_lambda_.1} parent=159 // pred_region
          %1273 = dma.done [#allocation26], 256
        $region212: #{_lambda_.1} parent=159 // pred_fallthru
          _
        // Predicated region
        $region213: #{_lambda_.1} parent=159 // pred_check
          %p1274 = pneg %p492
        $region214: #{_lambda_.1} parent=159 // pred_check_branch
          %1276 = sbr.rel (%p1274) target = $region216
        $region215: #{_lambda_.1} parent=159 // pred_region
          %1278 = dma.done [#allocation29], 256
        $region216: #{_lambda_.1} parent=159 // pred_fallthru
          _
        // Predicated region
        $region217: #{_lambda_.1} parent=159 // pred_check
          %p1279 = pneg %p513
        $region218: #{_lambda_.1} parent=159 // pred_check_branch
          %1281 = sbr.rel (%p1279) target = $region220
        $region219: #{_lambda_.1} parent=159 // pred_region
          %1283 = dma.done [#allocation29], 256
        $region220: #{_lambda_.1} parent=159 // pred_fallthru
          _
        // Predicated region
        $region221: #{_lambda_.1} parent=159 // pred_check
          %p1284 = pneg %p555
        $region222: #{_lambda_.1} parent=159 // pred_check_branch
          %1286 = sbr.rel (%p1284) target = $region224
        $region223: #{_lambda_.1} parent=159 // pred_region
          %1288 = dma.done [#allocation32], 256
        $region224: #{_lambda_.1} parent=159 // pred_fallthru
          _
        // Predicated region
        $region225: #{_lambda_.1} parent=159 // pred_check
          %p1289 = pneg %p576
        $region226: #{_lambda_.1} parent=159 // pred_check_branch
          %1291 = sbr.rel (%p1289) target = $region228
        $region227: #{_lambda_.1} parent=159 // pred_region
          %1293 = dma.done [#allocation32], 256
        $region228: #{_lambda_.1} parent=159 // pred_fallthru
          _
        // Predicated region
        $region229: #{_lambda_.1} parent=159 // pred_check
          %p1294 = pneg %p597
        $region230: #{_lambda_.1} parent=159 // pred_check_branch
          %1296 = sbr.rel (%p1294) target = $region232
        $region231: #{_lambda_.1} parent=159 // pred_region
          %1298 = dma.done [#allocation35], 256
        $region232: #{_lambda_.1} parent=159 // pred_fallthru
          _
        // Predicated region
        $region233: #{_lambda_.1} parent=159 // pred_check
          %p1299 = pneg %p660
        $region234: #{_lambda_.1} parent=159 // pred_check_branch
          %1301 = sbr.rel (%p1299) target = $region236
        $region235: #{_lambda_.1} parent=159 // pred_region
          %1303 = dma.done [#allocation35], 256
        $region236: #{_lambda_.1} parent=159 // pred_fallthru
          _
        // Predicated region
        $region237: #{_lambda_.1} parent=159 // pred_check
          %p1304 = pneg %p807
        $region238: #{_lambda_.1} parent=159 // pred_check_branch
          %1306 = sbr.rel (%p1304) target = $region240
        $region239: #{_lambda_.1} parent=159 // pred_region
          %1308 = dma.done [#allocation38], 256
        $region240: #{_lambda_.1} parent=159 // pred_fallthru
          _
        %p1309 = scmp.lt.s32.totalorder %s93, 1
        %s1310 = scalar_select %p1309, %s93, 1
        %s1311 = smul.addr %s1310, 4
        %s1312 = scalar_lea.vmem %s1, %s1311
        %p1313 = pneg %p114
        %p1314 = pneg %p111
        %p1315 = pneg %p135
        %p1316 = pneg %p132
        %p1317 = pneg %p156
        %p1318 = pneg %p153
        %p1319 = pneg %p177
        %p1320 = pneg %p174
        %p1321 = pneg %p198
        %p1322 = pneg %p195
        %p1323 = pneg %p219
        %p1324 = pneg %p216
        %p1325 = pneg %p240
        %p1326 = pneg %p237
        %p1327 = pneg %p261
        %p1328 = pneg %p258
        %p1329 = pneg %p282
        %p1330 = pneg %p279
        %p1331 = pneg %p303
        %p1332 = pneg %p300
        %p1333 = pneg %p324
        %p1334 = pneg %p321
        %p1335 = pneg %p345
        %p1336 = pneg %p342
        %p1337 = pneg %p366
        %p1338 = pneg %p363
        %p1339 = pneg %p387
        %p1340 = pneg %p384
        %p1341 = pneg %p408
        %p1342 = pneg %p405
        %p1343 = pneg %p429
        %p1344 = pneg %p426
        %p1345 = pneg %p450
        %p1346 = pneg %p447
        %p1347 = pneg %p471
        %p1348 = pneg %p468
        %p1349 = pneg %p492
        %p1350 = pneg %p489
        %p1351 = pneg %p513
        %p1352 = pneg %p510
        %p1353 = pneg %p534
        %p1354 = pneg %p531
        %p1355 = pneg %p555
        %p1356 = pneg %p552
        %p1357 = pneg %p576
        %p1358 = pneg %p573
        %p1359 = pneg %p597
        %p1360 = pneg %p594
        %p1361 = pneg %p618
        %p1362 = pneg %p615
        %p1363 = pneg %p639
        %p1364 = pneg %p636
        %p1365 = pneg %p660
        %p1366 = pneg %p657
        %p1367 = pneg %p681
        %p1368 = pneg %p678
        %p1369 = pneg %p702
        %p1370 = pneg %p699
        %p1371 = pneg %p723
        %p1372 = pneg %p720
        %p1373 = pneg %p744
        %p1374 = pneg %p741
        %p1375 = pneg %p765
        %p1376 = pneg %p762
        %p1377 = pneg %p786
        %p1378 = pneg %p783
        %p1379 = pneg %p807
        %p1380 = pneg %p804
        %p1381 = pneg %p828
        %p1382 = pneg %p825
        %p1383 = pneg %p854
        %p1384 = pneg %p851
        %p1385 = scmp.lt.s32.totalorder %s93, 1
        %s1386 = scalar_select %p1385, %s93, 1
        %s1387 = smul.addr %s1386, 5
        %s1388 = smul.addr %s1387, 8
        %s1389 = scalar_lea.vmem %s71, %s1388
        %p1390 = scmp.lt.s32.totalorder %s93, 1
        %s1391 = scalar_select %p1390, %s93, 1
        %s1392 = smul.addr %s1391, 4
        %s1393 = scalar_lea.vmem %s1, %s1392
        %p1394 = scmp.lt.s32.totalorder %s93, 1
        %s1395 = scalar_select %p1394, %s93, 1
        %s1396 = smul.addr %s1395, 5
        %s1397 = smul.addr %s1396, 8
        %s1398 = scalar_lea.vmem %s71, %s1397
        %v1399 = vld [vmem:[%s1393] sm:$0xf]
        %v1400 = vld [vmem:[#allocation8] sm:$0xff]
        %v1401 = vld [vmem:[#allocation8 + $0x8] sm:$0xff]
        %v1402 = vld [vmem:[#allocation8 + $0x10] sm:$0xff]
        %v1403 = vld [vmem:[#allocation8 + $0x18] sm:$0xff]
        %v1404 = vld [vmem:[#allocation8 + $0x20] sm:$0xf]
        %v1405 = vld [vmem:[#allocation10] sm:$0xff]
        %v1406 = vld [vmem:[#allocation10 + $0x8] sm:$0xff]
        %v1407 = vld [vmem:[#allocation10 + $0x10] sm:$0xff]
        %v1408 = vld [vmem:[#allocation10 + $0x18] sm:$0xff]
        %v1409 = vld [vmem:[#allocation10 + $0x20] sm:$0xf]
        %1411 = vset.pattern.permute.xlu0 0
        %1412 = vperm.xlu0 %1411, %v1405
        %v1413 = vpop.permute.xlu0 %1412
        %1416 = vset.pattern.permute.xlu0 0
        %1417 = vperm.xlu0 %1416, %v1406
        %v1418 = vpop.permute.xlu0 %1417
        %1421 = vset.pattern.permute.xlu0 0
        %1422 = vperm.xlu0 %1421, %v1407
        %v1423 = vpop.permute.xlu0 %1422
        %1426 = vset.pattern.permute.xlu0 0
        %1427 = vperm.xlu0 %1426, %v1408
        %v1428 = vpop.permute.xlu0 %1427
        %1431 = vset.pattern.permute.xlu0 0
        %1432 = vperm.xlu0 %1431, %v1409
        %v1433 = vpop.permute.xlu0 %1432
        %vm1435 = vcmask 31744
        %v1437 = vsel %vm1435, %v1400, 0
        %v1440 = vsel %vm1435, %v1401, 0
        %v1443 = vsel %vm1435, %v1402, 0
        %v1446 = vsel %vm1435, %v1403, 0
        %v1449 = vsel %vm1435, %v1404, 0
        %vm1451 = vcmask 1043456
        %v1453 = vsel %vm1451, %v1399, 0
        %1455 = vmatpush.msra.mxu0 0.0
        %1456 = vmatpush.msra.mxu0 0.0
        %1457 = vmatpush.msra.mxu0 0.0
        %1458 = vmatpush.msra.mxu0 0.0
        %1459 = vmatpush.msra.mxu0 0.0
        %1460 = vmatpush.msra.mxu0 0.0
        %1461 = vmatpush.msra.mxu0 0.0
        %1462 = vmatpush.msra.mxu0 0.0
        %1463 = vmatpush.msra.mxu0 0.0
        %1464 = vmatpush.msra.mxu0 0.0
        %1465 = vmatpush.msra.mxu0 0.0
        %1466 = vmatpush.msra.mxu0 0.0
        %1467 = vmatpush.msra.mxu0 0.0
        %1468 = vmatpush.msra.mxu0 0.0
        %1469 = vmatpush.msra.mxu0 0.0
        %1470 = vmatpush.msra.mxu0 %v1453
        %1471 = vmatmul.f32.gmra.mxu0 %v1437
        %v1472 = vpop.f32.mrf.mxu0
        %v1473 = vadd.f32 %v1413, %v1472
        %1474 = vmatmul.f32.gmra.mxu0 %v1440
        %v1475 = vpop.f32.mrf.mxu0
        %v1476 = vadd.f32 %v1418, %v1475
        %1477 = vmatmul.f32.gmra.mxu0 %v1443
        %v1478 = vpop.f32.mrf.mxu0
        %v1479 = vadd.f32 %v1423, %v1478
        %1480 = vmatmul.f32.gmra.mxu0 %v1446
        %v1481 = vpop.f32.mrf.mxu0
        %v1482 = vadd.f32 %v1428, %v1481
        %1483 = vmatmul.f32.gmra.mxu0 %v1449
        %v1484 = vpop.f32.mrf.mxu0
        %v1485 = vadd.f32 %v1433, %v1484
        %1486 = vdwg.mxu0
        %v1487 = vld [vmem:[%s7] sm:$0xff]
        %v1488 = vld [vmem:[%s7 + $0x8] sm:$0xff]
        %v1489 = vld [vmem:[%s7 + $0x10] sm:$0xff]
        %v1490 = vld [vmem:[%s7 + $0x18] sm:$0xff]
        %v1491 = vld [vmem:[%s7 + $0x20] sm:$0xf]
        %v1492 = vld [vmem:[%s9] sm:$0xff]
        %v1493 = vld [vmem:[%s9 + $0x8] sm:$0xff]
        %v1494 = vld [vmem:[%s9 + $0x10] sm:$0xff]
        %v1495 = vld [vmem:[%s9 + $0x18] sm:$0xff]
        %v1496 = vld [vmem:[%s9 + $0x20] sm:$0xf]
        %v1497 = vld [vmem:[#allocation12] sm:$0xff]
        %v1498 = vld [vmem:[#allocation12 + $0x8] sm:$0xff]
        %v1499 = vld [vmem:[#allocation12 + $0x10] sm:$0xff]
        %v1500 = vld [vmem:[#allocation12 + $0x18] sm:$0xff]
        %v1501 = vld [vmem:[#allocation12 + $0x20] sm:$0xf]
        %vm1502 = vcmask 523264
        %v1503 = vsel %vm1502, %v1473, 0.0
        %1504 = vadd.xlane.f32.xlu0 %v1503
        %v1505 = vpop.xlane.xlu0 %1504
        %v1506 = vsel %vm1502, %v1476, 0.0
        %1507 = vadd.xlane.f32.xlu0 %v1506
        %v1508 = vpop.xlane.xlu0 %1507
        %v1509 = vsel %vm1502, %v1479, 0.0
        %1510 = vadd.xlane.f32.xlu0 %v1509
        %v1511 = vpop.xlane.xlu0 %1510
        %v1512 = vsel %vm1502, %v1482, 0.0
        %1513 = vadd.xlane.f32.xlu0 %v1512
        %v1514 = vpop.xlane.xlu0 %1513
        %vm1515 = vcmask 519168
        %v1516 = vsel %vm1515, %v1485, 0.0
        %1517 = vadd.xlane.f32.xlu0 %v1516
        %v1518 = vpop.xlane.xlu0 %1517
        %v1519 = vmul.f32 %v1473, %v1473
        %v1520 = vmul.f32 %v1476, %v1476
        %v1521 = vmul.f32 %v1479, %v1479
        %v1522 = vmul.f32 %v1482, %v1482
        %v1523 = vmul.f32 %v1485, %v1485
        %v1524 = vsel %vm1502, %v1519, 0.0
        %1525 = vadd.xlane.f32.xlu0 %v1524
        %v1526 = vpop.xlane.xlu0 %1525
        %v1527 = vsel %vm1502, %v1520, 0.0
        %1528 = vadd.xlane.f32.xlu0 %v1527
        %v1529 = vpop.xlane.xlu0 %1528
        %v1530 = vsel %vm1502, %v1521, 0.0
        %1531 = vadd.xlane.f32.xlu0 %v1530
        %v1532 = vpop.xlane.xlu0 %1531
        %v1533 = vsel %vm1502, %v1522, 0.0
        %1534 = vadd.xlane.f32.xlu0 %v1533
        %v1535 = vpop.xlane.xlu0 %1534
        %v1536 = vsel %vm1515, %v1523, 0.0
        %1537 = vadd.xlane.f32.xlu0 %v1536
        %v1538 = vpop.xlane.xlu0 %1537
        %vm1539 = vcmask 293888
        %v1541 = vsel %vm1539, %v1497, 0
        %v1544 = vsel %vm1539, %v1498, 0
        %v1547 = vsel %vm1539, %v1499, 0
        %v1550 = vsel %vm1539, %v1500, 0
        %v1553 = vsel %vm1539, %v1501, 0
        %v1556 = vsel %vm1451, %v1518, 0
        %1558 = vmatpush.msra.mxu0 0.0
        %1559 = vmatpush.msra.mxu0 0.0
        %1560 = vmatpush.msra.mxu0 0.0
        %1561 = vmatpush.msra.mxu0 0.0
        %1562 = vmatpush.msra.mxu0 0.0
        %1563 = vmatpush.msra.mxu0 0.0
        %1564 = vmatpush.msra.mxu0 0.0
        %1565 = vmatpush.msra.mxu0 0.0
        %1566 = vmatpush.msra.mxu0 0.0
        %1567 = vmatpush.msra.mxu0 0.0
        %1568 = vmatpush.msra.mxu0 0.0
        %1569 = vmatpush.msra.mxu0 %v1556
        %1570 = vmatpush.msra.mxu0 %v1514
        %1571 = vmatpush.msra.mxu0 %v1511
        %1572 = vmatpush.msra.mxu0 %v1508
        %1573 = vmatpush.msra.mxu0 %v1505
        %1574 = vmatmul.f32.gmra.mxu0 %v1541
        %v1575 = vpop.f32.mrf.mxu0
        %v1576 = vadd.f32 0.0, %v1575
        %1577 = vmatmul.f32.gmra.mxu0 %v1544
        %v1578 = vpop.f32.mrf.mxu0
        %v1579 = vadd.f32 0.0, %v1578
        %1580 = vmatmul.f32.gmra.mxu0 %v1547
        %v1581 = vpop.f32.mrf.mxu0
        %v1582 = vadd.f32 0.0, %v1581
        %1583 = vmatmul.f32.gmra.mxu0 %v1550
        %v1584 = vpop.f32.mrf.mxu0
        %v1585 = vadd.f32 0.0, %v1584
        %1586 = vmatmul.f32.gmra.mxu0 %v1553
        %v1587 = vpop.f32.mrf.mxu0
        %v1588 = vadd.f32 0.0, %v1587
        %1589 = vdwg.mxu0
        %v1590 = vmul.f32 %v1576, 0.0052083335
        %v1591 = vmul.f32 %v1579, 0.0052083335
        %v1592 = vmul.f32 %v1582, 0.0052083335
        %v1593 = vmul.f32 %v1585, 0.0052083335
        %v1594 = vmul.f32 %v1588, 0.0052083335
        %v1596 = vsel %vm1451, %v1538, 0
        %1598 = vmatpush.msra.mxu0 0.0
        %1599 = vmatpush.msra.mxu0 0.0
        %1600 = vmatpush.msra.mxu0 0.0
        %1601 = vmatpush.msra.mxu0 0.0
        %1602 = vmatpush.msra.mxu0 0.0
        %1603 = vmatpush.msra.mxu0 0.0
        %1604 = vmatpush.msra.mxu0 0.0
        %1605 = vmatpush.msra.mxu0 0.0
        %1606 = vmatpush.msra.mxu0 0.0
        %1607 = vmatpush.msra.mxu0 0.0
        %1608 = vmatpush.msra.mxu0 0.0
        %1609 = vmatpush.msra.mxu0 %v1596
        %1610 = vmatpush.msra.mxu0 %v1535
        %1611 = vmatpush.msra.mxu0 %v1532
        %1612 = vmatpush.msra.mxu0 %v1529
        %1613 = vmatpush.msra.mxu0 %v1526
        %1614 = vmatmul.f32.gmra.mxu0 %v1541
        %v1615 = vpop.f32.mrf.mxu0
        %v1616 = vadd.f32 0.0, %v1615
        %1617 = vmatmul.f32.gmra.mxu0 %v1544
        %v1618 = vpop.f32.mrf.mxu0
        %v1619 = vadd.f32 0.0, %v1618
        %1620 = vmatmul.f32.gmra.mxu0 %v1547
        %v1621 = vpop.f32.mrf.mxu0
        %v1622 = vadd.f32 0.0, %v1621
        %1623 = vmatmul.f32.gmra.mxu0 %v1550
        %v1624 = vpop.f32.mrf.mxu0
        %v1625 = vadd.f32 0.0, %v1624
        %1626 = vmatmul.f32.gmra.mxu0 %v1553
        %v1627 = vpop.f32.mrf.mxu0
        %v1628 = vadd.f32 0.0, %v1627
        %1629 = vdwg.mxu0
        %v1630 = vmul.f32 %v1616, 0.0052083335
        %v1631 = vmul.f32 %v1619, 0.0052083335
        %v1632 = vmul.f32 %v1622, 0.0052083335
        %v1633 = vmul.f32 %v1625, 0.0052083335
        %v1634 = vmul.f32 %v1628, 0.0052083335
        %v1635 = vmul.f32 %v1590, %v1590
        %v1636 = vmul.f32 %v1591, %v1591
        %v1637 = vmul.f32 %v1592, %v1592
        %v1638 = vmul.f32 %v1593, %v1593
        %v1639 = vmul.f32 %v1594, %v1594
        %v1640 = vsub.f32 %v1630, %v1635
        %v1641 = vsub.f32 %v1631, %v1636
        %v1642 = vsub.f32 %v1632, %v1637
        %v1643 = vsub.f32 %v1633, %v1638
        %v1644 = vsub.f32 %v1634, %v1639
        %v1645 = vadd.f32 %v1640, 1e-05
        %v1646 = vadd.f32 %v1641, 1e-05
        %v1647 = vadd.f32 %v1642, 1e-05
        %v1648 = vadd.f32 %v1643, 1e-05
        %v1649 = vadd.f32 %v1644, 1e-05
        %v1650 = vrsqrt.pop %v1645
        %v1651 = vmul.f32 %v1650, %v1645
        %v1652 = vmul.f32 %v1651, %v1650
        %v1653 = vmul.f32 0.5, %v1652
        %v1654 = vsub.f32 1.5, %v1653
        %v1655 = vmul.f32 %v1650, %v1654
        %vm1656 = vweird.f32 %v1645
        %vm1657 = vweird.f32 %v1650
        %vm1658 = vmor %vm1656, %vm1657
        %v1659 = vsel %vm1658, %v1650, %v1655
        %v1660 = vrsqrt.pop %v1646
        %v1661 = vmul.f32 %v1660, %v1646
        %v1662 = vmul.f32 %v1661, %v1660
        %v1663 = vmul.f32 0.5, %v1662
        %v1664 = vsub.f32 1.5, %v1663
        %v1665 = vmul.f32 %v1660, %v1664
        %vm1666 = vweird.f32 %v1646
        %vm1667 = vweird.f32 %v1660
        %vm1668 = vmor %vm1666, %vm1667
        %v1669 = vsel %vm1668, %v1660, %v1665
        %v1670 = vrsqrt.pop %v1647
        %v1671 = vmul.f32 %v1670, %v1647
        %v1672 = vmul.f32 %v1671, %v1670
        %v1673 = vmul.f32 0.5, %v1672
        %v1674 = vsub.f32 1.5, %v1673
        %v1675 = vmul.f32 %v1670, %v1674
        %vm1676 = vweird.f32 %v1647
        %vm1677 = vweird.f32 %v1670
        %vm1678 = vmor %vm1676, %vm1677
        %v1679 = vsel %vm1678, %v1670, %v1675
        %v1680 = vrsqrt.pop %v1648
        %v1681 = vmul.f32 %v1680, %v1648
        %v1682 = vmul.f32 %v1681, %v1680
        %v1683 = vmul.f32 0.5, %v1682
        %v1684 = vsub.f32 1.5, %v1683
        %v1685 = vmul.f32 %v1680, %v1684
        %vm1686 = vweird.f32 %v1648
        %vm1687 = vweird.f32 %v1680
        %vm1688 = vmor %vm1686, %vm1687
        %v1689 = vsel %vm1688, %v1680, %v1685
        %v1690 = vrsqrt.pop %v1649
        %v1691 = vmul.f32 %v1690, %v1649
        %v1692 = vmul.f32 %v1691, %v1690
        %v1693 = vmul.f32 0.5, %v1692
        %v1694 = vsub.f32 1.5, %v1693
        %v1695 = vmul.f32 %v1690, %v1694
        %vm1696 = vweird.f32 %v1649
        %vm1697 = vweird.f32 %v1690
        %vm1698 = vmor %vm1696, %vm1697
        %v1699 = vsel %vm1698, %v1690, %v1695
        %v1700 = vmul.f32 %v1487, %v1659
        %v1701 = vmul.f32 %v1488, %v1669
        %v1702 = vmul.f32 %v1489, %v1679
        %v1703 = vmul.f32 %v1490, %v1689
        %v1704 = vmul.f32 %v1491, %v1699
        %1706 = vset.pattern.permute.xlu0 0
        %1707 = vperm.xlu0 %1706, %v1700
        %v1708 = vpop.permute.xlu0 %1707
        %1711 = vset.pattern.permute.xlu0 0
        %1712 = vperm.xlu0 %1711, %v1701
        %v1713 = vpop.permute.xlu0 %1712
        %1716 = vset.pattern.permute.xlu0 0
        %1717 = vperm.xlu0 %1716, %v1702
        %v1718 = vpop.permute.xlu0 %1717
        %1721 = vset.pattern.permute.xlu0 0
        %1722 = vperm.xlu0 %1721, %v1703
        %v1723 = vpop.permute.xlu0 %1722
        %1726 = vset.pattern.permute.xlu0 0
        %1727 = vperm.xlu0 %1726, %v1704
        %v1728 = vpop.permute.xlu0 %1727
        %v1730 = vmul.f32 %v1473, %v1708
        %v1731 = vmul.f32 %v1476, %v1713
        %v1732 = vmul.f32 %v1479, %v1718
        %v1733 = vmul.f32 %v1482, %v1723
        %v1734 = vmul.f32 %v1485, %v1728
        %v1735 = vmul.f32 %v1590, %v1700
        %v1736 = vmul.f32 %v1591, %v1701
        %v1737 = vmul.f32 %v1592, %v1702
        %v1738 = vmul.f32 %v1593, %v1703
        %v1739 = vmul.f32 %v1594, %v1704
        %v1740 = vsub.f32 %v1492, %v1735
        %v1741 = vsub.f32 %v1493, %v1736
        %v1742 = vsub.f32 %v1494, %v1737
        %v1743 = vsub.f32 %v1495, %v1738
        %v1744 = vsub.f32 %v1496, %v1739
        %1746 = vset.pattern.permute.xlu0 0
        %1747 = vperm.xlu0 %1746, %v1740
        %v1748 = vpop.permute.xlu0 %1747
        %1751 = vset.pattern.permute.xlu0 0
        %1752 = vperm.xlu0 %1751, %v1741
        %v1753 = vpop.permute.xlu0 %1752
        %1756 = vset.pattern.permute.xlu0 0
        %1757 = vperm.xlu0 %1756, %v1742
        %v1758 = vpop.permute.xlu0 %1757
        %1761 = vset.pattern.permute.xlu0 0
        %1762 = vperm.xlu0 %1761, %v1743
        %v1763 = vpop.permute.xlu0 %1762
        %1766 = vset.pattern.permute.xlu0 0
        %1767 = vperm.xlu0 %1766, %v1744
        %v1768 = vpop.permute.xlu0 %1767
        %v1770 = vadd.f32 %v1730, %v1748
        %v1771 = vadd.f32 %v1731, %v1753
        %v1772 = vadd.f32 %v1732, %v1758
        %v1773 = vadd.f32 %v1733, %v1763
        %v1774 = vadd.f32 %v1734, %v1768
        %v1775 = vadd.f32 %v1770, 3.0
        %v1776 = vadd.f32 %v1771, 3.0
        %v1777 = vadd.f32 %v1772, 3.0
        %v1778 = vadd.f32 %v1773, 3.0
        %v1779 = vadd.f32 %v1774, 3.0
        %v1780 = vmax.f32 %v1775, 0.0
        %v1781 = vmax.f32 %v1776, 0.0
        %v1782 = vmax.f32 %v1777, 0.0
        %v1783 = vmax.f32 %v1778, 0.0
        %v1784 = vmax.f32 %v1779, 0.0
        %v1785 = vmin.f32 %v1780, 6.0
        %v1786 = vmin.f32 %v1781, 6.0
        %v1787 = vmin.f32 %v1782, 6.0
        %v1788 = vmin.f32 %v1783, 6.0
        %v1789 = vmin.f32 %v1784, 6.0
        %v1790 = vmul.f32 %v1770, %v1785
        %v1791 = vmul.f32 %v1771, %v1786
        %v1792 = vmul.f32 %v1772, %v1787
        %v1793 = vmul.f32 %v1773, %v1788
        %v1794 = vmul.f32 %v1774, %v1789
        %v1795 = vmul.f32 %v1790, 0.16666667
        %v1796 = vmul.f32 %v1791, 0.16666667
        %v1797 = vmul.f32 %v1792, 0.16666667
        %v1798 = vmul.f32 %v1793, 0.16666667
        %v1799 = vmul.f32 %v1794, 0.16666667
        %v1800 = vmax.f32 %v1770, 0.0
        %v1801 = vmax.f32 %v1771, 0.0
        %v1802 = vmax.f32 %v1772, 0.0
        %v1803 = vmax.f32 %v1773, 0.0
        %v1804 = vmax.f32 %v1774, 0.0
        %v1805 = vmin.f32 %v1800, 6.0
        %v1806 = vmin.f32 %v1801, 6.0
        %v1807 = vmin.f32 %v1802, 6.0
        %v1808 = vmin.f32 %v1803, 6.0
        %v1809 = vmin.f32 %v1804, 6.0
        %v1810 = vmin.f32 %v1770, 0.0
        %v1811 = vmin.f32 %v1771, 0.0
        %v1812 = vmin.f32 %v1772, 0.0
        %v1813 = vmin.f32 %v1773, 0.0
        %v1814 = vmin.f32 %v1774, 0.0
        %v1815 = vmul.f32 %v1810, 0.01
        %v1816 = vmul.f32 %v1811, 0.01
        %v1817 = vmul.f32 %v1812, 0.01
        %v1818 = vmul.f32 %v1813, 0.01
        %v1819 = vmul.f32 %v1814, 0.01
        %v1820 = vadd.f32 %v1805, %v1815
        %v1821 = vadd.f32 %v1806, %v1816
        %v1822 = vadd.f32 %v1807, %v1817
        %v1823 = vadd.f32 %v1808, %v1818
        %v1824 = vadd.f32 %v1809, %v1819
        %vm1825 = vcmp.ge.f32.partialorder %v1770, -3.0
        %vm1826 = vcmp.ge.f32.partialorder %v1771, -3.0
        %vm1827 = vcmp.ge.f32.partialorder %v1772, -3.0
        %vm1828 = vcmp.ge.f32.partialorder %v1773, -3.0
        %vm1829 = vcmp.ge.f32.partialorder %v1774, -3.0
        %vm1830 = vcmp.le.f32.partialorder %v1770, 3.0
        %vm1831 = vcmp.le.f32.partialorder %v1771, 3.0
        %vm1832 = vcmp.le.f32.partialorder %v1772, 3.0
        %vm1833 = vcmp.le.f32.partialorder %v1773, 3.0
        %vm1834 = vcmp.le.f32.partialorder %v1774, 3.0
        %vm1835 = vmand %vm1825, %vm1830
        %vm1836 = vmand %vm1826, %vm1831
        %vm1837 = vmand %vm1827, %vm1832
        %vm1838 = vmand %vm1828, %vm1833
        %vm1839 = vmand %vm1829, %vm1834
        %v1840 = vsel %vm1835, %v1795, %v1820
        %v1841 = vsel %vm1836, %v1796, %v1821
        %v1842 = vsel %vm1837, %v1797, %v1822
        %v1843 = vsel %vm1838, %v1798, %v1823
        %v1844 = vsel %vm1839, %v1799, %v1824
        %v1845 = vld [vmem:[#allocation16] sm:$0xff]
        %v1846 = vld [vmem:[#allocation16 + $0x8] sm:$0xf]
        %v1847 = vld [vmem:[#allocation18] sm:$0xff]
        %v1848 = vld [vmem:[#allocation18 + $0x8] sm:$0xf]
        %vm1849 = vcmask 97280
        %1850 = vst.msk [vmem:[#allocation3] sm:$0xff] %vm1849, 0.0
        %vm1851 = vcmask 93184
        %1852 = vst.msk [vmem:[#allocation3 + $0x8] sm:$0xf] %vm1851, 0.0
        %1853 = vst.msk [vmem:[#allocation3 + $0x10] sm:$0xff] %vm1849, 0.0
        %1854 = vst.msk [vmem:[#allocation3 + $0x18] sm:$0xf] %vm1851, 0.0
        %1855 = vst.msk [vmem:[#allocation3 + $0x20] sm:$0xff] %vm1849, 0.0
        %1856 = vst.msk [vmem:[#allocation3 + $0x28] sm:$0xf] %vm1851, 0.0
        %1857 = vst.msk [vmem:[#allocation3 + $0x30] sm:$0xff] %vm1849, 0.0
        %1858 = vst.msk [vmem:[#allocation3 + $0x38] sm:$0xf] %vm1851, 0.0
        %1859 = vst.msk [vmem:[#allocation3 + $0x40] sm:$0xff] %vm1849, 0.0
        %1860 = vst.msk [vmem:[#allocation3 + $0x48] sm:$0xf] %vm1851, 0.0
        %1861 = vst.msk [vmem:[#allocation3 + $0x50] sm:$0xff] %vm1849, 0.0
        %1862 = vst.msk [vmem:[#allocation3 + $0x58] sm:$0xf] %vm1851, 0.0
        %1863 = vst.msk [vmem:[#allocation3 + $0x60] sm:$0xff] %vm1849, 0.0
        %1864 = vst.msk [vmem:[#allocation3 + $0x68] sm:$0xf] %vm1851, 0.0
        %1865 = vst.msk [vmem:[#allocation3 + $0x70] sm:$0xff] %vm1849, 0.0
        %1866 = vst.msk [vmem:[#allocation3 + $0x78] sm:$0xf] %vm1851, 0.0
        %1867 = vst.msk [vmem:[#allocation3 + $0x80] sm:$0xff] %vm1849, 0.0
        %1868 = vst.msk [vmem:[#allocation3 + $0x88] sm:$0xf] %vm1851, 0.0
        %1869 = vst.msk [vmem:[#allocation3 + $0x90] sm:$0xff] %vm1849, 0.0
        %1870 = vst.msk [vmem:[#allocation3 + $0x98] sm:$0xf] %vm1851, 0.0
        %1871 = vst.msk [vmem:[#allocation3 + $0xa0] sm:$0xff] %vm1849, 0.0
        %1872 = vst.msk [vmem:[#allocation3 + $0xa8] sm:$0xf] %vm1851, 0.0
        %1873 = vst.msk [vmem:[#allocation3 + $0xb0] sm:$0xff] %vm1849, 0.0
        %1874 = vst.msk [vmem:[#allocation3 + $0xb8] sm:$0xf] %vm1851, 0.0
        %1877 = vrot.lane.b32.xlu0 %v1841, 2
        %v1878 = vpop.permute.xlu0 %1877
        %1879 = vrot.lane.b32.xlu0 %v1842, 2
        %v1880 = vpop.permute.xlu0 %1879
        %s1883 = scalar_lea.vmem [#allocation3], 32
        %vm1884 = vcmask 80916
        %1885 = vst.msk [vmem:[%s1883 - $0x4] sm:$0xf0] %vm1884, %v1878
        %vm1886 = vcmask 80912
        %1887 = vst.msk [vmem:[%s1883 + $0x4] sm:$0xff] %vm1886, %v1880
        %1888 = vrot.lane.b32.xlu0 %v1841, 122
        %v1889 = vpop.permute.xlu0 %1888
        %1890 = vrot.lane.b32.xlu0 %v1842, 122
        %v1891 = vpop.permute.xlu0 %1890
        %s1894 = scalar_lea.vmem [#allocation3], 48
        %1895 = vst.msk [vmem:[%s1894 - $0x4] sm:$0xf0] %vm1884, %v1889
        %1896 = vst.msk [vmem:[%s1894 + $0x4] sm:$0xff] %vm1886, %v1891
        %1897 = vrot.lane.b32.xlu0 %v1841, 114
        %v1898 = vpop.permute.xlu0 %1897
        %1899 = vrot.lane.b32.xlu0 %v1842, 114
        %v1900 = vpop.permute.xlu0 %1899
        %s1903 = scalar_lea.vmem [#allocation3], 64
        %1904 = vst.msk [vmem:[%s1903 - $0x4] sm:$0xf0] %vm1884, %v1898
        %1905 = vst.msk [vmem:[%s1903 + $0x4] sm:$0xff] %vm1886, %v1900
        %1906 = vrot.lane.b32.xlu0 %v1841, 106
        %v1907 = vpop.permute.xlu0 %1906
        %1908 = vrot.lane.b32.xlu0 %v1842, 106
        %v1909 = vpop.permute.xlu0 %1908
        %s1912 = scalar_lea.vmem [#allocation3], 80
        %1913 = vst.msk [vmem:[%s1912 - $0x4] sm:$0xf0] %vm1884, %v1907
        %1914 = vst.msk [vmem:[%s1912 + $0x4] sm:$0xff] %vm1886, %v1909
        %1915 = vrot.lane.b32.xlu0 %v1841, 98
        %v1916 = vpop.permute.xlu0 %1915
        %1917 = vrot.lane.b32.xlu0 %v1842, 98
        %v1918 = vpop.permute.xlu0 %1917
        %s1921 = scalar_lea.vmem [#allocation3], 96
        %1922 = vst.msk [vmem:[%s1921 - $0x4] sm:$0xf0] %vm1884, %v1916
        %1923 = vst.msk [vmem:[%s1921 + $0x4] sm:$0xff] %vm1886, %v1918
        %1924 = vrot.lane.b32.xlu0 %v1841, 90
        %v1925 = vpop.permute.xlu0 %1924
        %1926 = vrot.lane.b32.xlu0 %v1842, 90
        %v1927 = vpop.permute.xlu0 %1926
        %s1930 = scalar_lea.vmem [#allocation3], 112
        %1931 = vst.msk [vmem:[%s1930 - $0x4] sm:$0xf0] %vm1884, %v1925
        %1932 = vst.msk [vmem:[%s1930 + $0x4] sm:$0xff] %vm1886, %v1927
        %1933 = vrot.lane.b32.xlu0 %v1841, 82
        %v1934 = vpop.permute.xlu0 %1933
        %1935 = vrot.lane.b32.xlu0 %v1842, 82
        %v1936 = vpop.permute.xlu0 %1935
        %s1939 = scalar_lea.vmem [#allocation3], 128
        %1940 = vst.msk [vmem:[%s1939 - $0x4] sm:$0xf0] %vm1884, %v1934
        %1941 = vst.msk [vmem:[%s1939 + $0x4] sm:$0xff] %vm1886, %v1936
        %1942 = vrot.lane.b32.xlu0 %v1841, 74
        %v1943 = vpop.permute.xlu0 %1942
        %1944 = vrot.lane.b32.xlu0 %v1842, 74
        %v1945 = vpop.permute.xlu0 %1944
        %s1948 = scalar_lea.vmem [#allocation3], 144
        %1949 = vst.msk [vmem:[%s1948 - $0x4] sm:$0xf0] %vm1884, %v1943
        %1950 = vst.msk [vmem:[%s1948 + $0x4] sm:$0xff] %vm1886, %v1945
        %v1951 = vld [vmem:[#allocation3] sm:$0xff]
        %v1952 = vld [vmem:[#allocation3 + $0x8] sm:$0xf]
        %1954 = vset.pattern.permute.xlu0 0
        %1955 = vperm.xlu0 %1954, %v1845
        %v1956 = vpop.permute.xlu0 %1955
        %1959 = vset.pattern.permute.xlu0 0
        %1960 = vperm.xlu0 %1959, %v1846
        %v1961 = vpop.permute.xlu0 %1960
        %v1963 = vmul.f32 %v1956, %v1951
        %v1964 = vmul.f32 %v1961, %v1952
        %v1965 = vadd.f32 %v1963, 0.0
        %v1966 = vadd.f32 %v1964, 0.0
        %1967 = vset.pattern.permute.xlu0 1
        %1968 = vperm.xlu0 %1967, %v1845
        %v1969 = vpop.permute.xlu0 %1968
        %1971 = vset.pattern.permute.xlu0 1
        %1972 = vperm.xlu0 %1971, %v1846
        %v1973 = vpop.permute.xlu0 %1972
        %v1975 = vmul.f32 %v1969, %v1951
        %v1976 = vmul.f32 %v1973, %v1952
        %1979 = vrot.lane.b32.xlu0 %v1975, 126
        %v1980 = vpop.permute.xlu0 %1979
        %1981 = vrot.lane.b32.xlu0 %v1976, 126
        %v1982 = vpop.permute.xlu0 %1981
        %v1985 = vadd.f32 %v1965, %v1980
        %v1986 = vadd.f32 %v1966, %v1982
        %1987 = vset.pattern.permute.xlu0 2
        %1988 = vperm.xlu0 %1987, %v1845
        %v1989 = vpop.permute.xlu0 %1988
        %1991 = vset.pattern.permute.xlu0 2
        %1992 = vperm.xlu0 %1991, %v1846
        %v1993 = vpop.permute.xlu0 %1992
        %v1995 = vmul.f32 %v1989, %v1951
        %v1996 = vmul.f32 %v1993, %v1952
        %1999 = vrot.lane.b32.xlu0 %v1995, 124
        %v2000 = vpop.permute.xlu0 %1999
        %2001 = vrot.lane.b32.xlu0 %v1996, 124
        %v2002 = vpop.permute.xlu0 %2001
        %v2005 = vadd.f32 %v1985, %v2000
        %v2006 = vadd.f32 %v1986, %v2002
        %v2007 = vld [vmem:[%s1883] sm:$0xff]
        %v2008 = vld [vmem:[%s1883 + $0x8] sm:$0xf]
        %2009 = vset.pattern.permute.xlu0 3
        %2010 = vperm.xlu0 %2009, %v1845
        %v2011 = vpop.permute.xlu0 %2010
        %2013 = vset.pattern.permute.xlu0 3
        %2014 = vperm.xlu0 %2013, %v1846
        %v2015 = vpop.permute.xlu0 %2014
        %v2017 = vmul.f32 %v2011, %v2007
        %v2018 = vmul.f32 %v2015, %v2008
        %v2019 = vadd.f32 %v2005, %v2017
        %v2020 = vadd.f32 %v2006, %v2018
        %2021 = vset.pattern.permute.xlu0 4
        %2022 = vperm.xlu0 %2021, %v1845
        %v2023 = vpop.permute.xlu0 %2022
        %2025 = vset.pattern.permute.xlu0 4
        %2026 = vperm.xlu0 %2025, %v1846
        %v2027 = vpop.permute.xlu0 %2026
        %v2029 = vmul.f32 %v2023, %v2007
        %v2030 = vmul.f32 %v2027, %v2008
        %2033 = vrot.lane.b32.xlu0 %v2029, 126
        %v2034 = vpop.permute.xlu0 %2033
        %2035 = vrot.lane.b32.xlu0 %v2030, 126
        %v2036 = vpop.permute.xlu0 %2035
        %v2039 = vadd.f32 %v2019, %v2034
        %v2040 = vadd.f32 %v2020, %v2036
        %2041 = vset.pattern.permute.xlu0 5
        %2042 = vperm.xlu0 %2041, %v1845
        %v2043 = vpop.permute.xlu0 %2042
        %2045 = vset.pattern.permute.xlu0 5
        %2046 = vperm.xlu0 %2045, %v1846
        %v2047 = vpop.permute.xlu0 %2046
        %v2049 = vmul.f32 %v2043, %v2007
        %v2050 = vmul.f32 %v2047, %v2008
        %2053 = vrot.lane.b32.xlu0 %v2049, 124
        %v2054 = vpop.permute.xlu0 %2053
        %2055 = vrot.lane.b32.xlu0 %v2050, 124
        %v2056 = vpop.permute.xlu0 %2055
        %v2059 = vadd.f32 %v2039, %v2054
        %v2060 = vadd.f32 %v2040, %v2056
        %v2061 = vld [vmem:[%s1903] sm:$0xff]
        %v2062 = vld [vmem:[%s1903 + $0x8] sm:$0xf]
        %2063 = vset.pattern.permute.xlu0 6
        %2064 = vperm.xlu0 %2063, %v1845
        %v2065 = vpop.permute.xlu0 %2064
        %2067 = vset.pattern.permute.xlu0 6
        %2068 = vperm.xlu0 %2067, %v1846
        %v2069 = vpop.permute.xlu0 %2068
        %v2071 = vmul.f32 %v2065, %v2061
        %v2072 = vmul.f32 %v2069, %v2062
        %v2073 = vadd.f32 %v2059, %v2071
        %v2074 = vadd.f32 %v2060, %v2072
        %2075 = vset.pattern.permute.xlu0 7
        %2076 = vperm.xlu0 %2075, %v1845
        %v2077 = vpop.permute.xlu0 %2076
        %2079 = vset.pattern.permute.xlu0 7
        %2080 = vperm.xlu0 %2079, %v1846
        %v2081 = vpop.permute.xlu0 %2080
        %v2083 = vmul.f32 %v2077, %v2061
        %v2084 = vmul.f32 %v2081, %v2062
        %2087 = vrot.lane.b32.xlu0 %v2083, 126
        %v2088 = vpop.permute.xlu0 %2087
        %2089 = vrot.lane.b32.xlu0 %v2084, 126
        %v2090 = vpop.permute.xlu0 %2089
        %v2093 = vadd.f32 %v2073, %v2088
        %v2094 = vadd.f32 %v2074, %v2090
        %2095 = vset.pattern.permute.xlu0 8
        %2096 = vperm.xlu0 %2095, %v1845
        %v2097 = vpop.permute.xlu0 %2096
        %2099 = vset.pattern.permute.xlu0 8
        %2100 = vperm.xlu0 %2099, %v1846
        %v2101 = vpop.permute.xlu0 %2100
        %v2103 = vmul.f32 %v2097, %v2061
        %v2104 = vmul.f32 %v2101, %v2062
        %2107 = vrot.lane.b32.xlu0 %v2103, 124
        %v2108 = vpop.permute.xlu0 %2107
        %2109 = vrot.lane.b32.xlu0 %v2104, 124
        %v2110 = vpop.permute.xlu0 %2109
        %v2113 = vadd.f32 %v2093, %v2108
        %v2114 = vadd.f32 %v2094, %v2110
        %2116 = vset.pattern.permute.xlu0 0
        %2117 = vperm.xlu0 %2116, %v1847
        %v2118 = vpop.permute.xlu0 %2117
        %2121 = vset.pattern.permute.xlu0 0
        %2122 = vperm.xlu0 %2121, %v1848
        %v2123 = vpop.permute.xlu0 %2122
        %v2125 = vadd.f32 %v2113, %v2118
        %v2126 = vadd.f32 %v2114, %v2123
        %vm2127 = vcmask 64512
        %2128 = vst.msk [vmem:[#allocation7] sm:$0xff] %vm2127, %v2125
        %vm2129 = vcmask 60416
        %2130 = vst.msk [vmem:[#allocation7 + $0x8] sm:$0xf] %vm2129, %v2126
        %s2131 = scalar_lea.vmem [#allocation3], 16
        %v2132 = vld [vmem:[%s2131] sm:$0xff]
        %v2133 = vld [vmem:[%s2131 + $0x8] sm:$0xf]
        %v2134 = vmul.f32 %v1956, %v2132
        %v2135 = vmul.f32 %v1961, %v2133
        %v2136 = vadd.f32 %v2134, 0.0
        %v2137 = vadd.f32 %v2135, 0.0
        %v2138 = vmul.f32 %v1969, %v2132
        %v2139 = vmul.f32 %v1973, %v2133
        %2142 = vrot.lane.b32.xlu0 %v2138, 126
        %v2143 = vpop.permute.xlu0 %2142
        %2144 = vrot.lane.b32.xlu0 %v2139, 126
        %v2145 = vpop.permute.xlu0 %2144
        %v2148 = vadd.f32 %v2136, %v2143
        %v2149 = vadd.f32 %v2137, %v2145
        %v2150 = vmul.f32 %v1989, %v2132
        %v2151 = vmul.f32 %v1993, %v2133
        %2154 = vrot.lane.b32.xlu0 %v2150, 124
        %v2155 = vpop.permute.xlu0 %2154
        %2156 = vrot.lane.b32.xlu0 %v2151, 124
        %v2157 = vpop.permute.xlu0 %2156
        %v2160 = vadd.f32 %v2148, %v2155
        %v2161 = vadd.f32 %v2149, %v2157
        %v2162 = vld [vmem:[%s1894] sm:$0xff]
        %v2163 = vld [vmem:[%s1894 + $0x8] sm:$0xf]
        %v2164 = vmul.f32 %v2011, %v2162
        %v2165 = vmul.f32 %v2015, %v2163
        %v2166 = vadd.f32 %v2160, %v2164
        %v2167 = vadd.f32 %v2161, %v2165
        %v2168 = vmul.f32 %v2023, %v2162
        %v2169 = vmul.f32 %v2027, %v2163
        %2172 = vrot.lane.b32.xlu0 %v2168, 126
        %v2173 = vpop.permute.xlu0 %2172
        %2174 = vrot.lane.b32.xlu0 %v2169, 126
        %v2175 = vpop.permute.xlu0 %2174
        %v2178 = vadd.f32 %v2166, %v2173
        %v2179 = vadd.f32 %v2167, %v2175
        %v2180 = vmul.f32 %v2043, %v2162
        %v2181 = vmul.f32 %v2047, %v2163
        %2184 = vrot.lane.b32.xlu0 %v2180, 124
        %v2185 = vpop.permute.xlu0 %2184
        %2186 = vrot.lane.b32.xlu0 %v2181, 124
        %v2187 = vpop.permute.xlu0 %2186
        %v2190 = vadd.f32 %v2178, %v2185
        %v2191 = vadd.f32 %v2179, %v2187
        %v2192 = vld [vmem:[%s1912] sm:$0xff]
        %v2193 = vld [vmem:[%s1912 + $0x8] sm:$0xf]
        %v2194 = vmul.f32 %v2065, %v2192
        %v2195 = vmul.f32 %v2069, %v2193
        %v2196 = vadd.f32 %v2190, %v2194
        %v2197 = vadd.f32 %v2191, %v2195
        %v2198 = vmul.f32 %v2077, %v2192
        %v2199 = vmul.f32 %v2081, %v2193
        %2202 = vrot.lane.b32.xlu0 %v2198, 126
        %v2203 = vpop.permute.xlu0 %2202
        %2204 = vrot.lane.b32.xlu0 %v2199, 126
        %v2205 = vpop.permute.xlu0 %2204
        %v2208 = vadd.f32 %v2196, %v2203
        %v2209 = vadd.f32 %v2197, %v2205
        %v2210 = vmul.f32 %v2097, %v2192
        %v2211 = vmul.f32 %v2101, %v2193
        %2214 = vrot.lane.b32.xlu0 %v2210, 124
        %v2215 = vpop.permute.xlu0 %2214
        %2216 = vrot.lane.b32.xlu0 %v2211, 124
        %v2217 = vpop.permute.xlu0 %2216
        %v2220 = vadd.f32 %v2208, %v2215
        %v2221 = vadd.f32 %v2209, %v2217
        %v2222 = vadd.f32 %v2220, %v2118
        %v2223 = vadd.f32 %v2221, %v2123
        %2226 = vrot.lane.b32.xlu0 %v2222, 8
        %v2227 = vpop.permute.xlu0 %2226
        %2228 = vrot.lane.b32.xlu0 %v2223, 8
        %v2229 = vpop.permute.xlu0 %2228
        %vm2232 = vcmask 130112
        %2233 = vst.msk [vmem:[#allocation7] sm:$0xff] %vm2232, %v2227
        %vm2234 = vcmask 126016
        %2235 = vst.msk [vmem:[#allocation7 + $0x8] sm:$0xf] %vm2234, %v2229
        %v2236 = vld [vmem:[%s1883] sm:$0xff]
        %v2237 = vld [vmem:[%s1883 + $0x8] sm:$0xf]
        %v2238 = vmul.f32 %v1956, %v2236
        %v2239 = vmul.f32 %v1961, %v2237
        %v2240 = vadd.f32 %v2238, 0.0
        %v2241 = vadd.f32 %v2239, 0.0
        %v2242 = vmul.f32 %v1969, %v2236
        %v2243 = vmul.f32 %v1973, %v2237
        %2246 = vrot.lane.b32.xlu0 %v2242, 126
        %v2247 = vpop.permute.xlu0 %2246
        %2248 = vrot.lane.b32.xlu0 %v2243, 126
        %v2249 = vpop.permute.xlu0 %2248
        %v2252 = vadd.f32 %v2240, %v2247
        %v2253 = vadd.f32 %v2241, %v2249
        %v2254 = vmul.f32 %v1989, %v2236
        %v2255 = vmul.f32 %v1993, %v2237
        %2258 = vrot.lane.b32.xlu0 %v2254, 124
        %v2259 = vpop.permute.xlu0 %2258
        %2260 = vrot.lane.b32.xlu0 %v2255, 124
        %v2261 = vpop.permute.xlu0 %2260
        %v2264 = vadd.f32 %v2252, %v2259
        %v2265 = vadd.f32 %v2253, %v2261
        %v2266 = vld [vmem:[%s1903] sm:$0xff]
        %v2267 = vld [vmem:[%s1903 + $0x8] sm:$0xf]
        %v2268 = vmul.f32 %v2011, %v2266
        %v2269 = vmul.f32 %v2015, %v2267
        %v2270 = vadd.f32 %v2264, %v2268
        %v2271 = vadd.f32 %v2265, %v2269
        %v2272 = vmul.f32 %v2023, %v2266
        %v2273 = vmul.f32 %v2027, %v2267
        %2276 = vrot.lane.b32.xlu0 %v2272, 126
        %v2277 = vpop.permute.xlu0 %2276
        %2278 = vrot.lane.b32.xlu0 %v2273, 126
        %v2279 = vpop.permute.xlu0 %2278
        %v2282 = vadd.f32 %v2270, %v2277
        %v2283 = vadd.f32 %v2271, %v2279
        %v2284 = vmul.f32 %v2043, %v2266
        %v2285 = vmul.f32 %v2047, %v2267
        %2288 = vrot.lane.b32.xlu0 %v2284, 124
        %v2289 = vpop.permute.xlu0 %2288
        %2290 = vrot.lane.b32.xlu0 %v2285, 124
        %v2291 = vpop.permute.xlu0 %2290
        %v2294 = vadd.f32 %v2282, %v2289
        %v2295 = vadd.f32 %v2283, %v2291
        %v2296 = vld [vmem:[%s1921] sm:$0xff]
        %v2297 = vld [vmem:[%s1921 + $0x8] sm:$0xf]
        %v2298 = vmul.f32 %v2065, %v2296
        %v2299 = vmul.f32 %v2069, %v2297
        %v2300 = vadd.f32 %v2294, %v2298
        %v2301 = vadd.f32 %v2295, %v2299
        %v2302 = vmul.f32 %v2077, %v2296
        %v2303 = vmul.f32 %v2081, %v2297
        %2306 = vrot.lane.b32.xlu0 %v2302, 126
        %v2307 = vpop.permute.xlu0 %2306
        %2308 = vrot.lane.b32.xlu0 %v2303, 126
        %v2309 = vpop.permute.xlu0 %2308
        %v2312 = vadd.f32 %v2300, %v2307
        %v2313 = vadd.f32 %v2301, %v2309
        %v2314 = vmul.f32 %v2097, %v2296
        %v2315 = vmul.f32 %v2101, %v2297
        %2318 = vrot.lane.b32.xlu0 %v2314, 124
        %v2319 = vpop.permute.xlu0 %2318
        %2320 = vrot.lane.b32.xlu0 %v2315, 124
        %v2321 = vpop.permute.xlu0 %2320
        %v2324 = vadd.f32 %v2312, %v2319
        %v2325 = vadd.f32 %v2313, %v2321
        %v2326 = vadd.f32 %v2324, %v2118
        %v2327 = vadd.f32 %v2325, %v2123
        %2330 = vrot.lane.b32.xlu0 %v2326, 16
        %v2331 = vpop.permute.xlu0 %2330
        %2332 = vrot.lane.b32.xlu0 %v2327, 16
        %v2333 = vpop.permute.xlu0 %2332
        %vm2336 = vcmask 195712
        %2337 = vst.msk [vmem:[#allocation7] sm:$0xff] %vm2336, %v2331
        %vm2338 = vcmask 191616
        %2339 = vst.msk [vmem:[#allocation7 + $0x8] sm:$0xf] %vm2338, %v2333
        %v2340 = vld [vmem:[%s1894] sm:$0xff]
        %v2341 = vld [vmem:[%s1894 + $0x8] sm:$0xf]
        %v2342 = vmul.f32 %v1956, %v2340
        %v2343 = vmul.f32 %v1961, %v2341
        %v2344 = vadd.f32 %v2342, 0.0
        %v2345 = vadd.f32 %v2343, 0.0
        %v2346 = vmul.f32 %v1969, %v2340
        %v2347 = vmul.f32 %v1973, %v2341
        %2350 = vrot.lane.b32.xlu0 %v2346, 126
        %v2351 = vpop.permute.xlu0 %2350
        %2352 = vrot.lane.b32.xlu0 %v2347, 126
        %v2353 = vpop.permute.xlu0 %2352
        %v2356 = vadd.f32 %v2344, %v2351
        %v2357 = vadd.f32 %v2345, %v2353
        %v2358 = vmul.f32 %v1989, %v2340
        %v2359 = vmul.f32 %v1993, %v2341
        %2362 = vrot.lane.b32.xlu0 %v2358, 124
        %v2363 = vpop.permute.xlu0 %2362
        %2364 = vrot.lane.b32.xlu0 %v2359, 124
        %v2365 = vpop.permute.xlu0 %2364
        %v2368 = vadd.f32 %v2356, %v2363
        %v2369 = vadd.f32 %v2357, %v2365
        %v2370 = vld [vmem:[%s1912] sm:$0xff]
        %v2371 = vld [vmem:[%s1912 + $0x8] sm:$0xf]
        %v2372 = vmul.f32 %v2011, %v2370
        %v2373 = vmul.f32 %v2015, %v2371
        %v2374 = vadd.f32 %v2368, %v2372
        %v2375 = vadd.f32 %v2369, %v2373
        %v2376 = vmul.f32 %v2023, %v2370
        %v2377 = vmul.f32 %v2027, %v2371
        %2380 = vrot.lane.b32.xlu0 %v2376, 126
        %v2381 = vpop.permute.xlu0 %2380
        %2382 = vrot.lane.b32.xlu0 %v2377, 126
        %v2383 = vpop.permute.xlu0 %2382
        %v2386 = vadd.f32 %v2374, %v2381
        %v2387 = vadd.f32 %v2375, %v2383
        %v2388 = vmul.f32 %v2043, %v2370
        %v2389 = vmul.f32 %v2047, %v2371
        %2392 = vrot.lane.b32.xlu0 %v2388, 124
        %v2393 = vpop.permute.xlu0 %2392
        %2394 = vrot.lane.b32.xlu0 %v2389, 124
        %v2395 = vpop.permute.xlu0 %2394
        %v2398 = vadd.f32 %v2386, %v2393
        %v2399 = vadd.f32 %v2387, %v2395
        %v2400 = vld [vmem:[%s1930] sm:$0xff]
        %v2401 = vld [vmem:[%s1930 + $0x8] sm:$0xf]
        %v2402 = vmul.f32 %v2065, %v2400
        %v2403 = vmul.f32 %v2069, %v2401
        %v2404 = vadd.f32 %v2398, %v2402
        %v2405 = vadd.f32 %v2399, %v2403
        %v2406 = vmul.f32 %v2077, %v2400
        %v2407 = vmul.f32 %v2081, %v2401
        %2410 = vrot.lane.b32.xlu0 %v2406, 126
        %v2411 = vpop.permute.xlu0 %2410
        %2412 = vrot.lane.b32.xlu0 %v2407, 126
        %v2413 = vpop.permute.xlu0 %2412
        %v2416 = vadd.f32 %v2404, %v2411
        %v2417 = vadd.f32 %v2405, %v2413
        %v2418 = vmul.f32 %v2097, %v2400
        %v2419 = vmul.f32 %v2101, %v2401
        %2422 = vrot.lane.b32.xlu0 %v2418, 124
        %v2423 = vpop.permute.xlu0 %2422
        %2424 = vrot.lane.b32.xlu0 %v2419, 124
        %v2425 = vpop.permute.xlu0 %2424
        %v2428 = vadd.f32 %v2416, %v2423
        %v2429 = vadd.f32 %v2417, %v2425
        %v2430 = vadd.f32 %v2428, %v2118
        %v2431 = vadd.f32 %v2429, %v2123
        %2434 = vrot.lane.b32.xlu0 %v2430, 24
        %v2435 = vpop.permute.xlu0 %2434
        %2436 = vrot.lane.b32.xlu0 %v2431, 24
        %v2437 = vpop.permute.xlu0 %2436
        %vm2440 = vcmask 261312
        %2441 = vst.msk [vmem:[#allocation7] sm:$0xff] %vm2440, %v2435
        %vm2442 = vcmask 257216
        %2443 = vst.msk [vmem:[#allocation7 + $0x8] sm:$0xf] %vm2442, %v2437
        %v2444 = vld [vmem:[%s1903] sm:$0xff]
        %v2445 = vld [vmem:[%s1903 + $0x8] sm:$0xf]
        %v2446 = vmul.f32 %v1956, %v2444
        %v2447 = vmul.f32 %v1961, %v2445
        %v2448 = vadd.f32 %v2446, 0.0
        %v2449 = vadd.f32 %v2447, 0.0
        %v2450 = vmul.f32 %v1969, %v2444
        %v2451 = vmul.f32 %v1973, %v2445
        %2454 = vrot.lane.b32.xlu0 %v2450, 126
        %v2455 = vpop.permute.xlu0 %2454
        %2456 = vrot.lane.b32.xlu0 %v2451, 126
        %v2457 = vpop.permute.xlu0 %2456
        %v2460 = vadd.f32 %v2448, %v2455
        %v2461 = vadd.f32 %v2449, %v2457
        %v2462 = vmul.f32 %v1989, %v2444
        %v2463 = vmul.f32 %v1993, %v2445
        %2466 = vrot.lane.b32.xlu0 %v2462, 124
        %v2467 = vpop.permute.xlu0 %2466
        %2468 = vrot.lane.b32.xlu0 %v2463, 124
        %v2469 = vpop.permute.xlu0 %2468
        %v2472 = vadd.f32 %v2460, %v2467
        %v2473 = vadd.f32 %v2461, %v2469
        %v2474 = vld [vmem:[%s1921] sm:$0xff]
        %v2475 = vld [vmem:[%s1921 + $0x8] sm:$0xf]
        %v2476 = vmul.f32 %v2011, %v2474
        %v2477 = vmul.f32 %v2015, %v2475
        %v2478 = vadd.f32 %v2472, %v2476
        %v2479 = vadd.f32 %v2473, %v2477
        %v2480 = vmul.f32 %v2023, %v2474
        %v2481 = vmul.f32 %v2027, %v2475
        %2484 = vrot.lane.b32.xlu0 %v2480, 126
        %v2485 = vpop.permute.xlu0 %2484
        %2486 = vrot.lane.b32.xlu0 %v2481, 126
        %v2487 = vpop.permute.xlu0 %2486
        %v2490 = vadd.f32 %v2478, %v2485
        %v2491 = vadd.f32 %v2479, %v2487
        %v2492 = vmul.f32 %v2043, %v2474
        %v2493 = vmul.f32 %v2047, %v2475
        %2496 = vrot.lane.b32.xlu0 %v2492, 124
        %v2497 = vpop.permute.xlu0 %2496
        %2498 = vrot.lane.b32.xlu0 %v2493, 124
        %v2499 = vpop.permute.xlu0 %2498
        %v2502 = vadd.f32 %v2490, %v2497
        %v2503 = vadd.f32 %v2491, %v2499
        %v2504 = vld [vmem:[%s1939] sm:$0xff]
        %v2505 = vld [vmem:[%s1939 + $0x8] sm:$0xf]
        %v2506 = vmul.f32 %v2065, %v2504
        %v2507 = vmul.f32 %v2069, %v2505
        %v2508 = vadd.f32 %v2502, %v2506
        %v2509 = vadd.f32 %v2503, %v2507
        %v2510 = vmul.f32 %v2077, %v2504
        %v2511 = vmul.f32 %v2081, %v2505
        %2514 = vrot.lane.b32.xlu0 %v2510, 126
        %v2515 = vpop.permute.xlu0 %2514
        %2516 = vrot.lane.b32.xlu0 %v2511, 126
        %v2517 = vpop.permute.xlu0 %2516
        %v2520 = vadd.f32 %v2508, %v2515
        %v2521 = vadd.f32 %v2509, %v2517
        %v2522 = vmul.f32 %v2097, %v2504
        %v2523 = vmul.f32 %v2101, %v2505
        %2526 = vrot.lane.b32.xlu0 %v2522, 124
        %v2527 = vpop.permute.xlu0 %2526
        %2528 = vrot.lane.b32.xlu0 %v2523, 124
        %v2529 = vpop.permute.xlu0 %2528
        %v2532 = vadd.f32 %v2520, %v2527
        %v2533 = vadd.f32 %v2521, %v2529
        %v2534 = vadd.f32 %v2532, %v2118
        %v2535 = vadd.f32 %v2533, %v2123
        %2538 = vrot.lane.b32.xlu0 %v2534, 32
        %v2539 = vpop.permute.xlu0 %2538
        %2540 = vrot.lane.b32.xlu0 %v2535, 32
        %v2541 = vpop.permute.xlu0 %2540
        %vm2544 = vcmask 326912
        %2545 = vst.msk [vmem:[#allocation7] sm:$0xff] %vm2544, %v2539
        %vm2546 = vcmask 322816
        %2547 = vst.msk [vmem:[#allocation7 + $0x8] sm:$0xf] %vm2546, %v2541
        %v2548 = vld [vmem:[%s1912] sm:$0xff]
        %v2549 = vld [vmem:[%s1912 + $0x8] sm:$0xf]
        %v2550 = vmul.f32 %v1956, %v2548
        %v2551 = vmul.f32 %v1961, %v2549
        %v2552 = vadd.f32 %v2550, 0.0
        %v2553 = vadd.f32 %v2551, 0.0
        %v2554 = vmul.f32 %v1969, %v2548
        %v2555 = vmul.f32 %v1973, %v2549
        %2558 = vrot.lane.b32.xlu0 %v2554, 126
        %v2559 = vpop.permute.xlu0 %2558
        %2560 = vrot.lane.b32.xlu0 %v2555, 126
        %v2561 = vpop.permute.xlu0 %2560
        %v2564 = vadd.f32 %v2552, %v2559
        %v2565 = vadd.f32 %v2553, %v2561
        %v2566 = vmul.f32 %v1989, %v2548
        %v2567 = vmul.f32 %v1993, %v2549
        %2570 = vrot.lane.b32.xlu0 %v2566, 124
        %v2571 = vpop.permute.xlu0 %2570
        %2572 = vrot.lane.b32.xlu0 %v2567, 124
        %v2573 = vpop.permute.xlu0 %2572
        %v2576 = vadd.f32 %v2564, %v2571
        %v2577 = vadd.f32 %v2565, %v2573
        %v2578 = vld [vmem:[%s1930] sm:$0xff]
        %v2579 = vld [vmem:[%s1930 + $0x8] sm:$0xf]
        %v2580 = vmul.f32 %v2011, %v2578
        %v2581 = vmul.f32 %v2015, %v2579
        %v2582 = vadd.f32 %v2576, %v2580
        %v2583 = vadd.f32 %v2577, %v2581
        %v2584 = vmul.f32 %v2023, %v2578
        %v2585 = vmul.f32 %v2027, %v2579
        %2588 = vrot.lane.b32.xlu0 %v2584, 126
        %v2589 = vpop.permute.xlu0 %2588
        %2590 = vrot.lane.b32.xlu0 %v2585, 126
        %v2591 = vpop.permute.xlu0 %2590
        %v2594 = vadd.f32 %v2582, %v2589
        %v2595 = vadd.f32 %v2583, %v2591
        %v2596 = vmul.f32 %v2043, %v2578
        %v2597 = vmul.f32 %v2047, %v2579
        %2600 = vrot.lane.b32.xlu0 %v2596, 124
        %v2601 = vpop.permute.xlu0 %2600
        %2602 = vrot.lane.b32.xlu0 %v2597, 124
        %v2603 = vpop.permute.xlu0 %2602
        %v2606 = vadd.f32 %v2594, %v2601
        %v2607 = vadd.f32 %v2595, %v2603
        %v2608 = vld [vmem:[%s1948] sm:$0xff]
        %v2609 = vld [vmem:[%s1948 + $0x8] sm:$0xf]
        %v2610 = vmul.f32 %v2065, %v2608
        %v2611 = vmul.f32 %v2069, %v2609
        %v2612 = vadd.f32 %v2606, %v2610
        %v2613 = vadd.f32 %v2607, %v2611
        %v2614 = vmul.f32 %v2077, %v2608
        %v2615 = vmul.f32 %v2081, %v2609
        %2618 = vrot.lane.b32.xlu0 %v2614, 126
        %v2619 = vpop.permute.xlu0 %2618
        %2620 = vrot.lane.b32.xlu0 %v2615, 126
        %v2621 = vpop.permute.xlu0 %2620
        %v2624 = vadd.f32 %v2612, %v2619
        %v2625 = vadd.f32 %v2613, %v2621
        %v2626 = vmul.f32 %v2097, %v2608
        %v2627 = vmul.f32 %v2101, %v2609
        %2630 = vrot.lane.b32.xlu0 %v2626, 124
        %v2631 = vpop.permute.xlu0 %2630
        %2632 = vrot.lane.b32.xlu0 %v2627, 124
        %v2633 = vpop.permute.xlu0 %2632
        %v2636 = vadd.f32 %v2624, %v2631
        %v2637 = vadd.f32 %v2625, %v2633
        %v2638 = vadd.f32 %v2636, %v2118
        %v2639 = vadd.f32 %v2637, %v2123
        %2642 = vrot.lane.b32.xlu0 %v2638, 40
        %v2643 = vpop.permute.xlu0 %2642
        %2644 = vrot.lane.b32.xlu0 %v2639, 40
        %v2645 = vpop.permute.xlu0 %2644
        %vm2648 = vcmask 392512
        %2649 = vst.msk [vmem:[#allocation7] sm:$0xff] %vm2648, %v2643
        %vm2650 = vcmask 388416
        %2651 = vst.msk [vmem:[#allocation7 + $0x8] sm:$0xf] %vm2650, %v2645
        %v2652 = vld [vmem:[%s1921] sm:$0xff]
        %v2653 = vld [vmem:[%s1921 + $0x8] sm:$0xf]
        %v2654 = vmul.f32 %v1956, %v2652
        %v2655 = vmul.f32 %v1961, %v2653
        %v2656 = vadd.f32 %v2654, 0.0
        %v2657 = vadd.f32 %v2655, 0.0
        %v2658 = vmul.f32 %v1969, %v2652
        %v2659 = vmul.f32 %v1973, %v2653
        %2662 = vrot.lane.b32.xlu0 %v2658, 126
        %v2663 = vpop.permute.xlu0 %2662
        %2664 = vrot.lane.b32.xlu0 %v2659, 126
        %v2665 = vpop.permute.xlu0 %2664
        %v2668 = vadd.f32 %v2656, %v2663
        %v2669 = vadd.f32 %v2657, %v2665
        %v2670 = vmul.f32 %v1989, %v2652
        %v2671 = vmul.f32 %v1993, %v2653
        %2674 = vrot.lane.b32.xlu0 %v2670, 124
        %v2675 = vpop.permute.xlu0 %2674
        %2676 = vrot.lane.b32.xlu0 %v2671, 124
        %v2677 = vpop.permute.xlu0 %2676
        %v2680 = vadd.f32 %v2668, %v2675
        %v2681 = vadd.f32 %v2669, %v2677
        %v2682 = vld [vmem:[%s1939] sm:$0xff]
        %v2683 = vld [vmem:[%s1939 + $0x8] sm:$0xf]
        %v2684 = vmul.f32 %v2011, %v2682
        %v2685 = vmul.f32 %v2015, %v2683
        %v2686 = vadd.f32 %v2680, %v2684
        %v2687 = vadd.f32 %v2681, %v2685
        %v2688 = vmul.f32 %v2023, %v2682
        %v2689 = vmul.f32 %v2027, %v2683
        %2692 = vrot.lane.b32.xlu0 %v2688, 126
        %v2693 = vpop.permute.xlu0 %2692
        %2694 = vrot.lane.b32.xlu0 %v2689, 126
        %v2695 = vpop.permute.xlu0 %2694
        %v2698 = vadd.f32 %v2686, %v2693
        %v2699 = vadd.f32 %v2687, %v2695
        %v2700 = vmul.f32 %v2043, %v2682
        %v2701 = vmul.f32 %v2047, %v2683
        %2704 = vrot.lane.b32.xlu0 %v2700, 124
        %v2705 = vpop.permute.xlu0 %2704
        %2706 = vrot.lane.b32.xlu0 %v2701, 124
        %v2707 = vpop.permute.xlu0 %2706
        %v2710 = vadd.f32 %v2698, %v2705
        %v2711 = vadd.f32 %v2699, %v2707
        %s2712 = scalar_lea.vmem [#allocation3], 160
        %v2713 = vld [vmem:[%s2712] sm:$0xff]
        %v2714 = vld [vmem:[%s2712 + $0x8] sm:$0xf]
        %v2715 = vmul.f32 %v2065, %v2713
        %v2716 = vmul.f32 %v2069, %v2714
        %v2717 = vadd.f32 %v2710, %v2715
        %v2718 = vadd.f32 %v2711, %v2716
        %v2719 = vmul.f32 %v2077, %v2713
        %v2720 = vmul.f32 %v2081, %v2714
        %2723 = vrot.lane.b32.xlu0 %v2719, 126
        %v2724 = vpop.permute.xlu0 %2723
        %2725 = vrot.lane.b32.xlu0 %v2720, 126
        %v2726 = vpop.permute.xlu0 %2725
        %v2729 = vadd.f32 %v2717, %v2724
        %v2730 = vadd.f32 %v2718, %v2726
        %v2731 = vmul.f32 %v2097, %v2713
        %v2732 = vmul.f32 %v2101, %v2714
        %2735 = vrot.lane.b32.xlu0 %v2731, 124
        %v2736 = vpop.permute.xlu0 %2735
        %2737 = vrot.lane.b32.xlu0 %v2732, 124
        %v2738 = vpop.permute.xlu0 %2737
        %v2741 = vadd.f32 %v2729, %v2736
        %v2742 = vadd.f32 %v2730, %v2738
        %v2743 = vadd.f32 %v2741, %v2118
        %v2744 = vadd.f32 %v2742, %v2123
        %2747 = vrot.lane.b32.xlu0 %v2743, 48
        %v2748 = vpop.permute.xlu0 %2747
        %2749 = vrot.lane.b32.xlu0 %v2744, 48
        %v2750 = vpop.permute.xlu0 %2749
        %vm2753 = vcmask 458112
        %2754 = vst.msk [vmem:[#allocation7] sm:$0xff] %vm2753, %v2748
        %vm2755 = vcmask 454016
        %2756 = vst.msk [vmem:[#allocation7 + $0x8] sm:$0xf] %vm2755, %v2750
        %v2757 = vld [vmem:[%s1930] sm:$0xff]
        %v2758 = vld [vmem:[%s1930 + $0x8] sm:$0xf]
        %v2759 = vmul.f32 %v1956, %v2757
        %v2760 = vmul.f32 %v1961, %v2758
        %v2761 = vadd.f32 %v2759, 0.0
        %v2762 = vadd.f32 %v2760, 0.0
        %v2763 = vmul.f32 %v1969, %v2757
        %v2764 = vmul.f32 %v1973, %v2758
        %2767 = vrot.lane.b32.xlu0 %v2763, 126
        %v2768 = vpop.permute.xlu0 %2767
        %2769 = vrot.lane.b32.xlu0 %v2764, 126
        %v2770 = vpop.permute.xlu0 %2769
        %v2773 = vadd.f32 %v2761, %v2768
        %v2774 = vadd.f32 %v2762, %v2770
        %v2775 = vmul.f32 %v1989, %v2757
        %v2776 = vmul.f32 %v1993, %v2758
        %2779 = vrot.lane.b32.xlu0 %v2775, 124
        %v2780 = vpop.permute.xlu0 %2779
        %2781 = vrot.lane.b32.xlu0 %v2776, 124
        %v2782 = vpop.permute.xlu0 %2781
        %v2785 = vadd.f32 %v2773, %v2780
        %v2786 = vadd.f32 %v2774, %v2782
        %v2787 = vld [vmem:[%s1948] sm:$0xff]
        %v2788 = vld [vmem:[%s1948 + $0x8] sm:$0xf]
        %v2789 = vmul.f32 %v2011, %v2787
        %v2790 = vmul.f32 %v2015, %v2788
        %v2791 = vadd.f32 %v2785, %v2789
        %v2792 = vadd.f32 %v2786, %v2790
        %v2793 = vmul.f32 %v2023, %v2787
        %v2794 = vmul.f32 %v2027, %v2788
        %2797 = vrot.lane.b32.xlu0 %v2793, 126
        %v2798 = vpop.permute.xlu0 %2797
        %2799 = vrot.lane.b32.xlu0 %v2794, 126
        %v2800 = vpop.permute.xlu0 %2799
        %v2803 = vadd.f32 %v2791, %v2798
        %v2804 = vadd.f32 %v2792, %v2800
        %v2805 = vmul.f32 %v2043, %v2787
        %v2806 = vmul.f32 %v2047, %v2788
        %2809 = vrot.lane.b32.xlu0 %v2805, 124
        %v2810 = vpop.permute.xlu0 %2809
        %2811 = vrot.lane.b32.xlu0 %v2806, 124
        %v2812 = vpop.permute.xlu0 %2811
        %v2815 = vadd.f32 %v2803, %v2810
        %v2816 = vadd.f32 %v2804, %v2812
        %s2817 = scalar_lea.vmem [#allocation3], 176
        %v2818 = vld [vmem:[%s2817] sm:$0xff]
        %v2819 = vld [vmem:[%s2817 + $0x8] sm:$0xf]
        %v2820 = vmul.f32 %v2065, %v2818
        %v2821 = vmul.f32 %v2069, %v2819
        %v2822 = vadd.f32 %v2815, %v2820
        %v2823 = vadd.f32 %v2816, %v2821
        %v2824 = vmul.f32 %v2077, %v2818
        %v2825 = vmul.f32 %v2081, %v2819
        %2828 = vrot.lane.b32.xlu0 %v2824, 126
        %v2829 = vpop.permute.xlu0 %2828
        %2830 = vrot.lane.b32.xlu0 %v2825, 126
        %v2831 = vpop.permute.xlu0 %2830
        %v2834 = vadd.f32 %v2822, %v2829
        %v2835 = vadd.f32 %v2823, %v2831
        %v2836 = vmul.f32 %v2097, %v2818
        %v2837 = vmul.f32 %v2101, %v2819
        %2840 = vrot.lane.b32.xlu0 %v2836, 124
        %v2841 = vpop.permute.xlu0 %2840
        %2842 = vrot.lane.b32.xlu0 %v2837, 124
        %v2843 = vpop.permute.xlu0 %2842
        %v2846 = vadd.f32 %v2834, %v2841
        %v2847 = vadd.f32 %v2835, %v2843
        %v2848 = vadd.f32 %v2846, %v2118
        %v2849 = vadd.f32 %v2847, %v2123
        %2852 = vrot.lane.b32.xlu0 %v2848, 56
        %v2853 = vpop.permute.xlu0 %2852
        %2854 = vrot.lane.b32.xlu0 %v2849, 56
        %v2855 = vpop.permute.xlu0 %2854
        %vm2858 = vcmask 523712
        %2859 = vst.msk [vmem:[#allocation7] sm:$0xff] %vm2858, %v2853
        %vm2860 = vcmask 519616
        %2861 = vst.msk [vmem:[#allocation7 + $0x8] sm:$0xf] %vm2860, %v2855
        %v2862 = vld [vmem:[#allocation25] sm:$0xff]
        %v2863 = vld [vmem:[#allocation25 + $0x8] sm:$0xf]
        %v2864 = vld [vmem:[#allocation7] sm:$0xff]
        %v2865 = vld [vmem:[#allocation7 + $0x8] sm:$0xf]
        %v2866 = vld [vmem:[#allocation27] sm:$0xff]
        %v2867 = vld [vmem:[#allocation27 + $0x8] sm:$0xf]
        %2869 = vset.pattern.permute.xlu0 0
        %2870 = vperm.xlu0 %2869, %v2866
        %v2871 = vpop.permute.xlu0 %2870
        %2874 = vset.pattern.permute.xlu0 0
        %2875 = vperm.xlu0 %2874, %v2867
        %v2876 = vpop.permute.xlu0 %2875
        %v2879 = vsel %vm1849, %v2862, 0
        %v2882 = vsel %vm1849, %v2863, 0
        %v2885 = vsel %vm1451, %v2865, 0
        %2887 = vmatpush.msra.mxu0 0.0
        %2888 = vmatpush.msra.mxu0 0.0
        %2889 = vmatpush.msra.mxu0 0.0
        %2890 = vmatpush.msra.mxu0 0.0
        %2891 = vmatpush.msra.mxu0 0.0
        %2892 = vmatpush.msra.mxu0 0.0
        %2893 = vmatpush.msra.mxu0 0.0
        %2894 = vmatpush.msra.mxu0 0.0
        %2895 = vmatpush.msra.mxu0 0.0
        %2896 = vmatpush.msra.mxu0 0.0
        %2897 = vmatpush.msra.mxu0 0.0
        %2898 = vmatpush.msra.mxu0 0.0
        %2899 = vmatpush.msra.mxu0 0.0
        %2900 = vmatpush.msra.mxu0 0.0
        %2901 = vmatpush.msra.mxu0 %v2885
        %2902 = vmatpush.msra.mxu0 %v2864
        %2903 = vmatmul.f32.gmra.mxu0 %v2879
        %v2904 = vpop.f32.mrf.mxu0
        %v2905 = vadd.f32 %v2871, %v2904
        %2906 = vmatmul.f32.gmra.mxu0 %v2882
        %v2907 = vpop.f32.mrf.mxu0
        %v2908 = vadd.f32 %v2876, %v2907
        %2909 = vdwg.mxu0
        %v2910 = vld [vmem:[%s33] sm:$0xff]
        %v2911 = vld [vmem:[%s33 + $0x8] sm:$0xf]
        %v2912 = vld [vmem:[%s35] sm:$0xff]
        %v2913 = vld [vmem:[%s35 + $0x8] sm:$0xf]
        %v2914 = vld [vmem:[#allocation28] sm:$0xff]
        %v2915 = vld [vmem:[#allocation28 + $0x8] sm:$0xf]
        %v2916 = vsel %vm1502, %v2905, 0.0
        %2917 = vadd.xlane.f32.xlu0 %v2916
        %v2918 = vpop.xlane.xlu0 %2917
        %v2919 = vsel %vm1515, %v2908, 0.0
        %2920 = vadd.xlane.f32.xlu0 %v2919
        %v2921 = vpop.xlane.xlu0 %2920
        %v2922 = vmul.f32 %v2905, %v2905
        %v2923 = vmul.f32 %v2908, %v2908
        %v2924 = vsel %vm1502, %v2922, 0.0
        %2925 = vadd.xlane.f32.xlu0 %v2924
        %v2926 = vpop.xlane.xlu0 %2925
        %v2927 = vsel %vm1515, %v2923, 0.0
        %2928 = vadd.xlane.f32.xlu0 %v2927
        %v2929 = vpop.xlane.xlu0 %2928
        %v2931 = vsel %vm1849, %v2914, 0
        %v2934 = vsel %vm1849, %v2915, 0
        %v2937 = vsel %vm1451, %v2921, 0
        %2939 = vmatpush.msra.mxu0 0.0
        %2940 = vmatpush.msra.mxu0 0.0
        %2941 = vmatpush.msra.mxu0 0.0
        %2942 = vmatpush.msra.mxu0 0.0
        %2943 = vmatpush.msra.mxu0 0.0
        %2944 = vmatpush.msra.mxu0 0.0
        %2945 = vmatpush.msra.mxu0 0.0
        %2946 = vmatpush.msra.mxu0 0.0
        %2947 = vmatpush.msra.mxu0 0.0
        %2948 = vmatpush.msra.mxu0 0.0
        %2949 = vmatpush.msra.mxu0 0.0
        %2950 = vmatpush.msra.mxu0 0.0
        %2951 = vmatpush.msra.mxu0 0.0
        %2952 = vmatpush.msra.mxu0 0.0
        %2953 = vmatpush.msra.mxu0 %v2937
        %2954 = vmatpush.msra.mxu0 %v2918
        %2955 = vmatmul.f32.gmra.mxu0 %v2931
        %v2956 = vpop.f32.mrf.mxu0
        %v2957 = vadd.f32 0.0, %v2956
        %2958 = vmatmul.f32.gmra.mxu0 %v2934
        %v2959 = vpop.f32.mrf.mxu0
        %v2960 = vadd.f32 0.0, %v2959
        %2961 = vdwg.mxu0
        %v2962 = vmul.f32 %v2957, 0.0052083335
        %v2963 = vmul.f32 %v2960, 0.0052083335
        %v2965 = vsel %vm1451, %v2929, 0
        %2967 = vmatpush.msra.mxu0 0.0
        %2968 = vmatpush.msra.mxu0 0.0
        %2969 = vmatpush.msra.mxu0 0.0
        %2970 = vmatpush.msra.mxu0 0.0
        %2971 = vmatpush.msra.mxu0 0.0
        %2972 = vmatpush.msra.mxu0 0.0
        %2973 = vmatpush.msra.mxu0 0.0
        %2974 = vmatpush.msra.mxu0 0.0
        %2975 = vmatpush.msra.mxu0 0.0
        %2976 = vmatpush.msra.mxu0 0.0
        %2977 = vmatpush.msra.mxu0 0.0
        %2978 = vmatpush.msra.mxu0 0.0
        %2979 = vmatpush.msra.mxu0 0.0
        %2980 = vmatpush.msra.mxu0 0.0
        %2981 = vmatpush.msra.mxu0 %v2965
        %2982 = vmatpush.msra.mxu0 %v2926
        %2983 = vmatmul.f32.gmra.mxu0 %v2931
        %v2984 = vpop.f32.mrf.mxu0
        %v2985 = vadd.f32 0.0, %v2984
        %2986 = vmatmul.f32.gmra.mxu0 %v2934
        %v2987 = vpop.f32.mrf.mxu0
        %v2988 = vadd.f32 0.0, %v2987
        %2989 = vdwg.mxu0
        %v2990 = vmul.f32 %v2985, 0.0052083335
        %v2991 = vmul.f32 %v2988, 0.0052083335
        %v2992 = vmul.f32 %v2962, %v2962
        %v2993 = vmul.f32 %v2963, %v2963
        %v2994 = vsub.f32 %v2990, %v2992
        %v2995 = vsub.f32 %v2991, %v2993
        %v2996 = vadd.f32 %v2994, 1e-05
        %v2997 = vadd.f32 %v2995, 1e-05
        %v2998 = vrsqrt.pop %v2996
        %v2999 = vmul.f32 %v2998, %v2996
        %v3000 = vmul.f32 %v2999, %v2998
        %v3001 = vmul.f32 0.5, %v3000
        %v3002 = vsub.f32 1.5, %v3001
        %v3003 = vmul.f32 %v2998, %v3002
        %vm3004 = vweird.f32 %v2996
        %vm3005 = vweird.f32 %v2998
        %vm3006 = vmor %vm3004, %vm3005
        %v3007 = vsel %vm3006, %v2998, %v3003
        %v3008 = vrsqrt.pop %v2997
        %v3009 = vmul.f32 %v3008, %v2997
        %v3010 = vmul.f32 %v3009, %v3008
        %v3011 = vmul.f32 0.5, %v3010
        %v3012 = vsub.f32 1.5, %v3011
        %v3013 = vmul.f32 %v3008, %v3012
        %vm3014 = vweird.f32 %v2997
        %vm3015 = vweird.f32 %v3008
        %vm3016 = vmor %vm3014, %vm3015
        %v3017 = vsel %vm3016, %v3008, %v3013
        %v3018 = vmul.f32 %v2910, %v3007
        %v3019 = vmul.f32 %v2911, %v3017
        %3021 = vset.pattern.permute.xlu0 0
        %3022 = vperm.xlu0 %3021, %v3018
        %v3023 = vpop.permute.xlu0 %3022
        %3026 = vset.pattern.permute.xlu0 0
        %3027 = vperm.xlu0 %3026, %v3019
        %v3028 = vpop.permute.xlu0 %3027
        %v3030 = vmul.f32 %v2905, %v3023
        %v3031 = vmul.f32 %v2908, %v3028
        %v3032 = vmul.f32 %v2962, %v3018
        %v3033 = vmul.f32 %v2963, %v3019
        %v3034 = vsub.f32 %v2912, %v3032
        %v3035 = vsub.f32 %v2913, %v3033
        %3037 = vset.pattern.permute.xlu0 0
        %3038 = vperm.xlu0 %3037, %v3034
        %v3039 = vpop.permute.xlu0 %3038
        %3042 = vset.pattern.permute.xlu0 0
        %3043 = vperm.xlu0 %3042, %v3035
        %v3044 = vpop.permute.xlu0 %3043
        %v3046 = vadd.f32 %v3030, %v3039
        %v3047 = vadd.f32 %v3031, %v3044
        %v3048 = vadd.f32 %v3046, 3.0
        %v3049 = vadd.f32 %v3047, 3.0
        %v3050 = vmax.f32 %v3048, 0.0
        %v3051 = vmax.f32 %v3049, 0.0
        %v3052 = vmin.f32 %v3050, 6.0
        %v3053 = vmin.f32 %v3051, 6.0
        %v3054 = vmul.f32 %v3046, %v3052
        %v3055 = vmul.f32 %v3047, %v3053
        %v3056 = vmul.f32 %v3054, 0.16666667
        %v3057 = vmul.f32 %v3055, 0.16666667
        %v3058 = vmax.f32 %v3046, 0.0
        %v3059 = vmax.f32 %v3047, 0.0
        %v3060 = vmin.f32 %v3058, 6.0
        %v3061 = vmin.f32 %v3059, 6.0
        %v3062 = vmin.f32 %v3046, 0.0
        %v3063 = vmin.f32 %v3047, 0.0
        %v3064 = vmul.f32 %v3062, 0.01
        %v3065 = vmul.f32 %v3063, 0.01
        %v3066 = vadd.f32 %v3060, %v3064
        %v3067 = vadd.f32 %v3061, %v3065
        %vm3068 = vcmp.ge.f32.partialorder %v3046, -3.0
        %vm3069 = vcmp.ge.f32.partialorder %v3047, -3.0
        %vm3070 = vcmp.le.f32.partialorder %v3046, 3.0
        %vm3071 = vcmp.le.f32.partialorder %v3047, 3.0
        %vm3072 = vmand %vm3068, %vm3070
        %vm3073 = vmand %vm3069, %vm3071
        %v3074 = vsel %vm3072, %v3056, %v3066
        %v3075 = vsel %vm3073, %v3057, %v3067
        %v3076 = vld [vmem:[#allocation30] sm:$0xff]
        %v3077 = vld [vmem:[#allocation30 + $0x8] sm:$0xf]
        %v3078 = vld [vmem:[%s41] sm:$0xf]
        %v3079 = vld [vmem:[#allocation31] sm:$0xff]
        %v3080 = vld [vmem:[#allocation31 + $0x8] sm:$0xf]
        %v3081 = vsel %vm1502, %v3074, 0.0
        %3082 = vadd.xlane.f32.xlu0 %v3081
        %v3083 = vpop.xlane.xlu0 %3082
        %v3084 = vsel %vm1515, %v3075, 0.0
        %3085 = vadd.xlane.f32.xlu0 %v3084
        %v3086 = vpop.xlane.xlu0 %3085
        %v3087 = vmul.f32 %v3083, 0.015625
        %v3088 = vmul.f32 %v3086, 0.015625
        %v3090 = vsel %vm1849, %v3078, 0
        %v3093 = vsel %vm1451, %v3088, 0
        %3095 = vmatpush.msra.mxu0 0.0
        %3096 = vmatpush.msra.mxu0 0.0
        %3097 = vmatpush.msra.mxu0 0.0
        %3098 = vmatpush.msra.mxu0 0.0
        %3099 = vmatpush.msra.mxu0 0.0
        %3100 = vmatpush.msra.mxu0 0.0
        %3101 = vmatpush.msra.mxu0 0.0
        %3102 = vmatpush.msra.mxu0 0.0
        %3103 = vmatpush.msra.mxu0 0.0
        %3104 = vmatpush.msra.mxu0 0.0
        %3105 = vmatpush.msra.mxu0 0.0
        %3106 = vmatpush.msra.mxu0 0.0
        %3107 = vmatpush.msra.mxu0 0.0
        %3108 = vmatpush.msra.mxu0 0.0
        %3109 = vmatpush.msra.mxu0 %v3093
        %3110 = vmatpush.msra.mxu0 %v3087
        %3111 = vmatmul.f32.gmra.mxu0 %v3090
        %v3112 = vpop.f32.mrf.mxu0
        %v3113 = vadd.f32 0.0, %v3112
        %3114 = vdwg.mxu0
        %v3115 = vmax.f32 %v3113, 0.0
        %v3117 = vsel %vm1435, %v3079, 0
        %v3120 = vsel %vm1435, %v3080, 0
        %v3123 = vsel %vm1451, %v3115, 0
        %3125 = vmatpush.msra.mxu0 0.0
        %3126 = vmatpush.msra.mxu0 0.0
        %3127 = vmatpush.msra.mxu0 0.0
        %3128 = vmatpush.msra.mxu0 0.0
        %3129 = vmatpush.msra.mxu0 0.0
        %3130 = vmatpush.msra.mxu0 0.0
        %3131 = vmatpush.msra.mxu0 0.0
        %3132 = vmatpush.msra.mxu0 0.0
        %3133 = vmatpush.msra.mxu0 0.0
        %3134 = vmatpush.msra.mxu0 0.0
        %3135 = vmatpush.msra.mxu0 0.0
        %3136 = vmatpush.msra.mxu0 0.0
        %3137 = vmatpush.msra.mxu0 0.0
        %3138 = vmatpush.msra.mxu0 0.0
        %3139 = vmatpush.msra.mxu0 0.0
        %3140 = vmatpush.msra.mxu0 %v3123
        %3141 = vmatmul.f32.gmra.mxu0 %v3117
        %v3142 = vpop.f32.mrf.mxu0
        %v3143 = vadd.f32 0.0, %v3142
        %3144 = vmatmul.f32.gmra.mxu0 %v3120
        %v3145 = vpop.f32.mrf.mxu0
        %v3146 = vadd.f32 0.0, %v3145
        %3147 = vdwg.mxu0
        %v3148 = vmul.f32 %v3143, 0.16666667
        %v3149 = vmul.f32 %v3146, 0.16666667
        %v3150 = vadd.f32 %v3148, 0.5
        %v3151 = vadd.f32 %v3149, 0.5
        %v3152 = vmax.f32 %v3150, 0.0
        %v3153 = vmax.f32 %v3151, 0.0
        %v3154 = vmin.f32 %v3152, 1.0
        %v3155 = vmin.f32 %v3153, 1.0
        %v3157 = vsel %vm1849, %v3076, 0
        %v3160 = vsel %vm1849, %v3077, 0
        %v3163 = vsel %vm1451, %v3075, 0
        %3165 = vmatpush.msra.mxu0 0.0
        %3166 = vmatpush.msra.mxu0 0.0
        %3167 = vmatpush.msra.mxu0 0.0
        %3168 = vmatpush.msra.mxu0 0.0
        %3169 = vmatpush.msra.mxu0 0.0
        %3170 = vmatpush.msra.mxu0 0.0
        %3171 = vmatpush.msra.mxu0 0.0
        %3172 = vmatpush.msra.mxu0 0.0
        %3173 = vmatpush.msra.mxu0 0.0
        %3174 = vmatpush.msra.mxu0 0.0
        %3175 = vmatpush.msra.mxu0 0.0
        %3176 = vmatpush.msra.mxu0 0.0
        %3177 = vmatpush.msra.mxu0 0.0
        %3178 = vmatpush.msra.mxu0 0.0
        %3179 = vmatpush.msra.mxu0 %v3163
        %3180 = vmatpush.msra.mxu0 %v3074
        %3181 = vmatmul.f32.gmra.mxu0 %v3157
        %v3182 = vpop.f32.mrf.mxu0
        %v3183 = vadd.f32 0.0, %v3182
        %3184 = vmatmul.f32.gmra.mxu0 %v3160
        %v3185 = vpop.f32.mrf.mxu0
        %v3186 = vadd.f32 0.0, %v3185
        %3187 = vdwg.mxu0
        %v3188 = vxor.u32 %v3183, 2147483648
        %v3189 = vxor.u32 %v3186, 2147483648
        %v3190 = vmul.f32 %v3188, 1.442695
        %v3191 = vpow.pop %v3190
        %v3192 = vmul.f32 %v3189, 1.442695
        %v3193 = vpow.pop %v3192
        %v3194 = vadd.f32 %v3191, 1.0
        %v3195 = vadd.f32 %v3193, 1.0
        %v3196 = vrcp.pop %v3194
        %v3197 = vmul.f32 %v3194, %v3196
        %v3198 = vsub.f32 1.0, %v3197
        %v3199 = vmul.f32 %v3196, %v3198
        %v3200 = vadd.f32 %v3196, %v3199
        %vm3201 = vweird.f32 %v3194
        %vm3202 = vweird.f32 %v3196
        %vm3203 = vmor %vm3201, %vm3202
        %v3204 = vsel %vm3203, %v3196, %v3200
        %v3205 = vand.u32 2147483647, %v3194
        %vm3206 = vcmp.eq.f32.partialorder %v3205, 8.507059e+37
        %v3207 = vand.u32 %v3194, 2147483648
        %v3208 = vor.u32 1.1754944e-38, %v3207
        %v3209 = vsel %vm3206, %v3208, %v3204
        %v3210 = vmul.f32 1.0, %v3209
        %v3211 = vrcp.pop %v3195
        %v3212 = vmul.f32 %v3195, %v3211
        %v3213 = vsub.f32 1.0, %v3212
        %v3214 = vmul.f32 %v3211, %v3213
        %v3215 = vadd.f32 %v3211, %v3214
        %vm3216 = vweird.f32 %v3195
        %vm3217 = vweird.f32 %v3211
        %vm3218 = vmor %vm3216, %vm3217
        %v3219 = vsel %vm3218, %v3211, %v3215
        %v3220 = vand.u32 2147483647, %v3195
        %vm3221 = vcmp.eq.f32.partialorder %v3220, 8.507059e+37
        %v3222 = vand.u32 %v3195, 2147483648
        %v3223 = vor.u32 1.1754944e-38, %v3222
        %v3224 = vsel %vm3221, %v3223, %v3219
        %v3225 = vmul.f32 1.0, %v3224
        %3227 = vset.pattern.permute.xlu0 0
        %3228 = vperm.xlu0 %3227, %v3154
        %v3229 = vpop.permute.xlu0 %3228
        %3232 = vset.pattern.permute.xlu0 0
        %3233 = vperm.xlu0 %3232, %v3155
        %v3234 = vpop.permute.xlu0 %3233
        %v3236 = vadd.f32 %v3229, %v3210
        %v3237 = vadd.f32 %v3234, %v3225
        %v3238 = vmul.f32 %v3074, %v3236
        %v3239 = vmul.f32 %v3075, %v3237
        %v3240 = vld [vmem:[#allocation33] sm:$0xff]
        %v3241 = vld [vmem:[#allocation33 + $0x8] sm:$0xf]
        %v3242 = vld [vmem:[#allocation34] sm:$0xff]
        %v3243 = vld [vmem:[#allocation34 + $0x8] sm:$0xf]
        %3245 = vset.pattern.permute.xlu0 0
        %3246 = vperm.xlu0 %3245, %v3242
        %v3247 = vpop.permute.xlu0 %3246
        %3250 = vset.pattern.permute.xlu0 0
        %3251 = vperm.xlu0 %3250, %v3243
        %v3252 = vpop.permute.xlu0 %3251
        %v3255 = vsel %vm1849, %v3240, 0
        %v3258 = vsel %vm1849, %v3241, 0
        %v3261 = vsel %vm1451, %v3239, 0
        %3263 = vmatpush.msra.mxu0 0.0
        %3264 = vmatpush.msra.mxu0 0.0
        %3265 = vmatpush.msra.mxu0 0.0
        %3266 = vmatpush.msra.mxu0 0.0
        %3267 = vmatpush.msra.mxu0 0.0
        %3268 = vmatpush.msra.mxu0 0.0
        %3269 = vmatpush.msra.mxu0 0.0
        %3270 = vmatpush.msra.mxu0 0.0
        %3271 = vmatpush.msra.mxu0 0.0
        %3272 = vmatpush.msra.mxu0 0.0
        %3273 = vmatpush.msra.mxu0 0.0
        %3274 = vmatpush.msra.mxu0 0.0
        %3275 = vmatpush.msra.mxu0 0.0
        %3276 = vmatpush.msra.mxu0 0.0
        %3277 = vmatpush.msra.mxu0 %v3261
        %3278 = vmatpush.msra.mxu0 %v3238
        %3279 = vmatmul.f32.gmra.mxu0 %v3255
        %v3280 = vpop.f32.mrf.mxu0
        %v3281 = vadd.f32 %v3247, %v3280
        %3282 = vmatmul.f32.gmra.mxu0 %v3258
        %v3283 = vpop.f32.mrf.mxu0
        %v3284 = vadd.f32 %v3252, %v3283
        %3285 = vdwg.mxu0
        %v3286 = vld [vmem:[%s49] sm:$0xff]
        %v3287 = vld [vmem:[%s49 + $0x8] sm:$0xf]
        %v3288 = vld [vmem:[%s51] sm:$0xff]
        %v3289 = vld [vmem:[%s51 + $0x8] sm:$0xf]
        %v3290 = vld [vmem:[#allocation36] sm:$0xff]
        %v3291 = vld [vmem:[#allocation36 + $0x8] sm:$0xf]
        %v3292 = vsel %vm1502, %v3281, 0.0
        %3293 = vadd.xlane.f32.xlu0 %v3292
        %v3294 = vpop.xlane.xlu0 %3293
        %v3295 = vsel %vm1515, %v3284, 0.0
        %3296 = vadd.xlane.f32.xlu0 %v3295
        %v3297 = vpop.xlane.xlu0 %3296
        %v3298 = vmul.f32 %v3281, %v3281
        %v3299 = vmul.f32 %v3284, %v3284
        %v3300 = vsel %vm1502, %v3298, 0.0
        %3301 = vadd.xlane.f32.xlu0 %v3300
        %v3302 = vpop.xlane.xlu0 %3301
        %v3303 = vsel %vm1515, %v3299, 0.0
        %3304 = vadd.xlane.f32.xlu0 %v3303
        %v3305 = vpop.xlane.xlu0 %3304
        %v3307 = vsel %vm1849, %v3290, 0
        %v3310 = vsel %vm1849, %v3291, 0
        %v3313 = vsel %vm1451, %v3297, 0
        %3315 = vmatpush.msra.mxu0 0.0
        %3316 = vmatpush.msra.mxu0 0.0
        %3317 = vmatpush.msra.mxu0 0.0
        %3318 = vmatpush.msra.mxu0 0.0
        %3319 = vmatpush.msra.mxu0 0.0
        %3320 = vmatpush.msra.mxu0 0.0
        %3321 = vmatpush.msra.mxu0 0.0
        %3322 = vmatpush.msra.mxu0 0.0
        %3323 = vmatpush.msra.mxu0 0.0
        %3324 = vmatpush.msra.mxu0 0.0
        %3325 = vmatpush.msra.mxu0 0.0
        %3326 = vmatpush.msra.mxu0 0.0
        %3327 = vmatpush.msra.mxu0 0.0
        %3328 = vmatpush.msra.mxu0 0.0
        %3329 = vmatpush.msra.mxu0 %v3313
        %3330 = vmatpush.msra.mxu0 %v3294
        %3331 = vmatmul.f32.gmra.mxu0 %v3307
        %v3332 = vpop.f32.mrf.mxu0
        %v3333 = vadd.f32 0.0, %v3332
        %3334 = vmatmul.f32.gmra.mxu0 %v3310
        %v3335 = vpop.f32.mrf.mxu0
        %v3336 = vadd.f32 0.0, %v3335
        %3337 = vdwg.mxu0
        %v3338 = vmul.f32 %v3333, 0.0052083335
        %v3339 = vmul.f32 %v3336, 0.0052083335
        %v3341 = vsel %vm1451, %v3305, 0
        %3343 = vmatpush.msra.mxu0 0.0
        %3344 = vmatpush.msra.mxu0 0.0
        %3345 = vmatpush.msra.mxu0 0.0
        %3346 = vmatpush.msra.mxu0 0.0
        %3347 = vmatpush.msra.mxu0 0.0
        %3348 = vmatpush.msra.mxu0 0.0
        %3349 = vmatpush.msra.mxu0 0.0
        %3350 = vmatpush.msra.mxu0 0.0
        %3351 = vmatpush.msra.mxu0 0.0
        %3352 = vmatpush.msra.mxu0 0.0
        %3353 = vmatpush.msra.mxu0 0.0
        %3354 = vmatpush.msra.mxu0 0.0
        %3355 = vmatpush.msra.mxu0 0.0
        %3356 = vmatpush.msra.mxu0 0.0
        %3357 = vmatpush.msra.mxu0 %v3341
        %3358 = vmatpush.msra.mxu0 %v3302
        %3359 = vmatmul.f32.gmra.mxu0 %v3307
        %v3360 = vpop.f32.mrf.mxu0
        %v3361 = vadd.f32 0.0, %v3360
        %3362 = vmatmul.f32.gmra.mxu0 %v3310
        %v3363 = vpop.f32.mrf.mxu0
        %v3364 = vadd.f32 0.0, %v3363
        %3365 = vdwg.mxu0
        %v3366 = vmul.f32 %v3361, 0.0052083335
        %v3367 = vmul.f32 %v3364, 0.0052083335
        %v3368 = vmul.f32 %v3338, %v3338
        %v3369 = vmul.f32 %v3339, %v3339
        %v3370 = vsub.f32 %v3366, %v3368
        %v3371 = vsub.f32 %v3367, %v3369
        %v3372 = vadd.f32 %v3370, 1e-05
        %v3373 = vadd.f32 %v3371, 1e-05
        %v3374 = vrsqrt.pop %v3372
        %v3375 = vmul.f32 %v3374, %v3372
        %v3376 = vmul.f32 %v3375, %v3374
        %v3377 = vmul.f32 0.5, %v3376
        %v3378 = vsub.f32 1.5, %v3377
        %v3379 = vmul.f32 %v3374, %v3378
        %vm3380 = vweird.f32 %v3372
        %vm3381 = vweird.f32 %v3374
        %vm3382 = vmor %vm3380, %vm3381
        %v3383 = vsel %vm3382, %v3374, %v3379
        %v3384 = vrsqrt.pop %v3373
        %v3385 = vmul.f32 %v3384, %v3373
        %v3386 = vmul.f32 %v3385, %v3384
        %v3387 = vmul.f32 0.5, %v3386
        %v3388 = vsub.f32 1.5, %v3387
        %v3389 = vmul.f32 %v3384, %v3388
        %vm3390 = vweird.f32 %v3373
        %vm3391 = vweird.f32 %v3384
        %vm3392 = vmor %vm3390, %vm3391
        %v3393 = vsel %vm3392, %v3384, %v3389
        %v3394 = vmul.f32 %v3286, %v3383
        %v3395 = vmul.f32 %v3287, %v3393
        %3397 = vset.pattern.permute.xlu0 0
        %3398 = vperm.xlu0 %3397, %v3394
        %v3399 = vpop.permute.xlu0 %3398
        %3402 = vset.pattern.permute.xlu0 0
        %3403 = vperm.xlu0 %3402, %v3395
        %v3404 = vpop.permute.xlu0 %3403
        %v3406 = vmul.f32 %v3281, %v3399
        %v3407 = vmul.f32 %v3284, %v3404
        %v3408 = vmul.f32 %v3338, %v3394
        %v3409 = vmul.f32 %v3339, %v3395
        %v3410 = vsub.f32 %v3288, %v3408
        %v3411 = vsub.f32 %v3289, %v3409
        %3413 = vset.pattern.permute.xlu0 0
        %3414 = vperm.xlu0 %3413, %v3410
        %v3415 = vpop.permute.xlu0 %3414
        %3418 = vset.pattern.permute.xlu0 0
        %3419 = vperm.xlu0 %3418, %v3411
        %v3420 = vpop.permute.xlu0 %3419
        %v3422 = vadd.f32 %v3406, %v3415
        %v3423 = vadd.f32 %v3407, %v3420
        %v3424 = vadd.f32 %v3422, 3.0
        %v3425 = vadd.f32 %v3423, 3.0
        %v3426 = vmax.f32 %v3424, 0.0
        %v3427 = vmax.f32 %v3425, 0.0
        %v3428 = vmin.f32 %v3426, 6.0
        %v3429 = vmin.f32 %v3427, 6.0
        %v3430 = vmul.f32 %v3422, %v3428
        %v3431 = vmul.f32 %v3423, %v3429
        %v3432 = vmul.f32 %v3430, 0.16666667
        %v3433 = vmul.f32 %v3431, 0.16666667
        %v3434 = vmax.f32 %v3422, 0.0
        %v3435 = vmax.f32 %v3423, 0.0
        %v3436 = vmin.f32 %v3434, 6.0
        %v3437 = vmin.f32 %v3435, 6.0
        %v3438 = vmin.f32 %v3422, 0.0
        %v3439 = vmin.f32 %v3423, 0.0
        %v3440 = vmul.f32 %v3438, 0.01
        %v3441 = vmul.f32 %v3439, 0.01
        %v3442 = vadd.f32 %v3436, %v3440
        %v3443 = vadd.f32 %v3437, %v3441
        %vm3444 = vcmp.ge.f32.partialorder %v3422, -3.0
        %vm3445 = vcmp.ge.f32.partialorder %v3423, -3.0
        %vm3446 = vcmp.le.f32.partialorder %v3422, 3.0
        %vm3447 = vcmp.le.f32.partialorder %v3423, 3.0
        %vm3448 = vmand %vm3444, %vm3446
        %vm3449 = vmand %vm3445, %vm3447
        %v3450 = vsel %vm3448, %v3432, %v3442
        %v3451 = vsel %vm3449, %v3433, %v3443
        %v3452 = vld [vmem:[#allocation13] sm:$0xff]
        %v3453 = vld [vmem:[#allocation13 + $0x8] sm:$0xf]
        %v3454 = vld [vmem:[#allocation15] sm:$0xff]
        %v3455 = vld [vmem:[#allocation15 + $0x8] sm:$0xf]
        %3456 = vst.msk [vmem:[#allocation2] sm:$0xff] %vm1849, 0.0
        %3457 = vst.msk [vmem:[#allocation2 + $0x8] sm:$0xf] %vm1851, 0.0
        %3458 = vst.msk [vmem:[#allocation2 + $0x10] sm:$0xff] %vm1849, 0.0
        %3459 = vst.msk [vmem:[#allocation2 + $0x18] sm:$0xf] %vm1851, 0.0
        %3460 = vst.msk [vmem:[#allocation2 + $0x20] sm:$0xff] %vm1849, 0.0
        %3461 = vst.msk [vmem:[#allocation2 + $0x28] sm:$0xf] %vm1851, 0.0
        %3462 = vst.msk [vmem:[#allocation2 + $0x30] sm:$0xff] %vm1849, 0.0
        %3463 = vst.msk [vmem:[#allocation2 + $0x38] sm:$0xf] %vm1851, 0.0
        %3464 = vst.msk [vmem:[#allocation2 + $0x40] sm:$0xff] %vm1849, 0.0
        %3465 = vst.msk [vmem:[#allocation2 + $0x48] sm:$0xf] %vm1851, 0.0
        %3466 = vst.msk [vmem:[#allocation2 + $0x50] sm:$0xff] %vm1849, 0.0
        %3467 = vst.msk [vmem:[#allocation2 + $0x58] sm:$0xf] %vm1851, 0.0
        %3468 = vst.msk [vmem:[#allocation2 + $0x60] sm:$0xff] %vm1849, 0.0
        %3469 = vst.msk [vmem:[#allocation2 + $0x68] sm:$0xf] %vm1851, 0.0
        %3470 = vst.msk [vmem:[#allocation2 + $0x70] sm:$0xff] %vm1849, 0.0
        %3471 = vst.msk [vmem:[#allocation2 + $0x78] sm:$0xf] %vm1851, 0.0
        %3472 = vst.msk [vmem:[#allocation2 + $0x80] sm:$0xff] %vm1849, 0.0
        %3473 = vst.msk [vmem:[#allocation2 + $0x88] sm:$0xf] %vm1851, 0.0
        %3474 = vst.msk [vmem:[#allocation2 + $0x90] sm:$0xff] %vm1849, 0.0
        %3475 = vst.msk [vmem:[#allocation2 + $0x98] sm:$0xf] %vm1851, 0.0
        %3476 = vst.msk [vmem:[#allocation2 + $0xa0] sm:$0xff] %vm1849, 0.0
        %3477 = vst.msk [vmem:[#allocation2 + $0xa8] sm:$0xf] %vm1851, 0.0
        %3478 = vst.msk [vmem:[#allocation2 + $0xb0] sm:$0xff] %vm1849, 0.0
        %3479 = vst.msk [vmem:[#allocation2 + $0xb8] sm:$0xf] %vm1851, 0.0
        %3481 = vrot.lane.b32.xlu0 %v1840, 2
        %v3482 = vpop.permute.xlu0 %3481
        %s3484 = scalar_lea.vmem [#allocation2], 32
        %3485 = vst.msk [vmem:[%s3484] sm:$0xff] %vm1886, %v3482
        %vm3486 = vcmask 76816
        %3487 = vst.msk [vmem:[%s3484 + $0x8] sm:$0xf] %vm3486, %v1878
        %3488 = vrot.lane.b32.xlu0 %v1840, 122
        %v3489 = vpop.permute.xlu0 %3488
        %s3491 = scalar_lea.vmem [#allocation2], 48
        %3492 = vst.msk [vmem:[%s3491] sm:$0xff] %vm1886, %v3489
        %3493 = vst.msk [vmem:[%s3491 + $0x8] sm:$0xf] %vm3486, %v1889
        %3494 = vrot.lane.b32.xlu0 %v1840, 114
        %v3495 = vpop.permute.xlu0 %3494
        %s3497 = scalar_lea.vmem [#allocation2], 64
        %3498 = vst.msk [vmem:[%s3497] sm:$0xff] %vm1886, %v3495
        %3499 = vst.msk [vmem:[%s3497 + $0x8] sm:$0xf] %vm3486, %v1898
        %3500 = vrot.lane.b32.xlu0 %v1840, 106
        %v3501 = vpop.permute.xlu0 %3500
        %s3503 = scalar_lea.vmem [#allocation2], 80
        %3504 = vst.msk [vmem:[%s3503] sm:$0xff] %vm1886, %v3501
        %3505 = vst.msk [vmem:[%s3503 + $0x8] sm:$0xf] %vm3486, %v1907
        %3506 = vrot.lane.b32.xlu0 %v1840, 98
        %v3507 = vpop.permute.xlu0 %3506
        %s3509 = scalar_lea.vmem [#allocation2], 96
        %3510 = vst.msk [vmem:[%s3509] sm:$0xff] %vm1886, %v3507
        %3511 = vst.msk [vmem:[%s3509 + $0x8] sm:$0xf] %vm3486, %v1916
        %3512 = vrot.lane.b32.xlu0 %v1840, 90
        %v3513 = vpop.permute.xlu0 %3512
        %s3515 = scalar_lea.vmem [#allocation2], 112
        %3516 = vst.msk [vmem:[%s3515] sm:$0xff] %vm1886, %v3513
        %3517 = vst.msk [vmem:[%s3515 + $0x8] sm:$0xf] %vm3486, %v1925
        %3518 = vrot.lane.b32.xlu0 %v1840, 82
        %v3519 = vpop.permute.xlu0 %3518
        %s3521 = scalar_lea.vmem [#allocation2], 128
        %3522 = vst.msk [vmem:[%s3521] sm:$0xff] %vm1886, %v3519
        %3523 = vst.msk [vmem:[%s3521 + $0x8] sm:$0xf] %vm3486, %v1934
        %3524 = vrot.lane.b32.xlu0 %v1840, 74
        %v3525 = vpop.permute.xlu0 %3524
        %s3527 = scalar_lea.vmem [#allocation2], 144
        %3528 = vst.msk [vmem:[%s3527] sm:$0xff] %vm1886, %v3525
        %3529 = vst.msk [vmem:[%s3527 + $0x8] sm:$0xf] %vm3486, %v1943
        %v3530 = vld [vmem:[#allocation2] sm:$0xff]
        %v3531 = vld [vmem:[#allocation2 + $0x8] sm:$0xf]
        %3533 = vset.pattern.permute.xlu0 0
        %3534 = vperm.xlu0 %3533, %v3452
        %v3535 = vpop.permute.xlu0 %3534
        %3538 = vset.pattern.permute.xlu0 0
        %3539 = vperm.xlu0 %3538, %v3453
        %v3540 = vpop.permute.xlu0 %3539
        %v3542 = vmul.f32 %v3535, %v3530
        %v3543 = vmul.f32 %v3540, %v3531
        %v3544 = vadd.f32 %v3542, 0.0
        %v3545 = vadd.f32 %v3543, 0.0
        %3546 = vset.pattern.permute.xlu0 1
        %3547 = vperm.xlu0 %3546, %v3452
        %v3548 = vpop.permute.xlu0 %3547
        %3550 = vset.pattern.permute.xlu0 1
        %3551 = vperm.xlu0 %3550, %v3453
        %v3552 = vpop.permute.xlu0 %3551
        %v3554 = vmul.f32 %v3548, %v3530
        %v3555 = vmul.f32 %v3552, %v3531
        %3558 = vrot.lane.b32.xlu0 %v3554, 125
        %v3559 = vpop.permute.xlu0 %3558
        %3560 = vrot.lane.b32.xlu0 %v3555, 125
        %v3561 = vpop.permute.xlu0 %3560
        %v3564 = vadd.f32 %v3544, %v3559
        %v3565 = vadd.f32 %v3545, %v3561
        %v3566 = vld [vmem:[%s3491] sm:$0xff]
        %v3567 = vld [vmem:[%s3491 + $0x8] sm:$0xf]
        %3568 = vset.pattern.permute.xlu0 2
        %3569 = vperm.xlu0 %3568, %v3452
        %v3570 = vpop.permute.xlu0 %3569
        %3572 = vset.pattern.permute.xlu0 2
        %3573 = vperm.xlu0 %3572, %v3453
        %v3574 = vpop.permute.xlu0 %3573
        %v3576 = vmul.f32 %v3570, %v3566
        %v3577 = vmul.f32 %v3574, %v3567
        %v3578 = vadd.f32 %v3564, %v3576
        %v3579 = vadd.f32 %v3565, %v3577
        %3580 = vset.pattern.permute.xlu0 3
        %3581 = vperm.xlu0 %3580, %v3452
        %v3582 = vpop.permute.xlu0 %3581
        %3584 = vset.pattern.permute.xlu0 3
        %3585 = vperm.xlu0 %3584, %v3453
        %v3586 = vpop.permute.xlu0 %3585
        %v3588 = vmul.f32 %v3582, %v3566
        %v3589 = vmul.f32 %v3586, %v3567
        %3592 = vrot.lane.b32.xlu0 %v3588, 125
        %v3593 = vpop.permute.xlu0 %3592
        %3594 = vrot.lane.b32.xlu0 %v3589, 125
        %v3595 = vpop.permute.xlu0 %3594
        %v3598 = vadd.f32 %v3578, %v3593
        %v3599 = vadd.f32 %v3579, %v3595
        %3601 = vset.pattern.permute.xlu0 0
        %3602 = vperm.xlu0 %3601, %v3454
        %v3603 = vpop.permute.xlu0 %3602
        %3606 = vset.pattern.permute.xlu0 0
        %3607 = vperm.xlu0 %3606, %v3455
        %v3608 = vpop.permute.xlu0 %3607
        %v3610 = vadd.f32 %v3598, %v3603
        %v3611 = vadd.f32 %v3599, %v3608
        %vm3612 = vcmask 72704
        %3613 = vst.msk [vmem:[#allocation6] sm:$0xff] %vm3612, %v3610
        %vm3614 = vcmask 68608
        %3615 = vst.msk [vmem:[#allocation6 + $0x8] sm:$0xf] %vm3614, %v3611
        %s3616 = scalar_lea.vmem [#allocation2], 16
        %v3617 = vld [vmem:[%s3616] sm:$0xff]
        %v3618 = vld [vmem:[%s3616 + $0x8] sm:$0xf]
        %v3619 = vmul.f32 %v3535, %v3617
        %v3620 = vmul.f32 %v3540, %v3618
        %v3621 = vadd.f32 %v3619, 0.0
        %v3622 = vadd.f32 %v3620, 0.0
        %v3623 = vmul.f32 %v3548, %v3617
        %v3624 = vmul.f32 %v3552, %v3618
        %3627 = vrot.lane.b32.xlu0 %v3623, 125
        %v3628 = vpop.permute.xlu0 %3627
        %3629 = vrot.lane.b32.xlu0 %v3624, 125
        %v3630 = vpop.permute.xlu0 %3629
        %v3633 = vadd.f32 %v3621, %v3628
        %v3634 = vadd.f32 %v3622, %v3630
        %v3635 = vld [vmem:[%s3497] sm:$0xff]
        %v3636 = vld [vmem:[%s3497 + $0x8] sm:$0xf]
        %v3637 = vmul.f32 %v3570, %v3635
        %v3638 = vmul.f32 %v3574, %v3636
        %v3639 = vadd.f32 %v3633, %v3637
        %v3640 = vadd.f32 %v3634, %v3638
        %v3641 = vmul.f32 %v3582, %v3635
        %v3642 = vmul.f32 %v3586, %v3636
        %3645 = vrot.lane.b32.xlu0 %v3641, 125
        %v3646 = vpop.permute.xlu0 %3645
        %3647 = vrot.lane.b32.xlu0 %v3642, 125
        %v3648 = vpop.permute.xlu0 %3647
        %v3651 = vadd.f32 %v3639, %v3646
        %v3652 = vadd.f32 %v3640, %v3648
        %v3653 = vadd.f32 %v3651, %v3603
        %v3654 = vadd.f32 %v3652, %v3608
        %3657 = vrot.lane.b32.xlu0 %v3653, 9
        %v3658 = vpop.permute.xlu0 %3657
        %3659 = vrot.lane.b32.xlu0 %v3654, 9
        %v3660 = vpop.permute.xlu0 %3659
        %vm3663 = vcmask 146504
        %3664 = vst.msk [vmem:[#allocation6] sm:$0xff] %vm3663, %v3658
        %vm3665 = vcmask 142408
        %3666 = vst.msk [vmem:[#allocation6 + $0x8] sm:$0xf] %vm3665, %v3660
        %v3667 = vld [vmem:[%s3484] sm:$0xff]
        %v3668 = vld [vmem:[%s3484 + $0x8] sm:$0xf]
        %v3669 = vmul.f32 %v3535, %v3667
        %v3670 = vmul.f32 %v3540, %v3668
        %v3671 = vadd.f32 %v3669, 0.0
        %v3672 = vadd.f32 %v3670, 0.0
        %v3673 = vmul.f32 %v3548, %v3667
        %v3674 = vmul.f32 %v3552, %v3668
        %3677 = vrot.lane.b32.xlu0 %v3673, 125
        %v3678 = vpop.permute.xlu0 %3677
        %3679 = vrot.lane.b32.xlu0 %v3674, 125
        %v3680 = vpop.permute.xlu0 %3679
        %v3683 = vadd.f32 %v3671, %v3678
        %v3684 = vadd.f32 %v3672, %v3680
        %v3685 = vld [vmem:[%s3503] sm:$0xff]
        %v3686 = vld [vmem:[%s3503 + $0x8] sm:$0xf]
        %v3687 = vmul.f32 %v3570, %v3685
        %v3688 = vmul.f32 %v3574, %v3686
        %v3689 = vadd.f32 %v3683, %v3687
        %v3690 = vadd.f32 %v3684, %v3688
        %v3691 = vmul.f32 %v3582, %v3685
        %v3692 = vmul.f32 %v3586, %v3686
        %3695 = vrot.lane.b32.xlu0 %v3691, 125
        %v3696 = vpop.permute.xlu0 %3695
        %3697 = vrot.lane.b32.xlu0 %v3692, 125
        %v3698 = vpop.permute.xlu0 %3697
        %v3701 = vadd.f32 %v3689, %v3696
        %v3702 = vadd.f32 %v3690, %v3698
        %v3703 = vadd.f32 %v3701, %v3603
        %v3704 = vadd.f32 %v3702, %v3608
        %3707 = vrot.lane.b32.xlu0 %v3703, 18
        %v3708 = vpop.permute.xlu0 %3707
        %3709 = vrot.lane.b32.xlu0 %v3704, 18
        %v3710 = vpop.permute.xlu0 %3709
        %vm3713 = vcmask 220304
        %3714 = vst.msk [vmem:[#allocation6] sm:$0xff] %vm3713, %v3708
        %vm3715 = vcmask 216208
        %3716 = vst.msk [vmem:[#allocation6 + $0x8] sm:$0xf] %vm3715, %v3710
        %v3717 = vld [vmem:[%s3491] sm:$0xff]
        %v3718 = vld [vmem:[%s3491 + $0x8] sm:$0xf]
        %v3719 = vmul.f32 %v3535, %v3717
        %v3720 = vmul.f32 %v3540, %v3718
        %v3721 = vadd.f32 %v3719, 0.0
        %v3722 = vadd.f32 %v3720, 0.0
        %v3723 = vmul.f32 %v3548, %v3717
        %v3724 = vmul.f32 %v3552, %v3718
        %3727 = vrot.lane.b32.xlu0 %v3723, 125
        %v3728 = vpop.permute.xlu0 %3727
        %3729 = vrot.lane.b32.xlu0 %v3724, 125
        %v3730 = vpop.permute.xlu0 %3729
        %v3733 = vadd.f32 %v3721, %v3728
        %v3734 = vadd.f32 %v3722, %v3730
        %v3735 = vld [vmem:[%s3509] sm:$0xff]
        %v3736 = vld [vmem:[%s3509 + $0x8] sm:$0xf]
        %v3737 = vmul.f32 %v3570, %v3735
        %v3738 = vmul.f32 %v3574, %v3736
        %v3739 = vadd.f32 %v3733, %v3737
        %v3740 = vadd.f32 %v3734, %v3738
        %v3741 = vmul.f32 %v3582, %v3735
        %v3742 = vmul.f32 %v3586, %v3736
        %3745 = vrot.lane.b32.xlu0 %v3741, 125
        %v3746 = vpop.permute.xlu0 %3745
        %3747 = vrot.lane.b32.xlu0 %v3742, 125
        %v3748 = vpop.permute.xlu0 %3747
        %v3751 = vadd.f32 %v3739, %v3746
        %v3752 = vadd.f32 %v3740, %v3748
        %v3753 = vadd.f32 %v3751, %v3603
        %v3754 = vadd.f32 %v3752, %v3608
        %3757 = vrot.lane.b32.xlu0 %v3753, 27
        %v3758 = vpop.permute.xlu0 %3757
        %3759 = vrot.lane.b32.xlu0 %v3754, 27
        %v3760 = vpop.permute.xlu0 %3759
        %vm3763 = vcmask 294104
        %3764 = vst.msk [vmem:[#allocation6] sm:$0xff] %vm3763, %v3758
        %vm3765 = vcmask 290008
        %3766 = vst.msk [vmem:[#allocation6 + $0x8] sm:$0xf] %vm3765, %v3760
        %v3767 = vld [vmem:[%s3497] sm:$0xff]
        %v3768 = vld [vmem:[%s3497 + $0x8] sm:$0xf]
        %v3769 = vmul.f32 %v3535, %v3767
        %v3770 = vmul.f32 %v3540, %v3768
        %v3771 = vadd.f32 %v3769, 0.0
        %v3772 = vadd.f32 %v3770, 0.0
        %v3773 = vmul.f32 %v3548, %v3767
        %v3774 = vmul.f32 %v3552, %v3768
        %3777 = vrot.lane.b32.xlu0 %v3773, 125
        %v3778 = vpop.permute.xlu0 %3777
        %3779 = vrot.lane.b32.xlu0 %v3774, 125
        %v3780 = vpop.permute.xlu0 %3779
        %v3783 = vadd.f32 %v3771, %v3778
        %v3784 = vadd.f32 %v3772, %v3780
        %v3785 = vld [vmem:[%s3515] sm:$0xff]
        %v3786 = vld [vmem:[%s3515 + $0x8] sm:$0xf]
        %v3787 = vmul.f32 %v3570, %v3785
        %v3788 = vmul.f32 %v3574, %v3786
        %v3789 = vadd.f32 %v3783, %v3787
        %v3790 = vadd.f32 %v3784, %v3788
        %v3791 = vmul.f32 %v3582, %v3785
        %v3792 = vmul.f32 %v3586, %v3786
        %3795 = vrot.lane.b32.xlu0 %v3791, 125
        %v3796 = vpop.permute.xlu0 %3795
        %3797 = vrot.lane.b32.xlu0 %v3792, 125
        %v3798 = vpop.permute.xlu0 %3797
        %v3801 = vadd.f32 %v3789, %v3796
        %v3802 = vadd.f32 %v3790, %v3798
        %v3803 = vadd.f32 %v3801, %v3603
        %v3804 = vadd.f32 %v3802, %v3608
        %3807 = vrot.lane.b32.xlu0 %v3803, 36
        %v3808 = vpop.permute.xlu0 %3807
        %3809 = vrot.lane.b32.xlu0 %v3804, 36
        %v3810 = vpop.permute.xlu0 %3809
        %vm3813 = vcmask 367904
        %3814 = vst.msk [vmem:[#allocation6] sm:$0xff] %vm3813, %v3808
        %vm3815 = vcmask 363808
        %3816 = vst.msk [vmem:[#allocation6 + $0x8] sm:$0xf] %vm3815, %v3810
        %v3817 = vld [vmem:[%s3503] sm:$0xff]
        %v3818 = vld [vmem:[%s3503 + $0x8] sm:$0xf]
        %v3819 = vmul.f32 %v3535, %v3817
        %v3820 = vmul.f32 %v3540, %v3818
        %v3821 = vadd.f32 %v3819, 0.0
        %v3822 = vadd.f32 %v3820, 0.0
        %v3823 = vmul.f32 %v3548, %v3817
        %v3824 = vmul.f32 %v3552, %v3818
        %3827 = vrot.lane.b32.xlu0 %v3823, 125
        %v3828 = vpop.permute.xlu0 %3827
        %3829 = vrot.lane.b32.xlu0 %v3824, 125
        %v3830 = vpop.permute.xlu0 %3829
        %v3833 = vadd.f32 %v3821, %v3828
        %v3834 = vadd.f32 %v3822, %v3830
        %v3835 = vld [vmem:[%s3521] sm:$0xff]
        %v3836 = vld [vmem:[%s3521 + $0x8] sm:$0xf]
        %v3837 = vmul.f32 %v3570, %v3835
        %v3838 = vmul.f32 %v3574, %v3836
        %v3839 = vadd.f32 %v3833, %v3837
        %v3840 = vadd.f32 %v3834, %v3838
        %v3841 = vmul.f32 %v3582, %v3835
        %v3842 = vmul.f32 %v3586, %v3836
        %3845 = vrot.lane.b32.xlu0 %v3841, 125
        %v3846 = vpop.permute.xlu0 %3845
        %3847 = vrot.lane.b32.xlu0 %v3842, 125
        %v3848 = vpop.permute.xlu0 %3847
        %v3851 = vadd.f32 %v3839, %v3846
        %v3852 = vadd.f32 %v3840, %v3848
        %v3853 = vadd.f32 %v3851, %v3603
        %v3854 = vadd.f32 %v3852, %v3608
        %3857 = vrot.lane.b32.xlu0 %v3853, 45
        %v3858 = vpop.permute.xlu0 %3857
        %3859 = vrot.lane.b32.xlu0 %v3854, 45
        %v3860 = vpop.permute.xlu0 %3859
        %vm3863 = vcmask 441704
        %3864 = vst.msk [vmem:[#allocation6] sm:$0xff] %vm3863, %v3858
        %vm3865 = vcmask 437608
        %3866 = vst.msk [vmem:[#allocation6 + $0x8] sm:$0xf] %vm3865, %v3860
        %v3867 = vld [vmem:[%s3509] sm:$0xff]
        %v3868 = vld [vmem:[%s3509 + $0x8] sm:$0xf]
        %v3869 = vmul.f32 %v3535, %v3867
        %v3870 = vmul.f32 %v3540, %v3868
        %v3871 = vadd.f32 %v3869, 0.0
        %v3872 = vadd.f32 %v3870, 0.0
        %v3873 = vmul.f32 %v3548, %v3867
        %v3874 = vmul.f32 %v3552, %v3868
        %3877 = vrot.lane.b32.xlu0 %v3873, 125
        %v3878 = vpop.permute.xlu0 %3877
        %3879 = vrot.lane.b32.xlu0 %v3874, 125
        %v3880 = vpop.permute.xlu0 %3879
        %v3883 = vadd.f32 %v3871, %v3878
        %v3884 = vadd.f32 %v3872, %v3880
        %v3885 = vld [vmem:[%s3527] sm:$0xff]
        %v3886 = vld [vmem:[%s3527 + $0x8] sm:$0xf]
        %v3887 = vmul.f32 %v3570, %v3885
        %v3888 = vmul.f32 %v3574, %v3886
        %v3889 = vadd.f32 %v3883, %v3887
        %v3890 = vadd.f32 %v3884, %v3888
        %v3891 = vmul.f32 %v3582, %v3885
        %v3892 = vmul.f32 %v3586, %v3886
        %3895 = vrot.lane.b32.xlu0 %v3891, 125
        %v3896 = vpop.permute.xlu0 %3895
        %3897 = vrot.lane.b32.xlu0 %v3892, 125
        %v3898 = vpop.permute.xlu0 %3897
        %v3901 = vadd.f32 %v3889, %v3896
        %v3902 = vadd.f32 %v3890, %v3898
        %v3903 = vadd.f32 %v3901, %v3603
        %v3904 = vadd.f32 %v3902, %v3608
        %3907 = vrot.lane.b32.xlu0 %v3903, 54
        %v3908 = vpop.permute.xlu0 %3907
        %3909 = vrot.lane.b32.xlu0 %v3904, 54
        %v3910 = vpop.permute.xlu0 %3909
        %vm3913 = vcmask 515504
        %3914 = vst.msk [vmem:[#allocation6] sm:$0xff] %vm3913, %v3908
        %vm3915 = vcmask 511408
        %3916 = vst.msk [vmem:[#allocation6 + $0x8] sm:$0xf] %vm3915, %v3910
        %v3917 = vld [vmem:[%s3515] sm:$0xff]
        %v3918 = vld [vmem:[%s3515 + $0x8] sm:$0xf]
        %v3919 = vmul.f32 %v3535, %v3917
        %v3920 = vmul.f32 %v3540, %v3918
        %v3921 = vadd.f32 %v3919, 0.0
        %v3922 = vadd.f32 %v3920, 0.0
        %v3923 = vmul.f32 %v3548, %v3917
        %v3924 = vmul.f32 %v3552, %v3918
        %3927 = vrot.lane.b32.xlu0 %v3923, 125
        %v3928 = vpop.permute.xlu0 %3927
        %3929 = vrot.lane.b32.xlu0 %v3924, 125
        %v3930 = vpop.permute.xlu0 %3929
        %v3933 = vadd.f32 %v3921, %v3928
        %v3934 = vadd.f32 %v3922, %v3930
        %s3935 = scalar_lea.vmem [#allocation2], 160
        %v3936 = vld [vmem:[%s3935] sm:$0xff]
        %v3937 = vld [vmem:[%s3935 + $0x8] sm:$0xf]
        %v3938 = vmul.f32 %v3570, %v3936
        %v3939 = vmul.f32 %v3574, %v3937
        %v3940 = vadd.f32 %v3933, %v3938
        %v3941 = vadd.f32 %v3934, %v3939
        %v3942 = vmul.f32 %v3582, %v3936
        %v3943 = vmul.f32 %v3586, %v3937
        %3946 = vrot.lane.b32.xlu0 %v3942, 125
        %v3947 = vpop.permute.xlu0 %3946
        %3948 = vrot.lane.b32.xlu0 %v3943, 125
        %v3949 = vpop.permute.xlu0 %3948
        %v3952 = vadd.f32 %v3940, %v3947
        %v3953 = vadd.f32 %v3941, %v3949
        %v3954 = vadd.f32 %v3952, %v3603
        %v3955 = vadd.f32 %v3953, %v3608
        %3958 = vrot.lane.b32.xlu0 %v3954, 63
        %v3959 = vpop.permute.xlu0 %3958
        %3960 = vrot.lane.b32.xlu0 %v3955, 63
        %v3961 = vpop.permute.xlu0 %3960
        %vm3964 = vcmask 589304
        %3965 = vst.msk [vmem:[#allocation6] sm:$0xff] %vm3964, %v3959
        %vm3966 = vcmask 585208
        %3967 = vst.msk [vmem:[#allocation6 + $0x8] sm:$0xf] %vm3966, %v3961
        %v3968 = vld [vmem:[%s3521] sm:$0xff]
        %v3969 = vld [vmem:[%s3521 + $0x8] sm:$0xf]
        %v3970 = vmul.f32 %v3535, %v3968
        %v3971 = vmul.f32 %v3540, %v3969
        %v3972 = vadd.f32 %v3970, 0.0
        %v3973 = vadd.f32 %v3971, 0.0
        %v3974 = vmul.f32 %v3548, %v3968
        %v3975 = vmul.f32 %v3552, %v3969
        %3978 = vrot.lane.b32.xlu0 %v3974, 125
        %v3979 = vpop.permute.xlu0 %3978
        %3980 = vrot.lane.b32.xlu0 %v3975, 125
        %v3981 = vpop.permute.xlu0 %3980
        %v3984 = vadd.f32 %v3972, %v3979
        %v3985 = vadd.f32 %v3973, %v3981
        %s3986 = scalar_lea.vmem [#allocation2], 176
        %v3987 = vld [vmem:[%s3986] sm:$0xff]
        %v3988 = vld [vmem:[%s3986 + $0x8] sm:$0xf]
        %v3989 = vmul.f32 %v3570, %v3987
        %v3990 = vmul.f32 %v3574, %v3988
        %v3991 = vadd.f32 %v3984, %v3989
        %v3992 = vadd.f32 %v3985, %v3990
        %v3993 = vmul.f32 %v3582, %v3987
        %v3994 = vmul.f32 %v3586, %v3988
        %3997 = vrot.lane.b32.xlu0 %v3993, 125
        %v3998 = vpop.permute.xlu0 %3997
        %3999 = vrot.lane.b32.xlu0 %v3994, 125
        %v4000 = vpop.permute.xlu0 %3999
        %v4003 = vadd.f32 %v3991, %v3998
        %v4004 = vadd.f32 %v3992, %v4000
        %v4005 = vadd.f32 %v4003, %v3603
        %v4006 = vadd.f32 %v4004, %v3608
        %4009 = vrot.lane.b32.xlu0 %v4005, 72
        %v4010 = vpop.permute.xlu0 %4009
        %4011 = vrot.lane.b32.xlu0 %v4006, 72
        %v4012 = vpop.permute.xlu0 %4011
        %vm4015 = vcmask 663104
        %4016 = vst.msk [vmem:[#allocation6] sm:$0xff] %vm4015, %v4010
        %vm4017 = vcmask 659008
        %4018 = vst.msk [vmem:[#allocation6 + $0x8] sm:$0xf] %vm4017, %v4012
        %v4019 = vld [vmem:[#allocation19] sm:$0xff]
        %v4020 = vld [vmem:[#allocation19 + $0x8] sm:$0xf]
        %v4021 = vld [vmem:[#allocation21] sm:$0xff]
        %v4022 = vld [vmem:[#allocation21 + $0x8] sm:$0xf]
        %vm4023 = vcmask 80896
        %4024 = vst.msk [vmem:[#allocation4] sm:$0xff] %vm4023, 0.0
        %vm4025 = vcmask 76800
        %4026 = vst.msk [vmem:[#allocation4 + $0x8] sm:$0xf] %vm4025, 0.0
        %4027 = vst.msk [vmem:[#allocation4 + $0x10] sm:$0xff] %vm4023, 0.0
        %4028 = vst.msk [vmem:[#allocation4 + $0x18] sm:$0xf] %vm4025, 0.0
        %4029 = vst.msk [vmem:[#allocation4 + $0x20] sm:$0xff] %vm4023, 0.0
        %4030 = vst.msk [vmem:[#allocation4 + $0x28] sm:$0xf] %vm4025, 0.0
        %4031 = vst.msk [vmem:[#allocation4 + $0x30] sm:$0xff] %vm4023, 0.0
        %4032 = vst.msk [vmem:[#allocation4 + $0x38] sm:$0xf] %vm4025, 0.0
        %4033 = vst.msk [vmem:[#allocation4 + $0x40] sm:$0xff] %vm4023, 0.0
        %4034 = vst.msk [vmem:[#allocation4 + $0x48] sm:$0xf] %vm4025, 0.0
        %4035 = vst.msk [vmem:[#allocation4 + $0x50] sm:$0xff] %vm4023, 0.0
        %4036 = vst.msk [vmem:[#allocation4 + $0x58] sm:$0xf] %vm4025, 0.0
        %4037 = vst.msk [vmem:[#allocation4 + $0x60] sm:$0xff] %vm4023, 0.0
        %4038 = vst.msk [vmem:[#allocation4 + $0x68] sm:$0xf] %vm4025, 0.0
        %4039 = vst.msk [vmem:[#allocation4 + $0x70] sm:$0xff] %vm4023, 0.0
        %4040 = vst.msk [vmem:[#allocation4 + $0x78] sm:$0xf] %vm4025, 0.0
        %4041 = vst.msk [vmem:[#allocation4 + $0x80] sm:$0xff] %vm4023, 0.0
        %4042 = vst.msk [vmem:[#allocation4 + $0x88] sm:$0xf] %vm4025, 0.0
        %4043 = vst.msk [vmem:[#allocation4 + $0x90] sm:$0xff] %vm4023, 0.0
        %4044 = vst.msk [vmem:[#allocation4 + $0x98] sm:$0xf] %vm4025, 0.0
        %4047 = vrot.lane.b32.xlu0 %v3450, 1
        %v4048 = vpop.permute.xlu0 %4047
        %4049 = vrot.lane.b32.xlu0 %v3451, 1
        %v4050 = vpop.permute.xlu0 %4049
        %s4053 = scalar_lea.vmem [#allocation4], 16
        %vm4054 = vcmask 72712
        %4055 = vst.msk [vmem:[%s4053] sm:$0xff] %vm4054, %v4048
        %vm4056 = vcmask 68616
        %4057 = vst.msk [vmem:[%s4053 + $0x8] sm:$0xf] %vm4056, %v4050
        %4058 = vrot.lane.b32.xlu0 %v3450, 121
        %v4059 = vpop.permute.xlu0 %4058
        %4060 = vrot.lane.b32.xlu0 %v3451, 121
        %v4061 = vpop.permute.xlu0 %4060
        %s4064 = scalar_lea.vmem [#allocation4], 32
        %4065 = vst.msk [vmem:[%s4064] sm:$0xff] %vm4054, %v4059
        %4066 = vst.msk [vmem:[%s4064 + $0x8] sm:$0xf] %vm4056, %v4061
        %4067 = vrot.lane.b32.xlu0 %v3450, 113
        %v4068 = vpop.permute.xlu0 %4067
        %4069 = vrot.lane.b32.xlu0 %v3451, 113
        %v4070 = vpop.permute.xlu0 %4069
        %s4073 = scalar_lea.vmem [#allocation4], 48
        %4074 = vst.msk [vmem:[%s4073] sm:$0xff] %vm4054, %v4068
        %4075 = vst.msk [vmem:[%s4073 + $0x8] sm:$0xf] %vm4056, %v4070
        %4076 = vrot.lane.b32.xlu0 %v3450, 105
        %v4077 = vpop.permute.xlu0 %4076
        %4078 = vrot.lane.b32.xlu0 %v3451, 105
        %v4079 = vpop.permute.xlu0 %4078
        %s4082 = scalar_lea.vmem [#allocation4], 64
        %4083 = vst.msk [vmem:[%s4082] sm:$0xff] %vm4054, %v4077
        %4084 = vst.msk [vmem:[%s4082 + $0x8] sm:$0xf] %vm4056, %v4079
        %4085 = vrot.lane.b32.xlu0 %v3450, 97
        %v4086 = vpop.permute.xlu0 %4085
        %4087 = vrot.lane.b32.xlu0 %v3451, 97
        %v4088 = vpop.permute.xlu0 %4087
        %s4091 = scalar_lea.vmem [#allocation4], 80
        %4092 = vst.msk [vmem:[%s4091] sm:$0xff] %vm4054, %v4086
        %4093 = vst.msk [vmem:[%s4091 + $0x8] sm:$0xf] %vm4056, %v4088
        %4094 = vrot.lane.b32.xlu0 %v3450, 89
        %v4095 = vpop.permute.xlu0 %4094
        %4096 = vrot.lane.b32.xlu0 %v3451, 89
        %v4097 = vpop.permute.xlu0 %4096
        %s4100 = scalar_lea.vmem [#allocation4], 96
        %4101 = vst.msk [vmem:[%s4100] sm:$0xff] %vm4054, %v4095
        %4102 = vst.msk [vmem:[%s4100 + $0x8] sm:$0xf] %vm4056, %v4097
        %4103 = vrot.lane.b32.xlu0 %v3450, 81
        %v4104 = vpop.permute.xlu0 %4103
        %4105 = vrot.lane.b32.xlu0 %v3451, 81
        %v4106 = vpop.permute.xlu0 %4105
        %s4109 = scalar_lea.vmem [#allocation4], 112
        %4110 = vst.msk [vmem:[%s4109] sm:$0xff] %vm4054, %v4104
        %4111 = vst.msk [vmem:[%s4109 + $0x8] sm:$0xf] %vm4056, %v4106
        %4112 = vrot.lane.b32.xlu0 %v3450, 73
        %v4113 = vpop.permute.xlu0 %4112
        %4114 = vrot.lane.b32.xlu0 %v3451, 73
        %v4115 = vpop.permute.xlu0 %4114
        %s4118 = scalar_lea.vmem [#allocation4], 128
        %4119 = vst.msk [vmem:[%s4118] sm:$0xff] %vm4054, %v4113
        %4120 = vst.msk [vmem:[%s4118 + $0x8] sm:$0xf] %vm4056, %v4115
        %v4121 = vld [vmem:[#allocation4] sm:$0xff]
        %v4122 = vld [vmem:[#allocation4 + $0x8] sm:$0xf]
        %4124 = vset.pattern.permute.xlu0 0
        %4125 = vperm.xlu0 %4124, %v4019
        %v4126 = vpop.permute.xlu0 %4125
        %4129 = vset.pattern.permute.xlu0 0
        %4130 = vperm.xlu0 %4129, %v4020
        %v4131 = vpop.permute.xlu0 %4130
        %v4133 = vmul.f32 %v4126, %v4121
        %v4134 = vmul.f32 %v4131, %v4122
        %v4135 = vadd.f32 %v4133, 0.0
        %v4136 = vadd.f32 %v4134, 0.0
        %4137 = vset.pattern.permute.xlu0 1
        %4138 = vperm.xlu0 %4137, %v4019
        %v4139 = vpop.permute.xlu0 %4138
        %4141 = vset.pattern.permute.xlu0 1
        %4142 = vperm.xlu0 %4141, %v4020
        %v4143 = vpop.permute.xlu0 %4142
        %v4145 = vmul.f32 %v4139, %v4121
        %v4146 = vmul.f32 %v4143, %v4122
        %4149 = vrot.lane.b32.xlu0 %v4145, 127
        %v4150 = vpop.permute.xlu0 %4149
        %4151 = vrot.lane.b32.xlu0 %v4146, 127
        %v4152 = vpop.permute.xlu0 %4151
        %v4155 = vadd.f32 %v4135, %v4150
        %v4156 = vadd.f32 %v4136, %v4152
        %v4157 = vld [vmem:[%s4053] sm:$0xff]
        %v4158 = vld [vmem:[%s4053 + $0x8] sm:$0xf]
        %4159 = vset.pattern.permute.xlu0 2
        %4160 = vperm.xlu0 %4159, %v4019
        %v4161 = vpop.permute.xlu0 %4160
        %4163 = vset.pattern.permute.xlu0 2
        %4164 = vperm.xlu0 %4163, %v4020
        %v4165 = vpop.permute.xlu0 %4164
        %v4167 = vmul.f32 %v4161, %v4157
        %v4168 = vmul.f32 %v4165, %v4158
        %v4169 = vadd.f32 %v4155, %v4167
        %v4170 = vadd.f32 %v4156, %v4168
        %4171 = vset.pattern.permute.xlu0 3
        %4172 = vperm.xlu0 %4171, %v4019
        %v4173 = vpop.permute.xlu0 %4172
        %4175 = vset.pattern.permute.xlu0 3
        %4176 = vperm.xlu0 %4175, %v4020
        %v4177 = vpop.permute.xlu0 %4176
        %v4179 = vmul.f32 %v4173, %v4157
        %v4180 = vmul.f32 %v4177, %v4158
        %4183 = vrot.lane.b32.xlu0 %v4179, 127
        %v4184 = vpop.permute.xlu0 %4183
        %4185 = vrot.lane.b32.xlu0 %v4180, 127
        %v4186 = vpop.permute.xlu0 %4185
        %v4189 = vadd.f32 %v4169, %v4184
        %v4190 = vadd.f32 %v4170, %v4186
        %4192 = vset.pattern.permute.xlu0 0
        %4193 = vperm.xlu0 %4192, %v4021
        %v4194 = vpop.permute.xlu0 %4193
        %4197 = vset.pattern.permute.xlu0 0
        %4198 = vperm.xlu0 %4197, %v4022
        %v4199 = vpop.permute.xlu0 %4198
        %v4201 = vadd.f32 %v4189, %v4194
        %v4202 = vadd.f32 %v4190, %v4199
        %4203 = vst.msk [vmem:[#allocation6 + $0xc] sm:$0xff] %vm3612, %v4201
        %4204 = vst.msk [vmem:[#allocation6 + $0x14] sm:$0xf] %vm3614, %v4202
        %v4205 = vld [vmem:[%s4053] sm:$0xff]
        %v4206 = vld [vmem:[%s4053 + $0x8] sm:$0xf]
        %v4207 = vmul.f32 %v4126, %v4205
        %v4208 = vmul.f32 %v4131, %v4206
        %v4209 = vadd.f32 %v4207, 0.0
        %v4210 = vadd.f32 %v4208, 0.0
        %v4211 = vmul.f32 %v4139, %v4205
        %v4212 = vmul.f32 %v4143, %v4206
        %4215 = vrot.lane.b32.xlu0 %v4211, 127
        %v4216 = vpop.permute.xlu0 %4215
        %4217 = vrot.lane.b32.xlu0 %v4212, 127
        %v4218 = vpop.permute.xlu0 %4217
        %v4221 = vadd.f32 %v4209, %v4216
        %v4222 = vadd.f32 %v4210, %v4218
        %v4223 = vld [vmem:[%s4064] sm:$0xff]
        %v4224 = vld [vmem:[%s4064 + $0x8] sm:$0xf]
        %v4225 = vmul.f32 %v4161, %v4223
        %v4226 = vmul.f32 %v4165, %v4224
        %v4227 = vadd.f32 %v4221, %v4225
        %v4228 = vadd.f32 %v4222, %v4226
        %v4229 = vmul.f32 %v4173, %v4223
        %v4230 = vmul.f32 %v4177, %v4224
        %4233 = vrot.lane.b32.xlu0 %v4229, 127
        %v4234 = vpop.permute.xlu0 %4233
        %4235 = vrot.lane.b32.xlu0 %v4230, 127
        %v4236 = vpop.permute.xlu0 %4235
        %v4239 = vadd.f32 %v4227, %v4234
        %v4240 = vadd.f32 %v4228, %v4236
        %v4241 = vadd.f32 %v4239, %v4194
        %v4242 = vadd.f32 %v4240, %v4199
        %4245 = vrot.lane.b32.xlu0 %v4241, 9
        %v4246 = vpop.permute.xlu0 %4245
        %4247 = vrot.lane.b32.xlu0 %v4242, 9
        %v4248 = vpop.permute.xlu0 %4247
        %4251 = vst.msk [vmem:[#allocation6 + $0xc] sm:$0xff] %vm3663, %v4246
        %4252 = vst.msk [vmem:[#allocation6 + $0x14] sm:$0xf] %vm3665, %v4248
        %v4253 = vld [vmem:[%s4064] sm:$0xff]
        %v4254 = vld [vmem:[%s4064 + $0x8] sm:$0xf]
        %v4255 = vmul.f32 %v4126, %v4253
        %v4256 = vmul.f32 %v4131, %v4254
        %v4257 = vadd.f32 %v4255, 0.0
        %v4258 = vadd.f32 %v4256, 0.0
        %v4259 = vmul.f32 %v4139, %v4253
        %v4260 = vmul.f32 %v4143, %v4254
        %4263 = vrot.lane.b32.xlu0 %v4259, 127
        %v4264 = vpop.permute.xlu0 %4263
        %4265 = vrot.lane.b32.xlu0 %v4260, 127
        %v4266 = vpop.permute.xlu0 %4265
        %v4269 = vadd.f32 %v4257, %v4264
        %v4270 = vadd.f32 %v4258, %v4266
        %v4271 = vld [vmem:[%s4073] sm:$0xff]
        %v4272 = vld [vmem:[%s4073 + $0x8] sm:$0xf]
        %v4273 = vmul.f32 %v4161, %v4271
        %v4274 = vmul.f32 %v4165, %v4272
        %v4275 = vadd.f32 %v4269, %v4273
        %v4276 = vadd.f32 %v4270, %v4274
        %v4277 = vmul.f32 %v4173, %v4271
        %v4278 = vmul.f32 %v4177, %v4272
        %4281 = vrot.lane.b32.xlu0 %v4277, 127
        %v4282 = vpop.permute.xlu0 %4281
        %4283 = vrot.lane.b32.xlu0 %v4278, 127
        %v4284 = vpop.permute.xlu0 %4283
        %v4287 = vadd.f32 %v4275, %v4282
        %v4288 = vadd.f32 %v4276, %v4284
        %v4289 = vadd.f32 %v4287, %v4194
        %v4290 = vadd.f32 %v4288, %v4199
        %4293 = vrot.lane.b32.xlu0 %v4289, 18
        %v4294 = vpop.permute.xlu0 %4293
        %4295 = vrot.lane.b32.xlu0 %v4290, 18
        %v4296 = vpop.permute.xlu0 %4295
        %4299 = vst.msk [vmem:[#allocation6 + $0xc] sm:$0xff] %vm3713, %v4294
        %4300 = vst.msk [vmem:[#allocation6 + $0x14] sm:$0xf] %vm3715, %v4296
        %v4301 = vld [vmem:[%s4073] sm:$0xff]
        %v4302 = vld [vmem:[%s4073 + $0x8] sm:$0xf]
        %v4303 = vmul.f32 %v4126, %v4301
        %v4304 = vmul.f32 %v4131, %v4302
        %v4305 = vadd.f32 %v4303, 0.0
        %v4306 = vadd.f32 %v4304, 0.0
        %v4307 = vmul.f32 %v4139, %v4301
        %v4308 = vmul.f32 %v4143, %v4302
        %4311 = vrot.lane.b32.xlu0 %v4307, 127
        %v4312 = vpop.permute.xlu0 %4311
        %4313 = vrot.lane.b32.xlu0 %v4308, 127
        %v4314 = vpop.permute.xlu0 %4313
        %v4317 = vadd.f32 %v4305, %v4312
        %v4318 = vadd.f32 %v4306, %v4314
        %v4319 = vld [vmem:[%s4082] sm:$0xff]
        %v4320 = vld [vmem:[%s4082 + $0x8] sm:$0xf]
        %v4321 = vmul.f32 %v4161, %v4319
        %v4322 = vmul.f32 %v4165, %v4320
        %v4323 = vadd.f32 %v4317, %v4321
        %v4324 = vadd.f32 %v4318, %v4322
        %v4325 = vmul.f32 %v4173, %v4319
        %v4326 = vmul.f32 %v4177, %v4320
        %4329 = vrot.lane.b32.xlu0 %v4325, 127
        %v4330 = vpop.permute.xlu0 %4329
        %4331 = vrot.lane.b32.xlu0 %v4326, 127
        %v4332 = vpop.permute.xlu0 %4331
        %v4335 = vadd.f32 %v4323, %v4330
        %v4336 = vadd.f32 %v4324, %v4332
        %v4337 = vadd.f32 %v4335, %v4194
        %v4338 = vadd.f32 %v4336, %v4199
        %4341 = vrot.lane.b32.xlu0 %v4337, 27
        %v4342 = vpop.permute.xlu0 %4341
        %4343 = vrot.lane.b32.xlu0 %v4338, 27
        %v4344 = vpop.permute.xlu0 %4343
        %4347 = vst.msk [vmem:[#allocation6 + $0xc] sm:$0xff] %vm3763, %v4342
        %4348 = vst.msk [vmem:[#allocation6 + $0x14] sm:$0xf] %vm3765, %v4344
        %v4349 = vld [vmem:[%s4082] sm:$0xff]
        %v4350 = vld [vmem:[%s4082 + $0x8] sm:$0xf]
        %v4351 = vmul.f32 %v4126, %v4349
        %v4352 = vmul.f32 %v4131, %v4350
        %v4353 = vadd.f32 %v4351, 0.0
        %v4354 = vadd.f32 %v4352, 0.0
        %v4355 = vmul.f32 %v4139, %v4349
        %v4356 = vmul.f32 %v4143, %v4350
        %4359 = vrot.lane.b32.xlu0 %v4355, 127
        %v4360 = vpop.permute.xlu0 %4359
        %4361 = vrot.lane.b32.xlu0 %v4356, 127
        %v4362 = vpop.permute.xlu0 %4361
        %v4365 = vadd.f32 %v4353, %v4360
        %v4366 = vadd.f32 %v4354, %v4362
        %v4367 = vld [vmem:[%s4091] sm:$0xff]
        %v4368 = vld [vmem:[%s4091 + $0x8] sm:$0xf]
        %v4369 = vmul.f32 %v4161, %v4367
        %v4370 = vmul.f32 %v4165, %v4368
        %v4371 = vadd.f32 %v4365, %v4369
        %v4372 = vadd.f32 %v4366, %v4370
        %v4373 = vmul.f32 %v4173, %v4367
        %v4374 = vmul.f32 %v4177, %v4368
        %4377 = vrot.lane.b32.xlu0 %v4373, 127
        %v4378 = vpop.permute.xlu0 %4377
        %4379 = vrot.lane.b32.xlu0 %v4374, 127
        %v4380 = vpop.permute.xlu0 %4379
        %v4383 = vadd.f32 %v4371, %v4378
        %v4384 = vadd.f32 %v4372, %v4380
        %v4385 = vadd.f32 %v4383, %v4194
        %v4386 = vadd.f32 %v4384, %v4199
        %4389 = vrot.lane.b32.xlu0 %v4385, 36
        %v4390 = vpop.permute.xlu0 %4389
        %4391 = vrot.lane.b32.xlu0 %v4386, 36
        %v4392 = vpop.permute.xlu0 %4391
        %4395 = vst.msk [vmem:[#allocation6 + $0xc] sm:$0xff] %vm3813, %v4390
        %4396 = vst.msk [vmem:[#allocation6 + $0x14] sm:$0xf] %vm3815, %v4392
        %v4397 = vld [vmem:[%s4091] sm:$0xff]
        %v4398 = vld [vmem:[%s4091 + $0x8] sm:$0xf]
        %v4399 = vmul.f32 %v4126, %v4397
        %v4400 = vmul.f32 %v4131, %v4398
        %v4401 = vadd.f32 %v4399, 0.0
        %v4402 = vadd.f32 %v4400, 0.0
        %v4403 = vmul.f32 %v4139, %v4397
        %v4404 = vmul.f32 %v4143, %v4398
        %4407 = vrot.lane.b32.xlu0 %v4403, 127
        %v4408 = vpop.permute.xlu0 %4407
        %4409 = vrot.lane.b32.xlu0 %v4404, 127
        %v4410 = vpop.permute.xlu0 %4409
        %v4413 = vadd.f32 %v4401, %v4408
        %v4414 = vadd.f32 %v4402, %v4410
        %v4415 = vld [vmem:[%s4100] sm:$0xff]
        %v4416 = vld [vmem:[%s4100 + $0x8] sm:$0xf]
        %v4417 = vmul.f32 %v4161, %v4415
        %v4418 = vmul.f32 %v4165, %v4416
        %v4419 = vadd.f32 %v4413, %v4417
        %v4420 = vadd.f32 %v4414, %v4418
        %v4421 = vmul.f32 %v4173, %v4415
        %v4422 = vmul.f32 %v4177, %v4416
        %4425 = vrot.lane.b32.xlu0 %v4421, 127
        %v4426 = vpop.permute.xlu0 %4425
        %4427 = vrot.lane.b32.xlu0 %v4422, 127
        %v4428 = vpop.permute.xlu0 %4427
        %v4431 = vadd.f32 %v4419, %v4426
        %v4432 = vadd.f32 %v4420, %v4428
        %v4433 = vadd.f32 %v4431, %v4194
        %v4434 = vadd.f32 %v4432, %v4199
        %4437 = vrot.lane.b32.xlu0 %v4433, 45
        %v4438 = vpop.permute.xlu0 %4437
        %4439 = vrot.lane.b32.xlu0 %v4434, 45
        %v4440 = vpop.permute.xlu0 %4439
        %4443 = vst.msk [vmem:[#allocation6 + $0xc] sm:$0xff] %vm3863, %v4438
        %4444 = vst.msk [vmem:[#allocation6 + $0x14] sm:$0xf] %vm3865, %v4440
        %v4445 = vld [vmem:[%s4100] sm:$0xff]
        %v4446 = vld [vmem:[%s4100 + $0x8] sm:$0xf]
        %v4447 = vmul.f32 %v4126, %v4445
        %v4448 = vmul.f32 %v4131, %v4446
        %v4449 = vadd.f32 %v4447, 0.0
        %v4450 = vadd.f32 %v4448, 0.0
        %v4451 = vmul.f32 %v4139, %v4445
        %v4452 = vmul.f32 %v4143, %v4446
        %4455 = vrot.lane.b32.xlu0 %v4451, 127
        %v4456 = vpop.permute.xlu0 %4455
        %4457 = vrot.lane.b32.xlu0 %v4452, 127
        %v4458 = vpop.permute.xlu0 %4457
        %v4461 = vadd.f32 %v4449, %v4456
        %v4462 = vadd.f32 %v4450, %v4458
        %v4463 = vld [vmem:[%s4109] sm:$0xff]
        %v4464 = vld [vmem:[%s4109 + $0x8] sm:$0xf]
        %v4465 = vmul.f32 %v4161, %v4463
        %v4466 = vmul.f32 %v4165, %v4464
        %v4467 = vadd.f32 %v4461, %v4465
        %v4468 = vadd.f32 %v4462, %v4466
        %v4469 = vmul.f32 %v4173, %v4463
        %v4470 = vmul.f32 %v4177, %v4464
        %4473 = vrot.lane.b32.xlu0 %v4469, 127
        %v4474 = vpop.permute.xlu0 %4473
        %4475 = vrot.lane.b32.xlu0 %v4470, 127
        %v4476 = vpop.permute.xlu0 %4475
        %v4479 = vadd.f32 %v4467, %v4474
        %v4480 = vadd.f32 %v4468, %v4476
        %v4481 = vadd.f32 %v4479, %v4194
        %v4482 = vadd.f32 %v4480, %v4199
        %4485 = vrot.lane.b32.xlu0 %v4481, 54
        %v4486 = vpop.permute.xlu0 %4485
        %4487 = vrot.lane.b32.xlu0 %v4482, 54
        %v4488 = vpop.permute.xlu0 %4487
        %4491 = vst.msk [vmem:[#allocation6 + $0xc] sm:$0xff] %vm3913, %v4486
        %4492 = vst.msk [vmem:[#allocation6 + $0x14] sm:$0xf] %vm3915, %v4488
        %v4493 = vld [vmem:[%s4109] sm:$0xff]
        %v4494 = vld [vmem:[%s4109 + $0x8] sm:$0xf]
        %v4495 = vmul.f32 %v4126, %v4493
        %v4496 = vmul.f32 %v4131, %v4494
        %v4497 = vadd.f32 %v4495, 0.0
        %v4498 = vadd.f32 %v4496, 0.0
        %v4499 = vmul.f32 %v4139, %v4493
        %v4500 = vmul.f32 %v4143, %v4494
        %4503 = vrot.lane.b32.xlu0 %v4499, 127
        %v4504 = vpop.permute.xlu0 %4503
        %4505 = vrot.lane.b32.xlu0 %v4500, 127
        %v4506 = vpop.permute.xlu0 %4505
        %v4509 = vadd.f32 %v4497, %v4504
        %v4510 = vadd.f32 %v4498, %v4506
        %v4511 = vld [vmem:[%s4118] sm:$0xff]
        %v4512 = vld [vmem:[%s4118 + $0x8] sm:$0xf]
        %v4513 = vmul.f32 %v4161, %v4511
        %v4514 = vmul.f32 %v4165, %v4512
        %v4515 = vadd.f32 %v4509, %v4513
        %v4516 = vadd.f32 %v4510, %v4514
        %v4517 = vmul.f32 %v4173, %v4511
        %v4518 = vmul.f32 %v4177, %v4512
        %4521 = vrot.lane.b32.xlu0 %v4517, 127
        %v4522 = vpop.permute.xlu0 %4521
        %4523 = vrot.lane.b32.xlu0 %v4518, 127
        %v4524 = vpop.permute.xlu0 %4523
        %v4527 = vadd.f32 %v4515, %v4522
        %v4528 = vadd.f32 %v4516, %v4524
        %v4529 = vadd.f32 %v4527, %v4194
        %v4530 = vadd.f32 %v4528, %v4199
        %4533 = vrot.lane.b32.xlu0 %v4529, 63
        %v4534 = vpop.permute.xlu0 %4533
        %4535 = vrot.lane.b32.xlu0 %v4530, 63
        %v4536 = vpop.permute.xlu0 %4535
        %4539 = vst.msk [vmem:[#allocation6 + $0xc] sm:$0xff] %vm3964, %v4534
        %4540 = vst.msk [vmem:[#allocation6 + $0x14] sm:$0xf] %vm3966, %v4536
        %v4541 = vld [vmem:[%s4118] sm:$0xff]
        %v4542 = vld [vmem:[%s4118 + $0x8] sm:$0xf]
        %v4543 = vmul.f32 %v4126, %v4541
        %v4544 = vmul.f32 %v4131, %v4542
        %v4545 = vadd.f32 %v4543, 0.0
        %v4546 = vadd.f32 %v4544, 0.0
        %v4547 = vmul.f32 %v4139, %v4541
        %v4548 = vmul.f32 %v4143, %v4542
        %4551 = vrot.lane.b32.xlu0 %v4547, 127
        %v4552 = vpop.permute.xlu0 %4551
        %4553 = vrot.lane.b32.xlu0 %v4548, 127
        %v4554 = vpop.permute.xlu0 %4553
        %v4557 = vadd.f32 %v4545, %v4552
        %v4558 = vadd.f32 %v4546, %v4554
        %s4559 = scalar_lea.vmem [#allocation4], 144
        %v4560 = vld [vmem:[%s4559] sm:$0xff]
        %v4561 = vld [vmem:[%s4559 + $0x8] sm:$0xf]
        %v4562 = vmul.f32 %v4161, %v4560
        %v4563 = vmul.f32 %v4165, %v4561
        %v4564 = vadd.f32 %v4557, %v4562
        %v4565 = vadd.f32 %v4558, %v4563
        %v4566 = vmul.f32 %v4173, %v4560
        %v4567 = vmul.f32 %v4177, %v4561
        %4570 = vrot.lane.b32.xlu0 %v4566, 127
        %v4571 = vpop.permute.xlu0 %4570
        %4572 = vrot.lane.b32.xlu0 %v4567, 127
        %v4573 = vpop.permute.xlu0 %4572
        %v4576 = vadd.f32 %v4564, %v4571
        %v4577 = vadd.f32 %v4565, %v4573
        %v4578 = vadd.f32 %v4576, %v4194
        %v4579 = vadd.f32 %v4577, %v4199
        %4582 = vrot.lane.b32.xlu0 %v4578, 72
        %v4583 = vpop.permute.xlu0 %4582
        %4584 = vrot.lane.b32.xlu0 %v4579, 72
        %v4585 = vpop.permute.xlu0 %4584
        %4588 = vst.msk [vmem:[#allocation6 + $0xc] sm:$0xff] %vm4015, %v4583
        %4589 = vst.msk [vmem:[#allocation6 + $0x14] sm:$0xf] %vm4017, %v4585
        %v4590 = vld [vmem:[#allocation22] sm:$0xff]
        %v4591 = vld [vmem:[#allocation22 + $0x8] sm:$0xf]
        %v4592 = vld [vmem:[#allocation24] sm:$0xff]
        %v4593 = vld [vmem:[#allocation24 + $0x8] sm:$0xf]
        %4594 = vst.msk [vmem:[#allocation5] sm:$0xff] %vm4023, 0.0
        %4595 = vst.msk [vmem:[#allocation5 + $0x8] sm:$0xf] %vm4025, 0.0
        %4596 = vst.msk [vmem:[#allocation5 + $0x10] sm:$0xff] %vm4023, 0.0
        %4597 = vst.msk [vmem:[#allocation5 + $0x18] sm:$0xf] %vm4025, 0.0
        %4598 = vst.msk [vmem:[#allocation5 + $0x20] sm:$0xff] %vm4023, 0.0
        %4599 = vst.msk [vmem:[#allocation5 + $0x28] sm:$0xf] %vm4025, 0.0
        %4600 = vst.msk [vmem:[#allocation5 + $0x30] sm:$0xff] %vm4023, 0.0
        %4601 = vst.msk [vmem:[#allocation5 + $0x38] sm:$0xf] %vm4025, 0.0
        %4602 = vst.msk [vmem:[#allocation5 + $0x40] sm:$0xff] %vm4023, 0.0
        %4603 = vst.msk [vmem:[#allocation5 + $0x48] sm:$0xf] %vm4025, 0.0
        %4604 = vst.msk [vmem:[#allocation5 + $0x50] sm:$0xff] %vm4023, 0.0
        %4605 = vst.msk [vmem:[#allocation5 + $0x58] sm:$0xf] %vm4025, 0.0
        %4606 = vst.msk [vmem:[#allocation5 + $0x60] sm:$0xff] %vm4023, 0.0
        %4607 = vst.msk [vmem:[#allocation5 + $0x68] sm:$0xf] %vm4025, 0.0
        %4608 = vst.msk [vmem:[#allocation5 + $0x70] sm:$0xff] %vm4023, 0.0
        %4609 = vst.msk [vmem:[#allocation5 + $0x78] sm:$0xf] %vm4025, 0.0
        %4610 = vst.msk [vmem:[#allocation5 + $0x80] sm:$0xff] %vm4023, 0.0
        %4611 = vst.msk [vmem:[#allocation5 + $0x88] sm:$0xf] %vm4025, 0.0
        %4612 = vst.msk [vmem:[#allocation5 + $0x90] sm:$0xff] %vm4023, 0.0
        %4613 = vst.msk [vmem:[#allocation5 + $0x98] sm:$0xf] %vm4025, 0.0
        %4616 = vrot.lane.b32.xlu0 %v1843, 1
        %v4617 = vpop.permute.xlu0 %4616
        %4618 = vrot.lane.b32.xlu0 %v1844, 1
        %v4619 = vpop.permute.xlu0 %4618
        %s4622 = scalar_lea.vmem [#allocation5], 16
        %4623 = vst.msk [vmem:[%s4622] sm:$0xff] %vm4054, %v4617
        %4624 = vst.msk [vmem:[%s4622 + $0x8] sm:$0xf] %vm4056, %v4619
        %4625 = vrot.lane.b32.xlu0 %v1843, 121
        %v4626 = vpop.permute.xlu0 %4625
        %4627 = vrot.lane.b32.xlu0 %v1844, 121
        %v4628 = vpop.permute.xlu0 %4627
        %s4631 = scalar_lea.vmem [#allocation5], 32
        %4632 = vst.msk [vmem:[%s4631] sm:$0xff] %vm4054, %v4626
        %4633 = vst.msk [vmem:[%s4631 + $0x8] sm:$0xf] %vm4056, %v4628
        %4634 = vrot.lane.b32.xlu0 %v1843, 113
        %v4635 = vpop.permute.xlu0 %4634
        %4636 = vrot.lane.b32.xlu0 %v1844, 113
        %v4637 = vpop.permute.xlu0 %4636
        %s4640 = scalar_lea.vmem [#allocation5], 48
        %4641 = vst.msk [vmem:[%s4640] sm:$0xff] %vm4054, %v4635
        %4642 = vst.msk [vmem:[%s4640 + $0x8] sm:$0xf] %vm4056, %v4637
        %4643 = vrot.lane.b32.xlu0 %v1843, 105
        %v4644 = vpop.permute.xlu0 %4643
        %4645 = vrot.lane.b32.xlu0 %v1844, 105
        %v4646 = vpop.permute.xlu0 %4645
        %s4649 = scalar_lea.vmem [#allocation5], 64
        %4650 = vst.msk [vmem:[%s4649] sm:$0xff] %vm4054, %v4644
        %4651 = vst.msk [vmem:[%s4649 + $0x8] sm:$0xf] %vm4056, %v4646
        %4652 = vrot.lane.b32.xlu0 %v1843, 97
        %v4653 = vpop.permute.xlu0 %4652
        %4654 = vrot.lane.b32.xlu0 %v1844, 97
        %v4655 = vpop.permute.xlu0 %4654
        %s4658 = scalar_lea.vmem [#allocation5], 80
        %4659 = vst.msk [vmem:[%s4658] sm:$0xff] %vm4054, %v4653
        %4660 = vst.msk [vmem:[%s4658 + $0x8] sm:$0xf] %vm4056, %v4655
        %4661 = vrot.lane.b32.xlu0 %v1843, 89
        %v4662 = vpop.permute.xlu0 %4661
        %4663 = vrot.lane.b32.xlu0 %v1844, 89
        %v4664 = vpop.permute.xlu0 %4663
        %s4667 = scalar_lea.vmem [#allocation5], 96
        %4668 = vst.msk [vmem:[%s4667] sm:$0xff] %vm4054, %v4662
        %4669 = vst.msk [vmem:[%s4667 + $0x8] sm:$0xf] %vm4056, %v4664
        %4670 = vrot.lane.b32.xlu0 %v1843, 81
        %v4671 = vpop.permute.xlu0 %4670
        %4672 = vrot.lane.b32.xlu0 %v1844, 81
        %v4673 = vpop.permute.xlu0 %4672
        %s4676 = scalar_lea.vmem [#allocation5], 112
        %4677 = vst.msk [vmem:[%s4676] sm:$0xff] %vm4054, %v4671
        %4678 = vst.msk [vmem:[%s4676 + $0x8] sm:$0xf] %vm4056, %v4673
        %4679 = vrot.lane.b32.xlu0 %v1843, 73
        %v4680 = vpop.permute.xlu0 %4679
        %4681 = vrot.lane.b32.xlu0 %v1844, 73
        %v4682 = vpop.permute.xlu0 %4681
        %s4685 = scalar_lea.vmem [#allocation5], 128
        %4686 = vst.msk [vmem:[%s4685] sm:$0xff] %vm4054, %v4680
        %4687 = vst.msk [vmem:[%s4685 + $0x8] sm:$0xf] %vm4056, %v4682
        %v4688 = vld [vmem:[#allocation5] sm:$0xff]
        %v4689 = vld [vmem:[#allocation5 + $0x8] sm:$0xf]
        %4691 = vset.pattern.permute.xlu0 0
        %4692 = vperm.xlu0 %4691, %v4590
        %v4693 = vpop.permute.xlu0 %4692
        %4696 = vset.pattern.permute.xlu0 0
        %4697 = vperm.xlu0 %4696, %v4591
        %v4698 = vpop.permute.xlu0 %4697
        %v4700 = vmul.f32 %v4693, %v4688
        %v4701 = vmul.f32 %v4698, %v4689
        %v4702 = vadd.f32 %v4700, 0.0
        %v4703 = vadd.f32 %v4701, 0.0
        %4704 = vset.pattern.permute.xlu0 1
        %4705 = vperm.xlu0 %4704, %v4590
        %v4706 = vpop.permute.xlu0 %4705
        %4708 = vset.pattern.permute.xlu0 1
        %4709 = vperm.xlu0 %4708, %v4591
        %v4710 = vpop.permute.xlu0 %4709
        %v4712 = vmul.f32 %v4706, %v4688
        %v4713 = vmul.f32 %v4710, %v4689
        %4716 = vrot.lane.b32.xlu0 %v4712, 127
        %v4717 = vpop.permute.xlu0 %4716
        %4718 = vrot.lane.b32.xlu0 %v4713, 127
        %v4719 = vpop.permute.xlu0 %4718
        %v4722 = vadd.f32 %v4702, %v4717
        %v4723 = vadd.f32 %v4703, %v4719
        %v4724 = vld [vmem:[%s4622] sm:$0xff]
        %v4725 = vld [vmem:[%s4622 + $0x8] sm:$0xf]
        %4726 = vset.pattern.permute.xlu0 2
        %4727 = vperm.xlu0 %4726, %v4590
        %v4728 = vpop.permute.xlu0 %4727
        %4730 = vset.pattern.permute.xlu0 2
        %4731 = vperm.xlu0 %4730, %v4591
        %v4732 = vpop.permute.xlu0 %4731
        %v4734 = vmul.f32 %v4728, %v4724
        %v4735 = vmul.f32 %v4732, %v4725
        %v4736 = vadd.f32 %v4722, %v4734
        %v4737 = vadd.f32 %v4723, %v4735
        %4738 = vset.pattern.permute.xlu0 3
        %4739 = vperm.xlu0 %4738, %v4590
        %v4740 = vpop.permute.xlu0 %4739
        %4742 = vset.pattern.permute.xlu0 3
        %4743 = vperm.xlu0 %4742, %v4591
        %v4744 = vpop.permute.xlu0 %4743
        %v4746 = vmul.f32 %v4740, %v4724
        %v4747 = vmul.f32 %v4744, %v4725
        %4750 = vrot.lane.b32.xlu0 %v4746, 127
        %v4751 = vpop.permute.xlu0 %4750
        %4752 = vrot.lane.b32.xlu0 %v4747, 127
        %v4753 = vpop.permute.xlu0 %4752
        %v4756 = vadd.f32 %v4736, %v4751
        %v4757 = vadd.f32 %v4737, %v4753
        %4759 = vset.pattern.permute.xlu0 0
        %4760 = vperm.xlu0 %4759, %v4592
        %v4761 = vpop.permute.xlu0 %4760
        %4764 = vset.pattern.permute.xlu0 0
        %4765 = vperm.xlu0 %4764, %v4593
        %v4766 = vpop.permute.xlu0 %4765
        %v4768 = vadd.f32 %v4756, %v4761
        %v4769 = vadd.f32 %v4757, %v4766
        %4770 = vst.msk [vmem:[#allocation6 + $0x18] sm:$0xff] %vm3612, %v4768
        %4771 = vst.msk [vmem:[#allocation6 + $0x20] sm:$0xf] %vm3614, %v4769
        %v4772 = vld [vmem:[%s4622] sm:$0xff]
        %v4773 = vld [vmem:[%s4622 + $0x8] sm:$0xf]
        %v4774 = vmul.f32 %v4693, %v4772
        %v4775 = vmul.f32 %v4698, %v4773
        %v4776 = vadd.f32 %v4774, 0.0
        %v4777 = vadd.f32 %v4775, 0.0
        %v4778 = vmul.f32 %v4706, %v4772
        %v4779 = vmul.f32 %v4710, %v4773
        %4782 = vrot.lane.b32.xlu0 %v4778, 127
        %v4783 = vpop.permute.xlu0 %4782
        %4784 = vrot.lane.b32.xlu0 %v4779, 127
        %v4785 = vpop.permute.xlu0 %4784
        %v4788 = vadd.f32 %v4776, %v4783
        %v4789 = vadd.f32 %v4777, %v4785
        %v4790 = vld [vmem:[%s4631] sm:$0xff]
        %v4791 = vld [vmem:[%s4631 + $0x8] sm:$0xf]
        %v4792 = vmul.f32 %v4728, %v4790
        %v4793 = vmul.f32 %v4732, %v4791
        %v4794 = vadd.f32 %v4788, %v4792
        %v4795 = vadd.f32 %v4789, %v4793
        %v4796 = vmul.f32 %v4740, %v4790
        %v4797 = vmul.f32 %v4744, %v4791
        %4800 = vrot.lane.b32.xlu0 %v4796, 127
        %v4801 = vpop.permute.xlu0 %4800
        %4802 = vrot.lane.b32.xlu0 %v4797, 127
        %v4803 = vpop.permute.xlu0 %4802
        %v4806 = vadd.f32 %v4794, %v4801
        %v4807 = vadd.f32 %v4795, %v4803
        %v4808 = vadd.f32 %v4806, %v4761
        %v4809 = vadd.f32 %v4807, %v4766
        %4812 = vrot.lane.b32.xlu0 %v4808, 9
        %v4813 = vpop.permute.xlu0 %4812
        %4814 = vrot.lane.b32.xlu0 %v4809, 9
        %v4815 = vpop.permute.xlu0 %4814
        %4818 = vst.msk [vmem:[#allocation6 + $0x18] sm:$0xff] %vm3663, %v4813
        %4819 = vst.msk [vmem:[#allocation6 + $0x20] sm:$0xf] %vm3665, %v4815
        %v4820 = vld [vmem:[%s4631] sm:$0xff]
        %v4821 = vld [vmem:[%s4631 + $0x8] sm:$0xf]
        %v4822 = vmul.f32 %v4693, %v4820
        %v4823 = vmul.f32 %v4698, %v4821
        %v4824 = vadd.f32 %v4822, 0.0
        %v4825 = vadd.f32 %v4823, 0.0
        %v4826 = vmul.f32 %v4706, %v4820
        %v4827 = vmul.f32 %v4710, %v4821
        %4830 = vrot.lane.b32.xlu0 %v4826, 127
        %v4831 = vpop.permute.xlu0 %4830
        %4832 = vrot.lane.b32.xlu0 %v4827, 127
        %v4833 = vpop.permute.xlu0 %4832
        %v4836 = vadd.f32 %v4824, %v4831
        %v4837 = vadd.f32 %v4825, %v4833
        %v4838 = vld [vmem:[%s4640] sm:$0xff]
        %v4839 = vld [vmem:[%s4640 + $0x8] sm:$0xf]
        %v4840 = vmul.f32 %v4728, %v4838
        %v4841 = vmul.f32 %v4732, %v4839
        %v4842 = vadd.f32 %v4836, %v4840
        %v4843 = vadd.f32 %v4837, %v4841
        %v4844 = vmul.f32 %v4740, %v4838
        %v4845 = vmul.f32 %v4744, %v4839
        %4848 = vrot.lane.b32.xlu0 %v4844, 127
        %v4849 = vpop.permute.xlu0 %4848
        %4850 = vrot.lane.b32.xlu0 %v4845, 127
        %v4851 = vpop.permute.xlu0 %4850
        %v4854 = vadd.f32 %v4842, %v4849
        %v4855 = vadd.f32 %v4843, %v4851
        %v4856 = vadd.f32 %v4854, %v4761
        %v4857 = vadd.f32 %v4855, %v4766
        %4860 = vrot.lane.b32.xlu0 %v4856, 18
        %v4861 = vpop.permute.xlu0 %4860
        %4862 = vrot.lane.b32.xlu0 %v4857, 18
        %v4863 = vpop.permute.xlu0 %4862
        %4866 = vst.msk [vmem:[#allocation6 + $0x18] sm:$0xff] %vm3713, %v4861
        %4867 = vst.msk [vmem:[#allocation6 + $0x20] sm:$0xf] %vm3715, %v4863
        %v4868 = vld [vmem:[%s4640] sm:$0xff]
        %v4869 = vld [vmem:[%s4640 + $0x8] sm:$0xf]
        %v4870 = vmul.f32 %v4693, %v4868
        %v4871 = vmul.f32 %v4698, %v4869
        %v4872 = vadd.f32 %v4870, 0.0
        %v4873 = vadd.f32 %v4871, 0.0
        %v4874 = vmul.f32 %v4706, %v4868
        %v4875 = vmul.f32 %v4710, %v4869
        %4878 = vrot.lane.b32.xlu0 %v4874, 127
        %v4879 = vpop.permute.xlu0 %4878
        %4880 = vrot.lane.b32.xlu0 %v4875, 127
        %v4881 = vpop.permute.xlu0 %4880
        %v4884 = vadd.f32 %v4872, %v4879
        %v4885 = vadd.f32 %v4873, %v4881
        %v4886 = vld [vmem:[%s4649] sm:$0xff]
        %v4887 = vld [vmem:[%s4649 + $0x8] sm:$0xf]
        %v4888 = vmul.f32 %v4728, %v4886
        %v4889 = vmul.f32 %v4732, %v4887
        %v4890 = vadd.f32 %v4884, %v4888
        %v4891 = vadd.f32 %v4885, %v4889
        %v4892 = vmul.f32 %v4740, %v4886
        %v4893 = vmul.f32 %v4744, %v4887
        %4896 = vrot.lane.b32.xlu0 %v4892, 127
        %v4897 = vpop.permute.xlu0 %4896
        %4898 = vrot.lane.b32.xlu0 %v4893, 127
        %v4899 = vpop.permute.xlu0 %4898
        %v4902 = vadd.f32 %v4890, %v4897
        %v4903 = vadd.f32 %v4891, %v4899
        %v4904 = vadd.f32 %v4902, %v4761
        %v4905 = vadd.f32 %v4903, %v4766
        %4908 = vrot.lane.b32.xlu0 %v4904, 27
        %v4909 = vpop.permute.xlu0 %4908
        %4910 = vrot.lane.b32.xlu0 %v4905, 27
        %v4911 = vpop.permute.xlu0 %4910
        %4914 = vst.msk [vmem:[#allocation6 + $0x18] sm:$0xff] %vm3763, %v4909
        %4915 = vst.msk [vmem:[#allocation6 + $0x20] sm:$0xf] %vm3765, %v4911
        %v4916 = vld [vmem:[%s4649] sm:$0xff]
        %v4917 = vld [vmem:[%s4649 + $0x8] sm:$0xf]
        %v4918 = vmul.f32 %v4693, %v4916
        %v4919 = vmul.f32 %v4698, %v4917
        %v4920 = vadd.f32 %v4918, 0.0
        %v4921 = vadd.f32 %v4919, 0.0
        %v4922 = vmul.f32 %v4706, %v4916
        %v4923 = vmul.f32 %v4710, %v4917
        %4926 = vrot.lane.b32.xlu0 %v4922, 127
        %v4927 = vpop.permute.xlu0 %4926
        %4928 = vrot.lane.b32.xlu0 %v4923, 127
        %v4929 = vpop.permute.xlu0 %4928
        %v4932 = vadd.f32 %v4920, %v4927
        %v4933 = vadd.f32 %v4921, %v4929
        %v4934 = vld [vmem:[%s4658] sm:$0xff]
        %v4935 = vld [vmem:[%s4658 + $0x8] sm:$0xf]
        %v4936 = vmul.f32 %v4728, %v4934
        %v4937 = vmul.f32 %v4732, %v4935
        %v4938 = vadd.f32 %v4932, %v4936
        %v4939 = vadd.f32 %v4933, %v4937
        %v4940 = vmul.f32 %v4740, %v4934
        %v4941 = vmul.f32 %v4744, %v4935
        %4944 = vrot.lane.b32.xlu0 %v4940, 127
        %v4945 = vpop.permute.xlu0 %4944
        %4946 = vrot.lane.b32.xlu0 %v4941, 127
        %v4947 = vpop.permute.xlu0 %4946
        %v4950 = vadd.f32 %v4938, %v4945
        %v4951 = vadd.f32 %v4939, %v4947
        %v4952 = vadd.f32 %v4950, %v4761
        %v4953 = vadd.f32 %v4951, %v4766
        %4956 = vrot.lane.b32.xlu0 %v4952, 36
        %v4957 = vpop.permute.xlu0 %4956
        %4958 = vrot.lane.b32.xlu0 %v4953, 36
        %v4959 = vpop.permute.xlu0 %4958
        %4962 = vst.msk [vmem:[#allocation6 + $0x18] sm:$0xff] %vm3813, %v4957
        %4963 = vst.msk [vmem:[#allocation6 + $0x20] sm:$0xf] %vm3815, %v4959
        %v4964 = vld [vmem:[%s4658] sm:$0xff]
        %v4965 = vld [vmem:[%s4658 + $0x8] sm:$0xf]
        %v4966 = vmul.f32 %v4693, %v4964
        %v4967 = vmul.f32 %v4698, %v4965
        %v4968 = vadd.f32 %v4966, 0.0
        %v4969 = vadd.f32 %v4967, 0.0
        %v4970 = vmul.f32 %v4706, %v4964
        %v4971 = vmul.f32 %v4710, %v4965
        %4974 = vrot.lane.b32.xlu0 %v4970, 127
        %v4975 = vpop.permute.xlu0 %4974
        %4976 = vrot.lane.b32.xlu0 %v4971, 127
        %v4977 = vpop.permute.xlu0 %4976
        %v4980 = vadd.f32 %v4968, %v4975
        %v4981 = vadd.f32 %v4969, %v4977
        %v4982 = vld [vmem:[%s4667] sm:$0xff]
        %v4983 = vld [vmem:[%s4667 + $0x8] sm:$0xf]
        %v4984 = vmul.f32 %v4728, %v4982
        %v4985 = vmul.f32 %v4732, %v4983
        %v4986 = vadd.f32 %v4980, %v4984
        %v4987 = vadd.f32 %v4981, %v4985
        %v4988 = vmul.f32 %v4740, %v4982
        %v4989 = vmul.f32 %v4744, %v4983
        %4992 = vrot.lane.b32.xlu0 %v4988, 127
        %v4993 = vpop.permute.xlu0 %4992
        %4994 = vrot.lane.b32.xlu0 %v4989, 127
        %v4995 = vpop.permute.xlu0 %4994
        %v4998 = vadd.f32 %v4986, %v4993
        %v4999 = vadd.f32 %v4987, %v4995
        %v5000 = vadd.f32 %v4998, %v4761
        %v5001 = vadd.f32 %v4999, %v4766
        %5004 = vrot.lane.b32.xlu0 %v5000, 45
        %v5005 = vpop.permute.xlu0 %5004
        %5006 = vrot.lane.b32.xlu0 %v5001, 45
        %v5007 = vpop.permute.xlu0 %5006
        %5010 = vst.msk [vmem:[#allocation6 + $0x18] sm:$0xff] %vm3863, %v5005
        %5011 = vst.msk [vmem:[#allocation6 + $0x20] sm:$0xf] %vm3865, %v5007
        %v5012 = vld [vmem:[%s4667] sm:$0xff]
        %v5013 = vld [vmem:[%s4667 + $0x8] sm:$0xf]
        %v5014 = vmul.f32 %v4693, %v5012
        %v5015 = vmul.f32 %v4698, %v5013
        %v5016 = vadd.f32 %v5014, 0.0
        %v5017 = vadd.f32 %v5015, 0.0
        %v5018 = vmul.f32 %v4706, %v5012
        %v5019 = vmul.f32 %v4710, %v5013
        %5022 = vrot.lane.b32.xlu0 %v5018, 127
        %v5023 = vpop.permute.xlu0 %5022
        %5024 = vrot.lane.b32.xlu0 %v5019, 127
        %v5025 = vpop.permute.xlu0 %5024
        %v5028 = vadd.f32 %v5016, %v5023
        %v5029 = vadd.f32 %v5017, %v5025
        %v5030 = vld [vmem:[%s4676] sm:$0xff]
        %v5031 = vld [vmem:[%s4676 + $0x8] sm:$0xf]
        %v5032 = vmul.f32 %v4728, %v5030
        %v5033 = vmul.f32 %v4732, %v5031
        %v5034 = vadd.f32 %v5028, %v5032
        %v5035 = vadd.f32 %v5029, %v5033
        %v5036 = vmul.f32 %v4740, %v5030
        %v5037 = vmul.f32 %v4744, %v5031
        %5040 = vrot.lane.b32.xlu0 %v5036, 127
        %v5041 = vpop.permute.xlu0 %5040
        %5042 = vrot.lane.b32.xlu0 %v5037, 127
        %v5043 = vpop.permute.xlu0 %5042
        %v5046 = vadd.f32 %v5034, %v5041
        %v5047 = vadd.f32 %v5035, %v5043
        %v5048 = vadd.f32 %v5046, %v4761
        %v5049 = vadd.f32 %v5047, %v4766
        %5052 = vrot.lane.b32.xlu0 %v5048, 54
        %v5053 = vpop.permute.xlu0 %5052
        %5054 = vrot.lane.b32.xlu0 %v5049, 54
        %v5055 = vpop.permute.xlu0 %5054
        %5058 = vst.msk [vmem:[#allocation6 + $0x18] sm:$0xff] %vm3913, %v5053
        %5059 = vst.msk [vmem:[#allocation6 + $0x20] sm:$0xf] %vm3915, %v5055
        %v5060 = vld [vmem:[%s4676] sm:$0xff]
        %v5061 = vld [vmem:[%s4676 + $0x8] sm:$0xf]
        %v5062 = vmul.f32 %v4693, %v5060
        %v5063 = vmul.f32 %v4698, %v5061
        %v5064 = vadd.f32 %v5062, 0.0
        %v5065 = vadd.f32 %v5063, 0.0
        %v5066 = vmul.f32 %v4706, %v5060
        %v5067 = vmul.f32 %v4710, %v5061
        %5070 = vrot.lane.b32.xlu0 %v5066, 127
        %v5071 = vpop.permute.xlu0 %5070
        %5072 = vrot.lane.b32.xlu0 %v5067, 127
        %v5073 = vpop.permute.xlu0 %5072
        %v5076 = vadd.f32 %v5064, %v5071
        %v5077 = vadd.f32 %v5065, %v5073
        %v5078 = vld [vmem:[%s4685] sm:$0xff]
        %v5079 = vld [vmem:[%s4685 + $0x8] sm:$0xf]
        %v5080 = vmul.f32 %v4728, %v5078
        %v5081 = vmul.f32 %v4732, %v5079
        %v5082 = vadd.f32 %v5076, %v5080
        %v5083 = vadd.f32 %v5077, %v5081
        %v5084 = vmul.f32 %v4740, %v5078
        %v5085 = vmul.f32 %v4744, %v5079
        %5088 = vrot.lane.b32.xlu0 %v5084, 127
        %v5089 = vpop.permute.xlu0 %5088
        %5090 = vrot.lane.b32.xlu0 %v5085, 127
        %v5091 = vpop.permute.xlu0 %5090
        %v5094 = vadd.f32 %v5082, %v5089
        %v5095 = vadd.f32 %v5083, %v5091
        %v5096 = vadd.f32 %v5094, %v4761
        %v5097 = vadd.f32 %v5095, %v4766
        %5100 = vrot.lane.b32.xlu0 %v5096, 63
        %v5101 = vpop.permute.xlu0 %5100
        %5102 = vrot.lane.b32.xlu0 %v5097, 63
        %v5103 = vpop.permute.xlu0 %5102
        %5106 = vst.msk [vmem:[#allocation6 + $0x18] sm:$0xff] %vm3964, %v5101
        %5107 = vst.msk [vmem:[#allocation6 + $0x20] sm:$0xf] %vm3966, %v5103
        %v5108 = vld [vmem:[%s4685] sm:$0xff]
        %v5109 = vld [vmem:[%s4685 + $0x8] sm:$0xf]
        %v5110 = vmul.f32 %v4693, %v5108
        %v5111 = vmul.f32 %v4698, %v5109
        %v5112 = vadd.f32 %v5110, 0.0
        %v5113 = vadd.f32 %v5111, 0.0
        %v5114 = vmul.f32 %v4706, %v5108
        %v5115 = vmul.f32 %v4710, %v5109
        %5118 = vrot.lane.b32.xlu0 %v5114, 127
        %v5119 = vpop.permute.xlu0 %5118
        %5120 = vrot.lane.b32.xlu0 %v5115, 127
        %v5121 = vpop.permute.xlu0 %5120
        %v5124 = vadd.f32 %v5112, %v5119
        %v5125 = vadd.f32 %v5113, %v5121
        %s5126 = scalar_lea.vmem [#allocation5], 144
        %v5127 = vld [vmem:[%s5126] sm:$0xff]
        %v5128 = vld [vmem:[%s5126 + $0x8] sm:$0xf]
        %v5129 = vmul.f32 %v4728, %v5127
        %v5130 = vmul.f32 %v4732, %v5128
        %v5131 = vadd.f32 %v5124, %v5129
        %v5132 = vadd.f32 %v5125, %v5130
        %v5133 = vmul.f32 %v4740, %v5127
        %v5134 = vmul.f32 %v4744, %v5128
        %5137 = vrot.lane.b32.xlu0 %v5133, 127
        %v5138 = vpop.permute.xlu0 %5137
        %5139 = vrot.lane.b32.xlu0 %v5134, 127
        %v5140 = vpop.permute.xlu0 %5139
        %v5143 = vadd.f32 %v5131, %v5138
        %v5144 = vadd.f32 %v5132, %v5140
        %v5145 = vadd.f32 %v5143, %v4761
        %v5146 = vadd.f32 %v5144, %v4766
        %5149 = vrot.lane.b32.xlu0 %v5145, 72
        %v5150 = vpop.permute.xlu0 %5149
        %5151 = vrot.lane.b32.xlu0 %v5146, 72
        %v5152 = vpop.permute.xlu0 %5151
        %5155 = vst.msk [vmem:[#allocation6 + $0x18] sm:$0xff] %vm4015, %v5150
        %5156 = vst.msk [vmem:[#allocation6 + $0x20] sm:$0xf] %vm4017, %v5152
        %v5157 = vld [vmem:[%s55] sm:$0xff]
        %v5158 = vld [vmem:[%s55 + $0x8] sm:$0xff]
        %v5159 = vld [vmem:[%s55 + $0x10] sm:$0xff]
        %v5160 = vld [vmem:[%s55 + $0x18] sm:$0xff]
        %v5161 = vld [vmem:[%s55 + $0x20] sm:$0xf]
        %v5162 = vld [vmem:[#allocation6] sm:$0xff]
        %v5163 = vld [vmem:[#allocation6 + $0x8] sm:$0xff]
        %v5164 = vld [vmem:[#allocation6 + $0x10] sm:$0xff]
        %v5165 = vld [vmem:[#allocation6 + $0x18] sm:$0xff]
        %v5166 = vld [vmem:[#allocation6 + $0x20] sm:$0xf]
        %v5167 = vld [vmem:[%s57] sm:$0xff]
        %v5168 = vld [vmem:[%s57 + $0x8] sm:$0xff]
        %v5169 = vld [vmem:[%s57 + $0x10] sm:$0xff]
        %v5170 = vld [vmem:[%s57 + $0x18] sm:$0xff]
        %v5171 = vld [vmem:[%s57 + $0x20] sm:$0xf]
        %5173 = vset.pattern.permute.xlu0 0
        %5174 = vperm.xlu0 %5173, %v5167
        %v5175 = vpop.permute.xlu0 %5174
        %5178 = vset.pattern.permute.xlu0 0
        %5179 = vperm.xlu0 %5178, %v5168
        %v5180 = vpop.permute.xlu0 %5179
        %5183 = vset.pattern.permute.xlu0 0
        %5184 = vperm.xlu0 %5183, %v5169
        %v5185 = vpop.permute.xlu0 %5184
        %5188 = vset.pattern.permute.xlu0 0
        %5189 = vperm.xlu0 %5188, %v5170
        %v5190 = vpop.permute.xlu0 %5189
        %5193 = vset.pattern.permute.xlu0 0
        %5194 = vperm.xlu0 %5193, %v5171
        %v5195 = vpop.permute.xlu0 %5194
        %v5198 = vsel %vm1539, %v5157, 0
        %v5201 = vsel %vm1539, %v5158, 0
        %v5204 = vsel %vm1539, %v5159, 0
        %v5207 = vsel %vm1539, %v5160, 0
        %v5210 = vsel %vm1539, %v5161, 0
        %v5213 = vsel %vm1451, %v5166, 0
        %5215 = vmatpush.msra.mxu0 0.0
        %5216 = vmatpush.msra.mxu0 0.0
        %5217 = vmatpush.msra.mxu0 0.0
        %5218 = vmatpush.msra.mxu0 0.0
        %5219 = vmatpush.msra.mxu0 0.0
        %5220 = vmatpush.msra.mxu0 0.0
        %5221 = vmatpush.msra.mxu0 0.0
        %5222 = vmatpush.msra.mxu0 0.0
        %5223 = vmatpush.msra.mxu0 0.0
        %5224 = vmatpush.msra.mxu0 0.0
        %5225 = vmatpush.msra.mxu0 0.0
        %5226 = vmatpush.msra.mxu0 %v5213
        %5227 = vmatpush.msra.mxu0 %v5165
        %5228 = vmatpush.msra.mxu0 %v5164
        %5229 = vmatpush.msra.mxu0 %v5163
        %5230 = vmatpush.msra.mxu0 %v5162
        %5231 = vmatmul.f32.gmra.mxu0 %v5198
        %v5232 = vpop.f32.mrf.mxu0
        %v5233 = vadd.f32 %v5175, %v5232
        %5234 = vmatmul.f32.gmra.mxu0 %v5201
        %v5235 = vpop.f32.mrf.mxu0
        %v5236 = vadd.f32 %v5180, %v5235
        %5237 = vmatmul.f32.gmra.mxu0 %v5204
        %v5238 = vpop.f32.mrf.mxu0
        %v5239 = vadd.f32 %v5185, %v5238
        %5240 = vmatmul.f32.gmra.mxu0 %v5207
        %v5241 = vpop.f32.mrf.mxu0
        %v5242 = vadd.f32 %v5190, %v5241
        %5243 = vmatmul.f32.gmra.mxu0 %v5210
        %v5244 = vpop.f32.mrf.mxu0
        %v5245 = vadd.f32 %v5195, %v5244
        %5246 = vdwg.mxu0
        %v5247 = vld [vmem:[%s59] sm:$0xff]
        %v5248 = vld [vmem:[%s59 + $0x8] sm:$0xff]
        %v5249 = vld [vmem:[%s59 + $0x10] sm:$0xff]
        %v5250 = vld [vmem:[%s59 + $0x18] sm:$0xff]
        %v5251 = vld [vmem:[%s59 + $0x20] sm:$0xf]
        %v5252 = vld [vmem:[%s61] sm:$0xff]
        %v5253 = vld [vmem:[%s61 + $0x8] sm:$0xff]
        %v5254 = vld [vmem:[%s61 + $0x10] sm:$0xff]
        %v5255 = vld [vmem:[%s61 + $0x18] sm:$0xff]
        %v5256 = vld [vmem:[%s61 + $0x20] sm:$0xf]
        %v5257 = vld [vmem:[%s63] sm:$0xff]
        %v5258 = vld [vmem:[%s63 + $0x8] sm:$0xff]
        %v5259 = vld [vmem:[%s63 + $0x10] sm:$0xff]
        %v5260 = vld [vmem:[%s63 + $0x18] sm:$0xff]
        %v5261 = vld [vmem:[%s63 + $0x20] sm:$0xf]
        %vm5262 = vcmask 662528
        %v5263 = vsel %vm5262, %v5233, 0.0
        %5264 = vadd.xlane.f32.xlu0 %v5263
        %v5265 = vpop.xlane.xlu0 %5264
        %v5266 = vsel %vm5262, %v5236, 0.0
        %5267 = vadd.xlane.f32.xlu0 %v5266
        %v5268 = vpop.xlane.xlu0 %5267
        %v5269 = vsel %vm5262, %v5239, 0.0
        %5270 = vadd.xlane.f32.xlu0 %v5269
        %v5271 = vpop.xlane.xlu0 %5270
        %v5272 = vsel %vm5262, %v5242, 0.0
        %5273 = vadd.xlane.f32.xlu0 %v5272
        %v5274 = vpop.xlane.xlu0 %5273
        %vm5275 = vcmask 658432
        %v5276 = vsel %vm5275, %v5245, 0.0
        %5277 = vadd.xlane.f32.xlu0 %v5276
        %v5278 = vpop.xlane.xlu0 %5277
        %v5279 = vmul.f32 %v5233, %v5233
        %v5280 = vmul.f32 %v5236, %v5236
        %v5281 = vmul.f32 %v5239, %v5239
        %v5282 = vmul.f32 %v5242, %v5242
        %v5283 = vmul.f32 %v5245, %v5245
        %v5284 = vsel %vm5262, %v5279, 0.0
        %5285 = vadd.xlane.f32.xlu0 %v5284
        %v5286 = vpop.xlane.xlu0 %5285
        %v5287 = vsel %vm5262, %v5280, 0.0
        %5288 = vadd.xlane.f32.xlu0 %v5287
        %v5289 = vpop.xlane.xlu0 %5288
        %v5290 = vsel %vm5262, %v5281, 0.0
        %5291 = vadd.xlane.f32.xlu0 %v5290
        %v5292 = vpop.xlane.xlu0 %5291
        %v5293 = vsel %vm5262, %v5282, 0.0
        %5294 = vadd.xlane.f32.xlu0 %v5293
        %v5295 = vpop.xlane.xlu0 %5294
        %v5296 = vsel %vm5275, %v5283, 0.0
        %5297 = vadd.xlane.f32.xlu0 %v5296
        %v5298 = vpop.xlane.xlu0 %5297
        %v5300 = vsel %vm1539, %v5257, 0
        %v5303 = vsel %vm1539, %v5258, 0
        %v5306 = vsel %vm1539, %v5259, 0
        %v5309 = vsel %vm1539, %v5260, 0
        %v5312 = vsel %vm1539, %v5261, 0
        %v5315 = vsel %vm1451, %v5278, 0
        %5317 = vmatpush.msra.mxu0 0.0
        %5318 = vmatpush.msra.mxu0 0.0
        %5319 = vmatpush.msra.mxu0 0.0
        %5320 = vmatpush.msra.mxu0 0.0
        %5321 = vmatpush.msra.mxu0 0.0
        %5322 = vmatpush.msra.mxu0 0.0
        %5323 = vmatpush.msra.mxu0 0.0
        %5324 = vmatpush.msra.mxu0 0.0
        %5325 = vmatpush.msra.mxu0 0.0
        %5326 = vmatpush.msra.mxu0 0.0
        %5327 = vmatpush.msra.mxu0 0.0
        %5328 = vmatpush.msra.mxu0 %v5315
        %5329 = vmatpush.msra.mxu0 %v5274
        %5330 = vmatpush.msra.mxu0 %v5271
        %5331 = vmatpush.msra.mxu0 %v5268
        %5332 = vmatpush.msra.mxu0 %v5265
        %5333 = vmatmul.f32.gmra.mxu0 %v5300
        %v5334 = vpop.f32.mrf.mxu0
        %v5335 = vadd.f32 0.0, %v5334
        %5336 = vmatmul.f32.gmra.mxu0 %v5303
        %v5337 = vpop.f32.mrf.mxu0
        %v5338 = vadd.f32 0.0, %v5337
        %5339 = vmatmul.f32.gmra.mxu0 %v5306
        %v5340 = vpop.f32.mrf.mxu0
        %v5341 = vadd.f32 0.0, %v5340
        %5342 = vmatmul.f32.gmra.mxu0 %v5309
        %v5343 = vpop.f32.mrf.mxu0
        %v5344 = vadd.f32 0.0, %v5343
        %5345 = vmatmul.f32.gmra.mxu0 %v5312
        %v5346 = vpop.f32.mrf.mxu0
        %v5347 = vadd.f32 0.0, %v5346
        %5348 = vdwg.mxu0
        %v5349 = vmul.f32 %v5335, 0.004115226
        %v5350 = vmul.f32 %v5338, 0.004115226
        %v5351 = vmul.f32 %v5341, 0.004115226
        %v5352 = vmul.f32 %v5344, 0.004115226
        %v5353 = vmul.f32 %v5347, 0.004115226
        %v5355 = vsel %vm1451, %v5298, 0
        %5357 = vmatpush.msra.mxu0 0.0
        %5358 = vmatpush.msra.mxu0 0.0
        %5359 = vmatpush.msra.mxu0 0.0
        %5360 = vmatpush.msra.mxu0 0.0
        %5361 = vmatpush.msra.mxu0 0.0
        %5362 = vmatpush.msra.mxu0 0.0
        %5363 = vmatpush.msra.mxu0 0.0
        %5364 = vmatpush.msra.mxu0 0.0
        %5365 = vmatpush.msra.mxu0 0.0
        %5366 = vmatpush.msra.mxu0 0.0
        %5367 = vmatpush.msra.mxu0 0.0
        %5368 = vmatpush.msra.mxu0 %v5355
        %5369 = vmatpush.msra.mxu0 %v5295
        %5370 = vmatpush.msra.mxu0 %v5292
        %5371 = vmatpush.msra.mxu0 %v5289
        %5372 = vmatpush.msra.mxu0 %v5286
        %5373 = vmatmul.f32.gmra.mxu0 %v5300
        %v5374 = vpop.f32.mrf.mxu0
        %v5375 = vadd.f32 0.0, %v5374
        %5376 = vmatmul.f32.gmra.mxu0 %v5303
        %v5377 = vpop.f32.mrf.mxu0
        %v5378 = vadd.f32 0.0, %v5377
        %5379 = vmatmul.f32.gmra.mxu0 %v5306
        %v5380 = vpop.f32.mrf.mxu0
        %v5381 = vadd.f32 0.0, %v5380
        %5382 = vmatmul.f32.gmra.mxu0 %v5309
        %v5383 = vpop.f32.mrf.mxu0
        %v5384 = vadd.f32 0.0, %v5383
        %5385 = vmatmul.f32.gmra.mxu0 %v5312
        %v5386 = vpop.f32.mrf.mxu0
        %v5387 = vadd.f32 0.0, %v5386
        %5388 = vdwg.mxu0
        %v5389 = vmul.f32 %v5375, 0.004115226
        %v5390 = vmul.f32 %v5378, 0.004115226
        %v5391 = vmul.f32 %v5381, 0.004115226
        %v5392 = vmul.f32 %v5384, 0.004115226
        %v5393 = vmul.f32 %v5387, 0.004115226
        %v5394 = vmul.f32 %v5349, %v5349
        %v5395 = vmul.f32 %v5350, %v5350
        %v5396 = vmul.f32 %v5351, %v5351
        %v5397 = vmul.f32 %v5352, %v5352
        %v5398 = vmul.f32 %v5353, %v5353
        %v5399 = vsub.f32 %v5389, %v5394
        %v5400 = vsub.f32 %v5390, %v5395
        %v5401 = vsub.f32 %v5391, %v5396
        %v5402 = vsub.f32 %v5392, %v5397
        %v5403 = vsub.f32 %v5393, %v5398
        %v5404 = vadd.f32 %v5399, 1e-05
        %v5405 = vadd.f32 %v5400, 1e-05
        %v5406 = vadd.f32 %v5401, 1e-05
        %v5407 = vadd.f32 %v5402, 1e-05
        %v5408 = vadd.f32 %v5403, 1e-05
        %v5409 = vrsqrt.pop %v5404
        %v5410 = vmul.f32 %v5409, %v5404
        %v5411 = vmul.f32 %v5410, %v5409
        %v5412 = vmul.f32 0.5, %v5411
        %v5413 = vsub.f32 1.5, %v5412
        %v5414 = vmul.f32 %v5409, %v5413
        %vm5415 = vweird.f32 %v5404
        %vm5416 = vweird.f32 %v5409
        %vm5417 = vmor %vm5415, %vm5416
        %v5418 = vsel %vm5417, %v5409, %v5414
        %v5419 = vrsqrt.pop %v5405
        %v5420 = vmul.f32 %v5419, %v5405
        %v5421 = vmul.f32 %v5420, %v5419
        %v5422 = vmul.f32 0.5, %v5421
        %v5423 = vsub.f32 1.5, %v5422
        %v5424 = vmul.f32 %v5419, %v5423
        %vm5425 = vweird.f32 %v5405
        %vm5426 = vweird.f32 %v5419
        %vm5427 = vmor %vm5425, %vm5426
        %v5428 = vsel %vm5427, %v5419, %v5424
        %v5429 = vrsqrt.pop %v5406
        %v5430 = vmul.f32 %v5429, %v5406
        %v5431 = vmul.f32 %v5430, %v5429
        %v5432 = vmul.f32 0.5, %v5431
        %v5433 = vsub.f32 1.5, %v5432
        %v5434 = vmul.f32 %v5429, %v5433
        %vm5435 = vweird.f32 %v5406
        %vm5436 = vweird.f32 %v5429
        %vm5437 = vmor %vm5435, %vm5436
        %v5438 = vsel %vm5437, %v5429, %v5434
        %v5439 = vrsqrt.pop %v5407
        %v5440 = vmul.f32 %v5439, %v5407
        %v5441 = vmul.f32 %v5440, %v5439
        %v5442 = vmul.f32 0.5, %v5441
        %v5443 = vsub.f32 1.5, %v5442
        %v5444 = vmul.f32 %v5439, %v5443
        %vm5445 = vweird.f32 %v5407
        %vm5446 = vweird.f32 %v5439
        %vm5447 = vmor %vm5445, %vm5446
        %v5448 = vsel %vm5447, %v5439, %v5444
        %v5449 = vrsqrt.pop %v5408
        %v5450 = vmul.f32 %v5449, %v5408
        %v5451 = vmul.f32 %v5450, %v5449
        %v5452 = vmul.f32 0.5, %v5451
        %v5453 = vsub.f32 1.5, %v5452
        %v5454 = vmul.f32 %v5449, %v5453
        %vm5455 = vweird.f32 %v5408
        %vm5456 = vweird.f32 %v5449
        %vm5457 = vmor %vm5455, %vm5456
        %v5458 = vsel %vm5457, %v5449, %v5454
        %v5459 = vmul.f32 %v5247, %v5418
        %v5460 = vmul.f32 %v5248, %v5428
        %v5461 = vmul.f32 %v5249, %v5438
        %v5462 = vmul.f32 %v5250, %v5448
        %v5463 = vmul.f32 %v5251, %v5458
        %5465 = vset.pattern.permute.xlu0 0
        %5466 = vperm.xlu0 %5465, %v5459
        %v5467 = vpop.permute.xlu0 %5466
        %5470 = vset.pattern.permute.xlu0 0
        %5471 = vperm.xlu0 %5470, %v5460
        %v5472 = vpop.permute.xlu0 %5471
        %5475 = vset.pattern.permute.xlu0 0
        %5476 = vperm.xlu0 %5475, %v5461
        %v5477 = vpop.permute.xlu0 %5476
        %5480 = vset.pattern.permute.xlu0 0
        %5481 = vperm.xlu0 %5480, %v5462
        %v5482 = vpop.permute.xlu0 %5481
        %5485 = vset.pattern.permute.xlu0 0
        %5486 = vperm.xlu0 %5485, %v5463
        %v5487 = vpop.permute.xlu0 %5486
        %v5489 = vmul.f32 %v5233, %v5467
        %v5490 = vmul.f32 %v5236, %v5472
        %v5491 = vmul.f32 %v5239, %v5477
        %v5492 = vmul.f32 %v5242, %v5482
        %v5493 = vmul.f32 %v5245, %v5487
        %v5494 = vmul.f32 %v5349, %v5459
        %v5495 = vmul.f32 %v5350, %v5460
        %v5496 = vmul.f32 %v5351, %v5461
        %v5497 = vmul.f32 %v5352, %v5462
        %v5498 = vmul.f32 %v5353, %v5463
        %v5499 = vsub.f32 %v5252, %v5494
        %v5500 = vsub.f32 %v5253, %v5495
        %v5501 = vsub.f32 %v5254, %v5496
        %v5502 = vsub.f32 %v5255, %v5497
        %v5503 = vsub.f32 %v5256, %v5498
        %5505 = vset.pattern.permute.xlu0 0
        %5506 = vperm.xlu0 %5505, %v5499
        %v5507 = vpop.permute.xlu0 %5506
        %5510 = vset.pattern.permute.xlu0 0
        %5511 = vperm.xlu0 %5510, %v5500
        %v5512 = vpop.permute.xlu0 %5511
        %5515 = vset.pattern.permute.xlu0 0
        %5516 = vperm.xlu0 %5515, %v5501
        %v5517 = vpop.permute.xlu0 %5516
        %5520 = vset.pattern.permute.xlu0 0
        %5521 = vperm.xlu0 %5520, %v5502
        %v5522 = vpop.permute.xlu0 %5521
        %5525 = vset.pattern.permute.xlu0 0
        %5526 = vperm.xlu0 %5525, %v5503
        %v5527 = vpop.permute.xlu0 %5526
        %v5529 = vadd.f32 %v5489, %v5507
        %v5530 = vadd.f32 %v5490, %v5512
        %v5531 = vadd.f32 %v5491, %v5517
        %v5532 = vadd.f32 %v5492, %v5522
        %v5533 = vadd.f32 %v5493, %v5527
        %v5534 = vadd.f32 %v5529, 3.0
        %v5535 = vadd.f32 %v5530, 3.0
        %v5536 = vadd.f32 %v5531, 3.0
        %v5537 = vadd.f32 %v5532, 3.0
        %v5538 = vadd.f32 %v5533, 3.0
        %v5539 = vmax.f32 %v5534, 0.0
        %v5540 = vmax.f32 %v5535, 0.0
        %v5541 = vmax.f32 %v5536, 0.0
        %v5542 = vmax.f32 %v5537, 0.0
        %v5543 = vmax.f32 %v5538, 0.0
        %v5544 = vmin.f32 %v5539, 6.0
        %v5545 = vmin.f32 %v5540, 6.0
        %v5546 = vmin.f32 %v5541, 6.0
        %v5547 = vmin.f32 %v5542, 6.0
        %v5548 = vmin.f32 %v5543, 6.0
        %v5549 = vmul.f32 %v5529, %v5544
        %v5550 = vmul.f32 %v5530, %v5545
        %v5551 = vmul.f32 %v5531, %v5546
        %v5552 = vmul.f32 %v5532, %v5547
        %v5553 = vmul.f32 %v5533, %v5548
        %v5554 = vmul.f32 %v5549, 0.16666667
        %v5555 = vmul.f32 %v5550, 0.16666667
        %v5556 = vmul.f32 %v5551, 0.16666667
        %v5557 = vmul.f32 %v5552, 0.16666667
        %v5558 = vmul.f32 %v5553, 0.16666667
        %v5559 = vmax.f32 %v5529, 0.0
        %v5560 = vmax.f32 %v5530, 0.0
        %v5561 = vmax.f32 %v5531, 0.0
        %v5562 = vmax.f32 %v5532, 0.0
        %v5563 = vmax.f32 %v5533, 0.0
        %v5564 = vmin.f32 %v5559, 6.0
        %v5565 = vmin.f32 %v5560, 6.0
        %v5566 = vmin.f32 %v5561, 6.0
        %v5567 = vmin.f32 %v5562, 6.0
        %v5568 = vmin.f32 %v5563, 6.0
        %v5569 = vmin.f32 %v5529, 0.0
        %v5570 = vmin.f32 %v5530, 0.0
        %v5571 = vmin.f32 %v5531, 0.0
        %v5572 = vmin.f32 %v5532, 0.0
        %v5573 = vmin.f32 %v5533, 0.0
        %v5574 = vmul.f32 %v5569, 0.01
        %v5575 = vmul.f32 %v5570, 0.01
        %v5576 = vmul.f32 %v5571, 0.01
        %v5577 = vmul.f32 %v5572, 0.01
        %v5578 = vmul.f32 %v5573, 0.01
        %v5579 = vadd.f32 %v5564, %v5574
        %v5580 = vadd.f32 %v5565, %v5575
        %v5581 = vadd.f32 %v5566, %v5576
        %v5582 = vadd.f32 %v5567, %v5577
        %v5583 = vadd.f32 %v5568, %v5578
        %vm5584 = vcmp.ge.f32.partialorder %v5529, -3.0
        %vm5585 = vcmp.ge.f32.partialorder %v5530, -3.0
        %vm5586 = vcmp.ge.f32.partialorder %v5531, -3.0
        %vm5587 = vcmp.ge.f32.partialorder %v5532, -3.0
        %vm5588 = vcmp.ge.f32.partialorder %v5533, -3.0
        %vm5589 = vcmp.le.f32.partialorder %v5529, 3.0
        %vm5590 = vcmp.le.f32.partialorder %v5530, 3.0
        %vm5591 = vcmp.le.f32.partialorder %v5531, 3.0
        %vm5592 = vcmp.le.f32.partialorder %v5532, 3.0
        %vm5593 = vcmp.le.f32.partialorder %v5533, 3.0
        %vm5594 = vmand %vm5584, %vm5589
        %vm5595 = vmand %vm5585, %vm5590
        %vm5596 = vmand %vm5586, %vm5591
        %vm5597 = vmand %vm5587, %vm5592
        %vm5598 = vmand %vm5588, %vm5593
        %v5599 = vsel %vm5594, %v5554, %v5579
        %v5600 = vsel %vm5595, %v5555, %v5580
        %v5601 = vsel %vm5596, %v5556, %v5581
        %v5602 = vsel %vm5597, %v5557, %v5582
        %v5603 = vsel %vm5598, %v5558, %v5583
        %v5604 = vld [vmem:[%s65] sm:$0xff]
        %v5605 = vld [vmem:[%s65 + $0x8] sm:$0xff]
        %v5606 = vld [vmem:[%s65 + $0x10] sm:$0xff]
        %v5607 = vld [vmem:[%s65 + $0x18] sm:$0xff]
        %v5608 = vld [vmem:[%s65 + $0x20] sm:$0xf]
        %v5609 = vld [vmem:[#allocation37] sm:$0xff]
        %v5610 = vld [vmem:[#allocation37 + $0x8] sm:$0xf]
        %v5611 = vld [vmem:[%s69] sm:$0xff]
        %v5612 = vld [vmem:[%s69 + $0x8] sm:$0xff]
        %v5613 = vld [vmem:[%s69 + $0x10] sm:$0xff]
        %v5614 = vld [vmem:[%s69 + $0x18] sm:$0xff]
        %v5615 = vld [vmem:[%s69 + $0x20] sm:$0xf]
        %v5616 = vsel %vm5262, %v5599, 0.0
        %5617 = vadd.xlane.f32.xlu0 %v5616
        %v5618 = vpop.xlane.xlu0 %5617
        %v5619 = vsel %vm5262, %v5600, 0.0
        %5620 = vadd.xlane.f32.xlu0 %v5619
        %v5621 = vpop.xlane.xlu0 %5620
        %v5622 = vsel %vm5262, %v5601, 0.0
        %5623 = vadd.xlane.f32.xlu0 %v5622
        %v5624 = vpop.xlane.xlu0 %5623
        %v5625 = vsel %vm5262, %v5602, 0.0
        %5626 = vadd.xlane.f32.xlu0 %v5625
        %v5627 = vpop.xlane.xlu0 %5626
        %v5628 = vsel %vm5275, %v5603, 0.0
        %5629 = vadd.xlane.f32.xlu0 %v5628
        %v5630 = vpop.xlane.xlu0 %5629
        %v5631 = vmul.f32 %v5618, 0.012345679
        %v5632 = vmul.f32 %v5621, 0.012345679
        %v5633 = vmul.f32 %v5624, 0.012345679
        %v5634 = vmul.f32 %v5627, 0.012345679
        %v5635 = vmul.f32 %v5630, 0.012345679
        %v5637 = vsel %vm1539, %v5609, 0
        %v5640 = vsel %vm1539, %v5610, 0
        %v5643 = vsel %vm1451, %v5635, 0
        %5645 = vmatpush.msra.mxu0 0.0
        %5646 = vmatpush.msra.mxu0 0.0
        %5647 = vmatpush.msra.mxu0 0.0
        %5648 = vmatpush.msra.mxu0 0.0
        %5649 = vmatpush.msra.mxu0 0.0
        %5650 = vmatpush.msra.mxu0 0.0
        %5651 = vmatpush.msra.mxu0 0.0
        %5652 = vmatpush.msra.mxu0 0.0
        %5653 = vmatpush.msra.mxu0 0.0
        %5654 = vmatpush.msra.mxu0 0.0
        %5655 = vmatpush.msra.mxu0 0.0
        %5656 = vmatpush.msra.mxu0 %v5643
        %5657 = vmatpush.msra.mxu0 %v5634
        %5658 = vmatpush.msra.mxu0 %v5633
        %5659 = vmatpush.msra.mxu0 %v5632
        %5660 = vmatpush.msra.mxu0 %v5631
        %5661 = vmatmul.f32.gmra.mxu0 %v5637
        %v5662 = vpop.f32.mrf.mxu0
        %v5663 = vadd.f32 0.0, %v5662
        %5664 = vmatmul.f32.gmra.mxu0 %v5640
        %v5665 = vpop.f32.mrf.mxu0
        %v5666 = vadd.f32 0.0, %v5665
        %5667 = vdwg.mxu0
        %v5668 = vmax.f32 %v5663, 0.0
        %v5669 = vmax.f32 %v5666, 0.0
        %v5671 = vsel %vm1849, %v5611, 0
        %v5674 = vsel %vm1849, %v5612, 0
        %v5677 = vsel %vm1849, %v5613, 0
        %v5680 = vsel %vm1849, %v5614, 0
        %v5683 = vsel %vm1849, %v5615, 0
        %v5686 = vsel %vm1451, %v5669, 0
        %5688 = vmatpush.msra.mxu0 0.0
        %5689 = vmatpush.msra.mxu0 0.0
        %5690 = vmatpush.msra.mxu0 0.0
        %5691 = vmatpush.msra.mxu0 0.0
        %5692 = vmatpush.msra.mxu0 0.0
        %5693 = vmatpush.msra.mxu0 0.0
        %5694 = vmatpush.msra.mxu0 0.0
        %5695 = vmatpush.msra.mxu0 0.0
        %5696 = vmatpush.msra.mxu0 0.0
        %5697 = vmatpush.msra.mxu0 0.0
        %5698 = vmatpush.msra.mxu0 0.0
        %5699 = vmatpush.msra.mxu0 0.0
        %5700 = vmatpush.msra.mxu0 0.0
        %5701 = vmatpush.msra.mxu0 0.0
        %5702 = vmatpush.msra.mxu0 %v5686
        %5703 = vmatpush.msra.mxu0 %v5668
        %5704 = vmatmul.f32.gmra.mxu0 %v5671
        %v5705 = vpop.f32.mrf.mxu0
        %v5706 = vadd.f32 0.0, %v5705
        %5707 = vmatmul.f32.gmra.mxu0 %v5674
        %v5708 = vpop.f32.mrf.mxu0
        %v5709 = vadd.f32 0.0, %v5708
        %5710 = vmatmul.f32.gmra.mxu0 %v5677
        %v5711 = vpop.f32.mrf.mxu0
        %v5712 = vadd.f32 0.0, %v5711
        %5713 = vmatmul.f32.gmra.mxu0 %v5680
        %v5714 = vpop.f32.mrf.mxu0
        %v5715 = vadd.f32 0.0, %v5714
        %5716 = vmatmul.f32.gmra.mxu0 %v5683
        %v5717 = vpop.f32.mrf.mxu0
        %v5718 = vadd.f32 0.0, %v5717
        %5719 = vdwg.mxu0
        %v5720 = vmul.f32 %v5706, 0.16666667
        %v5721 = vmul.f32 %v5709, 0.16666667
        %v5722 = vmul.f32 %v5712, 0.16666667
        %v5723 = vmul.f32 %v5715, 0.16666667
        %v5724 = vmul.f32 %v5718, 0.16666667
        %v5725 = vadd.f32 %v5720, 0.5
        %v5726 = vadd.f32 %v5721, 0.5
        %v5727 = vadd.f32 %v5722, 0.5
        %v5728 = vadd.f32 %v5723, 0.5
        %v5729 = vadd.f32 %v5724, 0.5
        %v5730 = vmax.f32 %v5725, 0.0
        %v5731 = vmax.f32 %v5726, 0.0
        %v5732 = vmax.f32 %v5727, 0.0
        %v5733 = vmax.f32 %v5728, 0.0
        %v5734 = vmax.f32 %v5729, 0.0
        %v5735 = vmin.f32 %v5730, 1.0
        %v5736 = vmin.f32 %v5731, 1.0
        %v5737 = vmin.f32 %v5732, 1.0
        %v5738 = vmin.f32 %v5733, 1.0
        %v5739 = vmin.f32 %v5734, 1.0
        %v5741 = vsel %vm1539, %v5604, 0
        %v5744 = vsel %vm1539, %v5605, 0
        %v5747 = vsel %vm1539, %v5606, 0
        %v5750 = vsel %vm1539, %v5607, 0
        %v5753 = vsel %vm1539, %v5608, 0
        %v5756 = vsel %vm1451, %v5603, 0
        %5758 = vmatpush.msra.mxu0 0.0
        %5759 = vmatpush.msra.mxu0 0.0
        %5760 = vmatpush.msra.mxu0 0.0
        %5761 = vmatpush.msra.mxu0 0.0
        %5762 = vmatpush.msra.mxu0 0.0
        %5763 = vmatpush.msra.mxu0 0.0
        %5764 = vmatpush.msra.mxu0 0.0
        %5765 = vmatpush.msra.mxu0 0.0
        %5766 = vmatpush.msra.mxu0 0.0
        %5767 = vmatpush.msra.mxu0 0.0
        %5768 = vmatpush.msra.mxu0 0.0
        %5769 = vmatpush.msra.mxu0 %v5756
        %5770 = vmatpush.msra.mxu0 %v5602
        %5771 = vmatpush.msra.mxu0 %v5601
        %5772 = vmatpush.msra.mxu0 %v5600
        %5773 = vmatpush.msra.mxu0 %v5599
        %5774 = vmatmul.f32.gmra.mxu0 %v5741
        %v5775 = vpop.f32.mrf.mxu0
        %v5776 = vadd.f32 0.0, %v5775
        %5777 = vmatmul.f32.gmra.mxu0 %v5744
        %v5778 = vpop.f32.mrf.mxu0
        %v5779 = vadd.f32 0.0, %v5778
        %5780 = vmatmul.f32.gmra.mxu0 %v5747
        %v5781 = vpop.f32.mrf.mxu0
        %v5782 = vadd.f32 0.0, %v5781
        %5783 = vmatmul.f32.gmra.mxu0 %v5750
        %v5784 = vpop.f32.mrf.mxu0
        %v5785 = vadd.f32 0.0, %v5784
        %5786 = vmatmul.f32.gmra.mxu0 %v5753
        %v5787 = vpop.f32.mrf.mxu0
        %v5788 = vadd.f32 0.0, %v5787
        %5789 = vdwg.mxu0
        %v5790 = vxor.u32 %v5776, 2147483648
        %v5791 = vxor.u32 %v5779, 2147483648
        %v5792 = vxor.u32 %v5782, 2147483648
        %v5793 = vxor.u32 %v5785, 2147483648
        %v5794 = vxor.u32 %v5788, 2147483648
        %v5795 = vmul.f32 %v5790, 1.442695
        %v5796 = vpow.pop %v5795
        %v5797 = vmul.f32 %v5791, 1.442695
        %v5798 = vpow.pop %v5797
        %v5799 = vmul.f32 %v5792, 1.442695
        %v5800 = vpow.pop %v5799
        %v5801 = vmul.f32 %v5793, 1.442695
        %v5802 = vpow.pop %v5801
        %v5803 = vmul.f32 %v5794, 1.442695
        %v5804 = vpow.pop %v5803
        %v5805 = vadd.f32 %v5796, 1.0
        %v5806 = vadd.f32 %v5798, 1.0
        %v5807 = vadd.f32 %v5800, 1.0
        %v5808 = vadd.f32 %v5802, 1.0
        %v5809 = vadd.f32 %v5804, 1.0
        %v5810 = vrcp.pop %v5805
        %v5811 = vmul.f32 %v5805, %v5810
        %v5812 = vsub.f32 1.0, %v5811
        %v5813 = vmul.f32 %v5810, %v5812
        %v5814 = vadd.f32 %v5810, %v5813
        %vm5815 = vweird.f32 %v5805
        %vm5816 = vweird.f32 %v5810
        %vm5817 = vmor %vm5815, %vm5816
        %v5818 = vsel %vm5817, %v5810, %v5814
        %v5819 = vand.u32 2147483647, %v5805
        %vm5820 = vcmp.eq.f32.partialorder %v5819, 8.507059e+37
        %v5821 = vand.u32 %v5805, 2147483648
        %v5822 = vor.u32 1.1754944e-38, %v5821
        %v5823 = vsel %vm5820, %v5822, %v5818
        %v5824 = vmul.f32 1.0, %v5823
        %v5825 = vrcp.pop %v5806
        %v5826 = vmul.f32 %v5806, %v5825
        %v5827 = vsub.f32 1.0, %v5826
        %v5828 = vmul.f32 %v5825, %v5827
        %v5829 = vadd.f32 %v5825, %v5828
        %vm5830 = vweird.f32 %v5806
        %vm5831 = vweird.f32 %v5825
        %vm5832 = vmor %vm5830, %vm5831
        %v5833 = vsel %vm5832, %v5825, %v5829
        %v5834 = vand.u32 2147483647, %v5806
        %vm5835 = vcmp.eq.f32.partialorder %v5834, 8.507059e+37
        %v5836 = vand.u32 %v5806, 2147483648
        %v5837 = vor.u32 1.1754944e-38, %v5836
        %v5838 = vsel %vm5835, %v5837, %v5833
        %v5839 = vmul.f32 1.0, %v5838
        %v5840 = vrcp.pop %v5807
        %v5841 = vmul.f32 %v5807, %v5840
        %v5842 = vsub.f32 1.0, %v5841
        %v5843 = vmul.f32 %v5840, %v5842
        %v5844 = vadd.f32 %v5840, %v5843
        %vm5845 = vweird.f32 %v5807
        %vm5846 = vweird.f32 %v5840
        %vm5847 = vmor %vm5845, %vm5846
        %v5848 = vsel %vm5847, %v5840, %v5844
        %v5849 = vand.u32 2147483647, %v5807
        %vm5850 = vcmp.eq.f32.partialorder %v5849, 8.507059e+37
        %v5851 = vand.u32 %v5807, 2147483648
        %v5852 = vor.u32 1.1754944e-38, %v5851
        %v5853 = vsel %vm5850, %v5852, %v5848
        %v5854 = vmul.f32 1.0, %v5853
        %v5855 = vrcp.pop %v5808
        %v5856 = vmul.f32 %v5808, %v5855
        %v5857 = vsub.f32 1.0, %v5856
        %v5858 = vmul.f32 %v5855, %v5857
        %v5859 = vadd.f32 %v5855, %v5858
        %vm5860 = vweird.f32 %v5808
        %vm5861 = vweird.f32 %v5855
        %vm5862 = vmor %vm5860, %vm5861
        %v5863 = vsel %vm5862, %v5855, %v5859
        %v5864 = vand.u32 2147483647, %v5808
        %vm5865 = vcmp.eq.f32.partialorder %v5864, 8.507059e+37
        %v5866 = vand.u32 %v5808, 2147483648
        %v5867 = vor.u32 1.1754944e-38, %v5866
        %v5868 = vsel %vm5865, %v5867, %v5863
        %v5869 = vmul.f32 1.0, %v5868
        %v5870 = vrcp.pop %v5809
        %v5871 = vmul.f32 %v5809, %v5870
        %v5872 = vsub.f32 1.0, %v5871
        %v5873 = vmul.f32 %v5870, %v5872
        %v5874 = vadd.f32 %v5870, %v5873
        %vm5875 = vweird.f32 %v5809
        %vm5876 = vweird.f32 %v5870
        %vm5877 = vmor %vm5875, %vm5876
        %v5878 = vsel %vm5877, %v5870, %v5874
        %v5879 = vand.u32 2147483647, %v5809
        %vm5880 = vcmp.eq.f32.partialorder %v5879, 8.507059e+37
        %v5881 = vand.u32 %v5809, 2147483648
        %v5882 = vor.u32 1.1754944e-38, %v5881
        %v5883 = vsel %vm5880, %v5882, %v5878
        %v5884 = vmul.f32 1.0, %v5883
        %5886 = vset.pattern.permute.xlu0 0
        %5887 = vperm.xlu0 %5886, %v5735
        %v5888 = vpop.permute.xlu0 %5887
        %5891 = vset.pattern.permute.xlu0 0
        %5892 = vperm.xlu0 %5891, %v5736
        %v5893 = vpop.permute.xlu0 %5892
        %5896 = vset.pattern.permute.xlu0 0
        %5897 = vperm.xlu0 %5896, %v5737
        %v5898 = vpop.permute.xlu0 %5897
        %5901 = vset.pattern.permute.xlu0 0
        %5902 = vperm.xlu0 %5901, %v5738
        %v5903 = vpop.permute.xlu0 %5902
        %5906 = vset.pattern.permute.xlu0 0
        %5907 = vperm.xlu0 %5906, %v5739
        %v5908 = vpop.permute.xlu0 %5907
        %v5910 = vadd.f32 %v5888, %v5824
        %v5911 = vadd.f32 %v5893, %v5839
        %v5912 = vadd.f32 %v5898, %v5854
        %v5913 = vadd.f32 %v5903, %v5869
        %v5914 = vadd.f32 %v5908, %v5884
        %v5915 = vmul.f32 %v5599, %v5910
        %v5916 = vmul.f32 %v5600, %v5911
        %v5917 = vmul.f32 %v5601, %v5912
        %v5918 = vmul.f32 %v5602, %v5913
        %v5919 = vmul.f32 %v5603, %v5914
        %5920 = vst.msk [vmem:[%s1398] sm:$0xff] %vm5262, %v5915
        %5921 = vst.msk [vmem:[%s1398 + $0x8] sm:$0xff] %vm5262, %v5916
        %5922 = vst.msk [vmem:[%s1398 + $0x10] sm:$0xff] %vm5262, %v5917
        %5923 = vst.msk [vmem:[%s1398 + $0x18] sm:$0xff] %vm5262, %v5918
        %5924 = vst.msk [vmem:[%s1398 + $0x20] sm:$0xf] %vm5275, %v5919
        %p5925 = scmp.lt.s32.totalorder %s93, 1
        %s5926 = scalar_select %p5925, %s93, 1
        %s5927 = smul.addr %s5926, 5
        %s5928 = smul.addr %s5927, 8
        %s5929 = scalar_lea.vmem %s71, %s5928
        // Predicated region
        $region241: #{_lambda_.1} parent=159 // pred_check
          %p5930 = pneg %p851
        $region242: #{_lambda_.1} parent=159 // pred_check_branch
          %5932 = sbr.rel (%p5930) target = $region244
        $region243: #{_lambda_.1} parent=159 // pred_region
          _
        $region244: #{_lambda_.1} parent=159 // pred_fallthru
          _
      $region160: #{_lambda_.1} parent=5 // pred_fallthru
        _
      %p5933 = scmp.le.s32.totalorder 2, %s88
      // Predicated region
      $region245: #{_lambda_.1} parent=5 // pred_check
        %p5934 = pneg %p5933
      $region246: #{_lambda_.1} parent=5 // pred_check_branch
        %5936 = sbr.rel (%p5934) target = $region248
      $region247: #{_lambda_.1} parent=5 // pred_region
        %s5937 = ssub.s32 %s88, 2
        // Predicated region
        $region249: #{_lambda_.1} parent=247 // pred_check
          %p5938 = pneg %p857
        $region250: #{_lambda_.1} parent=247 // pred_check_branch
          %5940 = sbr.rel (%p5938) target = $region252
        $region251: #{_lambda_.1} parent=247 // pred_region
          %p5941 = scmp.lt.s32.totalorder %s94, 1
          %s5942 = scalar_select %p5941, %s94, 1
          %s5943 = smul.addr %s5942, 5
          %s5944 = smul.addr %s5943, 8
          %s5945 = scalar_lea.vmem %s71, %s5944
        $region252: #{_lambda_.1} parent=247 // pred_fallthru
          _
      $region248: #{_lambda_.1} parent=5 // pred_fallthru
        _
    $region6: #{_lambda_.1} parent=1 // loop_footer
      %s92 = sadd.s32 1, %s88
    $region7: #{_lambda_.1} parent=1 // loop_footer_branch
      %87 = sbr.rel target = $region3
    $region8: #{_lambda_.1} parent=1 // loop_exit
      _
    %5946 = vsyncpa [#allocation9], 1
    %s5947 = scalar_lea.sflag [#allocation9], 1
    %5948 = vsyncpa %s5947, 1
    %5949 = vsyncpa [#allocation11], 1
    %5950 = vsyncpa [#allocation14], 1
    %5951 = vsyncpa [#allocation17], 1
    %5952 = vsyncpa [#allocation20], 1
    %5953 = vsyncpa [#allocation23], 1
    %5954 = vsyncpa [#allocation26], 1
    %5955 = vsyncpa [#allocation29], 1
    %5956 = vsyncpa [#allocation32], 1
    %5957 = vsyncpa [#allocation35], 1
    %5958 = vsyncpa [#allocation38], 1

</llo_original>
